<compile_context>
chip_gen: v7x
topology: tpu7x:2x2x1
jax: 0.10.0
libtpu: 0.0.40
codegen_flags: <defaults>
</compile_context>

<pallas_src>
import math
import functools

import jax
import jax.numpy as jnp
from jax.experimental import pallas as pl
from jax.experimental.pallas import tpu as pltpu


_TARGET_BLOCK_ROWS = 512  # rows (= lines_per_block * line_size) per grid step


def _pick_vmem_limit_bytes():
    try:
        cap = int(pltpu.get_tpu_info().vmem_capacity_bytes)
        return (cap * 3) // 4          # leave headroom (v7x has only 64 MiB / TC)
    except Exception:
        return 32 * 1024 * 1024


_VMEM_LIMIT_BYTES = _pick_vmem_limit_bytes()


def line_attention_kernel(x_ref, wq_ref, wk_ref, wv_ref, wo_ref, bo_ref, pos_ref,
                          o_ref, *, heads, dim_head, line_size, lines_per_block,
                          scale):
    rows = lines_per_block * line_size
    mm_dtype = x_ref.dtype            # keep MXU operands in the input dtype (bf16 stays bf16)
    x = x_ref[...]                    # [rows, dim]

    # QKV projections, f32 accumulation on the MXU.
    q2 = jnp.dot(x, wq_ref[...], preferred_element_type=jnp.float32) * scale
    k2 = jnp.dot(x, wk_ref[...], preferred_element_type=jnp.float32)
    v2 = jnp.dot(x, wv_ref[...], preferred_element_type=jnp.float32)

    acc = jnp.zeros((rows, o_ref.shape[-1]), dtype=jnp.float32)
    for h in range(heads):            # static unroll over heads
        lo, hi = h * dim_head, (h + 1) * dim_head
        # [rows, dh] -> [lines, line_size, dh]  (layout-preserving when line_size % 8 == 0)
        q_h = q2[:, lo:hi].astype(mm_dtype).reshape(lines_per_block, line_size, dim_head)
        k_h = k2[:, lo:hi].astype(mm_dtype).reshape(lines_per_block, line_size, dim_head)
        v_h = v2[:, lo:hi].astype(mm_dtype).reshape(lines_per_block, line_size, dim_head)

        sim = jnp.einsum('bid,bjd->bij', q_h, k_h,
                         preferred_element_type=jnp.float32)       # [lines, L, L]
        sim = sim + pos_ref[h][None].astype(jnp.float32)

        # softmax along the line axis, in f32 (exp runs on the EUP slot)
        sim_max = jnp.max(sim, axis=-1, keepdims=True)
        p = jnp.exp(sim - sim_max)
        attn = p / jnp.sum(p, axis=-1, keepdims=True)

        out_h = jnp.einsum('bij,bjd->bid', attn.astype(mm_dtype), v_h,
                           preferred_element_type=jnp.float32)      # [lines, L, dh]
        out_h = out_h.reshape(rows, dim_head)

        # Head-wise block of to_out: sum_h out_h @ Wo[h*dh:(h+1)*dh]  ==  concat-heads @ Wo
        acc = acc + jnp.dot(out_h.astype(mm_dtype), wo_ref[lo:hi, :],
                            preferred_element_type=jnp.float32)

    y = acc + bo_ref[...].astype(jnp.float32)     # bias [1, dim] broadcasts over rows
    o_ref[...] = y.astype(o_ref.dtype)


@functools.partial(jax.jit,
                   static_argnames=("heads", "dim_head", "line_size", "block_lines"))
def line_attention_forward(x, wq, wk, wv, wo, bo, pos, *, heads, dim_head,
                           line_size, block_lines=None):
    """x: [n, dim] with n = N_ray * N_samples (n % line_size == 0, as in the module)."""
    n, dim = x.shape
    inner = heads * dim_head
    assert n % line_size == 0, "n must be divisible by line_size (PyTorch .view requires it)"
    assert wq.shape == (dim, inner) and wk.shape == (dim, inner) and wv.shape == (dim, inner)
    assert wo.shape == (inner, dim) and bo.shape == (1, dim)
    assert pos.shape == (heads, line_size, line_size)

    num_lines = n // line_size
    scale = float(dim_head) ** -0.5

    # Large row tile; the block's sublane dim must be a multiple of 8 unless it
    # spans the whole (padded) row axis.
    if block_lines is None:
        block_lines = max(1, _TARGET_BLOCK_ROWS // line_size)
    block_lines = min(block_lines, num_lines)
    while block_lines < num_lines and (block_lines * line_size) % 8 != 0:
        block_lines += 1
    block_rows = block_lines * line_size

    # Pad whole lines so the grid tiles the row axis exactly; padded lines are
    # self-contained garbage and sliced off below (no divisibility assert).
    lines_pad = -(-num_lines // block_lines) * block_lines
    n_pad = lines_pad * line_size
    x_p = jnp.pad(x, ((0, n_pad - n), (0, 0))) if n_pad != n else x
    grid = (lines_pad // block_lines,)

    kernel = functools.partial(
        line_attention_kernel,
        heads=heads, dim_head=dim_head, line_size=line_size,
        lines_per_block=block_lines, scale=scale)

    flops = 2 * n_pad * inner * (4 * dim + 2 * line_size)
    transcendentals = n_pad * heads * line_size
    bytes_accessed = (2 * n_pad * dim * x.dtype.itemsize
                      + (3 * dim * inner + inner * dim) * wq.dtype.itemsize
                      + dim * bo.dtype.itemsize
                      + heads * line_size * line_size * pos.dtype.itemsize)

    out = pl.pallas_call(
        kernel,
        out_shape=jax.ShapeDtypeStruct((n_pad, dim), x.dtype),
        grid_spec=pltpu.PrefetchScalarGridSpec(
            num_scalar_prefetch=0,
            grid=grid,
            in_specs=[
                pl.BlockSpec((block_rows, dim), lambda i: (i, 0)),
                pl.BlockSpec((dim, inner), lambda i: (0, 0)),
                pl.BlockSpec((dim, inner), lambda i: (0, 0)),
                pl.BlockSpec((dim, inner), lambda i: (0, 0)),
                pl.BlockSpec((inner, dim), lambda i: (0, 0)),
                pl.BlockSpec((1, dim), lambda i: (0, 0)),
                pl.BlockSpec((heads, line_size, line_size), lambda i: (0, 0, 0)),
            ],
            out_specs=pl.BlockSpec((block_rows, dim), lambda i: (i, 0)),
        ),
        compiler_params=pltpu.CompilerParams(
            dimension_semantics=("parallel",),
            vmem_limit_bytes=_VMEM_LIMIT_BYTES,
        ),
        cost_estimate=pl.CostEstimate(
            flops=int(flops),
            transcendentals=int(transcendentals),
            bytes_accessed=int(bytes_accessed)),
    )(x_p, wq, wk, wv, wo, bo, pos)

    return out[:n] if n_pad != n else out


def line_attention_reference(x, wq, wk, wv, wo, bo, pos, *, heads, dim_head, line_size):
    """Pure-JAX transcription of the PyTorch LineAttention.forward."""
    n, c = x.shape
    num_lines = n // line_size
    scale = float(dim_head) ** -0.5
    xl = x.reshape(num_lines, line_size, c)

    def split_heads(t):
        return t.reshape(num_lines, line_size, heads, dim_head).transpose(0, 2, 1, 3)

    q = split_heads(xl @ wq) * scale
    k = split_heads(xl @ wk)
    v = split_heads(xl @ wv)
    sim = jnp.einsum('bhid,bhjd->bhij', q, k) + pos[None]
    attn = jax.nn.softmax(sim, axis=-1)
    out = jnp.einsum('bhij,bhjd->bhid', attn, v)
    out = out.transpose(0, 2, 1, 3).reshape(num_lines, line_size, heads * dim_head)
    out = out @ wo + bo
    return out.reshape(n, c)


def init_line_attention_params(key, dim, heads, dim_head, line_size, dtype=jnp.float32):
    """nn.Linear-style init (U(-1/sqrt(fan_in), 1/sqrt(fan_in))), stored as [in, out]."""
    inner = heads * dim_head
    kq, kkv, ko, kb, kp = jax.random.split(key, 5)

    def linear_w(k, fan_in, fan_out):
        bound = 1.0 / math.sqrt(fan_in)
        return jax.random.uniform(k, (fan_out, fan_in), dtype, -bound, bound).T

    wq = linear_w(kq, dim, inner)                       # [dim, inner]
    wkv = linear_w(kkv, dim, 2 * inner)                 # [dim, 2*inner]
    wk, wv = wkv[:, :inner], wkv[:, inner:]             # chunk(2, dim=-1) equivalent
    wo = linear_w(ko, inner, dim)                       # [inner, dim]
    b_bound = 1.0 / math.sqrt(inner)
    bo = jax.random.uniform(kb, (1, dim), dtype, -b_bound, b_bound)
    # trunc_normal_-like pos embedding (std=1, clipped to [-2, 2]); exact law irrelevant here
    pos = jnp.clip(jax.random.normal(kp, (heads, line_size, line_size), dtype), -2.0, 2.0)
    return wq, wk, wv, wo, bo, pos


if __name__ == "__main__":
    key = jax.random.PRNGKey(0)
    kx, kp = jax.random.split(key)

    # Small shapes consistent with the module: n = N_ray * N_samples rows of dim channels.
    dim, line_size, heads, dim_head = 32, 8, 4, 8      # inner_dim = 32
    N_ray, N_sample = 16, 8
    n = N_ray * N_sample                                # 128 rows -> 16 lines of 8

    x = jax.random.normal(kx, (n, dim), dtype=jnp.float32)
    wq, wk, wv, wo, bo, pos = init_line_attention_params(kp, dim, heads, dim_head, line_size)

    out = line_attention_forward(x, wq, wk, wv, wo, bo, pos,
                                 heads=heads, dim_head=dim_head, line_size=line_size)
    out = jax.block_until_ready(out)

    ref = line_attention_reference(x, wq, wk, wv, wo, bo, pos,
                                   heads=heads, dim_head=dim_head, line_size=line_size)
    assert out.shape == (n, dim)
    assert jnp.allclose(out, ref, atol=1e-4, rtol=1e-4), float(jnp.max(jnp.abs(out - ref)))

    print("KERNEL_OK")
</pallas_src>

<mosaic_0001>
module attributes {stable_mosaic.version = 11 : i64} {
  func.func @line_attention_kernel(%arg0: i32, %arg1: memref<128x32xf32, #tpu.memory_space<vmem>>, %arg2: memref<32x32xf32, #tpu.memory_space<vmem>>, %arg3: memref<32x32xf32, #tpu.memory_space<vmem>>, %arg4: memref<32x32xf32, #tpu.memory_space<vmem>>, %arg5: memref<32x32xf32, #tpu.memory_space<vmem>>, %arg6: memref<1x32xf32, #tpu.memory_space<vmem>>, %arg7: memref<4x8x8xf32, #tpu.memory_space<vmem>>, %arg8: memref<128x32xf32, #tpu.memory_space<vmem>>) attributes {dimension_semantics = [#tpu.dimension_semantics<parallel>], iteration_bounds = array<i64: 1>, scalar_prefetch = 0 : i64, scratch_operands = 0 : i64, tpu.core_type = #tpu.core_type<tc>, window_params = [{transform_indices = @transform_0, window_bounds = array<i64: 128, 32>}, {pipeline_mode = #tpu.pipeline_mode<synchronous>, transform_indices = @transform_1, window_bounds = array<i64: 32, 32>}, {pipeline_mode = #tpu.pipeline_mode<synchronous>, transform_indices = @transform_2, window_bounds = array<i64: 32, 32>}, {pipeline_mode = #tpu.pipeline_mode<synchronous>, transform_indices = @transform_3, window_bounds = array<i64: 32, 32>}, {pipeline_mode = #tpu.pipeline_mode<synchronous>, transform_indices = @transform_4, window_bounds = array<i64: 32, 32>}, {pipeline_mode = #tpu.pipeline_mode<synchronous>, transform_indices = @transform_5, window_bounds = array<i64: 1, 32>}, {pipeline_mode = #tpu.pipeline_mode<synchronous>, transform_indices = @transform_6, window_bounds = array<i64: 4, 8, 8>}, {transform_indices = @transform_7, window_bounds = array<i64: 128, 32>}]} {
    %c0 = arith.constant 0 : index
    %c0_0 = arith.constant 0 : index
    %0 = vector.load %arg1[%c0, %c0_0] : memref<128x32xf32, #tpu.memory_space<vmem>>, vector<128x32xf32>
    %c0_1 = arith.constant 0 : index
    %c0_2 = arith.constant 0 : index
    %1 = vector.load %arg2[%c0_1, %c0_2] : memref<32x32xf32, #tpu.memory_space<vmem>>, vector<32x32xf32>
    %cst = arith.constant dense<0.000000e+00> : vector<128x32xf32>
    %2 = tpu.matmul %0, %1, %cst {dimension_numbers = #tpu.dot_dimension_numbers<[1], [0], [0], [1], [0, 0, 1, 1], [], []>} : vector<128x32xf32>, vector<32x32xf32>, vector<128x32xf32> -> vector<128x32xf32>
    %cst_3 = arith.constant 0.353553385 : f32
    %3 = vector.broadcast %cst_3 : f32 to vector<128x32xf32>
    %4 = arith.mulf %2, %3 : vector<128x32xf32>
    %c0_4 = arith.constant 0 : index
    %c0_5 = arith.constant 0 : index
    %5 = vector.load %arg3[%c0_4, %c0_5] : memref<32x32xf32, #tpu.memory_space<vmem>>, vector<32x32xf32>
    %cst_6 = arith.constant dense<0.000000e+00> : vector<128x32xf32>
    %6 = tpu.matmul %0, %5, %cst_6 {dimension_numbers = #tpu.dot_dimension_numbers<[1], [0], [0], [1], [0, 0, 1, 1], [], []>} : vector<128x32xf32>, vector<32x32xf32>, vector<128x32xf32> -> vector<128x32xf32>
    %c0_7 = arith.constant 0 : index
    %c0_8 = arith.constant 0 : index
    %7 = vector.load %arg4[%c0_7, %c0_8] : memref<32x32xf32, #tpu.memory_space<vmem>>, vector<32x32xf32>
    %cst_9 = arith.constant dense<0.000000e+00> : vector<128x32xf32>
    %8 = tpu.matmul %0, %7, %cst_9 {dimension_numbers = #tpu.dot_dimension_numbers<[1], [0], [0], [1], [0, 0, 1, 1], [], []>} : vector<128x32xf32>, vector<32x32xf32>, vector<128x32xf32> -> vector<128x32xf32>
    %cst_10 = arith.constant 0.000000e+00 : f32
    %9 = vector.broadcast %cst_10 : f32 to vector<128x32xf32>
    %10 = vector.extract_strided_slice %4 {offsets = [0, 0], sizes = [128, 8], strides = [1, 1]} : vector<128x32xf32> to vector<128x8xf32>
    %11 = vector.shape_cast %10 : vector<128x8xf32> to vector<16x8x8xf32>
    %12 = vector.extract_strided_slice %6 {offsets = [0, 0], sizes = [128, 8], strides = [1, 1]} : vector<128x32xf32> to vector<128x8xf32>
    %13 = vector.shape_cast %12 : vector<128x8xf32> to vector<16x8x8xf32>
    %14 = vector.extract_strided_slice %8 {offsets = [0, 0], sizes = [128, 8], strides = [1, 1]} : vector<128x32xf32> to vector<128x8xf32>
    %15 = vector.shape_cast %14 : vector<128x8xf32> to vector<16x8x8xf32>
    "tpu.trace_start"() <{level = 10 : i32, message = "bid,bjd->bij"}> : () -> ()
    %cst_11 = arith.constant dense<0.000000e+00> : vector<16x8x8xf32>
    %16 = tpu.matmul %11, %13, %cst_11 {dimension_numbers = #tpu.dot_dimension_numbers<[2], [2], [1], [1], [0, 0, 0, 1, 1, 1], [0], [0]>} : vector<16x8x8xf32>, vector<16x8x8xf32>, vector<16x8x8xf32> -> vector<16x8x8xf32>
    "tpu.trace_stop"() : () -> ()
    %c0_12 = arith.constant 0 : index
    %c0_13 = arith.constant 0 : index
    %c0_14 = arith.constant 0 : index
    %17 = vector.load %arg7[%c0_12, %c0_13, %c0_14] : memref<4x8x8xf32, #tpu.memory_space<vmem>>, vector<1x8x8xf32>
    %18 = vector.shape_cast %17 : vector<1x8x8xf32> to vector<8x8xf32>
    %19 = vector.shape_cast %18 : vector<8x8xf32> to vector<1x8x8xf32>
    %20 = vector.broadcast %19 : vector<1x8x8xf32> to vector<16x8x8xf32>
    %21 = arith.addf %16, %20 : vector<16x8x8xf32>
    %cst_15 = arith.constant dense<0xFF800000> : vector<16x8xf32>
    %22 = vector.multi_reduction <maximumf>, %21, %cst_15 [2] : vector<16x8x8xf32> to vector<16x8xf32>
    %23 = vector.shape_cast %22 : vector<16x8xf32> to vector<16x8x1xf32>
    %24 = vector.broadcast %23 : vector<16x8x1xf32> to vector<16x8x8xf32>
    %25 = arith.subf %21, %24 : vector<16x8x8xf32>
    %26 = math.exp %25 : vector<16x8x8xf32>
    %cst_16 = arith.constant dense<0.000000e+00> : vector<16x8xf32>
    %27 = vector.multi_reduction <add>, %26, %cst_16 [2] : vector<16x8x8xf32> to vector<16x8xf32>
    %28 = vector.shape_cast %27 : vector<16x8xf32> to vector<16x8x1xf32>
    %29 = vector.broadcast %28 : vector<16x8x1xf32> to vector<16x8x8xf32>
    %30 = arith.divf %26, %29 : vector<16x8x8xf32>
    "tpu.trace_start"() <{level = 10 : i32, message = "bij,bjd->bid"}> : () -> ()
    %cst_17 = arith.constant dense<0.000000e+00> : vector<16x8x8xf32>
    %31 = tpu.matmul %30, %15, %cst_17 {dimension_numbers = #tpu.dot_dimension_numbers<[2], [1], [1], [2], [0, 0, 0, 1, 1, 2], [0], [0]>} : vector<16x8x8xf32>, vector<16x8x8xf32>, vector<16x8x8xf32> -> vector<16x8x8xf32>
    "tpu.trace_stop"() : () -> ()
    %32 = vector.shape_cast %31 : vector<16x8x8xf32> to vector<128x8xf32>
    %c0_18 = arith.constant 0 : index
    %c0_19 = arith.constant 0 : index
    %33 = vector.load %arg5[%c0_18, %c0_19] : memref<32x32xf32, #tpu.memory_space<vmem>>, vector<8x32xf32>
    %cst_20 = arith.constant dense<0.000000e+00> : vector<128x32xf32>
    %34 = tpu.matmul %32, %33, %cst_20 {dimension_numbers = #tpu.dot_dimension_numbers<[1], [0], [0], [1], [0, 0, 1, 1], [], []>} : vector<128x8xf32>, vector<8x32xf32>, vector<128x32xf32> -> vector<128x32xf32>
    %35 = arith.addf %9, %34 : vector<128x32xf32>
    %36 = vector.extract_strided_slice %4 {offsets = [0, 8], sizes = [128, 8], strides = [1, 1]} : vector<128x32xf32> to vector<128x8xf32>
    %37 = vector.shape_cast %36 : vector<128x8xf32> to vector<16x8x8xf32>
    %38 = vector.extract_strided_slice %6 {offsets = [0, 8], sizes = [128, 8], strides = [1, 1]} : vector<128x32xf32> to vector<128x8xf32>
    %39 = vector.shape_cast %38 : vector<128x8xf32> to vector<16x8x8xf32>
    %40 = vector.extract_strided_slice %8 {offsets = [0, 8], sizes = [128, 8], strides = [1, 1]} : vector<128x32xf32> to vector<128x8xf32>
    %41 = vector.shape_cast %40 : vector<128x8xf32> to vector<16x8x8xf32>
    "tpu.trace_start"() <{level = 10 : i32, message = "bid,bjd->bij"}> : () -> ()
    %cst_21 = arith.constant dense<0.000000e+00> : vector<16x8x8xf32>
    %42 = tpu.matmul %37, %39, %cst_21 {dimension_numbers = #tpu.dot_dimension_numbers<[2], [2], [1], [1], [0, 0, 0, 1, 1, 1], [0], [0]>} : vector<16x8x8xf32>, vector<16x8x8xf32>, vector<16x8x8xf32> -> vector<16x8x8xf32>
    "tpu.trace_stop"() : () -> ()
    %c1 = arith.constant 1 : index
    %c0_22 = arith.constant 0 : index
    %c0_23 = arith.constant 0 : index
    %43 = vector.load %arg7[%c1, %c0_22, %c0_23] : memref<4x8x8xf32, #tpu.memory_space<vmem>>, vector<1x8x8xf32>
    %44 = vector.shape_cast %43 : vector<1x8x8xf32> to vector<8x8xf32>
    %45 = vector.shape_cast %44 : vector<8x8xf32> to vector<1x8x8xf32>
    %46 = vector.broadcast %45 : vector<1x8x8xf32> to vector<16x8x8xf32>
    %47 = arith.addf %42, %46 : vector<16x8x8xf32>
    %cst_24 = arith.constant dense<0xFF800000> : vector<16x8xf32>
    %48 = vector.multi_reduction <maximumf>, %47, %cst_24 [2] : vector<16x8x8xf32> to vector<16x8xf32>
    %49 = vector.shape_cast %48 : vector<16x8xf32> to vector<16x8x1xf32>
    %50 = vector.broadcast %49 : vector<16x8x1xf32> to vector<16x8x8xf32>
    %51 = arith.subf %47, %50 : vector<16x8x8xf32>
    %52 = math.exp %51 : vector<16x8x8xf32>
    %cst_25 = arith.constant dense<0.000000e+00> : vector<16x8xf32>
    %53 = vector.multi_reduction <add>, %52, %cst_25 [2] : vector<16x8x8xf32> to vector<16x8xf32>
    %54 = vector.shape_cast %53 : vector<16x8xf32> to vector<16x8x1xf32>
    %55 = vector.broadcast %54 : vector<16x8x1xf32> to vector<16x8x8xf32>
    %56 = arith.divf %52, %55 : vector<16x8x8xf32>
    "tpu.trace_start"() <{level = 10 : i32, message = "bij,bjd->bid"}> : () -> ()
    %cst_26 = arith.constant dense<0.000000e+00> : vector<16x8x8xf32>
    %57 = tpu.matmul %56, %41, %cst_26 {dimension_numbers = #tpu.dot_dimension_numbers<[2], [1], [1], [2], [0, 0, 0, 1, 1, 2], [0], [0]>} : vector<16x8x8xf32>, vector<16x8x8xf32>, vector<16x8x8xf32> -> vector<16x8x8xf32>
    "tpu.trace_stop"() : () -> ()
    %58 = vector.shape_cast %57 : vector<16x8x8xf32> to vector<128x8xf32>
    %c8 = arith.constant 8 : index
    %c0_27 = arith.constant 0 : index
    %59 = vector.load %arg5[%c8, %c0_27] : memref<32x32xf32, #tpu.memory_space<vmem>>, vector<8x32xf32>
    %cst_28 = arith.constant dense<0.000000e+00> : vector<128x32xf32>
    %60 = tpu.matmul %58, %59, %cst_28 {dimension_numbers = #tpu.dot_dimension_numbers<[1], [0], [0], [1], [0, 0, 1, 1], [], []>} : vector<128x8xf32>, vector<8x32xf32>, vector<128x32xf32> -> vector<128x32xf32>
    %61 = arith.addf %35, %60 : vector<128x32xf32>
    %62 = vector.extract_strided_slice %4 {offsets = [0, 16], sizes = [128, 8], strides = [1, 1]} : vector<128x32xf32> to vector<128x8xf32>
    %63 = vector.shape_cast %62 : vector<128x8xf32> to vector<16x8x8xf32>
    %64 = vector.extract_strided_slice %6 {offsets = [0, 16], sizes = [128, 8], strides = [1, 1]} : vector<128x32xf32> to vector<128x8xf32>
    %65 = vector.shape_cast %64 : vector<128x8xf32> to vector<16x8x8xf32>
    %66 = vector.extract_strided_slice %8 {offsets = [0, 16], sizes = [128, 8], strides = [1, 1]} : vector<128x32xf32> to vector<128x8xf32>
    %67 = vector.shape_cast %66 : vector<128x8xf32> to vector<16x8x8xf32>
    "tpu.trace_start"() <{level = 10 : i32, message = "bid,bjd->bij"}> : () -> ()
    %cst_29 = arith.constant dense<0.000000e+00> : vector<16x8x8xf32>
    %68 = tpu.matmul %63, %65, %cst_29 {dimension_numbers = #tpu.dot_dimension_numbers<[2], [2], [1], [1], [0, 0, 0, 1, 1, 1], [0], [0]>} : vector<16x8x8xf32>, vector<16x8x8xf32>, vector<16x8x8xf32> -> vector<16x8x8xf32>
    "tpu.trace_stop"() : () -> ()
    %c2 = arith.constant 2 : index
    %c0_30 = arith.constant 0 : index
    %c0_31 = arith.constant 0 : index
    %69 = vector.load %arg7[%c2, %c0_30, %c0_31] : memref<4x8x8xf32, #tpu.memory_space<vmem>>, vector<1x8x8xf32>
    %70 = vector.shape_cast %69 : vector<1x8x8xf32> to vector<8x8xf32>
    %71 = vector.shape_cast %70 : vector<8x8xf32> to vector<1x8x8xf32>
    %72 = vector.broadcast %71 : vector<1x8x8xf32> to vector<16x8x8xf32>
    %73 = arith.addf %68, %72 : vector<16x8x8xf32>
    %cst_32 = arith.constant dense<0xFF800000> : vector<16x8xf32>
    %74 = vector.multi_reduction <maximumf>, %73, %cst_32 [2] : vector<16x8x8xf32> to vector<16x8xf32>
    %75 = vector.shape_cast %74 : vector<16x8xf32> to vector<16x8x1xf32>
    %76 = vector.broadcast %75 : vector<16x8x1xf32> to vector<16x8x8xf32>
    %77 = arith.subf %73, %76 : vector<16x8x8xf32>
    %78 = math.exp %77 : vector<16x8x8xf32>
    %cst_33 = arith.constant dense<0.000000e+00> : vector<16x8xf32>
    %79 = vector.multi_reduction <add>, %78, %cst_33 [2] : vector<16x8x8xf32> to vector<16x8xf32>
    %80 = vector.shape_cast %79 : vector<16x8xf32> to vector<16x8x1xf32>
    %81 = vector.broadcast %80 : vector<16x8x1xf32> to vector<16x8x8xf32>
    %82 = arith.divf %78, %81 : vector<16x8x8xf32>
    "tpu.trace_start"() <{level = 10 : i32, message = "bij,bjd->bid"}> : () -> ()
    %cst_34 = arith.constant dense<0.000000e+00> : vector<16x8x8xf32>
    %83 = tpu.matmul %82, %67, %cst_34 {dimension_numbers = #tpu.dot_dimension_numbers<[2], [1], [1], [2], [0, 0, 0, 1, 1, 2], [0], [0]>} : vector<16x8x8xf32>, vector<16x8x8xf32>, vector<16x8x8xf32> -> vector<16x8x8xf32>
    "tpu.trace_stop"() : () -> ()
    %84 = vector.shape_cast %83 : vector<16x8x8xf32> to vector<128x8xf32>
    %c16 = arith.constant 16 : index
    %c0_35 = arith.constant 0 : index
    %85 = vector.load %arg5[%c16, %c0_35] : memref<32x32xf32, #tpu.memory_space<vmem>>, vector<8x32xf32>
    %cst_36 = arith.constant dense<0.000000e+00> : vector<128x32xf32>
    %86 = tpu.matmul %84, %85, %cst_36 {dimension_numbers = #tpu.dot_dimension_numbers<[1], [0], [0], [1], [0, 0, 1, 1], [], []>} : vector<128x8xf32>, vector<8x32xf32>, vector<128x32xf32> -> vector<128x32xf32>
    %87 = arith.addf %61, %86 : vector<128x32xf32>
    %88 = vector.extract_strided_slice %4 {offsets = [0, 24], sizes = [128, 8], strides = [1, 1]} : vector<128x32xf32> to vector<128x8xf32>
    %89 = vector.shape_cast %88 : vector<128x8xf32> to vector<16x8x8xf32>
    %90 = vector.extract_strided_slice %6 {offsets = [0, 24], sizes = [128, 8], strides = [1, 1]} : vector<128x32xf32> to vector<128x8xf32>
    %91 = vector.shape_cast %90 : vector<128x8xf32> to vector<16x8x8xf32>
    %92 = vector.extract_strided_slice %8 {offsets = [0, 24], sizes = [128, 8], strides = [1, 1]} : vector<128x32xf32> to vector<128x8xf32>
    %93 = vector.shape_cast %92 : vector<128x8xf32> to vector<16x8x8xf32>
    "tpu.trace_start"() <{level = 10 : i32, message = "bid,bjd->bij"}> : () -> ()
    %cst_37 = arith.constant dense<0.000000e+00> : vector<16x8x8xf32>
    %94 = tpu.matmul %89, %91, %cst_37 {dimension_numbers = #tpu.dot_dimension_numbers<[2], [2], [1], [1], [0, 0, 0, 1, 1, 1], [0], [0]>} : vector<16x8x8xf32>, vector<16x8x8xf32>, vector<16x8x8xf32> -> vector<16x8x8xf32>
    "tpu.trace_stop"() : () -> ()
    %c3 = arith.constant 3 : index
    %c0_38 = arith.constant 0 : index
    %c0_39 = arith.constant 0 : index
    %95 = vector.load %arg7[%c3, %c0_38, %c0_39] : memref<4x8x8xf32, #tpu.memory_space<vmem>>, vector<1x8x8xf32>
    %96 = vector.shape_cast %95 : vector<1x8x8xf32> to vector<8x8xf32>
    %97 = vector.shape_cast %96 : vector<8x8xf32> to vector<1x8x8xf32>
    %98 = vector.broadcast %97 : vector<1x8x8xf32> to vector<16x8x8xf32>
    %99 = arith.addf %94, %98 : vector<16x8x8xf32>
    %cst_40 = arith.constant dense<0xFF800000> : vector<16x8xf32>
    %100 = vector.multi_reduction <maximumf>, %99, %cst_40 [2] : vector<16x8x8xf32> to vector<16x8xf32>
    %101 = vector.shape_cast %100 : vector<16x8xf32> to vector<16x8x1xf32>
    %102 = vector.broadcast %101 : vector<16x8x1xf32> to vector<16x8x8xf32>
    %103 = arith.subf %99, %102 : vector<16x8x8xf32>
    %104 = math.exp %103 : vector<16x8x8xf32>
    %cst_41 = arith.constant dense<0.000000e+00> : vector<16x8xf32>
    %105 = vector.multi_reduction <add>, %104, %cst_41 [2] : vector<16x8x8xf32> to vector<16x8xf32>
    %106 = vector.shape_cast %105 : vector<16x8xf32> to vector<16x8x1xf32>
    %107 = vector.broadcast %106 : vector<16x8x1xf32> to vector<16x8x8xf32>
    %108 = arith.divf %104, %107 : vector<16x8x8xf32>
    "tpu.trace_start"() <{level = 10 : i32, message = "bij,bjd->bid"}> : () -> ()
    %cst_42 = arith.constant dense<0.000000e+00> : vector<16x8x8xf32>
    %109 = tpu.matmul %108, %93, %cst_42 {dimension_numbers = #tpu.dot_dimension_numbers<[2], [1], [1], [2], [0, 0, 0, 1, 1, 2], [0], [0]>} : vector<16x8x8xf32>, vector<16x8x8xf32>, vector<16x8x8xf32> -> vector<16x8x8xf32>
    "tpu.trace_stop"() : () -> ()
    %110 = vector.shape_cast %109 : vector<16x8x8xf32> to vector<128x8xf32>
    %c24 = arith.constant 24 : index
    %c0_43 = arith.constant 0 : index
    %111 = vector.load %arg5[%c24, %c0_43] : memref<32x32xf32, #tpu.memory_space<vmem>>, vector<8x32xf32>
    %cst_44 = arith.constant dense<0.000000e+00> : vector<128x32xf32>
    %112 = tpu.matmul %110, %111, %cst_44 {dimension_numbers = #tpu.dot_dimension_numbers<[1], [0], [0], [1], [0, 0, 1, 1], [], []>} : vector<128x8xf32>, vector<8x32xf32>, vector<128x32xf32> -> vector<128x32xf32>
    %113 = arith.addf %87, %112 : vector<128x32xf32>
    %c0_45 = arith.constant 0 : index
    %c0_46 = arith.constant 0 : index
    %114 = vector.load %arg6[%c0_45, %c0_46] : memref<1x32xf32, #tpu.memory_space<vmem>>, vector<1x32xf32>
    %115 = vector.broadcast %114 : vector<1x32xf32> to vector<128x32xf32>
    %116 = arith.addf %113, %115 : vector<128x32xf32>
    %c0_47 = arith.constant 0 : index
    %c0_48 = arith.constant 0 : index
    %117 = vector.load %arg8[%c0_47, %c0_48] : memref<128x32xf32, #tpu.memory_space<vmem>>, vector<128x32xf32>
    tpu.vector_store %arg8[%c0_47, %c0_48], %116 {strides = array<i32>} : memref<128x32xf32, #tpu.memory_space<vmem>>, vector<128x32xf32>,
    return
  }
  func.func @transform_0(%arg0: i32) -> (i32, i32) {
    %c0_i32 = arith.constant 0 : i32
    %c0_i32_0 = arith.constant 0 : i32
    return %arg0, %c0_i32 : i32, i32
  }
  func.func @transform_1(%arg0: i32) -> (i32, i32) {
    %c0_i32 = arith.constant 0 : i32
    %c0_i32_0 = arith.constant 0 : i32
    %c0_i32_1 = arith.constant 0 : i32
    return %c0_i32, %c0_i32_0 : i32, i32
  }
  func.func @transform_2(%arg0: i32) -> (i32, i32) {
    %c0_i32 = arith.constant 0 : i32
    %c0_i32_0 = arith.constant 0 : i32
    %c0_i32_1 = arith.constant 0 : i32
    return %c0_i32, %c0_i32_0 : i32, i32
  }
  func.func @transform_3(%arg0: i32) -> (i32, i32) {
    %c0_i32 = arith.constant 0 : i32
    %c0_i32_0 = arith.constant 0 : i32
    %c0_i32_1 = arith.constant 0 : i32
    return %c0_i32, %c0_i32_0 : i32, i32
  }
  func.func @transform_4(%arg0: i32) -> (i32, i32) {
    %c0_i32 = arith.constant 0 : i32
    %c0_i32_0 = arith.constant 0 : i32
    %c0_i32_1 = arith.constant 0 : i32
    return %c0_i32, %c0_i32_0 : i32, i32
  }
  func.func @transform_5(%arg0: i32) -> (i32, i32) {
    %c0_i32 = arith.constant 0 : i32
    %c0_i32_0 = arith.constant 0 : i32
    %c0_i32_1 = arith.constant 0 : i32
    return %c0_i32, %c0_i32_0 : i32, i32
  }
  func.func @transform_6(%arg0: i32) -> (i32, i32, i32) {
    %c0_i32 = arith.constant 0 : i32
    %c0_i32_0 = arith.constant 0 : i32
    %c0_i32_1 = arith.constant 0 : i32
    %c0_i32_2 = arith.constant 0 : i32
    return %c0_i32, %c0_i32_0, %c0_i32_1 : i32, i32, i32
  }
  func.func @transform_7(%arg0: i32) -> (i32, i32) {
    %c0_i32 = arith.constant 0 : i32
    %c0_i32_0 = arith.constant 0 : i32
    return %arg0, %c0_i32 : i32, i32
  }
}

</mosaic_0001>

<llo_original>
// kernel: line_attention_forward.1
$region0: #{line_attention_forward.1}
  #allocation0 [shape = 'u32[]', space=smem, size = 0x4, offset = 0x4, fixed_abs, tag = 'smem constant byte address 0x4 - core index']
  #allocation1 [shape = 'u32[144,128]{1,0:T(1,128)}', space=vmem, size = 0x12000, scoped, tag = 'internal scratch']
  %s0 = inlined_call_operand.vmem [shape: f32[128,32], index: 0, kind: input, shape index: {}]
  %s1 = inlined_call_operand.vmem [shape: f32[32,32], index: 1, kind: input, shape index: {}]
  %s2 = inlined_call_operand.vmem [shape: f32[32,32], index: 2, kind: input, shape index: {}]
  %s3 = inlined_call_operand.vmem [shape: f32[32,32], index: 3, kind: input, shape index: {}]
  %s4 = inlined_call_operand.vmem [shape: f32[32,32], index: 4, kind: input, shape index: {}]
  %s5 = inlined_call_operand.vmem [shape: f32[1,32], index: 5, kind: input, shape index: {}]
  %s6 = inlined_call_operand.vmem [shape: f32[4,8,8], index: 6, kind: input, shape index: {}]
  %s7 = inlined_call_operand.vmem [shape: f32[128,32], index: 7, kind: output, shape index: {}]
  %s8 = sld [smem:[#allocation0]]
  $region38: #{line_attention_forward.1} parent=0
    _
  %s10 = ssub.s32 1, %s8
  %s11 = scalar_select 0, %s10, %s8
  // Predicated region
  $region2: #{line_attention_forward.1} parent=0 // pred_check
    _
  $region3: #{line_attention_forward.1} parent=0 // pred_check_branch
    %13 = sbr.rel (0) target = $region5
  $region4: #{line_attention_forward.1} parent=0 // pred_region
    _
  $region5: #{line_attention_forward.1} parent=0 // pred_fallthru
    _
  // Predicated region
  $region6: #{line_attention_forward.1} parent=0 // pred_check
    _
  $region7: #{line_attention_forward.1} parent=0 // pred_check_branch
    %15 = sbr.rel (0) target = $region9
  $region8: #{line_attention_forward.1} parent=0 // pred_region
    _
  $region9: #{line_attention_forward.1} parent=0 // pred_fallthru
    _
  // Predicated region
  $region10: #{line_attention_forward.1} parent=0 // pred_check
    _
  $region11: #{line_attention_forward.1} parent=0 // pred_check_branch
    %17 = sbr.rel (0) target = $region13
  $region12: #{line_attention_forward.1} parent=0 // pred_region
    _
  $region13: #{line_attention_forward.1} parent=0 // pred_fallthru
    _
  // Predicated region
  $region14: #{line_attention_forward.1} parent=0 // pred_check
    _
  $region15: #{line_attention_forward.1} parent=0 // pred_check_branch
    %19 = sbr.rel (0) target = $region17
  $region16: #{line_attention_forward.1} parent=0 // pred_region
    _
  $region17: #{line_attention_forward.1} parent=0 // pred_fallthru
    _
  // Predicated region
  $region18: #{line_attention_forward.1} parent=0 // pred_check
    _
  $region19: #{line_attention_forward.1} parent=0 // pred_check_branch
    %21 = sbr.rel (0) target = $region21
  $region20: #{line_attention_forward.1} parent=0 // pred_region
    _
  $region21: #{line_attention_forward.1} parent=0 // pred_fallthru
    _
  // Predicated region
  $region22: #{line_attention_forward.1} parent=0 // pred_check
    _
  $region23: #{line_attention_forward.1} parent=0 // pred_check_branch
    %23 = sbr.rel (0) target = $region25
  $region24: #{line_attention_forward.1} parent=0 // pred_region
    _
  $region25: #{line_attention_forward.1} parent=0 // pred_fallthru
    _
  // Predicated region
  $region26: #{line_attention_forward.1} parent=0 // pred_check
    _
  $region27: #{line_attention_forward.1} parent=0 // pred_check_branch
    %25 = sbr.rel (0) target = $region29
  $region28: #{line_attention_forward.1} parent=0 // pred_region
    _
  $region29: #{line_attention_forward.1} parent=0 // pred_fallthru
    _
  %v26 = vld [vmem:[%s0] sm:$0xff]
  %v27 = vld [vmem:[%s0 + $0x8] sm:$0xff]
  %v28 = vld [vmem:[%s0 + $0x10] sm:$0xff]
  %v29 = vld [vmem:[%s0 + $0x18] sm:$0xff]
  %v30 = vld [vmem:[%s0 + $0x20] sm:$0xff]
  %v31 = vld [vmem:[%s0 + $0x28] sm:$0xff]
  %v32 = vld [vmem:[%s0 + $0x30] sm:$0xff]
  %v33 = vld [vmem:[%s0 + $0x38] sm:$0xff]
  %v34 = vld [vmem:[%s0 + $0x40] sm:$0xff]
  %v35 = vld [vmem:[%s0 + $0x48] sm:$0xff]
  %v36 = vld [vmem:[%s0 + $0x50] sm:$0xff]
  %v37 = vld [vmem:[%s0 + $0x58] sm:$0xff]
  %v38 = vld [vmem:[%s0 + $0x60] sm:$0xff]
  %v39 = vld [vmem:[%s0 + $0x68] sm:$0xff]
  %v40 = vld [vmem:[%s0 + $0x70] sm:$0xff]
  %v41 = vld [vmem:[%s0 + $0x78] sm:$0xff]
  %v42 = vld [vmem:[%s1] sm:$0xff]
  %v43 = vld [vmem:[%s1 + $0x8] sm:$0xff]
  %v44 = vld [vmem:[%s1 + $0x10] sm:$0xff]
  %v45 = vld [vmem:[%s1 + $0x18] sm:$0xff]
  %vm46 = vcmask 261120
  %v48 = vsel %vm46, %v26, 0
  %v51 = vsel %vm46, %v27, 0
  %v54 = vsel %vm46, %v28, 0
  %v57 = vsel %vm46, %v29, 0
  %v60 = vsel %vm46, %v30, 0
  %v63 = vsel %vm46, %v31, 0
  %v66 = vsel %vm46, %v32, 0
  %v69 = vsel %vm46, %v33, 0
  %v72 = vsel %vm46, %v34, 0
  %v75 = vsel %vm46, %v35, 0
  %v78 = vsel %vm46, %v36, 0
  %v81 = vsel %vm46, %v37, 0
  %v84 = vsel %vm46, %v38, 0
  %v87 = vsel %vm46, %v39, 0
  %v90 = vsel %vm46, %v40, 0
  %v93 = vsel %vm46, %v41, 0
  %95 = vmatprep.subr.mxu0 0.0
  %96 = vmatpush1.msra.mxu0 %v42
  %97 = vmatprep.subr.mxu0 0.0
  %98 = vmatpush1.msra.mxu0 %v43
  %99 = vmatprep.subr.mxu0 0.0
  %100 = vmatpush1.msra.mxu0 %v44
  %101 = vmatprep.subr.mxu0 0.0
  %102 = vmatpush1.msra.mxu0 %v45
  %103 = vmatprep.subr.mxu0 0.0
  %104 = vmatpush1.msra.mxu0 0.0
  %105 = vmatprep.subr.mxu0 0.0
  %106 = vmatpush1.msra.mxu0 0.0
  %107 = vmatprep.subr.mxu0 0.0
  %108 = vmatpush1.msra.mxu0 0.0
  %109 = vmatprep.subr.mxu0 0.0
  %110 = vmatpush1.msra.mxu0 0.0
  %111 = vmatprep.subr.mxu0 0.0
  %112 = vmatpush1.msra.mxu0 0.0
  %113 = vmatprep.subr.mxu0 0.0
  %114 = vmatpush1.msra.mxu0 0.0
  %115 = vmatprep.subr.mxu0 0.0
  %116 = vmatpush1.msra.mxu0 0.0
  %117 = vmatprep.subr.mxu0 0.0
  %118 = vmatpush1.msra.mxu0 0.0
  %119 = vmatprep.subr.mxu0 0.0
  %120 = vmatpush1.msra.mxu0 0.0
  %121 = vmatprep.subr.mxu0 0.0
  %122 = vmatpush1.msra.mxu0 0.0
  %123 = vmatprep.subr.mxu0 0.0
  %124 = vmatpush1.msra.mxu0 0.0
  %125 = vmatprep.subr.mxu0 0.0
  %126 = vmatpush1.msra.mxu0 0.0
  %127 = vmatprep.subr.mxu0 0.0
  %128 = vmatpush1.msra.mxu0 0.0
  %129 = vmatprep.subr.mxu0 0.0
  %130 = vmatpush1.msra.mxu0 0.0
  %131 = vmatprep.subr.mxu0 0.0
  %132 = vmatpush1.msra.mxu0 0.0
  %133 = vmatprep.subr.mxu0 0.0
  %134 = vmatpush1.msra.mxu0 0.0
  %135 = vmatprep.subr.mxu0 0.0
  %136 = vmatpush1.msra.mxu0 0.0
  %137 = vmatprep.subr.mxu0 0.0
  %138 = vmatpush1.msra.mxu0 0.0
  %139 = vmatprep.subr.mxu0 0.0
  %140 = vmatpush1.msra.mxu0 0.0
  %141 = vmatprep.subr.mxu0 0.0
  %142 = vmatpush1.msra.mxu0 0.0
  %143 = vmatprep.subr.mxu0 0.0
  %144 = vmatpush1.msra.mxu0 0.0
  %145 = vmatprep.subr.mxu0 0.0
  %146 = vmatpush1.msra.mxu0 0.0
  %147 = vmatprep.subr.mxu0 0.0
  %148 = vmatpush1.msra.mxu0 0.0
  %149 = vmatprep.subr.mxu0 0.0
  %150 = vmatpush1.msra.mxu0 0.0
  %151 = vmatprep.subr.mxu0 0.0
  %152 = vmatpush1.msra.mxu0 0.0
  %153 = vmatprep.subr.mxu0 0.0
  %154 = vmatpush1.msra.mxu0 0.0
  %155 = vmatprep.subr.mxu0 0.0
  %156 = vmatpush1.msra.mxu0 0.0
  %157 = vmatprep.subr.mxu0 0.0
  %158 = vmatpush1.msra.mxu0 0.0
  %159 = vmatprep.mubr.f32.mxu0 0.0
  %160 = vmatmul.mubr.f32.gmra.mrb[0].mxu0 %v48
  %v161 = vpop.f32.mrb[0].mxu0
  %v162 = vadd.f32 0.0, %v161
  %v163 = vpop.f32.mrb[0].mxu0
  %164 = vmatprep.mubr.f32.mxu0 0.0
  %165 = vmatmul.mubr.f32.gmra.mrb[0].mxu0 %v51
  %v166 = vpop.f32.mrb[0].mxu0
  %v167 = vadd.f32 0.0, %v166
  %v168 = vpop.f32.mrb[0].mxu0
  %169 = vmatprep.mubr.f32.mxu0 0.0
  %170 = vmatmul.mubr.f32.gmra.mrb[0].mxu0 %v54
  %v171 = vpop.f32.mrb[0].mxu0
  %v172 = vadd.f32 0.0, %v171
  %v173 = vpop.f32.mrb[0].mxu0
  %174 = vmatprep.mubr.f32.mxu0 0.0
  %175 = vmatmul.mubr.f32.gmra.mrb[0].mxu0 %v57
  %v176 = vpop.f32.mrb[0].mxu0
  %v177 = vadd.f32 0.0, %v176
  %v178 = vpop.f32.mrb[0].mxu0
  %179 = vmatprep.mubr.f32.mxu0 0.0
  %180 = vmatmul.mubr.f32.gmra.mrb[0].mxu0 %v60
  %v181 = vpop.f32.mrb[0].mxu0
  %v182 = vadd.f32 0.0, %v181
  %v183 = vpop.f32.mrb[0].mxu0
  %184 = vmatprep.mubr.f32.mxu0 0.0
  %185 = vmatmul.mubr.f32.gmra.mrb[0].mxu0 %v63
  %v186 = vpop.f32.mrb[0].mxu0
  %v187 = vadd.f32 0.0, %v186
  %v188 = vpop.f32.mrb[0].mxu0
  %189 = vmatprep.mubr.f32.mxu0 0.0
  %190 = vmatmul.mubr.f32.gmra.mrb[0].mxu0 %v66
  %v191 = vpop.f32.mrb[0].mxu0
  %v192 = vadd.f32 0.0, %v191
  %v193 = vpop.f32.mrb[0].mxu0
  %194 = vmatprep.mubr.f32.mxu0 0.0
  %195 = vmatmul.mubr.f32.gmra.mrb[0].mxu0 %v69
  %v196 = vpop.f32.mrb[0].mxu0
  %v197 = vadd.f32 0.0, %v196
  %v198 = vpop.f32.mrb[0].mxu0
  %199 = vmatprep.mubr.f32.mxu0 0.0
  %200 = vmatmul.mubr.f32.gmra.mrb[0].mxu0 %v72
  %v201 = vpop.f32.mrb[0].mxu0
  %v202 = vadd.f32 0.0, %v201
  %v203 = vpop.f32.mrb[0].mxu0
  %204 = vmatprep.mubr.f32.mxu0 0.0
  %205 = vmatmul.mubr.f32.gmra.mrb[0].mxu0 %v75
  %v206 = vpop.f32.mrb[0].mxu0
  %v207 = vadd.f32 0.0, %v206
  %v208 = vpop.f32.mrb[0].mxu0
  %209 = vmatprep.mubr.f32.mxu0 0.0
  %210 = vmatmul.mubr.f32.gmra.mrb[0].mxu0 %v78
  %v211 = vpop.f32.mrb[0].mxu0
  %v212 = vadd.f32 0.0, %v211
  %v213 = vpop.f32.mrb[0].mxu0
  %214 = vmatprep.mubr.f32.mxu0 0.0
  %215 = vmatmul.mubr.f32.gmra.mrb[0].mxu0 %v81
  %v216 = vpop.f32.mrb[0].mxu0
  %v217 = vadd.f32 0.0, %v216
  %v218 = vpop.f32.mrb[0].mxu0
  %219 = vmatprep.mubr.f32.mxu0 0.0
  %220 = vmatmul.mubr.f32.gmra.mrb[0].mxu0 %v84
  %v221 = vpop.f32.mrb[0].mxu0
  %v222 = vadd.f32 0.0, %v221
  %v223 = vpop.f32.mrb[0].mxu0
  %224 = vmatprep.mubr.f32.mxu0 0.0
  %225 = vmatmul.mubr.f32.gmra.mrb[0].mxu0 %v87
  %v226 = vpop.f32.mrb[0].mxu0
  %v227 = vadd.f32 0.0, %v226
  %v228 = vpop.f32.mrb[0].mxu0
  %229 = vmatprep.mubr.f32.mxu0 0.0
  %230 = vmatmul.mubr.f32.gmra.mrb[0].mxu0 %v90
  %v231 = vpop.f32.mrb[0].mxu0
  %v232 = vadd.f32 0.0, %v231
  %v233 = vpop.f32.mrb[0].mxu0
  %234 = vmatprep.mubr.f32.mxu0 0.0
  %235 = vmatmul.mubr.f32.gmra.mrb[0].mxu0 %v93
  %v236 = vpop.f32.mrb[0].mxu0
  %v237 = vadd.f32 0.0, %v236
  %v238 = vpop.f32.mrb[0].mxu0
  %239 = vdwg.mxu0
  %v240 = vmul.f32 %v162, 0.35355338
  %v241 = vmul.f32 %v167, 0.35355338
  %v242 = vmul.f32 %v172, 0.35355338
  %v243 = vmul.f32 %v177, 0.35355338
  %v244 = vmul.f32 %v182, 0.35355338
  %v245 = vmul.f32 %v187, 0.35355338
  %v246 = vmul.f32 %v192, 0.35355338
  %v247 = vmul.f32 %v197, 0.35355338
  %v248 = vmul.f32 %v202, 0.35355338
  %v249 = vmul.f32 %v207, 0.35355338
  %v250 = vmul.f32 %v212, 0.35355338
  %v251 = vmul.f32 %v217, 0.35355338
  %v252 = vmul.f32 %v222, 0.35355338
  %v253 = vmul.f32 %v227, 0.35355338
  %v254 = vmul.f32 %v232, 0.35355338
  %v255 = vmul.f32 %v237, 0.35355338
  %v256 = vld [vmem:[%s2] sm:$0xff]
  %v257 = vld [vmem:[%s2 + $0x8] sm:$0xff]
  %v258 = vld [vmem:[%s2 + $0x10] sm:$0xff]
  %v259 = vld [vmem:[%s2 + $0x18] sm:$0xff]
  %260 = vmatprep.subr.mxu0 0.0
  %261 = vmatpush1.msra.mxu0 %v256
  %262 = vmatprep.subr.mxu0 0.0
  %263 = vmatpush1.msra.mxu0 %v257
  %264 = vmatprep.subr.mxu0 0.0
  %265 = vmatpush1.msra.mxu0 %v258
  %266 = vmatprep.subr.mxu0 0.0
  %267 = vmatpush1.msra.mxu0 %v259
  %268 = vmatprep.subr.mxu0 0.0
  %269 = vmatpush1.msra.mxu0 0.0
  %270 = vmatprep.subr.mxu0 0.0
  %271 = vmatpush1.msra.mxu0 0.0
  %272 = vmatprep.subr.mxu0 0.0
  %273 = vmatpush1.msra.mxu0 0.0
  %274 = vmatprep.subr.mxu0 0.0
  %275 = vmatpush1.msra.mxu0 0.0
  %276 = vmatprep.subr.mxu0 0.0
  %277 = vmatpush1.msra.mxu0 0.0
  %278 = vmatprep.subr.mxu0 0.0
  %279 = vmatpush1.msra.mxu0 0.0
  %280 = vmatprep.subr.mxu0 0.0
  %281 = vmatpush1.msra.mxu0 0.0
  %282 = vmatprep.subr.mxu0 0.0
  %283 = vmatpush1.msra.mxu0 0.0
  %284 = vmatprep.subr.mxu0 0.0
  %285 = vmatpush1.msra.mxu0 0.0
  %286 = vmatprep.subr.mxu0 0.0
  %287 = vmatpush1.msra.mxu0 0.0
  %288 = vmatprep.subr.mxu0 0.0
  %289 = vmatpush1.msra.mxu0 0.0
  %290 = vmatprep.subr.mxu0 0.0
  %291 = vmatpush1.msra.mxu0 0.0
  %292 = vmatprep.subr.mxu0 0.0
  %293 = vmatpush1.msra.mxu0 0.0
  %294 = vmatprep.subr.mxu0 0.0
  %295 = vmatpush1.msra.mxu0 0.0
  %296 = vmatprep.subr.mxu0 0.0
  %297 = vmatpush1.msra.mxu0 0.0
  %298 = vmatprep.subr.mxu0 0.0
  %299 = vmatpush1.msra.mxu0 0.0
  %300 = vmatprep.subr.mxu0 0.0
  %301 = vmatpush1.msra.mxu0 0.0
  %302 = vmatprep.subr.mxu0 0.0
  %303 = vmatpush1.msra.mxu0 0.0
  %304 = vmatprep.subr.mxu0 0.0
  %305 = vmatpush1.msra.mxu0 0.0
  %306 = vmatprep.subr.mxu0 0.0
  %307 = vmatpush1.msra.mxu0 0.0
  %308 = vmatprep.subr.mxu0 0.0
  %309 = vmatpush1.msra.mxu0 0.0
  %310 = vmatprep.subr.mxu0 0.0
  %311 = vmatpush1.msra.mxu0 0.0
  %312 = vmatprep.subr.mxu0 0.0
  %313 = vmatpush1.msra.mxu0 0.0
  %314 = vmatprep.subr.mxu0 0.0
  %315 = vmatpush1.msra.mxu0 0.0
  %316 = vmatprep.subr.mxu0 0.0
  %317 = vmatpush1.msra.mxu0 0.0
  %318 = vmatprep.subr.mxu0 0.0
  %319 = vmatpush1.msra.mxu0 0.0
  %320 = vmatprep.subr.mxu0 0.0
  %321 = vmatpush1.msra.mxu0 0.0
  %322 = vmatprep.subr.mxu0 0.0
  %323 = vmatpush1.msra.mxu0 0.0
  %324 = vmatprep.mubr.f32.mxu0 0.0
  %325 = vmatmul.mubr.f32.gmra.mrb[0].mxu0 %v48
  %v326 = vpop.f32.mrb[0].mxu0
  %v327 = vadd.f32 0.0, %v326
  %v328 = vpop.f32.mrb[0].mxu0
  %329 = vmatprep.mubr.f32.mxu0 0.0
  %330 = vmatmul.mubr.f32.gmra.mrb[0].mxu0 %v51
  %v331 = vpop.f32.mrb[0].mxu0
  %v332 = vadd.f32 0.0, %v331
  %v333 = vpop.f32.mrb[0].mxu0
  %334 = vmatprep.mubr.f32.mxu0 0.0
  %335 = vmatmul.mubr.f32.gmra.mrb[0].mxu0 %v54
  %v336 = vpop.f32.mrb[0].mxu0
  %v337 = vadd.f32 0.0, %v336
  %v338 = vpop.f32.mrb[0].mxu0
  %339 = vmatprep.mubr.f32.mxu0 0.0
  %340 = vmatmul.mubr.f32.gmra.mrb[0].mxu0 %v57
  %v341 = vpop.f32.mrb[0].mxu0
  %v342 = vadd.f32 0.0, %v341
  %v343 = vpop.f32.mrb[0].mxu0
  %344 = vmatprep.mubr.f32.mxu0 0.0
  %345 = vmatmul.mubr.f32.gmra.mrb[0].mxu0 %v60
  %v346 = vpop.f32.mrb[0].mxu0
  %v347 = vadd.f32 0.0, %v346
  %v348 = vpop.f32.mrb[0].mxu0
  %349 = vmatprep.mubr.f32.mxu0 0.0
  %350 = vmatmul.mubr.f32.gmra.mrb[0].mxu0 %v63
  %v351 = vpop.f32.mrb[0].mxu0
  %v352 = vadd.f32 0.0, %v351
  %v353 = vpop.f32.mrb[0].mxu0
  %354 = vmatprep.mubr.f32.mxu0 0.0
  %355 = vmatmul.mubr.f32.gmra.mrb[0].mxu0 %v66
  %v356 = vpop.f32.mrb[0].mxu0
  %v357 = vadd.f32 0.0, %v356
  %v358 = vpop.f32.mrb[0].mxu0
  %359 = vmatprep.mubr.f32.mxu0 0.0
  %360 = vmatmul.mubr.f32.gmra.mrb[0].mxu0 %v69
  %v361 = vpop.f32.mrb[0].mxu0
  %v362 = vadd.f32 0.0, %v361
  %v363 = vpop.f32.mrb[0].mxu0
  %364 = vmatprep.mubr.f32.mxu0 0.0
  %365 = vmatmul.mubr.f32.gmra.mrb[0].mxu0 %v72
  %v366 = vpop.f32.mrb[0].mxu0
  %v367 = vadd.f32 0.0, %v366
  %v368 = vpop.f32.mrb[0].mxu0
  %369 = vmatprep.mubr.f32.mxu0 0.0
  %370 = vmatmul.mubr.f32.gmra.mrb[0].mxu0 %v75
  %v371 = vpop.f32.mrb[0].mxu0
  %v372 = vadd.f32 0.0, %v371
  %v373 = vpop.f32.mrb[0].mxu0
  %374 = vmatprep.mubr.f32.mxu0 0.0
  %375 = vmatmul.mubr.f32.gmra.mrb[0].mxu0 %v78
  %v376 = vpop.f32.mrb[0].mxu0
  %v377 = vadd.f32 0.0, %v376
  %v378 = vpop.f32.mrb[0].mxu0
  %379 = vmatprep.mubr.f32.mxu0 0.0
  %380 = vmatmul.mubr.f32.gmra.mrb[0].mxu0 %v81
  %v381 = vpop.f32.mrb[0].mxu0
  %v382 = vadd.f32 0.0, %v381
  %v383 = vpop.f32.mrb[0].mxu0
  %384 = vmatprep.mubr.f32.mxu0 0.0
  %385 = vmatmul.mubr.f32.gmra.mrb[0].mxu0 %v84
  %v386 = vpop.f32.mrb[0].mxu0
  %v387 = vadd.f32 0.0, %v386
  %v388 = vpop.f32.mrb[0].mxu0
  %389 = vmatprep.mubr.f32.mxu0 0.0
  %390 = vmatmul.mubr.f32.gmra.mrb[0].mxu0 %v87
  %v391 = vpop.f32.mrb[0].mxu0
  %v392 = vadd.f32 0.0, %v391
  %v393 = vpop.f32.mrb[0].mxu0
  %394 = vmatprep.mubr.f32.mxu0 0.0
  %395 = vmatmul.mubr.f32.gmra.mrb[0].mxu0 %v90
  %v396 = vpop.f32.mrb[0].mxu0
  %v397 = vadd.f32 0.0, %v396
  %v398 = vpop.f32.mrb[0].mxu0
  %399 = vmatprep.mubr.f32.mxu0 0.0
  %400 = vmatmul.mubr.f32.gmra.mrb[0].mxu0 %v93
  %v401 = vpop.f32.mrb[0].mxu0
  %v402 = vadd.f32 0.0, %v401
  %v403 = vpop.f32.mrb[0].mxu0
  %404 = vdwg.mxu0
  %v405 = vld [vmem:[%s3] sm:$0xff]
  %v406 = vld [vmem:[%s3 + $0x8] sm:$0xff]
  %v407 = vld [vmem:[%s3 + $0x10] sm:$0xff]
  %v408 = vld [vmem:[%s3 + $0x18] sm:$0xff]
  %409 = vmatprep.subr.mxu0 0.0
  %410 = vmatpush1.msra.mxu0 %v405
  %411 = vmatprep.subr.mxu0 0.0
  %412 = vmatpush1.msra.mxu0 %v406
  %413 = vmatprep.subr.mxu0 0.0
  %414 = vmatpush1.msra.mxu0 %v407
  %415 = vmatprep.subr.mxu0 0.0
  %416 = vmatpush1.msra.mxu0 %v408
  %417 = vmatprep.subr.mxu0 0.0
  %418 = vmatpush1.msra.mxu0 0.0
  %419 = vmatprep.subr.mxu0 0.0
  %420 = vmatpush1.msra.mxu0 0.0
  %421 = vmatprep.subr.mxu0 0.0
  %422 = vmatpush1.msra.mxu0 0.0
  %423 = vmatprep.subr.mxu0 0.0
  %424 = vmatpush1.msra.mxu0 0.0
  %425 = vmatprep.subr.mxu0 0.0
  %426 = vmatpush1.msra.mxu0 0.0
  %427 = vmatprep.subr.mxu0 0.0
  %428 = vmatpush1.msra.mxu0 0.0
  %429 = vmatprep.subr.mxu0 0.0
  %430 = vmatpush1.msra.mxu0 0.0
  %431 = vmatprep.subr.mxu0 0.0
  %432 = vmatpush1.msra.mxu0 0.0
  %433 = vmatprep.subr.mxu0 0.0
  %434 = vmatpush1.msra.mxu0 0.0
  %435 = vmatprep.subr.mxu0 0.0
  %436 = vmatpush1.msra.mxu0 0.0
  %437 = vmatprep.subr.mxu0 0.0
  %438 = vmatpush1.msra.mxu0 0.0
  %439 = vmatprep.subr.mxu0 0.0
  %440 = vmatpush1.msra.mxu0 0.0
  %441 = vmatprep.subr.mxu0 0.0
  %442 = vmatpush1.msra.mxu0 0.0
  %443 = vmatprep.subr.mxu0 0.0
  %444 = vmatpush1.msra.mxu0 0.0
  %445 = vmatprep.subr.mxu0 0.0
  %446 = vmatpush1.msra.mxu0 0.0
  %447 = vmatprep.subr.mxu0 0.0
  %448 = vmatpush1.msra.mxu0 0.0
  %449 = vmatprep.subr.mxu0 0.0
  %450 = vmatpush1.msra.mxu0 0.0
  %451 = vmatprep.subr.mxu0 0.0
  %452 = vmatpush1.msra.mxu0 0.0
  %453 = vmatprep.subr.mxu0 0.0
  %454 = vmatpush1.msra.mxu0 0.0
  %455 = vmatprep.subr.mxu0 0.0
  %456 = vmatpush1.msra.mxu0 0.0
  %457 = vmatprep.subr.mxu0 0.0
  %458 = vmatpush1.msra.mxu0 0.0
  %459 = vmatprep.subr.mxu0 0.0
  %460 = vmatpush1.msra.mxu0 0.0
  %461 = vmatprep.subr.mxu0 0.0
  %462 = vmatpush1.msra.mxu0 0.0
  %463 = vmatprep.subr.mxu0 0.0
  %464 = vmatpush1.msra.mxu0 0.0
  %465 = vmatprep.subr.mxu0 0.0
  %466 = vmatpush1.msra.mxu0 0.0
  %467 = vmatprep.subr.mxu0 0.0
  %468 = vmatpush1.msra.mxu0 0.0
  %469 = vmatprep.subr.mxu0 0.0
  %470 = vmatpush1.msra.mxu0 0.0
  %471 = vmatprep.subr.mxu0 0.0
  %472 = vmatpush1.msra.mxu0 0.0
  %473 = vmatprep.mubr.f32.mxu0 0.0
  %474 = vmatmul.mubr.f32.gmra.mrb[0].mxu0 %v48
  %v475 = vpop.f32.mrb[0].mxu0
  %v476 = vadd.f32 0.0, %v475
  %v477 = vpop.f32.mrb[0].mxu0
  %478 = vmatprep.mubr.f32.mxu0 0.0
  %479 = vmatmul.mubr.f32.gmra.mrb[0].mxu0 %v51
  %v480 = vpop.f32.mrb[0].mxu0
  %v481 = vadd.f32 0.0, %v480
  %v482 = vpop.f32.mrb[0].mxu0
  %483 = vmatprep.mubr.f32.mxu0 0.0
  %484 = vmatmul.mubr.f32.gmra.mrb[0].mxu0 %v54
  %v485 = vpop.f32.mrb[0].mxu0
  %v486 = vadd.f32 0.0, %v485
  %v487 = vpop.f32.mrb[0].mxu0
  %488 = vmatprep.mubr.f32.mxu0 0.0
  %489 = vmatmul.mubr.f32.gmra.mrb[0].mxu0 %v57
  %v490 = vpop.f32.mrb[0].mxu0
  %v491 = vadd.f32 0.0, %v490
  %v492 = vpop.f32.mrb[0].mxu0
  %493 = vmatprep.mubr.f32.mxu0 0.0
  %494 = vmatmul.mubr.f32.gmra.mrb[0].mxu0 %v60
  %v495 = vpop.f32.mrb[0].mxu0
  %v496 = vadd.f32 0.0, %v495
  %v497 = vpop.f32.mrb[0].mxu0
  %498 = vmatprep.mubr.f32.mxu0 0.0
  %499 = vmatmul.mubr.f32.gmra.mrb[0].mxu0 %v63
  %v500 = vpop.f32.mrb[0].mxu0
  %v501 = vadd.f32 0.0, %v500
  %v502 = vpop.f32.mrb[0].mxu0
  %503 = vmatprep.mubr.f32.mxu0 0.0
  %504 = vmatmul.mubr.f32.gmra.mrb[0].mxu0 %v66
  %v505 = vpop.f32.mrb[0].mxu0
  %v506 = vadd.f32 0.0, %v505
  %v507 = vpop.f32.mrb[0].mxu0
  %508 = vmatprep.mubr.f32.mxu0 0.0
  %509 = vmatmul.mubr.f32.gmra.mrb[0].mxu0 %v69
  %v510 = vpop.f32.mrb[0].mxu0
  %v511 = vadd.f32 0.0, %v510
  %v512 = vpop.f32.mrb[0].mxu0
  %513 = vmatprep.mubr.f32.mxu0 0.0
  %514 = vmatmul.mubr.f32.gmra.mrb[0].mxu0 %v72
  %v515 = vpop.f32.mrb[0].mxu0
  %v516 = vadd.f32 0.0, %v515
  %v517 = vpop.f32.mrb[0].mxu0
  %518 = vmatprep.mubr.f32.mxu0 0.0
  %519 = vmatmul.mubr.f32.gmra.mrb[0].mxu0 %v75
  %v520 = vpop.f32.mrb[0].mxu0
  %v521 = vadd.f32 0.0, %v520
  %v522 = vpop.f32.mrb[0].mxu0
  %523 = vmatprep.mubr.f32.mxu0 0.0
  %524 = vmatmul.mubr.f32.gmra.mrb[0].mxu0 %v78
  %v525 = vpop.f32.mrb[0].mxu0
  %v526 = vadd.f32 0.0, %v525
  %v527 = vpop.f32.mrb[0].mxu0
  %528 = vmatprep.mubr.f32.mxu0 0.0
  %529 = vmatmul.mubr.f32.gmra.mrb[0].mxu0 %v81
  %v530 = vpop.f32.mrb[0].mxu0
  %v531 = vadd.f32 0.0, %v530
  %v532 = vpop.f32.mrb[0].mxu0
  %533 = vmatprep.mubr.f32.mxu0 0.0
  %534 = vmatmul.mubr.f32.gmra.mrb[0].mxu0 %v84
  %v535 = vpop.f32.mrb[0].mxu0
  %v536 = vadd.f32 0.0, %v535
  %v537 = vpop.f32.mrb[0].mxu0
  %538 = vmatprep.mubr.f32.mxu0 0.0
  %539 = vmatmul.mubr.f32.gmra.mrb[0].mxu0 %v87
  %v540 = vpop.f32.mrb[0].mxu0
  %v541 = vadd.f32 0.0, %v540
  %v542 = vpop.f32.mrb[0].mxu0
  %543 = vmatprep.mubr.f32.mxu0 0.0
  %544 = vmatmul.mubr.f32.gmra.mrb[0].mxu0 %v90
  %v545 = vpop.f32.mrb[0].mxu0
  %v546 = vadd.f32 0.0, %v545
  %v547 = vpop.f32.mrb[0].mxu0
  %548 = vmatprep.mubr.f32.mxu0 0.0
  %549 = vmatmul.mubr.f32.gmra.mrb[0].mxu0 %v93
  %v550 = vpop.f32.mrb[0].mxu0
  %v551 = vadd.f32 0.0, %v550
  %v552 = vpop.f32.mrb[0].mxu0
  %553 = vdwg.mxu0
  %v554 = vld [vmem:[%s6] sm:$0xff]
  %vm555 = vcmask 64512
  %v557 = vsel %vm555, %v240, 0
  %v560 = vsel %vm555, %v327, 0
  %562 = vmatprep.subr.mxu0 0.0
  %563 = vmatpush1.xpose.msra.mxu0 %v560
  %564 = vmatprep.subr.mxu0 0.0
  %565 = vmatpush1.xpose.msra.mxu0 0.0
  %566 = vmatprep.subr.mxu0 0.0
  %567 = vmatpush1.xpose.msra.mxu0 0.0
  %568 = vmatprep.subr.mxu0 0.0
  %569 = vmatpush1.xpose.msra.mxu0 0.0
  %570 = vmatprep.subr.mxu0 0.0
  %571 = vmatpush1.xpose.msra.mxu0 0.0
  %572 = vmatprep.subr.mxu0 0.0
  %573 = vmatpush1.xpose.msra.mxu0 0.0
  %574 = vmatprep.subr.mxu0 0.0
  %575 = vmatpush1.xpose.msra.mxu0 0.0
  %576 = vmatprep.subr.mxu0 0.0
  %577 = vmatpush1.xpose.msra.mxu0 0.0
  %578 = vmatprep.subr.mxu0 0.0
  %579 = vmatpush1.xpose.msra.mxu0 0.0
  %580 = vmatprep.subr.mxu0 0.0
  %581 = vmatpush1.xpose.msra.mxu0 0.0
  %582 = vmatprep.subr.mxu0 0.0
  %583 = vmatpush1.xpose.msra.mxu0 0.0
  %584 = vmatprep.subr.mxu0 0.0
  %585 = vmatpush1.xpose.msra.mxu0 0.0
  %586 = vmatprep.subr.mxu0 0.0
  %587 = vmatpush1.xpose.msra.mxu0 0.0
  %588 = vmatprep.subr.mxu0 0.0
  %589 = vmatpush1.xpose.msra.mxu0 0.0
  %590 = vmatprep.subr.mxu0 0.0
  %591 = vmatpush1.xpose.msra.mxu0 0.0
  %592 = vmatprep.subr.mxu0 0.0
  %593 = vmatpush1.xpose.msra.mxu0 0.0
  %594 = vmatprep.subr.mxu0 0.0
  %595 = vmatpush1.xpose.msra.mxu0 0.0
  %596 = vmatprep.subr.mxu0 0.0
  %597 = vmatpush1.xpose.msra.mxu0 0.0
  %598 = vmatprep.subr.mxu0 0.0
  %599 = vmatpush1.xpose.msra.mxu0 0.0
  %600 = vmatprep.subr.mxu0 0.0
  %601 = vmatpush1.xpose.msra.mxu0 0.0
  %602 = vmatprep.subr.mxu0 0.0
  %603 = vmatpush1.xpose.msra.mxu0 0.0
  %604 = vmatprep.subr.mxu0 0.0
  %605 = vmatpush1.xpose.msra.mxu0 0.0
  %606 = vmatprep.subr.mxu0 0.0
  %607 = vmatpush1.xpose.msra.mxu0 0.0
  %608 = vmatprep.subr.mxu0 0.0
  %609 = vmatpush1.xpose.msra.mxu0 0.0
  %610 = vmatprep.subr.mxu0 0.0
  %611 = vmatpush1.xpose.msra.mxu0 0.0
  %612 = vmatprep.subr.mxu0 0.0
  %613 = vmatpush1.xpose.msra.mxu0 0.0
  %614 = vmatprep.subr.mxu0 0.0
  %615 = vmatpush1.xpose.msra.mxu0 0.0
  %616 = vmatprep.subr.mxu0 0.0
  %617 = vmatpush1.xpose.msra.mxu0 0.0
  %618 = vmatprep.subr.mxu0 0.0
  %619 = vmatpush1.xpose.msra.mxu0 0.0
  %620 = vmatprep.subr.mxu0 0.0
  %621 = vmatpush1.xpose.msra.mxu0 0.0
  %622 = vmatprep.subr.mxu0 0.0
  %623 = vmatpush1.xpose.msra.mxu0 0.0
  %624 = vmatprep.subr.mxu0 0.0
  %625 = vmatpush1.xpose.msra.mxu0 0.0
  %626 = vmatprep.mubr.f32.mxu0 0.0
  %627 = vmatmul.mubr.f32.gmra.mrb[0].mxu0 %v557
  %v628 = vpop.f32.mrb[0].mxu0
  %v629 = vadd.f32 %v554, %v628
  %v630 = vpop.f32.mrb[0].mxu0
  %631 = vdwg.mxu0
  %v633 = vsel %vm555, %v241, 0
  %v636 = vsel %vm555, %v332, 0
  %638 = vmatprep.subr.mxu0 0.0
  %639 = vmatpush1.xpose.msra.mxu0 %v636
  %640 = vmatprep.subr.mxu0 0.0
  %641 = vmatpush1.xpose.msra.mxu0 0.0
  %642 = vmatprep.subr.mxu0 0.0
  %643 = vmatpush1.xpose.msra.mxu0 0.0
  %644 = vmatprep.subr.mxu0 0.0
  %645 = vmatpush1.xpose.msra.mxu0 0.0
  %646 = vmatprep.subr.mxu0 0.0
  %647 = vmatpush1.xpose.msra.mxu0 0.0
  %648 = vmatprep.subr.mxu0 0.0
  %649 = vmatpush1.xpose.msra.mxu0 0.0
  %650 = vmatprep.subr.mxu0 0.0
  %651 = vmatpush1.xpose.msra.mxu0 0.0
  %652 = vmatprep.subr.mxu0 0.0
  %653 = vmatpush1.xpose.msra.mxu0 0.0
  %654 = vmatprep.subr.mxu0 0.0
  %655 = vmatpush1.xpose.msra.mxu0 0.0
  %656 = vmatprep.subr.mxu0 0.0
  %657 = vmatpush1.xpose.msra.mxu0 0.0
  %658 = vmatprep.subr.mxu0 0.0
  %659 = vmatpush1.xpose.msra.mxu0 0.0
  %660 = vmatprep.subr.mxu0 0.0
  %661 = vmatpush1.xpose.msra.mxu0 0.0
  %662 = vmatprep.subr.mxu0 0.0
  %663 = vmatpush1.xpose.msra.mxu0 0.0
  %664 = vmatprep.subr.mxu0 0.0
  %665 = vmatpush1.xpose.msra.mxu0 0.0
  %666 = vmatprep.subr.mxu0 0.0
  %667 = vmatpush1.xpose.msra.mxu0 0.0
  %668 = vmatprep.subr.mxu0 0.0
  %669 = vmatpush1.xpose.msra.mxu0 0.0
  %670 = vmatprep.subr.mxu0 0.0
  %671 = vmatpush1.xpose.msra.mxu0 0.0
  %672 = vmatprep.subr.mxu0 0.0
  %673 = vmatpush1.xpose.msra.mxu0 0.0
  %674 = vmatprep.subr.mxu0 0.0
  %675 = vmatpush1.xpose.msra.mxu0 0.0
  %676 = vmatprep.subr.mxu0 0.0
  %677 = vmatpush1.xpose.msra.mxu0 0.0
  %678 = vmatprep.subr.mxu0 0.0
  %679 = vmatpush1.xpose.msra.mxu0 0.0
  %680 = vmatprep.subr.mxu0 0.0
  %681 = vmatpush1.xpose.msra.mxu0 0.0
  %682 = vmatprep.subr.mxu0 0.0
  %683 = vmatpush1.xpose.msra.mxu0 0.0
  %684 = vmatprep.subr.mxu0 0.0
  %685 = vmatpush1.xpose.msra.mxu0 0.0
  %686 = vmatprep.subr.mxu0 0.0
  %687 = vmatpush1.xpose.msra.mxu0 0.0
  %688 = vmatprep.subr.mxu0 0.0
  %689 = vmatpush1.xpose.msra.mxu0 0.0
  %690 = vmatprep.subr.mxu0 0.0
  %691 = vmatpush1.xpose.msra.mxu0 0.0
  %692 = vmatprep.subr.mxu0 0.0
  %693 = vmatpush1.xpose.msra.mxu0 0.0
  %694 = vmatprep.subr.mxu0 0.0
  %695 = vmatpush1.xpose.msra.mxu0 0.0
  %696 = vmatprep.subr.mxu0 0.0
  %697 = vmatpush1.xpose.msra.mxu0 0.0
  %698 = vmatprep.subr.mxu0 0.0
  %699 = vmatpush1.xpose.msra.mxu0 0.0
  %700 = vmatprep.subr.mxu0 0.0
  %701 = vmatpush1.xpose.msra.mxu0 0.0
  %702 = vmatprep.mubr.f32.mxu0 0.0
  %703 = vmatmul.mubr.f32.gmra.mrb[0].mxu0 %v633
  %v704 = vpop.f32.mrb[0].mxu0
  %v705 = vadd.f32 %v554, %v704
  %v706 = vpop.f32.mrb[0].mxu0
  %707 = vdwg.mxu0
  %v709 = vsel %vm555, %v242, 0
  %v712 = vsel %vm555, %v337, 0
  %714 = vmatprep.subr.mxu0 0.0
  %715 = vmatpush1.xpose.msra.mxu0 %v712
  %716 = vmatprep.subr.mxu0 0.0
  %717 = vmatpush1.xpose.msra.mxu0 0.0
  %718 = vmatprep.subr.mxu0 0.0
  %719 = vmatpush1.xpose.msra.mxu0 0.0
  %720 = vmatprep.subr.mxu0 0.0
  %721 = vmatpush1.xpose.msra.mxu0 0.0
  %722 = vmatprep.subr.mxu0 0.0
  %723 = vmatpush1.xpose.msra.mxu0 0.0
  %724 = vmatprep.subr.mxu0 0.0
  %725 = vmatpush1.xpose.msra.mxu0 0.0
  %726 = vmatprep.subr.mxu0 0.0
  %727 = vmatpush1.xpose.msra.mxu0 0.0
  %728 = vmatprep.subr.mxu0 0.0
  %729 = vmatpush1.xpose.msra.mxu0 0.0
  %730 = vmatprep.subr.mxu0 0.0
  %731 = vmatpush1.xpose.msra.mxu0 0.0
  %732 = vmatprep.subr.mxu0 0.0
  %733 = vmatpush1.xpose.msra.mxu0 0.0
  %734 = vmatprep.subr.mxu0 0.0
  %735 = vmatpush1.xpose.msra.mxu0 0.0
  %736 = vmatprep.subr.mxu0 0.0
  %737 = vmatpush1.xpose.msra.mxu0 0.0
  %738 = vmatprep.subr.mxu0 0.0
  %739 = vmatpush1.xpose.msra.mxu0 0.0
  %740 = vmatprep.subr.mxu0 0.0
  %741 = vmatpush1.xpose.msra.mxu0 0.0
  %742 = vmatprep.subr.mxu0 0.0
  %743 = vmatpush1.xpose.msra.mxu0 0.0
  %744 = vmatprep.subr.mxu0 0.0
  %745 = vmatpush1.xpose.msra.mxu0 0.0
  %746 = vmatprep.subr.mxu0 0.0
  %747 = vmatpush1.xpose.msra.mxu0 0.0
  %748 = vmatprep.subr.mxu0 0.0
  %749 = vmatpush1.xpose.msra.mxu0 0.0
  %750 = vmatprep.subr.mxu0 0.0
  %751 = vmatpush1.xpose.msra.mxu0 0.0
  %752 = vmatprep.subr.mxu0 0.0
  %753 = vmatpush1.xpose.msra.mxu0 0.0
  %754 = vmatprep.subr.mxu0 0.0
  %755 = vmatpush1.xpose.msra.mxu0 0.0
  %756 = vmatprep.subr.mxu0 0.0
  %757 = vmatpush1.xpose.msra.mxu0 0.0
  %758 = vmatprep.subr.mxu0 0.0
  %759 = vmatpush1.xpose.msra.mxu0 0.0
  %760 = vmatprep.subr.mxu0 0.0
  %761 = vmatpush1.xpose.msra.mxu0 0.0
  %762 = vmatprep.subr.mxu0 0.0
  %763 = vmatpush1.xpose.msra.mxu0 0.0
  %764 = vmatprep.subr.mxu0 0.0
  %765 = vmatpush1.xpose.msra.mxu0 0.0
  %766 = vmatprep.subr.mxu0 0.0
  %767 = vmatpush1.xpose.msra.mxu0 0.0
  %768 = vmatprep.subr.mxu0 0.0
  %769 = vmatpush1.xpose.msra.mxu0 0.0
  %770 = vmatprep.subr.mxu0 0.0
  %771 = vmatpush1.xpose.msra.mxu0 0.0
  %772 = vmatprep.subr.mxu0 0.0
  %773 = vmatpush1.xpose.msra.mxu0 0.0
  %774 = vmatprep.subr.mxu0 0.0
  %775 = vmatpush1.xpose.msra.mxu0 0.0
  %776 = vmatprep.subr.mxu0 0.0
  %777 = vmatpush1.xpose.msra.mxu0 0.0
  %778 = vmatprep.mubr.f32.mxu0 0.0
  %779 = vmatmul.mubr.f32.gmra.mrb[0].mxu0 %v709
  %v780 = vpop.f32.mrb[0].mxu0
  %v781 = vadd.f32 %v554, %v780
  %v782 = vpop.f32.mrb[0].mxu0
  %783 = vdwg.mxu0
  %v785 = vsel %vm555, %v243, 0
  %v788 = vsel %vm555, %v342, 0
  %790 = vmatprep.subr.mxu0 0.0
  %791 = vmatpush1.xpose.msra.mxu0 %v788
  %792 = vmatprep.subr.mxu0 0.0
  %793 = vmatpush1.xpose.msra.mxu0 0.0
  %794 = vmatprep.subr.mxu0 0.0
  %795 = vmatpush1.xpose.msra.mxu0 0.0
  %796 = vmatprep.subr.mxu0 0.0
  %797 = vmatpush1.xpose.msra.mxu0 0.0
  %798 = vmatprep.subr.mxu0 0.0
  %799 = vmatpush1.xpose.msra.mxu0 0.0
  %800 = vmatprep.subr.mxu0 0.0
  %801 = vmatpush1.xpose.msra.mxu0 0.0
  %802 = vmatprep.subr.mxu0 0.0
  %803 = vmatpush1.xpose.msra.mxu0 0.0
  %804 = vmatprep.subr.mxu0 0.0
  %805 = vmatpush1.xpose.msra.mxu0 0.0
  %806 = vmatprep.subr.mxu0 0.0
  %807 = vmatpush1.xpose.msra.mxu0 0.0
  %808 = vmatprep.subr.mxu0 0.0
  %809 = vmatpush1.xpose.msra.mxu0 0.0
  %810 = vmatprep.subr.mxu0 0.0
  %811 = vmatpush1.xpose.msra.mxu0 0.0
  %812 = vmatprep.subr.mxu0 0.0
  %813 = vmatpush1.xpose.msra.mxu0 0.0
  %814 = vmatprep.subr.mxu0 0.0
  %815 = vmatpush1.xpose.msra.mxu0 0.0
  %816 = vmatprep.subr.mxu0 0.0
  %817 = vmatpush1.xpose.msra.mxu0 0.0
  %818 = vmatprep.subr.mxu0 0.0
  %819 = vmatpush1.xpose.msra.mxu0 0.0
  %820 = vmatprep.subr.mxu0 0.0
  %821 = vmatpush1.xpose.msra.mxu0 0.0
  %822 = vmatprep.subr.mxu0 0.0
  %823 = vmatpush1.xpose.msra.mxu0 0.0
  %824 = vmatprep.subr.mxu0 0.0
  %825 = vmatpush1.xpose.msra.mxu0 0.0
  %826 = vmatprep.subr.mxu0 0.0
  %827 = vmatpush1.xpose.msra.mxu0 0.0
  %828 = vmatprep.subr.mxu0 0.0
  %829 = vmatpush1.xpose.msra.mxu0 0.0
  %830 = vmatprep.subr.mxu0 0.0
  %831 = vmatpush1.xpose.msra.mxu0 0.0
  %832 = vmatprep.subr.mxu0 0.0
  %833 = vmatpush1.xpose.msra.mxu0 0.0
  %834 = vmatprep.subr.mxu0 0.0
  %835 = vmatpush1.xpose.msra.mxu0 0.0
  %836 = vmatprep.subr.mxu0 0.0
  %837 = vmatpush1.xpose.msra.mxu0 0.0
  %838 = vmatprep.subr.mxu0 0.0
  %839 = vmatpush1.xpose.msra.mxu0 0.0
  %840 = vmatprep.subr.mxu0 0.0
  %841 = vmatpush1.xpose.msra.mxu0 0.0
  %842 = vmatprep.subr.mxu0 0.0
  %843 = vmatpush1.xpose.msra.mxu0 0.0
  %844 = vmatprep.subr.mxu0 0.0
  %845 = vmatpush1.xpose.msra.mxu0 0.0
  %846 = vmatprep.subr.mxu0 0.0
  %847 = vmatpush1.xpose.msra.mxu0 0.0
  %848 = vmatprep.subr.mxu0 0.0
  %849 = vmatpush1.xpose.msra.mxu0 0.0
  %850 = vmatprep.subr.mxu0 0.0
  %851 = vmatpush1.xpose.msra.mxu0 0.0
  %852 = vmatprep.subr.mxu0 0.0
  %853 = vmatpush1.xpose.msra.mxu0 0.0
  %854 = vmatprep.mubr.f32.mxu0 0.0
  %855 = vmatmul.mubr.f32.gmra.mrb[0].mxu0 %v785
  %v856 = vpop.f32.mrb[0].mxu0
  %v857 = vadd.f32 %v554, %v856
  %v858 = vpop.f32.mrb[0].mxu0
  %859 = vdwg.mxu0
  %v861 = vsel %vm555, %v244, 0
  %v864 = vsel %vm555, %v347, 0
  %866 = vmatprep.subr.mxu0 0.0
  %867 = vmatpush1.xpose.msra.mxu0 %v864
  %868 = vmatprep.subr.mxu0 0.0
  %869 = vmatpush1.xpose.msra.mxu0 0.0
  %870 = vmatprep.subr.mxu0 0.0
  %871 = vmatpush1.xpose.msra.mxu0 0.0
  %872 = vmatprep.subr.mxu0 0.0
  %873 = vmatpush1.xpose.msra.mxu0 0.0
  %874 = vmatprep.subr.mxu0 0.0
  %875 = vmatpush1.xpose.msra.mxu0 0.0
  %876 = vmatprep.subr.mxu0 0.0
  %877 = vmatpush1.xpose.msra.mxu0 0.0
  %878 = vmatprep.subr.mxu0 0.0
  %879 = vmatpush1.xpose.msra.mxu0 0.0
  %880 = vmatprep.subr.mxu0 0.0
  %881 = vmatpush1.xpose.msra.mxu0 0.0
  %882 = vmatprep.subr.mxu0 0.0
  %883 = vmatpush1.xpose.msra.mxu0 0.0
  %884 = vmatprep.subr.mxu0 0.0
  %885 = vmatpush1.xpose.msra.mxu0 0.0
  %886 = vmatprep.subr.mxu0 0.0
  %887 = vmatpush1.xpose.msra.mxu0 0.0
  %888 = vmatprep.subr.mxu0 0.0
  %889 = vmatpush1.xpose.msra.mxu0 0.0
  %890 = vmatprep.subr.mxu0 0.0
  %891 = vmatpush1.xpose.msra.mxu0 0.0
  %892 = vmatprep.subr.mxu0 0.0
  %893 = vmatpush1.xpose.msra.mxu0 0.0
  %894 = vmatprep.subr.mxu0 0.0
  %895 = vmatpush1.xpose.msra.mxu0 0.0
  %896 = vmatprep.subr.mxu0 0.0
  %897 = vmatpush1.xpose.msra.mxu0 0.0
  %898 = vmatprep.subr.mxu0 0.0
  %899 = vmatpush1.xpose.msra.mxu0 0.0
  %900 = vmatprep.subr.mxu0 0.0
  %901 = vmatpush1.xpose.msra.mxu0 0.0
  %902 = vmatprep.subr.mxu0 0.0
  %903 = vmatpush1.xpose.msra.mxu0 0.0
  %904 = vmatprep.subr.mxu0 0.0
  %905 = vmatpush1.xpose.msra.mxu0 0.0
  %906 = vmatprep.subr.mxu0 0.0
  %907 = vmatpush1.xpose.msra.mxu0 0.0
  %908 = vmatprep.subr.mxu0 0.0
  %909 = vmatpush1.xpose.msra.mxu0 0.0
  %910 = vmatprep.subr.mxu0 0.0
  %911 = vmatpush1.xpose.msra.mxu0 0.0
  %912 = vmatprep.subr.mxu0 0.0
  %913 = vmatpush1.xpose.msra.mxu0 0.0
  %914 = vmatprep.subr.mxu0 0.0
  %915 = vmatpush1.xpose.msra.mxu0 0.0
  %916 = vmatprep.subr.mxu0 0.0
  %917 = vmatpush1.xpose.msra.mxu0 0.0
  %918 = vmatprep.subr.mxu0 0.0
  %919 = vmatpush1.xpose.msra.mxu0 0.0
  %920 = vmatprep.subr.mxu0 0.0
  %921 = vmatpush1.xpose.msra.mxu0 0.0
  %922 = vmatprep.subr.mxu0 0.0
  %923 = vmatpush1.xpose.msra.mxu0 0.0
  %924 = vmatprep.subr.mxu0 0.0
  %925 = vmatpush1.xpose.msra.mxu0 0.0
  %926 = vmatprep.subr.mxu0 0.0
  %927 = vmatpush1.xpose.msra.mxu0 0.0
  %928 = vmatprep.subr.mxu0 0.0
  %929 = vmatpush1.xpose.msra.mxu0 0.0
  %930 = vmatprep.mubr.f32.mxu0 0.0
  %931 = vmatmul.mubr.f32.gmra.mrb[0].mxu0 %v861
  %v932 = vpop.f32.mrb[0].mxu0
  %v933 = vadd.f32 %v554, %v932
  %v934 = vpop.f32.mrb[0].mxu0
  %935 = vdwg.mxu0
  %v937 = vsel %vm555, %v245, 0
  %v940 = vsel %vm555, %v352, 0
  %942 = vmatprep.subr.mxu0 0.0
  %943 = vmatpush1.xpose.msra.mxu0 %v940
  %944 = vmatprep.subr.mxu0 0.0
  %945 = vmatpush1.xpose.msra.mxu0 0.0
  %946 = vmatprep.subr.mxu0 0.0
  %947 = vmatpush1.xpose.msra.mxu0 0.0
  %948 = vmatprep.subr.mxu0 0.0
  %949 = vmatpush1.xpose.msra.mxu0 0.0
  %950 = vmatprep.subr.mxu0 0.0
  %951 = vmatpush1.xpose.msra.mxu0 0.0
  %952 = vmatprep.subr.mxu0 0.0
  %953 = vmatpush1.xpose.msra.mxu0 0.0
  %954 = vmatprep.subr.mxu0 0.0
  %955 = vmatpush1.xpose.msra.mxu0 0.0
  %956 = vmatprep.subr.mxu0 0.0
  %957 = vmatpush1.xpose.msra.mxu0 0.0
  %958 = vmatprep.subr.mxu0 0.0
  %959 = vmatpush1.xpose.msra.mxu0 0.0
  %960 = vmatprep.subr.mxu0 0.0
  %961 = vmatpush1.xpose.msra.mxu0 0.0
  %962 = vmatprep.subr.mxu0 0.0
  %963 = vmatpush1.xpose.msra.mxu0 0.0
  %964 = vmatprep.subr.mxu0 0.0
  %965 = vmatpush1.xpose.msra.mxu0 0.0
  %966 = vmatprep.subr.mxu0 0.0
  %967 = vmatpush1.xpose.msra.mxu0 0.0
  %968 = vmatprep.subr.mxu0 0.0
  %969 = vmatpush1.xpose.msra.mxu0 0.0
  %970 = vmatprep.subr.mxu0 0.0
  %971 = vmatpush1.xpose.msra.mxu0 0.0
  %972 = vmatprep.subr.mxu0 0.0
  %973 = vmatpush1.xpose.msra.mxu0 0.0
  %974 = vmatprep.subr.mxu0 0.0
  %975 = vmatpush1.xpose.msra.mxu0 0.0
  %976 = vmatprep.subr.mxu0 0.0
  %977 = vmatpush1.xpose.msra.mxu0 0.0
  %978 = vmatprep.subr.mxu0 0.0
  %979 = vmatpush1.xpose.msra.mxu0 0.0
  %980 = vmatprep.subr.mxu0 0.0
  %981 = vmatpush1.xpose.msra.mxu0 0.0
  %982 = vmatprep.subr.mxu0 0.0
  %983 = vmatpush1.xpose.msra.mxu0 0.0
  %984 = vmatprep.subr.mxu0 0.0
  %985 = vmatpush1.xpose.msra.mxu0 0.0
  %986 = vmatprep.subr.mxu0 0.0
  %987 = vmatpush1.xpose.msra.mxu0 0.0
  %988 = vmatprep.subr.mxu0 0.0
  %989 = vmatpush1.xpose.msra.mxu0 0.0
  %990 = vmatprep.subr.mxu0 0.0
  %991 = vmatpush1.xpose.msra.mxu0 0.0
  %992 = vmatprep.subr.mxu0 0.0
  %993 = vmatpush1.xpose.msra.mxu0 0.0
  %994 = vmatprep.subr.mxu0 0.0
  %995 = vmatpush1.xpose.msra.mxu0 0.0
  %996 = vmatprep.subr.mxu0 0.0
  %997 = vmatpush1.xpose.msra.mxu0 0.0
  %998 = vmatprep.subr.mxu0 0.0
  %999 = vmatpush1.xpose.msra.mxu0 0.0
  %1000 = vmatprep.subr.mxu0 0.0
  %1001 = vmatpush1.xpose.msra.mxu0 0.0
  %1002 = vmatprep.subr.mxu0 0.0
  %1003 = vmatpush1.xpose.msra.mxu0 0.0
  %1004 = vmatprep.subr.mxu0 0.0
  %1005 = vmatpush1.xpose.msra.mxu0 0.0
  %1006 = vmatprep.mubr.f32.mxu0 0.0
  %1007 = vmatmul.mubr.f32.gmra.mrb[0].mxu0 %v937
  %v1008 = vpop.f32.mrb[0].mxu0
  %v1009 = vadd.f32 %v554, %v1008
  %v1010 = vpop.f32.mrb[0].mxu0
  %1011 = vdwg.mxu0
  %v1013 = vsel %vm555, %v246, 0
  %v1016 = vsel %vm555, %v357, 0
  %1018 = vmatprep.subr.mxu0 0.0
  %1019 = vmatpush1.xpose.msra.mxu0 %v1016
  %1020 = vmatprep.subr.mxu0 0.0
  %1021 = vmatpush1.xpose.msra.mxu0 0.0
  %1022 = vmatprep.subr.mxu0 0.0
  %1023 = vmatpush1.xpose.msra.mxu0 0.0
  %1024 = vmatprep.subr.mxu0 0.0
  %1025 = vmatpush1.xpose.msra.mxu0 0.0
  %1026 = vmatprep.subr.mxu0 0.0
  %1027 = vmatpush1.xpose.msra.mxu0 0.0
  %1028 = vmatprep.subr.mxu0 0.0
  %1029 = vmatpush1.xpose.msra.mxu0 0.0
  %1030 = vmatprep.subr.mxu0 0.0
  %1031 = vmatpush1.xpose.msra.mxu0 0.0
  %1032 = vmatprep.subr.mxu0 0.0
  %1033 = vmatpush1.xpose.msra.mxu0 0.0
  %1034 = vmatprep.subr.mxu0 0.0
  %1035 = vmatpush1.xpose.msra.mxu0 0.0
  %1036 = vmatprep.subr.mxu0 0.0
  %1037 = vmatpush1.xpose.msra.mxu0 0.0
  %1038 = vmatprep.subr.mxu0 0.0
  %1039 = vmatpush1.xpose.msra.mxu0 0.0
  %1040 = vmatprep.subr.mxu0 0.0
  %1041 = vmatpush1.xpose.msra.mxu0 0.0
  %1042 = vmatprep.subr.mxu0 0.0
  %1043 = vmatpush1.xpose.msra.mxu0 0.0
  %1044 = vmatprep.subr.mxu0 0.0
  %1045 = vmatpush1.xpose.msra.mxu0 0.0
  %1046 = vmatprep.subr.mxu0 0.0
  %1047 = vmatpush1.xpose.msra.mxu0 0.0
  %1048 = vmatprep.subr.mxu0 0.0
  %1049 = vmatpush1.xpose.msra.mxu0 0.0
  %1050 = vmatprep.subr.mxu0 0.0
  %1051 = vmatpush1.xpose.msra.mxu0 0.0
  %1052 = vmatprep.subr.mxu0 0.0
  %1053 = vmatpush1.xpose.msra.mxu0 0.0
  %1054 = vmatprep.subr.mxu0 0.0
  %1055 = vmatpush1.xpose.msra.mxu0 0.0
  %1056 = vmatprep.subr.mxu0 0.0
  %1057 = vmatpush1.xpose.msra.mxu0 0.0
  %1058 = vmatprep.subr.mxu0 0.0
  %1059 = vmatpush1.xpose.msra.mxu0 0.0
  %1060 = vmatprep.subr.mxu0 0.0
  %1061 = vmatpush1.xpose.msra.mxu0 0.0
  %1062 = vmatprep.subr.mxu0 0.0
  %1063 = vmatpush1.xpose.msra.mxu0 0.0
  %1064 = vmatprep.subr.mxu0 0.0
  %1065 = vmatpush1.xpose.msra.mxu0 0.0
  %1066 = vmatprep.subr.mxu0 0.0
  %1067 = vmatpush1.xpose.msra.mxu0 0.0
  %1068 = vmatprep.subr.mxu0 0.0
  %1069 = vmatpush1.xpose.msra.mxu0 0.0
  %1070 = vmatprep.subr.mxu0 0.0
  %1071 = vmatpush1.xpose.msra.mxu0 0.0
  %1072 = vmatprep.subr.mxu0 0.0
  %1073 = vmatpush1.xpose.msra.mxu0 0.0
  %1074 = vmatprep.subr.mxu0 0.0
  %1075 = vmatpush1.xpose.msra.mxu0 0.0
  %1076 = vmatprep.subr.mxu0 0.0
  %1077 = vmatpush1.xpose.msra.mxu0 0.0
  %1078 = vmatprep.subr.mxu0 0.0
  %1079 = vmatpush1.xpose.msra.mxu0 0.0
  %1080 = vmatprep.subr.mxu0 0.0
  %1081 = vmatpush1.xpose.msra.mxu0 0.0
  %1082 = vmatprep.mubr.f32.mxu0 0.0
  %1083 = vmatmul.mubr.f32.gmra.mrb[0].mxu0 %v1013
  %v1084 = vpop.f32.mrb[0].mxu0
  %v1085 = vadd.f32 %v554, %v1084
  %v1086 = vpop.f32.mrb[0].mxu0
  %1087 = vdwg.mxu0
  %v1089 = vsel %vm555, %v247, 0
  %v1092 = vsel %vm555, %v362, 0
  %1094 = vmatprep.subr.mxu0 0.0
  %1095 = vmatpush1.xpose.msra.mxu0 %v1092
  %1096 = vmatprep.subr.mxu0 0.0
  %1097 = vmatpush1.xpose.msra.mxu0 0.0
  %1098 = vmatprep.subr.mxu0 0.0
  %1099 = vmatpush1.xpose.msra.mxu0 0.0
  %1100 = vmatprep.subr.mxu0 0.0
  %1101 = vmatpush1.xpose.msra.mxu0 0.0
  %1102 = vmatprep.subr.mxu0 0.0
  %1103 = vmatpush1.xpose.msra.mxu0 0.0
  %1104 = vmatprep.subr.mxu0 0.0
  %1105 = vmatpush1.xpose.msra.mxu0 0.0
  %1106 = vmatprep.subr.mxu0 0.0
  %1107 = vmatpush1.xpose.msra.mxu0 0.0
  %1108 = vmatprep.subr.mxu0 0.0
  %1109 = vmatpush1.xpose.msra.mxu0 0.0
  %1110 = vmatprep.subr.mxu0 0.0
  %1111 = vmatpush1.xpose.msra.mxu0 0.0
  %1112 = vmatprep.subr.mxu0 0.0
  %1113 = vmatpush1.xpose.msra.mxu0 0.0
  %1114 = vmatprep.subr.mxu0 0.0
  %1115 = vmatpush1.xpose.msra.mxu0 0.0
  %1116 = vmatprep.subr.mxu0 0.0
  %1117 = vmatpush1.xpose.msra.mxu0 0.0
  %1118 = vmatprep.subr.mxu0 0.0
  %1119 = vmatpush1.xpose.msra.mxu0 0.0
  %1120 = vmatprep.subr.mxu0 0.0
  %1121 = vmatpush1.xpose.msra.mxu0 0.0
  %1122 = vmatprep.subr.mxu0 0.0
  %1123 = vmatpush1.xpose.msra.mxu0 0.0
  %1124 = vmatprep.subr.mxu0 0.0
  %1125 = vmatpush1.xpose.msra.mxu0 0.0
  %1126 = vmatprep.subr.mxu0 0.0
  %1127 = vmatpush1.xpose.msra.mxu0 0.0
  %1128 = vmatprep.subr.mxu0 0.0
  %1129 = vmatpush1.xpose.msra.mxu0 0.0
  %1130 = vmatprep.subr.mxu0 0.0
  %1131 = vmatpush1.xpose.msra.mxu0 0.0
  %1132 = vmatprep.subr.mxu0 0.0
  %1133 = vmatpush1.xpose.msra.mxu0 0.0
  %1134 = vmatprep.subr.mxu0 0.0
  %1135 = vmatpush1.xpose.msra.mxu0 0.0
  %1136 = vmatprep.subr.mxu0 0.0
  %1137 = vmatpush1.xpose.msra.mxu0 0.0
  %1138 = vmatprep.subr.mxu0 0.0
  %1139 = vmatpush1.xpose.msra.mxu0 0.0
  %1140 = vmatprep.subr.mxu0 0.0
  %1141 = vmatpush1.xpose.msra.mxu0 0.0
  %1142 = vmatprep.subr.mxu0 0.0
  %1143 = vmatpush1.xpose.msra.mxu0 0.0
  %1144 = vmatprep.subr.mxu0 0.0
  %1145 = vmatpush1.xpose.msra.mxu0 0.0
  %1146 = vmatprep.subr.mxu0 0.0
  %1147 = vmatpush1.xpose.msra.mxu0 0.0
  %1148 = vmatprep.subr.mxu0 0.0
  %1149 = vmatpush1.xpose.msra.mxu0 0.0
  %1150 = vmatprep.subr.mxu0 0.0
  %1151 = vmatpush1.xpose.msra.mxu0 0.0
  %1152 = vmatprep.subr.mxu0 0.0
  %1153 = vmatpush1.xpose.msra.mxu0 0.0
  %1154 = vmatprep.subr.mxu0 0.0
  %1155 = vmatpush1.xpose.msra.mxu0 0.0
  %1156 = vmatprep.subr.mxu0 0.0
  %1157 = vmatpush1.xpose.msra.mxu0 0.0
  %1158 = vmatprep.mubr.f32.mxu0 0.0
  %1159 = vmatmul.mubr.f32.gmra.mrb[0].mxu0 %v1089
  %v1160 = vpop.f32.mrb[0].mxu0
  %v1161 = vadd.f32 %v554, %v1160
  %v1162 = vpop.f32.mrb[0].mxu0
  %1163 = vdwg.mxu0
  %v1165 = vsel %vm555, %v248, 0
  %v1168 = vsel %vm555, %v367, 0
  %1170 = vmatprep.subr.mxu0 0.0
  %1171 = vmatpush1.xpose.msra.mxu0 %v1168
  %1172 = vmatprep.subr.mxu0 0.0
  %1173 = vmatpush1.xpose.msra.mxu0 0.0
  %1174 = vmatprep.subr.mxu0 0.0
  %1175 = vmatpush1.xpose.msra.mxu0 0.0
  %1176 = vmatprep.subr.mxu0 0.0
  %1177 = vmatpush1.xpose.msra.mxu0 0.0
  %1178 = vmatprep.subr.mxu0 0.0
  %1179 = vmatpush1.xpose.msra.mxu0 0.0
  %1180 = vmatprep.subr.mxu0 0.0
  %1181 = vmatpush1.xpose.msra.mxu0 0.0
  %1182 = vmatprep.subr.mxu0 0.0
  %1183 = vmatpush1.xpose.msra.mxu0 0.0
  %1184 = vmatprep.subr.mxu0 0.0
  %1185 = vmatpush1.xpose.msra.mxu0 0.0
  %1186 = vmatprep.subr.mxu0 0.0
  %1187 = vmatpush1.xpose.msra.mxu0 0.0
  %1188 = vmatprep.subr.mxu0 0.0
  %1189 = vmatpush1.xpose.msra.mxu0 0.0
  %1190 = vmatprep.subr.mxu0 0.0
  %1191 = vmatpush1.xpose.msra.mxu0 0.0
  %1192 = vmatprep.subr.mxu0 0.0
  %1193 = vmatpush1.xpose.msra.mxu0 0.0
  %1194 = vmatprep.subr.mxu0 0.0
  %1195 = vmatpush1.xpose.msra.mxu0 0.0
  %1196 = vmatprep.subr.mxu0 0.0
  %1197 = vmatpush1.xpose.msra.mxu0 0.0
  %1198 = vmatprep.subr.mxu0 0.0
  %1199 = vmatpush1.xpose.msra.mxu0 0.0
  %1200 = vmatprep.subr.mxu0 0.0
  %1201 = vmatpush1.xpose.msra.mxu0 0.0
  %1202 = vmatprep.subr.mxu0 0.0
  %1203 = vmatpush1.xpose.msra.mxu0 0.0
  %1204 = vmatprep.subr.mxu0 0.0
  %1205 = vmatpush1.xpose.msra.mxu0 0.0
  %1206 = vmatprep.subr.mxu0 0.0
  %1207 = vmatpush1.xpose.msra.mxu0 0.0
  %1208 = vmatprep.subr.mxu0 0.0
  %1209 = vmatpush1.xpose.msra.mxu0 0.0
  %1210 = vmatprep.subr.mxu0 0.0
  %1211 = vmatpush1.xpose.msra.mxu0 0.0
  %1212 = vmatprep.subr.mxu0 0.0
  %1213 = vmatpush1.xpose.msra.mxu0 0.0
  %1214 = vmatprep.subr.mxu0 0.0
  %1215 = vmatpush1.xpose.msra.mxu0 0.0
  %1216 = vmatprep.subr.mxu0 0.0
  %1217 = vmatpush1.xpose.msra.mxu0 0.0
  %1218 = vmatprep.subr.mxu0 0.0
  %1219 = vmatpush1.xpose.msra.mxu0 0.0
  %1220 = vmatprep.subr.mxu0 0.0
  %1221 = vmatpush1.xpose.msra.mxu0 0.0
  %1222 = vmatprep.subr.mxu0 0.0
  %1223 = vmatpush1.xpose.msra.mxu0 0.0
  %1224 = vmatprep.subr.mxu0 0.0
  %1225 = vmatpush1.xpose.msra.mxu0 0.0
  %1226 = vmatprep.subr.mxu0 0.0
  %1227 = vmatpush1.xpose.msra.mxu0 0.0
  %1228 = vmatprep.subr.mxu0 0.0
  %1229 = vmatpush1.xpose.msra.mxu0 0.0
  %1230 = vmatprep.subr.mxu0 0.0
  %1231 = vmatpush1.xpose.msra.mxu0 0.0
  %1232 = vmatprep.subr.mxu0 0.0
  %1233 = vmatpush1.xpose.msra.mxu0 0.0
  %1234 = vmatprep.mubr.f32.mxu0 0.0
  %1235 = vmatmul.mubr.f32.gmra.mrb[0].mxu0 %v1165
  %v1236 = vpop.f32.mrb[0].mxu0
  %v1237 = vadd.f32 %v554, %v1236
  %v1238 = vpop.f32.mrb[0].mxu0
  %1239 = vdwg.mxu0
  %v1241 = vsel %vm555, %v249, 0
  %v1244 = vsel %vm555, %v372, 0
  %1246 = vmatprep.subr.mxu0 0.0
  %1247 = vmatpush1.xpose.msra.mxu0 %v1244
  %1248 = vmatprep.subr.mxu0 0.0
  %1249 = vmatpush1.xpose.msra.mxu0 0.0
  %1250 = vmatprep.subr.mxu0 0.0
  %1251 = vmatpush1.xpose.msra.mxu0 0.0
  %1252 = vmatprep.subr.mxu0 0.0
  %1253 = vmatpush1.xpose.msra.mxu0 0.0
  %1254 = vmatprep.subr.mxu0 0.0
  %1255 = vmatpush1.xpose.msra.mxu0 0.0
  %1256 = vmatprep.subr.mxu0 0.0
  %1257 = vmatpush1.xpose.msra.mxu0 0.0
  %1258 = vmatprep.subr.mxu0 0.0
  %1259 = vmatpush1.xpose.msra.mxu0 0.0
  %1260 = vmatprep.subr.mxu0 0.0
  %1261 = vmatpush1.xpose.msra.mxu0 0.0
  %1262 = vmatprep.subr.mxu0 0.0
  %1263 = vmatpush1.xpose.msra.mxu0 0.0
  %1264 = vmatprep.subr.mxu0 0.0
  %1265 = vmatpush1.xpose.msra.mxu0 0.0
  %1266 = vmatprep.subr.mxu0 0.0
  %1267 = vmatpush1.xpose.msra.mxu0 0.0
  %1268 = vmatprep.subr.mxu0 0.0
  %1269 = vmatpush1.xpose.msra.mxu0 0.0
  %1270 = vmatprep.subr.mxu0 0.0
  %1271 = vmatpush1.xpose.msra.mxu0 0.0
  %1272 = vmatprep.subr.mxu0 0.0
  %1273 = vmatpush1.xpose.msra.mxu0 0.0
  %1274 = vmatprep.subr.mxu0 0.0
  %1275 = vmatpush1.xpose.msra.mxu0 0.0
  %1276 = vmatprep.subr.mxu0 0.0
  %1277 = vmatpush1.xpose.msra.mxu0 0.0
  %1278 = vmatprep.subr.mxu0 0.0
  %1279 = vmatpush1.xpose.msra.mxu0 0.0
  %1280 = vmatprep.subr.mxu0 0.0
  %1281 = vmatpush1.xpose.msra.mxu0 0.0
  %1282 = vmatprep.subr.mxu0 0.0
  %1283 = vmatpush1.xpose.msra.mxu0 0.0
  %1284 = vmatprep.subr.mxu0 0.0
  %1285 = vmatpush1.xpose.msra.mxu0 0.0
  %1286 = vmatprep.subr.mxu0 0.0
  %1287 = vmatpush1.xpose.msra.mxu0 0.0
  %1288 = vmatprep.subr.mxu0 0.0
  %1289 = vmatpush1.xpose.msra.mxu0 0.0
  %1290 = vmatprep.subr.mxu0 0.0
  %1291 = vmatpush1.xpose.msra.mxu0 0.0
  %1292 = vmatprep.subr.mxu0 0.0
  %1293 = vmatpush1.xpose.msra.mxu0 0.0
  %1294 = vmatprep.subr.mxu0 0.0
  %1295 = vmatpush1.xpose.msra.mxu0 0.0
  %1296 = vmatprep.subr.mxu0 0.0
  %1297 = vmatpush1.xpose.msra.mxu0 0.0
  %1298 = vmatprep.subr.mxu0 0.0
  %1299 = vmatpush1.xpose.msra.mxu0 0.0
  %1300 = vmatprep.subr.mxu0 0.0
  %1301 = vmatpush1.xpose.msra.mxu0 0.0
  %1302 = vmatprep.subr.mxu0 0.0
  %1303 = vmatpush1.xpose.msra.mxu0 0.0
  %1304 = vmatprep.subr.mxu0 0.0
  %1305 = vmatpush1.xpose.msra.mxu0 0.0
  %1306 = vmatprep.subr.mxu0 0.0
  %1307 = vmatpush1.xpose.msra.mxu0 0.0
  %1308 = vmatprep.subr.mxu0 0.0
  %1309 = vmatpush1.xpose.msra.mxu0 0.0
  %1310 = vmatprep.mubr.f32.mxu0 0.0
  %1311 = vmatmul.mubr.f32.gmra.mrb[0].mxu0 %v1241
  %v1312 = vpop.f32.mrb[0].mxu0
  %v1313 = vadd.f32 %v554, %v1312
  %v1314 = vpop.f32.mrb[0].mxu0
  %1315 = vdwg.mxu0
  %v1317 = vsel %vm555, %v250, 0
  %v1320 = vsel %vm555, %v377, 0
  %1322 = vmatprep.subr.mxu0 0.0
  %1323 = vmatpush1.xpose.msra.mxu0 %v1320
  %1324 = vmatprep.subr.mxu0 0.0
  %1325 = vmatpush1.xpose.msra.mxu0 0.0
  %1326 = vmatprep.subr.mxu0 0.0
  %1327 = vmatpush1.xpose.msra.mxu0 0.0
  %1328 = vmatprep.subr.mxu0 0.0
  %1329 = vmatpush1.xpose.msra.mxu0 0.0
  %1330 = vmatprep.subr.mxu0 0.0
  %1331 = vmatpush1.xpose.msra.mxu0 0.0
  %1332 = vmatprep.subr.mxu0 0.0
  %1333 = vmatpush1.xpose.msra.mxu0 0.0
  %1334 = vmatprep.subr.mxu0 0.0
  %1335 = vmatpush1.xpose.msra.mxu0 0.0
  %1336 = vmatprep.subr.mxu0 0.0
  %1337 = vmatpush1.xpose.msra.mxu0 0.0
  %1338 = vmatprep.subr.mxu0 0.0
  %1339 = vmatpush1.xpose.msra.mxu0 0.0
  %1340 = vmatprep.subr.mxu0 0.0
  %1341 = vmatpush1.xpose.msra.mxu0 0.0
  %1342 = vmatprep.subr.mxu0 0.0
  %1343 = vmatpush1.xpose.msra.mxu0 0.0
  %1344 = vmatprep.subr.mxu0 0.0
  %1345 = vmatpush1.xpose.msra.mxu0 0.0
  %1346 = vmatprep.subr.mxu0 0.0
  %1347 = vmatpush1.xpose.msra.mxu0 0.0
  %1348 = vmatprep.subr.mxu0 0.0
  %1349 = vmatpush1.xpose.msra.mxu0 0.0
  %1350 = vmatprep.subr.mxu0 0.0
  %1351 = vmatpush1.xpose.msra.mxu0 0.0
  %1352 = vmatprep.subr.mxu0 0.0
  %1353 = vmatpush1.xpose.msra.mxu0 0.0
  %1354 = vmatprep.subr.mxu0 0.0
  %1355 = vmatpush1.xpose.msra.mxu0 0.0
  %1356 = vmatprep.subr.mxu0 0.0
  %1357 = vmatpush1.xpose.msra.mxu0 0.0
  %1358 = vmatprep.subr.mxu0 0.0
  %1359 = vmatpush1.xpose.msra.mxu0 0.0
  %1360 = vmatprep.subr.mxu0 0.0
  %1361 = vmatpush1.xpose.msra.mxu0 0.0
  %1362 = vmatprep.subr.mxu0 0.0
  %1363 = vmatpush1.xpose.msra.mxu0 0.0
  %1364 = vmatprep.subr.mxu0 0.0
  %1365 = vmatpush1.xpose.msra.mxu0 0.0
  %1366 = vmatprep.subr.mxu0 0.0
  %1367 = vmatpush1.xpose.msra.mxu0 0.0
  %1368 = vmatprep.subr.mxu0 0.0
  %1369 = vmatpush1.xpose.msra.mxu0 0.0
  %1370 = vmatprep.subr.mxu0 0.0
  %1371 = vmatpush1.xpose.msra.mxu0 0.0
  %1372 = vmatprep.subr.mxu0 0.0
  %1373 = vmatpush1.xpose.msra.mxu0 0.0
  %1374 = vmatprep.subr.mxu0 0.0
  %1375 = vmatpush1.xpose.msra.mxu0 0.0
  %1376 = vmatprep.subr.mxu0 0.0
  %1377 = vmatpush1.xpose.msra.mxu0 0.0
  %1378 = vmatprep.subr.mxu0 0.0
  %1379 = vmatpush1.xpose.msra.mxu0 0.0
  %1380 = vmatprep.subr.mxu0 0.0
  %1381 = vmatpush1.xpose.msra.mxu0 0.0
  %1382 = vmatprep.subr.mxu0 0.0
  %1383 = vmatpush1.xpose.msra.mxu0 0.0
  %1384 = vmatprep.subr.mxu0 0.0
  %1385 = vmatpush1.xpose.msra.mxu0 0.0
  %1386 = vmatprep.mubr.f32.mxu0 0.0
  %1387 = vmatmul.mubr.f32.gmra.mrb[0].mxu0 %v1317
  %v1388 = vpop.f32.mrb[0].mxu0
  %v1389 = vadd.f32 %v554, %v1388
  %v1390 = vpop.f32.mrb[0].mxu0
  %1391 = vdwg.mxu0
  %v1393 = vsel %vm555, %v251, 0
  %v1396 = vsel %vm555, %v382, 0
  %1398 = vmatprep.subr.mxu0 0.0
  %1399 = vmatpush1.xpose.msra.mxu0 %v1396
  %1400 = vmatprep.subr.mxu0 0.0
  %1401 = vmatpush1.xpose.msra.mxu0 0.0
  %1402 = vmatprep.subr.mxu0 0.0
  %1403 = vmatpush1.xpose.msra.mxu0 0.0
  %1404 = vmatprep.subr.mxu0 0.0
  %1405 = vmatpush1.xpose.msra.mxu0 0.0
  %1406 = vmatprep.subr.mxu0 0.0
  %1407 = vmatpush1.xpose.msra.mxu0 0.0
  %1408 = vmatprep.subr.mxu0 0.0
  %1409 = vmatpush1.xpose.msra.mxu0 0.0
  %1410 = vmatprep.subr.mxu0 0.0
  %1411 = vmatpush1.xpose.msra.mxu0 0.0
  %1412 = vmatprep.subr.mxu0 0.0
  %1413 = vmatpush1.xpose.msra.mxu0 0.0
  %1414 = vmatprep.subr.mxu0 0.0
  %1415 = vmatpush1.xpose.msra.mxu0 0.0
  %1416 = vmatprep.subr.mxu0 0.0
  %1417 = vmatpush1.xpose.msra.mxu0 0.0
  %1418 = vmatprep.subr.mxu0 0.0
  %1419 = vmatpush1.xpose.msra.mxu0 0.0
  %1420 = vmatprep.subr.mxu0 0.0
  %1421 = vmatpush1.xpose.msra.mxu0 0.0
  %1422 = vmatprep.subr.mxu0 0.0
  %1423 = vmatpush1.xpose.msra.mxu0 0.0
  %1424 = vmatprep.subr.mxu0 0.0
  %1425 = vmatpush1.xpose.msra.mxu0 0.0
  %1426 = vmatprep.subr.mxu0 0.0
  %1427 = vmatpush1.xpose.msra.mxu0 0.0
  %1428 = vmatprep.subr.mxu0 0.0
  %1429 = vmatpush1.xpose.msra.mxu0 0.0
  %1430 = vmatprep.subr.mxu0 0.0
  %1431 = vmatpush1.xpose.msra.mxu0 0.0
  %1432 = vmatprep.subr.mxu0 0.0
  %1433 = vmatpush1.xpose.msra.mxu0 0.0
  %1434 = vmatprep.subr.mxu0 0.0
  %1435 = vmatpush1.xpose.msra.mxu0 0.0
  %1436 = vmatprep.subr.mxu0 0.0
  %1437 = vmatpush1.xpose.msra.mxu0 0.0
  %1438 = vmatprep.subr.mxu0 0.0
  %1439 = vmatpush1.xpose.msra.mxu0 0.0
  %1440 = vmatprep.subr.mxu0 0.0
  %1441 = vmatpush1.xpose.msra.mxu0 0.0
  %1442 = vmatprep.subr.mxu0 0.0
  %1443 = vmatpush1.xpose.msra.mxu0 0.0
  %1444 = vmatprep.subr.mxu0 0.0
  %1445 = vmatpush1.xpose.msra.mxu0 0.0
  %1446 = vmatprep.subr.mxu0 0.0
  %1447 = vmatpush1.xpose.msra.mxu0 0.0
  %1448 = vmatprep.subr.mxu0 0.0
  %1449 = vmatpush1.xpose.msra.mxu0 0.0
  %1450 = vmatprep.subr.mxu0 0.0
  %1451 = vmatpush1.xpose.msra.mxu0 0.0
  %1452 = vmatprep.subr.mxu0 0.0
  %1453 = vmatpush1.xpose.msra.mxu0 0.0
  %1454 = vmatprep.subr.mxu0 0.0
  %1455 = vmatpush1.xpose.msra.mxu0 0.0
  %1456 = vmatprep.subr.mxu0 0.0
  %1457 = vmatpush1.xpose.msra.mxu0 0.0
  %1458 = vmatprep.subr.mxu0 0.0
  %1459 = vmatpush1.xpose.msra.mxu0 0.0
  %1460 = vmatprep.subr.mxu0 0.0
  %1461 = vmatpush1.xpose.msra.mxu0 0.0
  %1462 = vmatprep.mubr.f32.mxu0 0.0
  %1463 = vmatmul.mubr.f32.gmra.mrb[0].mxu0 %v1393
  %v1464 = vpop.f32.mrb[0].mxu0
  %v1465 = vadd.f32 %v554, %v1464
  %v1466 = vpop.f32.mrb[0].mxu0
  %1467 = vdwg.mxu0
  %v1469 = vsel %vm555, %v252, 0
  %v1472 = vsel %vm555, %v387, 0
  %1474 = vmatprep.subr.mxu0 0.0
  %1475 = vmatpush1.xpose.msra.mxu0 %v1472
  %1476 = vmatprep.subr.mxu0 0.0
  %1477 = vmatpush1.xpose.msra.mxu0 0.0
  %1478 = vmatprep.subr.mxu0 0.0
  %1479 = vmatpush1.xpose.msra.mxu0 0.0
  %1480 = vmatprep.subr.mxu0 0.0
  %1481 = vmatpush1.xpose.msra.mxu0 0.0
  %1482 = vmatprep.subr.mxu0 0.0
  %1483 = vmatpush1.xpose.msra.mxu0 0.0
  %1484 = vmatprep.subr.mxu0 0.0
  %1485 = vmatpush1.xpose.msra.mxu0 0.0
  %1486 = vmatprep.subr.mxu0 0.0
  %1487 = vmatpush1.xpose.msra.mxu0 0.0
  %1488 = vmatprep.subr.mxu0 0.0
  %1489 = vmatpush1.xpose.msra.mxu0 0.0
  %1490 = vmatprep.subr.mxu0 0.0
  %1491 = vmatpush1.xpose.msra.mxu0 0.0
  %1492 = vmatprep.subr.mxu0 0.0
  %1493 = vmatpush1.xpose.msra.mxu0 0.0
  %1494 = vmatprep.subr.mxu0 0.0
  %1495 = vmatpush1.xpose.msra.mxu0 0.0
  %1496 = vmatprep.subr.mxu0 0.0
  %1497 = vmatpush1.xpose.msra.mxu0 0.0
  %1498 = vmatprep.subr.mxu0 0.0
  %1499 = vmatpush1.xpose.msra.mxu0 0.0
  %1500 = vmatprep.subr.mxu0 0.0
  %1501 = vmatpush1.xpose.msra.mxu0 0.0
  %1502 = vmatprep.subr.mxu0 0.0
  %1503 = vmatpush1.xpose.msra.mxu0 0.0
  %1504 = vmatprep.subr.mxu0 0.0
  %1505 = vmatpush1.xpose.msra.mxu0 0.0
  %1506 = vmatprep.subr.mxu0 0.0
  %1507 = vmatpush1.xpose.msra.mxu0 0.0
  %1508 = vmatprep.subr.mxu0 0.0
  %1509 = vmatpush1.xpose.msra.mxu0 0.0
  %1510 = vmatprep.subr.mxu0 0.0
  %1511 = vmatpush1.xpose.msra.mxu0 0.0
  %1512 = vmatprep.subr.mxu0 0.0
  %1513 = vmatpush1.xpose.msra.mxu0 0.0
  %1514 = vmatprep.subr.mxu0 0.0
  %1515 = vmatpush1.xpose.msra.mxu0 0.0
  %1516 = vmatprep.subr.mxu0 0.0
  %1517 = vmatpush1.xpose.msra.mxu0 0.0
  %1518 = vmatprep.subr.mxu0 0.0
  %1519 = vmatpush1.xpose.msra.mxu0 0.0
  %1520 = vmatprep.subr.mxu0 0.0
  %1521 = vmatpush1.xpose.msra.mxu0 0.0
  %1522 = vmatprep.subr.mxu0 0.0
  %1523 = vmatpush1.xpose.msra.mxu0 0.0
  %1524 = vmatprep.subr.mxu0 0.0
  %1525 = vmatpush1.xpose.msra.mxu0 0.0
  %1526 = vmatprep.subr.mxu0 0.0
  %1527 = vmatpush1.xpose.msra.mxu0 0.0
  %1528 = vmatprep.subr.mxu0 0.0
  %1529 = vmatpush1.xpose.msra.mxu0 0.0
  %1530 = vmatprep.subr.mxu0 0.0
  %1531 = vmatpush1.xpose.msra.mxu0 0.0
  %1532 = vmatprep.subr.mxu0 0.0
  %1533 = vmatpush1.xpose.msra.mxu0 0.0
  %1534 = vmatprep.subr.mxu0 0.0
  %1535 = vmatpush1.xpose.msra.mxu0 0.0
  %1536 = vmatprep.subr.mxu0 0.0
  %1537 = vmatpush1.xpose.msra.mxu0 0.0
  %1538 = vmatprep.mubr.f32.mxu0 0.0
  %1539 = vmatmul.mubr.f32.gmra.mrb[0].mxu0 %v1469
  %v1540 = vpop.f32.mrb[0].mxu0
  %v1541 = vadd.f32 %v554, %v1540
  %v1542 = vpop.f32.mrb[0].mxu0
  %1543 = vdwg.mxu0
  %v1545 = vsel %vm555, %v253, 0
  %v1548 = vsel %vm555, %v392, 0
  %1550 = vmatprep.subr.mxu0 0.0
  %1551 = vmatpush1.xpose.msra.mxu0 %v1548
  %1552 = vmatprep.subr.mxu0 0.0
  %1553 = vmatpush1.xpose.msra.mxu0 0.0
  %1554 = vmatprep.subr.mxu0 0.0
  %1555 = vmatpush1.xpose.msra.mxu0 0.0
  %1556 = vmatprep.subr.mxu0 0.0
  %1557 = vmatpush1.xpose.msra.mxu0 0.0
  %1558 = vmatprep.subr.mxu0 0.0
  %1559 = vmatpush1.xpose.msra.mxu0 0.0
  %1560 = vmatprep.subr.mxu0 0.0
  %1561 = vmatpush1.xpose.msra.mxu0 0.0
  %1562 = vmatprep.subr.mxu0 0.0
  %1563 = vmatpush1.xpose.msra.mxu0 0.0
  %1564 = vmatprep.subr.mxu0 0.0
  %1565 = vmatpush1.xpose.msra.mxu0 0.0
  %1566 = vmatprep.subr.mxu0 0.0
  %1567 = vmatpush1.xpose.msra.mxu0 0.0
  %1568 = vmatprep.subr.mxu0 0.0
  %1569 = vmatpush1.xpose.msra.mxu0 0.0
  %1570 = vmatprep.subr.mxu0 0.0
  %1571 = vmatpush1.xpose.msra.mxu0 0.0
  %1572 = vmatprep.subr.mxu0 0.0
  %1573 = vmatpush1.xpose.msra.mxu0 0.0
  %1574 = vmatprep.subr.mxu0 0.0
  %1575 = vmatpush1.xpose.msra.mxu0 0.0
  %1576 = vmatprep.subr.mxu0 0.0
  %1577 = vmatpush1.xpose.msra.mxu0 0.0
  %1578 = vmatprep.subr.mxu0 0.0
  %1579 = vmatpush1.xpose.msra.mxu0 0.0
  %1580 = vmatprep.subr.mxu0 0.0
  %1581 = vmatpush1.xpose.msra.mxu0 0.0
  %1582 = vmatprep.subr.mxu0 0.0
  %1583 = vmatpush1.xpose.msra.mxu0 0.0
  %1584 = vmatprep.subr.mxu0 0.0
  %1585 = vmatpush1.xpose.msra.mxu0 0.0
  %1586 = vmatprep.subr.mxu0 0.0
  %1587 = vmatpush1.xpose.msra.mxu0 0.0
  %1588 = vmatprep.subr.mxu0 0.0
  %1589 = vmatpush1.xpose.msra.mxu0 0.0
  %1590 = vmatprep.subr.mxu0 0.0
  %1591 = vmatpush1.xpose.msra.mxu0 0.0
  %1592 = vmatprep.subr.mxu0 0.0
  %1593 = vmatpush1.xpose.msra.mxu0 0.0
  %1594 = vmatprep.subr.mxu0 0.0
  %1595 = vmatpush1.xpose.msra.mxu0 0.0
  %1596 = vmatprep.subr.mxu0 0.0
  %1597 = vmatpush1.xpose.msra.mxu0 0.0
  %1598 = vmatprep.subr.mxu0 0.0
  %1599 = vmatpush1.xpose.msra.mxu0 0.0
  %1600 = vmatprep.subr.mxu0 0.0
  %1601 = vmatpush1.xpose.msra.mxu0 0.0
  %1602 = vmatprep.subr.mxu0 0.0
  %1603 = vmatpush1.xpose.msra.mxu0 0.0
  %1604 = vmatprep.subr.mxu0 0.0
  %1605 = vmatpush1.xpose.msra.mxu0 0.0
  %1606 = vmatprep.subr.mxu0 0.0
  %1607 = vmatpush1.xpose.msra.mxu0 0.0
  %1608 = vmatprep.subr.mxu0 0.0
  %1609 = vmatpush1.xpose.msra.mxu0 0.0
  %1610 = vmatprep.subr.mxu0 0.0
  %1611 = vmatpush1.xpose.msra.mxu0 0.0
  %1612 = vmatprep.subr.mxu0 0.0
  %1613 = vmatpush1.xpose.msra.mxu0 0.0
  %1614 = vmatprep.mubr.f32.mxu0 0.0
  %1615 = vmatmul.mubr.f32.gmra.mrb[0].mxu0 %v1545
  %v1616 = vpop.f32.mrb[0].mxu0
  %v1617 = vadd.f32 %v554, %v1616
  %v1618 = vpop.f32.mrb[0].mxu0
  %1619 = vdwg.mxu0
  %v1621 = vsel %vm555, %v254, 0
  %v1624 = vsel %vm555, %v397, 0
  %1626 = vmatprep.subr.mxu0 0.0
  %1627 = vmatpush1.xpose.msra.mxu0 %v1624
  %1628 = vmatprep.subr.mxu0 0.0
  %1629 = vmatpush1.xpose.msra.mxu0 0.0
  %1630 = vmatprep.subr.mxu0 0.0
  %1631 = vmatpush1.xpose.msra.mxu0 0.0
  %1632 = vmatprep.subr.mxu0 0.0
  %1633 = vmatpush1.xpose.msra.mxu0 0.0
  %1634 = vmatprep.subr.mxu0 0.0
  %1635 = vmatpush1.xpose.msra.mxu0 0.0
  %1636 = vmatprep.subr.mxu0 0.0
  %1637 = vmatpush1.xpose.msra.mxu0 0.0
  %1638 = vmatprep.subr.mxu0 0.0
  %1639 = vmatpush1.xpose.msra.mxu0 0.0
  %1640 = vmatprep.subr.mxu0 0.0
  %1641 = vmatpush1.xpose.msra.mxu0 0.0
  %1642 = vmatprep.subr.mxu0 0.0
  %1643 = vmatpush1.xpose.msra.mxu0 0.0
  %1644 = vmatprep.subr.mxu0 0.0
  %1645 = vmatpush1.xpose.msra.mxu0 0.0
  %1646 = vmatprep.subr.mxu0 0.0
  %1647 = vmatpush1.xpose.msra.mxu0 0.0
  %1648 = vmatprep.subr.mxu0 0.0
  %1649 = vmatpush1.xpose.msra.mxu0 0.0
  %1650 = vmatprep.subr.mxu0 0.0
  %1651 = vmatpush1.xpose.msra.mxu0 0.0
  %1652 = vmatprep.subr.mxu0 0.0
  %1653 = vmatpush1.xpose.msra.mxu0 0.0
  %1654 = vmatprep.subr.mxu0 0.0
  %1655 = vmatpush1.xpose.msra.mxu0 0.0
  %1656 = vmatprep.subr.mxu0 0.0
  %1657 = vmatpush1.xpose.msra.mxu0 0.0
  %1658 = vmatprep.subr.mxu0 0.0
  %1659 = vmatpush1.xpose.msra.mxu0 0.0
  %1660 = vmatprep.subr.mxu0 0.0
  %1661 = vmatpush1.xpose.msra.mxu0 0.0
  %1662 = vmatprep.subr.mxu0 0.0
  %1663 = vmatpush1.xpose.msra.mxu0 0.0
  %1664 = vmatprep.subr.mxu0 0.0
  %1665 = vmatpush1.xpose.msra.mxu0 0.0
  %1666 = vmatprep.subr.mxu0 0.0
  %1667 = vmatpush1.xpose.msra.mxu0 0.0
  %1668 = vmatprep.subr.mxu0 0.0
  %1669 = vmatpush1.xpose.msra.mxu0 0.0
  %1670 = vmatprep.subr.mxu0 0.0
  %1671 = vmatpush1.xpose.msra.mxu0 0.0
  %1672 = vmatprep.subr.mxu0 0.0
  %1673 = vmatpush1.xpose.msra.mxu0 0.0
  %1674 = vmatprep.subr.mxu0 0.0
  %1675 = vmatpush1.xpose.msra.mxu0 0.0
  %1676 = vmatprep.subr.mxu0 0.0
  %1677 = vmatpush1.xpose.msra.mxu0 0.0
  %1678 = vmatprep.subr.mxu0 0.0
  %1679 = vmatpush1.xpose.msra.mxu0 0.0
  %1680 = vmatprep.subr.mxu0 0.0
  %1681 = vmatpush1.xpose.msra.mxu0 0.0
  %1682 = vmatprep.subr.mxu0 0.0
  %1683 = vmatpush1.xpose.msra.mxu0 0.0
  %1684 = vmatprep.subr.mxu0 0.0
  %1685 = vmatpush1.xpose.msra.mxu0 0.0
  %1686 = vmatprep.subr.mxu0 0.0
  %1687 = vmatpush1.xpose.msra.mxu0 0.0
  %1688 = vmatprep.subr.mxu0 0.0
  %1689 = vmatpush1.xpose.msra.mxu0 0.0
  %1690 = vmatprep.mubr.f32.mxu0 0.0
  %1691 = vmatmul.mubr.f32.gmra.mrb[0].mxu0 %v1621
  %v1692 = vpop.f32.mrb[0].mxu0
  %v1693 = vadd.f32 %v554, %v1692
  %v1694 = vpop.f32.mrb[0].mxu0
  %1695 = vdwg.mxu0
  %v1697 = vsel %vm555, %v255, 0
  %v1700 = vsel %vm555, %v402, 0
  %1702 = vmatprep.subr.mxu0 0.0
  %1703 = vmatpush1.xpose.msra.mxu0 %v1700
  %1704 = vmatprep.subr.mxu0 0.0
  %1705 = vmatpush1.xpose.msra.mxu0 0.0
  %1706 = vmatprep.subr.mxu0 0.0
  %1707 = vmatpush1.xpose.msra.mxu0 0.0
  %1708 = vmatprep.subr.mxu0 0.0
  %1709 = vmatpush1.xpose.msra.mxu0 0.0
  %1710 = vmatprep.subr.mxu0 0.0
  %1711 = vmatpush1.xpose.msra.mxu0 0.0
  %1712 = vmatprep.subr.mxu0 0.0
  %1713 = vmatpush1.xpose.msra.mxu0 0.0
  %1714 = vmatprep.subr.mxu0 0.0
  %1715 = vmatpush1.xpose.msra.mxu0 0.0
  %1716 = vmatprep.subr.mxu0 0.0
  %1717 = vmatpush1.xpose.msra.mxu0 0.0
  %1718 = vmatprep.subr.mxu0 0.0
  %1719 = vmatpush1.xpose.msra.mxu0 0.0
  %1720 = vmatprep.subr.mxu0 0.0
  %1721 = vmatpush1.xpose.msra.mxu0 0.0
  %1722 = vmatprep.subr.mxu0 0.0
  %1723 = vmatpush1.xpose.msra.mxu0 0.0
  %1724 = vmatprep.subr.mxu0 0.0
  %1725 = vmatpush1.xpose.msra.mxu0 0.0
  %1726 = vmatprep.subr.mxu0 0.0
  %1727 = vmatpush1.xpose.msra.mxu0 0.0
  %1728 = vmatprep.subr.mxu0 0.0
  %1729 = vmatpush1.xpose.msra.mxu0 0.0
  %1730 = vmatprep.subr.mxu0 0.0
  %1731 = vmatpush1.xpose.msra.mxu0 0.0
  %1732 = vmatprep.subr.mxu0 0.0
  %1733 = vmatpush1.xpose.msra.mxu0 0.0
  %1734 = vmatprep.subr.mxu0 0.0
  %1735 = vmatpush1.xpose.msra.mxu0 0.0
  %1736 = vmatprep.subr.mxu0 0.0
  %1737 = vmatpush1.xpose.msra.mxu0 0.0
  %1738 = vmatprep.subr.mxu0 0.0
  %1739 = vmatpush1.xpose.msra.mxu0 0.0
  %1740 = vmatprep.subr.mxu0 0.0
  %1741 = vmatpush1.xpose.msra.mxu0 0.0
  %1742 = vmatprep.subr.mxu0 0.0
  %1743 = vmatpush1.xpose.msra.mxu0 0.0
  %1744 = vmatprep.subr.mxu0 0.0
  %1745 = vmatpush1.xpose.msra.mxu0 0.0
  %1746 = vmatprep.subr.mxu0 0.0
  %1747 = vmatpush1.xpose.msra.mxu0 0.0
  %1748 = vmatprep.subr.mxu0 0.0
  %1749 = vmatpush1.xpose.msra.mxu0 0.0
  %1750 = vmatprep.subr.mxu0 0.0
  %1751 = vmatpush1.xpose.msra.mxu0 0.0
  %1752 = vmatprep.subr.mxu0 0.0
  %1753 = vmatpush1.xpose.msra.mxu0 0.0
  %1754 = vmatprep.subr.mxu0 0.0
  %1755 = vmatpush1.xpose.msra.mxu0 0.0
  %1756 = vmatprep.subr.mxu0 0.0
  %1757 = vmatpush1.xpose.msra.mxu0 0.0
  %1758 = vmatprep.subr.mxu0 0.0
  %1759 = vmatpush1.xpose.msra.mxu0 0.0
  %1760 = vmatprep.subr.mxu0 0.0
  %1761 = vmatpush1.xpose.msra.mxu0 0.0
  %1762 = vmatprep.subr.mxu0 0.0
  %1763 = vmatpush1.xpose.msra.mxu0 0.0
  %1764 = vmatprep.subr.mxu0 0.0
  %1765 = vmatpush1.xpose.msra.mxu0 0.0
  %1766 = vmatprep.mubr.f32.mxu0 0.0
  %1767 = vmatmul.mubr.f32.gmra.mrb[0].mxu0 %v1697
  %v1768 = vpop.f32.mrb[0].mxu0
  %v1769 = vadd.f32 %v554, %v1768
  %v1770 = vpop.f32.mrb[0].mxu0
  %1771 = vdwg.mxu0
  %v1772 = vsel %vm555, %v629, -inf
  %1773 = vmax.xlane.f32.xlu0 %v1772
  %v1774 = vpop.xlane.xlu0 %1773
  %v1775 = vsel %vm555, %v705, -inf
  %1776 = vmax.xlane.f32.xlu0 %v1775
  %v1777 = vpop.xlane.xlu0 %1776
  %v1778 = vsel %vm555, %v781, -inf
  %1779 = vmax.xlane.f32.xlu0 %v1778
  %v1780 = vpop.xlane.xlu0 %1779
  %v1781 = vsel %vm555, %v857, -inf
  %1782 = vmax.xlane.f32.xlu0 %v1781
  %v1783 = vpop.xlane.xlu0 %1782
  %v1784 = vsel %vm555, %v933, -inf
  %1785 = vmax.xlane.f32.xlu0 %v1784
  %v1786 = vpop.xlane.xlu0 %1785
  %v1787 = vsel %vm555, %v1009, -inf
  %1788 = vmax.xlane.f32.xlu0 %v1787
  %v1789 = vpop.xlane.xlu0 %1788
  %v1790 = vsel %vm555, %v1085, -inf
  %1791 = vmax.xlane.f32.xlu0 %v1790
  %v1792 = vpop.xlane.xlu0 %1791
  %v1793 = vsel %vm555, %v1161, -inf
  %1794 = vmax.xlane.f32.xlu0 %v1793
  %v1795 = vpop.xlane.xlu0 %1794
  %v1796 = vsel %vm555, %v1237, -inf
  %1797 = vmax.xlane.f32.xlu0 %v1796
  %v1798 = vpop.xlane.xlu0 %1797
  %v1799 = vsel %vm555, %v1313, -inf
  %1800 = vmax.xlane.f32.xlu0 %v1799
  %v1801 = vpop.xlane.xlu0 %1800
  %v1802 = vsel %vm555, %v1389, -inf
  %1803 = vmax.xlane.f32.xlu0 %v1802
  %v1804 = vpop.xlane.xlu0 %1803
  %v1805 = vsel %vm555, %v1465, -inf
  %1806 = vmax.xlane.f32.xlu0 %v1805
  %v1807 = vpop.xlane.xlu0 %1806
  %v1808 = vsel %vm555, %v1541, -inf
  %1809 = vmax.xlane.f32.xlu0 %v1808
  %v1810 = vpop.xlane.xlu0 %1809
  %v1811 = vsel %vm555, %v1617, -inf
  %1812 = vmax.xlane.f32.xlu0 %v1811
  %v1813 = vpop.xlane.xlu0 %1812
  %v1814 = vsel %vm555, %v1693, -inf
  %1815 = vmax.xlane.f32.xlu0 %v1814
  %v1816 = vpop.xlane.xlu0 %1815
  %v1817 = vsel %vm555, %v1769, -inf
  %1818 = vmax.xlane.f32.xlu0 %v1817
  %v1819 = vpop.xlane.xlu0 %1818
  %v1820 = vsub.f32 %v629, %v1774
  %v1821 = vsub.f32 %v705, %v1777
  %v1822 = vsub.f32 %v781, %v1780
  %v1823 = vsub.f32 %v857, %v1783
  %v1824 = vsub.f32 %v933, %v1786
  %v1825 = vsub.f32 %v1009, %v1789
  %v1826 = vsub.f32 %v1085, %v1792
  %v1827 = vsub.f32 %v1161, %v1795
  %v1828 = vsub.f32 %v1237, %v1798
  %v1829 = vsub.f32 %v1313, %v1801
  %v1830 = vsub.f32 %v1389, %v1804
  %v1831 = vsub.f32 %v1465, %v1807
  %v1832 = vsub.f32 %v1541, %v1810
  %v1833 = vsub.f32 %v1617, %v1813
  %v1834 = vsub.f32 %v1693, %v1816
  %v1835 = vsub.f32 %v1769, %v1819
  %v1836 = vmul.f32 %v1820, 1.442695
  %v1837 = vpow.pop %v1836
  %v1838 = vmul.f32 %v1821, 1.442695
  %v1839 = vpow.pop %v1838
  %v1840 = vmul.f32 %v1822, 1.442695
  %v1841 = vpow.pop %v1840
  %v1842 = vmul.f32 %v1823, 1.442695
  %v1843 = vpow.pop %v1842
  %v1844 = vmul.f32 %v1824, 1.442695
  %v1845 = vpow.pop %v1844
  %v1846 = vmul.f32 %v1825, 1.442695
  %v1847 = vpow.pop %v1846
  %v1848 = vmul.f32 %v1826, 1.442695
  %v1849 = vpow.pop %v1848
  %v1850 = vmul.f32 %v1827, 1.442695
  %v1851 = vpow.pop %v1850
  %v1852 = vmul.f32 %v1828, 1.442695
  %v1853 = vpow.pop %v1852
  %v1854 = vmul.f32 %v1829, 1.442695
  %v1855 = vpow.pop %v1854
  %v1856 = vmul.f32 %v1830, 1.442695
  %v1857 = vpow.pop %v1856
  %v1858 = vmul.f32 %v1831, 1.442695
  %v1859 = vpow.pop %v1858
  %v1860 = vmul.f32 %v1832, 1.442695
  %v1861 = vpow.pop %v1860
  %v1862 = vmul.f32 %v1833, 1.442695
  %v1863 = vpow.pop %v1862
  %v1864 = vmul.f32 %v1834, 1.442695
  %v1865 = vpow.pop %v1864
  %v1866 = vmul.f32 %v1835, 1.442695
  %v1867 = vpow.pop %v1866
  %v1868 = vsel %vm555, %v1837, 0.0
  %1869 = vadd.xlane.f32.xlu0 %v1868
  %v1870 = vpop.xlane.xlu0 %1869
  %v1871 = vsel %vm555, %v1839, 0.0
  %1872 = vadd.xlane.f32.xlu0 %v1871
  %v1873 = vpop.xlane.xlu0 %1872
  %v1874 = vsel %vm555, %v1841, 0.0
  %1875 = vadd.xlane.f32.xlu0 %v1874
  %v1876 = vpop.xlane.xlu0 %1875
  %v1877 = vsel %vm555, %v1843, 0.0
  %1878 = vadd.xlane.f32.xlu0 %v1877
  %v1879 = vpop.xlane.xlu0 %1878
  %v1880 = vsel %vm555, %v1845, 0.0
  %1881 = vadd.xlane.f32.xlu0 %v1880
  %v1882 = vpop.xlane.xlu0 %1881
  %v1883 = vsel %vm555, %v1847, 0.0
  %1884 = vadd.xlane.f32.xlu0 %v1883
  %v1885 = vpop.xlane.xlu0 %1884
  %v1886 = vsel %vm555, %v1849, 0.0
  %1887 = vadd.xlane.f32.xlu0 %v1886
  %v1888 = vpop.xlane.xlu0 %1887
  %v1889 = vsel %vm555, %v1851, 0.0
  %1890 = vadd.xlane.f32.xlu0 %v1889
  %v1891 = vpop.xlane.xlu0 %1890
  %v1892 = vsel %vm555, %v1853, 0.0
  %1893 = vadd.xlane.f32.xlu0 %v1892
  %v1894 = vpop.xlane.xlu0 %1893
  %v1895 = vsel %vm555, %v1855, 0.0
  %1896 = vadd.xlane.f32.xlu0 %v1895
  %v1897 = vpop.xlane.xlu0 %1896
  %v1898 = vsel %vm555, %v1857, 0.0
  %1899 = vadd.xlane.f32.xlu0 %v1898
  %v1900 = vpop.xlane.xlu0 %1899
  %v1901 = vsel %vm555, %v1859, 0.0
  %1902 = vadd.xlane.f32.xlu0 %v1901
  %v1903 = vpop.xlane.xlu0 %1902
  %v1904 = vsel %vm555, %v1861, 0.0
  %1905 = vadd.xlane.f32.xlu0 %v1904
  %v1906 = vpop.xlane.xlu0 %1905
  %v1907 = vsel %vm555, %v1863, 0.0
  %1908 = vadd.xlane.f32.xlu0 %v1907
  %v1909 = vpop.xlane.xlu0 %1908
  %v1910 = vsel %vm555, %v1865, 0.0
  %1911 = vadd.xlane.f32.xlu0 %v1910
  %v1912 = vpop.xlane.xlu0 %1911
  %v1913 = vsel %vm555, %v1867, 0.0
  %1914 = vadd.xlane.f32.xlu0 %v1913
  %v1915 = vpop.xlane.xlu0 %1914
  %v1916 = vrcp.pop %v1870
  %v1917 = vmul.f32 %v1837, %v1916
  %v1918 = vrcp.pop %v1873
  %v1919 = vmul.f32 %v1839, %v1918
  %v1920 = vrcp.pop %v1876
  %v1921 = vmul.f32 %v1841, %v1920
  %v1922 = vrcp.pop %v1879
  %v1923 = vmul.f32 %v1843, %v1922
  %v1924 = vrcp.pop %v1882
  %v1925 = vmul.f32 %v1845, %v1924
  %v1926 = vrcp.pop %v1885
  %v1927 = vmul.f32 %v1847, %v1926
  %v1928 = vrcp.pop %v1888
  %v1929 = vmul.f32 %v1849, %v1928
  %v1930 = vrcp.pop %v1891
  %v1931 = vmul.f32 %v1851, %v1930
  %v1932 = vrcp.pop %v1894
  %v1933 = vmul.f32 %v1853, %v1932
  %v1934 = vrcp.pop %v1897
  %v1935 = vmul.f32 %v1855, %v1934
  %v1936 = vrcp.pop %v1900
  %v1937 = vmul.f32 %v1857, %v1936
  %v1938 = vrcp.pop %v1903
  %v1939 = vmul.f32 %v1859, %v1938
  %v1940 = vrcp.pop %v1906
  %v1941 = vmul.f32 %v1861, %v1940
  %v1942 = vrcp.pop %v1909
  %v1943 = vmul.f32 %v1863, %v1942
  %v1944 = vrcp.pop %v1912
  %v1945 = vmul.f32 %v1865, %v1944
  %v1946 = vrcp.pop %v1915
  %v1947 = vmul.f32 %v1867, %v1946
  %v1949 = vsel %vm555, %v1917, 0
  %1951 = vmatprep.subr.mxu0 0.0
  %1952 = vmatpush1.msra.mxu0 %v476
  %1953 = vmatprep.subr.mxu0 0.0
  %1954 = vmatpush1.msra.mxu0 0.0
  %1955 = vmatprep.subr.mxu0 0.0
  %1956 = vmatpush1.msra.mxu0 0.0
  %1957 = vmatprep.subr.mxu0 0.0
  %1958 = vmatpush1.msra.mxu0 0.0
  %1959 = vmatprep.subr.mxu0 0.0
  %1960 = vmatpush1.msra.mxu0 0.0
  %1961 = vmatprep.subr.mxu0 0.0
  %1962 = vmatpush1.msra.mxu0 0.0
  %1963 = vmatprep.subr.mxu0 0.0
  %1964 = vmatpush1.msra.mxu0 0.0
  %1965 = vmatprep.subr.mxu0 0.0
  %1966 = vmatpush1.msra.mxu0 0.0
  %1967 = vmatprep.subr.mxu0 0.0
  %1968 = vmatpush1.msra.mxu0 0.0
  %1969 = vmatprep.subr.mxu0 0.0
  %1970 = vmatpush1.msra.mxu0 0.0
  %1971 = vmatprep.subr.mxu0 0.0
  %1972 = vmatpush1.msra.mxu0 0.0
  %1973 = vmatprep.subr.mxu0 0.0
  %1974 = vmatpush1.msra.mxu0 0.0
  %1975 = vmatprep.subr.mxu0 0.0
  %1976 = vmatpush1.msra.mxu0 0.0
  %1977 = vmatprep.subr.mxu0 0.0
  %1978 = vmatpush1.msra.mxu0 0.0
  %1979 = vmatprep.subr.mxu0 0.0
  %1980 = vmatpush1.msra.mxu0 0.0
  %1981 = vmatprep.subr.mxu0 0.0
  %1982 = vmatpush1.msra.mxu0 0.0
  %1983 = vmatprep.subr.mxu0 0.0
  %1984 = vmatpush1.msra.mxu0 0.0
  %1985 = vmatprep.subr.mxu0 0.0
  %1986 = vmatpush1.msra.mxu0 0.0
  %1987 = vmatprep.subr.mxu0 0.0
  %1988 = vmatpush1.msra.mxu0 0.0
  %1989 = vmatprep.subr.mxu0 0.0
  %1990 = vmatpush1.msra.mxu0 0.0
  %1991 = vmatprep.subr.mxu0 0.0
  %1992 = vmatpush1.msra.mxu0 0.0
  %1993 = vmatprep.subr.mxu0 0.0
  %1994 = vmatpush1.msra.mxu0 0.0
  %1995 = vmatprep.subr.mxu0 0.0
  %1996 = vmatpush1.msra.mxu0 0.0
  %1997 = vmatprep.subr.mxu0 0.0
  %1998 = vmatpush1.msra.mxu0 0.0
  %1999 = vmatprep.subr.mxu0 0.0
  %2000 = vmatpush1.msra.mxu0 0.0
  %2001 = vmatprep.subr.mxu0 0.0
  %2002 = vmatpush1.msra.mxu0 0.0
  %2003 = vmatprep.subr.mxu0 0.0
  %2004 = vmatpush1.msra.mxu0 0.0
  %2005 = vmatprep.subr.mxu0 0.0
  %2006 = vmatpush1.msra.mxu0 0.0
  %2007 = vmatprep.subr.mxu0 0.0
  %2008 = vmatpush1.msra.mxu0 0.0
  %2009 = vmatprep.subr.mxu0 0.0
  %2010 = vmatpush1.msra.mxu0 0.0
  %2011 = vmatprep.subr.mxu0 0.0
  %2012 = vmatpush1.msra.mxu0 0.0
  %2013 = vmatprep.subr.mxu0 0.0
  %2014 = vmatpush1.msra.mxu0 0.0
  %2015 = vmatprep.mubr.f32.mxu0 0.0
  %2016 = vmatmul.mubr.f32.gmra.mrb[0].mxu0 %v1949
  %v2017 = vpop.f32.mrb[0].mxu0
  %v2018 = vadd.f32 0.0, %v2017
  %v2019 = vpop.f32.mrb[0].mxu0
  %2020 = vdwg.mxu0
  %v2022 = vsel %vm555, %v1919, 0
  %2024 = vmatprep.subr.mxu0 0.0
  %2025 = vmatpush1.msra.mxu0 %v481
  %2026 = vmatprep.subr.mxu0 0.0
  %2027 = vmatpush1.msra.mxu0 0.0
  %2028 = vmatprep.subr.mxu0 0.0
  %2029 = vmatpush1.msra.mxu0 0.0
  %2030 = vmatprep.subr.mxu0 0.0
  %2031 = vmatpush1.msra.mxu0 0.0
  %2032 = vmatprep.subr.mxu0 0.0
  %2033 = vmatpush1.msra.mxu0 0.0
  %2034 = vmatprep.subr.mxu0 0.0
  %2035 = vmatpush1.msra.mxu0 0.0
  %2036 = vmatprep.subr.mxu0 0.0
  %2037 = vmatpush1.msra.mxu0 0.0
  %2038 = vmatprep.subr.mxu0 0.0
  %2039 = vmatpush1.msra.mxu0 0.0
  %2040 = vmatprep.subr.mxu0 0.0
  %2041 = vmatpush1.msra.mxu0 0.0
  %2042 = vmatprep.subr.mxu0 0.0
  %2043 = vmatpush1.msra.mxu0 0.0
  %2044 = vmatprep.subr.mxu0 0.0
  %2045 = vmatpush1.msra.mxu0 0.0
  %2046 = vmatprep.subr.mxu0 0.0
  %2047 = vmatpush1.msra.mxu0 0.0
  %2048 = vmatprep.subr.mxu0 0.0
  %2049 = vmatpush1.msra.mxu0 0.0
  %2050 = vmatprep.subr.mxu0 0.0
  %2051 = vmatpush1.msra.mxu0 0.0
  %2052 = vmatprep.subr.mxu0 0.0
  %2053 = vmatpush1.msra.mxu0 0.0
  %2054 = vmatprep.subr.mxu0 0.0
  %2055 = vmatpush1.msra.mxu0 0.0
  %2056 = vmatprep.subr.mxu0 0.0
  %2057 = vmatpush1.msra.mxu0 0.0
  %2058 = vmatprep.subr.mxu0 0.0
  %2059 = vmatpush1.msra.mxu0 0.0
  %2060 = vmatprep.subr.mxu0 0.0
  %2061 = vmatpush1.msra.mxu0 0.0
  %2062 = vmatprep.subr.mxu0 0.0
  %2063 = vmatpush1.msra.mxu0 0.0
  %2064 = vmatprep.subr.mxu0 0.0
  %2065 = vmatpush1.msra.mxu0 0.0
  %2066 = vmatprep.subr.mxu0 0.0
  %2067 = vmatpush1.msra.mxu0 0.0
  %2068 = vmatprep.subr.mxu0 0.0
  %2069 = vmatpush1.msra.mxu0 0.0
  %2070 = vmatprep.subr.mxu0 0.0
  %2071 = vmatpush1.msra.mxu0 0.0
  %2072 = vmatprep.subr.mxu0 0.0
  %2073 = vmatpush1.msra.mxu0 0.0
  %2074 = vmatprep.subr.mxu0 0.0
  %2075 = vmatpush1.msra.mxu0 0.0
  %2076 = vmatprep.subr.mxu0 0.0
  %2077 = vmatpush1.msra.mxu0 0.0
  %2078 = vmatprep.subr.mxu0 0.0
  %2079 = vmatpush1.msra.mxu0 0.0
  %2080 = vmatprep.subr.mxu0 0.0
  %2081 = vmatpush1.msra.mxu0 0.0
  %2082 = vmatprep.subr.mxu0 0.0
  %2083 = vmatpush1.msra.mxu0 0.0
  %2084 = vmatprep.subr.mxu0 0.0
  %2085 = vmatpush1.msra.mxu0 0.0
  %2086 = vmatprep.subr.mxu0 0.0
  %2087 = vmatpush1.msra.mxu0 0.0
  %2088 = vmatprep.mubr.f32.mxu0 0.0
  %2089 = vmatmul.mubr.f32.gmra.mrb[0].mxu0 %v2022
  %v2090 = vpop.f32.mrb[0].mxu0
  %v2091 = vadd.f32 0.0, %v2090
  %v2092 = vpop.f32.mrb[0].mxu0
  %2093 = vdwg.mxu0
  %v2095 = vsel %vm555, %v1921, 0
  %2097 = vmatprep.subr.mxu0 0.0
  %2098 = vmatpush1.msra.mxu0 %v486
  %2099 = vmatprep.subr.mxu0 0.0
  %2100 = vmatpush1.msra.mxu0 0.0
  %2101 = vmatprep.subr.mxu0 0.0
  %2102 = vmatpush1.msra.mxu0 0.0
  %2103 = vmatprep.subr.mxu0 0.0
  %2104 = vmatpush1.msra.mxu0 0.0
  %2105 = vmatprep.subr.mxu0 0.0
  %2106 = vmatpush1.msra.mxu0 0.0
  %2107 = vmatprep.subr.mxu0 0.0
  %2108 = vmatpush1.msra.mxu0 0.0
  %2109 = vmatprep.subr.mxu0 0.0
  %2110 = vmatpush1.msra.mxu0 0.0
  %2111 = vmatprep.subr.mxu0 0.0
  %2112 = vmatpush1.msra.mxu0 0.0
  %2113 = vmatprep.subr.mxu0 0.0
  %2114 = vmatpush1.msra.mxu0 0.0
  %2115 = vmatprep.subr.mxu0 0.0
  %2116 = vmatpush1.msra.mxu0 0.0
  %2117 = vmatprep.subr.mxu0 0.0
  %2118 = vmatpush1.msra.mxu0 0.0
  %2119 = vmatprep.subr.mxu0 0.0
  %2120 = vmatpush1.msra.mxu0 0.0
  %2121 = vmatprep.subr.mxu0 0.0
  %2122 = vmatpush1.msra.mxu0 0.0
  %2123 = vmatprep.subr.mxu0 0.0
  %2124 = vmatpush1.msra.mxu0 0.0
  %2125 = vmatprep.subr.mxu0 0.0
  %2126 = vmatpush1.msra.mxu0 0.0
  %2127 = vmatprep.subr.mxu0 0.0
  %2128 = vmatpush1.msra.mxu0 0.0
  %2129 = vmatprep.subr.mxu0 0.0
  %2130 = vmatpush1.msra.mxu0 0.0
  %2131 = vmatprep.subr.mxu0 0.0
  %2132 = vmatpush1.msra.mxu0 0.0
  %2133 = vmatprep.subr.mxu0 0.0
  %2134 = vmatpush1.msra.mxu0 0.0
  %2135 = vmatprep.subr.mxu0 0.0
  %2136 = vmatpush1.msra.mxu0 0.0
  %2137 = vmatprep.subr.mxu0 0.0
  %2138 = vmatpush1.msra.mxu0 0.0
  %2139 = vmatprep.subr.mxu0 0.0
  %2140 = vmatpush1.msra.mxu0 0.0
  %2141 = vmatprep.subr.mxu0 0.0
  %2142 = vmatpush1.msra.mxu0 0.0
  %2143 = vmatprep.subr.mxu0 0.0
  %2144 = vmatpush1.msra.mxu0 0.0
  %2145 = vmatprep.subr.mxu0 0.0
  %2146 = vmatpush1.msra.mxu0 0.0
  %2147 = vmatprep.subr.mxu0 0.0
  %2148 = vmatpush1.msra.mxu0 0.0
  %2149 = vmatprep.subr.mxu0 0.0
  %2150 = vmatpush1.msra.mxu0 0.0
  %2151 = vmatprep.subr.mxu0 0.0
  %2152 = vmatpush1.msra.mxu0 0.0
  %2153 = vmatprep.subr.mxu0 0.0
  %2154 = vmatpush1.msra.mxu0 0.0
  %2155 = vmatprep.subr.mxu0 0.0
  %2156 = vmatpush1.msra.mxu0 0.0
  %2157 = vmatprep.subr.mxu0 0.0
  %2158 = vmatpush1.msra.mxu0 0.0
  %2159 = vmatprep.subr.mxu0 0.0
  %2160 = vmatpush1.msra.mxu0 0.0
  %2161 = vmatprep.mubr.f32.mxu0 0.0
  %2162 = vmatmul.mubr.f32.gmra.mrb[0].mxu0 %v2095
  %v2163 = vpop.f32.mrb[0].mxu0
  %v2164 = vadd.f32 0.0, %v2163
  %v2165 = vpop.f32.mrb[0].mxu0
  %2166 = vdwg.mxu0
  %v2168 = vsel %vm555, %v1923, 0
  %2170 = vmatprep.subr.mxu0 0.0
  %2171 = vmatpush1.msra.mxu0 %v491
  %2172 = vmatprep.subr.mxu0 0.0
  %2173 = vmatpush1.msra.mxu0 0.0
  %2174 = vmatprep.subr.mxu0 0.0
  %2175 = vmatpush1.msra.mxu0 0.0
  %2176 = vmatprep.subr.mxu0 0.0
  %2177 = vmatpush1.msra.mxu0 0.0
  %2178 = vmatprep.subr.mxu0 0.0
  %2179 = vmatpush1.msra.mxu0 0.0
  %2180 = vmatprep.subr.mxu0 0.0
  %2181 = vmatpush1.msra.mxu0 0.0
  %2182 = vmatprep.subr.mxu0 0.0
  %2183 = vmatpush1.msra.mxu0 0.0
  %2184 = vmatprep.subr.mxu0 0.0
  %2185 = vmatpush1.msra.mxu0 0.0
  %2186 = vmatprep.subr.mxu0 0.0
  %2187 = vmatpush1.msra.mxu0 0.0
  %2188 = vmatprep.subr.mxu0 0.0
  %2189 = vmatpush1.msra.mxu0 0.0
  %2190 = vmatprep.subr.mxu0 0.0
  %2191 = vmatpush1.msra.mxu0 0.0
  %2192 = vmatprep.subr.mxu0 0.0
  %2193 = vmatpush1.msra.mxu0 0.0
  %2194 = vmatprep.subr.mxu0 0.0
  %2195 = vmatpush1.msra.mxu0 0.0
  %2196 = vmatprep.subr.mxu0 0.0
  %2197 = vmatpush1.msra.mxu0 0.0
  %2198 = vmatprep.subr.mxu0 0.0
  %2199 = vmatpush1.msra.mxu0 0.0
  %2200 = vmatprep.subr.mxu0 0.0
  %2201 = vmatpush1.msra.mxu0 0.0
  %2202 = vmatprep.subr.mxu0 0.0
  %2203 = vmatpush1.msra.mxu0 0.0
  %2204 = vmatprep.subr.mxu0 0.0
  %2205 = vmatpush1.msra.mxu0 0.0
  %2206 = vmatprep.subr.mxu0 0.0
  %2207 = vmatpush1.msra.mxu0 0.0
  %2208 = vmatprep.subr.mxu0 0.0
  %2209 = vmatpush1.msra.mxu0 0.0
  %2210 = vmatprep.subr.mxu0 0.0
  %2211 = vmatpush1.msra.mxu0 0.0
  %2212 = vmatprep.subr.mxu0 0.0
  %2213 = vmatpush1.msra.mxu0 0.0
  %2214 = vmatprep.subr.mxu0 0.0
  %2215 = vmatpush1.msra.mxu0 0.0
  %2216 = vmatprep.subr.mxu0 0.0
  %2217 = vmatpush1.msra.mxu0 0.0
  %2218 = vmatprep.subr.mxu0 0.0
  %2219 = vmatpush1.msra.mxu0 0.0
  %2220 = vmatprep.subr.mxu0 0.0
  %2221 = vmatpush1.msra.mxu0 0.0
  %2222 = vmatprep.subr.mxu0 0.0
  %2223 = vmatpush1.msra.mxu0 0.0
  %2224 = vmatprep.subr.mxu0 0.0
  %2225 = vmatpush1.msra.mxu0 0.0
  %2226 = vmatprep.subr.mxu0 0.0
  %2227 = vmatpush1.msra.mxu0 0.0
  %2228 = vmatprep.subr.mxu0 0.0
  %2229 = vmatpush1.msra.mxu0 0.0
  %2230 = vmatprep.subr.mxu0 0.0
  %2231 = vmatpush1.msra.mxu0 0.0
  %2232 = vmatprep.subr.mxu0 0.0
  %2233 = vmatpush1.msra.mxu0 0.0
  %2234 = vmatprep.mubr.f32.mxu0 0.0
  %2235 = vmatmul.mubr.f32.gmra.mrb[0].mxu0 %v2168
  %v2236 = vpop.f32.mrb[0].mxu0
  %v2237 = vadd.f32 0.0, %v2236
  %v2238 = vpop.f32.mrb[0].mxu0
  %2239 = vdwg.mxu0
  %v2241 = vsel %vm555, %v1925, 0
  %2243 = vmatprep.subr.mxu0 0.0
  %2244 = vmatpush1.msra.mxu0 %v496
  %2245 = vmatprep.subr.mxu0 0.0
  %2246 = vmatpush1.msra.mxu0 0.0
  %2247 = vmatprep.subr.mxu0 0.0
  %2248 = vmatpush1.msra.mxu0 0.0
  %2249 = vmatprep.subr.mxu0 0.0
  %2250 = vmatpush1.msra.mxu0 0.0
  %2251 = vmatprep.subr.mxu0 0.0
  %2252 = vmatpush1.msra.mxu0 0.0
  %2253 = vmatprep.subr.mxu0 0.0
  %2254 = vmatpush1.msra.mxu0 0.0
  %2255 = vmatprep.subr.mxu0 0.0
  %2256 = vmatpush1.msra.mxu0 0.0
  %2257 = vmatprep.subr.mxu0 0.0
  %2258 = vmatpush1.msra.mxu0 0.0
  %2259 = vmatprep.subr.mxu0 0.0
  %2260 = vmatpush1.msra.mxu0 0.0
  %2261 = vmatprep.subr.mxu0 0.0
  %2262 = vmatpush1.msra.mxu0 0.0
  %2263 = vmatprep.subr.mxu0 0.0
  %2264 = vmatpush1.msra.mxu0 0.0
  %2265 = vmatprep.subr.mxu0 0.0
  %2266 = vmatpush1.msra.mxu0 0.0
  %2267 = vmatprep.subr.mxu0 0.0
  %2268 = vmatpush1.msra.mxu0 0.0
  %2269 = vmatprep.subr.mxu0 0.0
  %2270 = vmatpush1.msra.mxu0 0.0
  %2271 = vmatprep.subr.mxu0 0.0
  %2272 = vmatpush1.msra.mxu0 0.0
  %2273 = vmatprep.subr.mxu0 0.0
  %2274 = vmatpush1.msra.mxu0 0.0
  %2275 = vmatprep.subr.mxu0 0.0
  %2276 = vmatpush1.msra.mxu0 0.0
  %2277 = vmatprep.subr.mxu0 0.0
  %2278 = vmatpush1.msra.mxu0 0.0
  %2279 = vmatprep.subr.mxu0 0.0
  %2280 = vmatpush1.msra.mxu0 0.0
  %2281 = vmatprep.subr.mxu0 0.0
  %2282 = vmatpush1.msra.mxu0 0.0
  %2283 = vmatprep.subr.mxu0 0.0
  %2284 = vmatpush1.msra.mxu0 0.0
  %2285 = vmatprep.subr.mxu0 0.0
  %2286 = vmatpush1.msra.mxu0 0.0
  %2287 = vmatprep.subr.mxu0 0.0
  %2288 = vmatpush1.msra.mxu0 0.0
  %2289 = vmatprep.subr.mxu0 0.0
  %2290 = vmatpush1.msra.mxu0 0.0
  %2291 = vmatprep.subr.mxu0 0.0
  %2292 = vmatpush1.msra.mxu0 0.0
  %2293 = vmatprep.subr.mxu0 0.0
  %2294 = vmatpush1.msra.mxu0 0.0
  %2295 = vmatprep.subr.mxu0 0.0
  %2296 = vmatpush1.msra.mxu0 0.0
  %2297 = vmatprep.subr.mxu0 0.0
  %2298 = vmatpush1.msra.mxu0 0.0
  %2299 = vmatprep.subr.mxu0 0.0
  %2300 = vmatpush1.msra.mxu0 0.0
  %2301 = vmatprep.subr.mxu0 0.0
  %2302 = vmatpush1.msra.mxu0 0.0
  %2303 = vmatprep.subr.mxu0 0.0
  %2304 = vmatpush1.msra.mxu0 0.0
  %2305 = vmatprep.subr.mxu0 0.0
  %2306 = vmatpush1.msra.mxu0 0.0
  %2307 = vmatprep.mubr.f32.mxu0 0.0
  %2308 = vmatmul.mubr.f32.gmra.mrb[0].mxu0 %v2241
  %v2309 = vpop.f32.mrb[0].mxu0
  %v2310 = vadd.f32 0.0, %v2309
  %v2311 = vpop.f32.mrb[0].mxu0
  %2312 = vdwg.mxu0
  %v2314 = vsel %vm555, %v1927, 0
  %2316 = vmatprep.subr.mxu0 0.0
  %2317 = vmatpush1.msra.mxu0 %v501
  %2318 = vmatprep.subr.mxu0 0.0
  %2319 = vmatpush1.msra.mxu0 0.0
  %2320 = vmatprep.subr.mxu0 0.0
  %2321 = vmatpush1.msra.mxu0 0.0
  %2322 = vmatprep.subr.mxu0 0.0
  %2323 = vmatpush1.msra.mxu0 0.0
  %2324 = vmatprep.subr.mxu0 0.0
  %2325 = vmatpush1.msra.mxu0 0.0
  %2326 = vmatprep.subr.mxu0 0.0
  %2327 = vmatpush1.msra.mxu0 0.0
  %2328 = vmatprep.subr.mxu0 0.0
  %2329 = vmatpush1.msra.mxu0 0.0
  %2330 = vmatprep.subr.mxu0 0.0
  %2331 = vmatpush1.msra.mxu0 0.0
  %2332 = vmatprep.subr.mxu0 0.0
  %2333 = vmatpush1.msra.mxu0 0.0
  %2334 = vmatprep.subr.mxu0 0.0
  %2335 = vmatpush1.msra.mxu0 0.0
  %2336 = vmatprep.subr.mxu0 0.0
  %2337 = vmatpush1.msra.mxu0 0.0
  %2338 = vmatprep.subr.mxu0 0.0
  %2339 = vmatpush1.msra.mxu0 0.0
  %2340 = vmatprep.subr.mxu0 0.0
  %2341 = vmatpush1.msra.mxu0 0.0
  %2342 = vmatprep.subr.mxu0 0.0
  %2343 = vmatpush1.msra.mxu0 0.0
  %2344 = vmatprep.subr.mxu0 0.0
  %2345 = vmatpush1.msra.mxu0 0.0
  %2346 = vmatprep.subr.mxu0 0.0
  %2347 = vmatpush1.msra.mxu0 0.0
  %2348 = vmatprep.subr.mxu0 0.0
  %2349 = vmatpush1.msra.mxu0 0.0
  %2350 = vmatprep.subr.mxu0 0.0
  %2351 = vmatpush1.msra.mxu0 0.0
  %2352 = vmatprep.subr.mxu0 0.0
  %2353 = vmatpush1.msra.mxu0 0.0
  %2354 = vmatprep.subr.mxu0 0.0
  %2355 = vmatpush1.msra.mxu0 0.0
  %2356 = vmatprep.subr.mxu0 0.0
  %2357 = vmatpush1.msra.mxu0 0.0
  %2358 = vmatprep.subr.mxu0 0.0
  %2359 = vmatpush1.msra.mxu0 0.0
  %2360 = vmatprep.subr.mxu0 0.0
  %2361 = vmatpush1.msra.mxu0 0.0
  %2362 = vmatprep.subr.mxu0 0.0
  %2363 = vmatpush1.msra.mxu0 0.0
  %2364 = vmatprep.subr.mxu0 0.0
  %2365 = vmatpush1.msra.mxu0 0.0
  %2366 = vmatprep.subr.mxu0 0.0
  %2367 = vmatpush1.msra.mxu0 0.0
  %2368 = vmatprep.subr.mxu0 0.0
  %2369 = vmatpush1.msra.mxu0 0.0
  %2370 = vmatprep.subr.mxu0 0.0
  %2371 = vmatpush1.msra.mxu0 0.0
  %2372 = vmatprep.subr.mxu0 0.0
  %2373 = vmatpush1.msra.mxu0 0.0
  %2374 = vmatprep.subr.mxu0 0.0
  %2375 = vmatpush1.msra.mxu0 0.0
  %2376 = vmatprep.subr.mxu0 0.0
  %2377 = vmatpush1.msra.mxu0 0.0
  %2378 = vmatprep.subr.mxu0 0.0
  %2379 = vmatpush1.msra.mxu0 0.0
  %2380 = vmatprep.mubr.f32.mxu0 0.0
  %2381 = vmatmul.mubr.f32.gmra.mrb[0].mxu0 %v2314
  %v2382 = vpop.f32.mrb[0].mxu0
  %v2383 = vadd.f32 0.0, %v2382
  %v2384 = vpop.f32.mrb[0].mxu0
  %2385 = vdwg.mxu0
  %v2387 = vsel %vm555, %v1929, 0
  %2389 = vmatprep.subr.mxu0 0.0
  %2390 = vmatpush1.msra.mxu0 %v506
  %2391 = vmatprep.subr.mxu0 0.0
  %2392 = vmatpush1.msra.mxu0 0.0
  %2393 = vmatprep.subr.mxu0 0.0
  %2394 = vmatpush1.msra.mxu0 0.0
  %2395 = vmatprep.subr.mxu0 0.0
  %2396 = vmatpush1.msra.mxu0 0.0
  %2397 = vmatprep.subr.mxu0 0.0
  %2398 = vmatpush1.msra.mxu0 0.0
  %2399 = vmatprep.subr.mxu0 0.0
  %2400 = vmatpush1.msra.mxu0 0.0
  %2401 = vmatprep.subr.mxu0 0.0
  %2402 = vmatpush1.msra.mxu0 0.0
  %2403 = vmatprep.subr.mxu0 0.0
  %2404 = vmatpush1.msra.mxu0 0.0
  %2405 = vmatprep.subr.mxu0 0.0
  %2406 = vmatpush1.msra.mxu0 0.0
  %2407 = vmatprep.subr.mxu0 0.0
  %2408 = vmatpush1.msra.mxu0 0.0
  %2409 = vmatprep.subr.mxu0 0.0
  %2410 = vmatpush1.msra.mxu0 0.0
  %2411 = vmatprep.subr.mxu0 0.0
  %2412 = vmatpush1.msra.mxu0 0.0
  %2413 = vmatprep.subr.mxu0 0.0
  %2414 = vmatpush1.msra.mxu0 0.0
  %2415 = vmatprep.subr.mxu0 0.0
  %2416 = vmatpush1.msra.mxu0 0.0
  %2417 = vmatprep.subr.mxu0 0.0
  %2418 = vmatpush1.msra.mxu0 0.0
  %2419 = vmatprep.subr.mxu0 0.0
  %2420 = vmatpush1.msra.mxu0 0.0
  %2421 = vmatprep.subr.mxu0 0.0
  %2422 = vmatpush1.msra.mxu0 0.0
  %2423 = vmatprep.subr.mxu0 0.0
  %2424 = vmatpush1.msra.mxu0 0.0
  %2425 = vmatprep.subr.mxu0 0.0
  %2426 = vmatpush1.msra.mxu0 0.0
  %2427 = vmatprep.subr.mxu0 0.0
  %2428 = vmatpush1.msra.mxu0 0.0
  %2429 = vmatprep.subr.mxu0 0.0
  %2430 = vmatpush1.msra.mxu0 0.0
  %2431 = vmatprep.subr.mxu0 0.0
  %2432 = vmatpush1.msra.mxu0 0.0
  %2433 = vmatprep.subr.mxu0 0.0
  %2434 = vmatpush1.msra.mxu0 0.0
  %2435 = vmatprep.subr.mxu0 0.0
  %2436 = vmatpush1.msra.mxu0 0.0
  %2437 = vmatprep.subr.mxu0 0.0
  %2438 = vmatpush1.msra.mxu0 0.0
  %2439 = vmatprep.subr.mxu0 0.0
  %2440 = vmatpush1.msra.mxu0 0.0
  %2441 = vmatprep.subr.mxu0 0.0
  %2442 = vmatpush1.msra.mxu0 0.0
  %2443 = vmatprep.subr.mxu0 0.0
  %2444 = vmatpush1.msra.mxu0 0.0
  %2445 = vmatprep.subr.mxu0 0.0
  %2446 = vmatpush1.msra.mxu0 0.0
  %2447 = vmatprep.subr.mxu0 0.0
  %2448 = vmatpush1.msra.mxu0 0.0
  %2449 = vmatprep.subr.mxu0 0.0
  %2450 = vmatpush1.msra.mxu0 0.0
  %2451 = vmatprep.subr.mxu0 0.0
  %2452 = vmatpush1.msra.mxu0 0.0
  %2453 = vmatprep.mubr.f32.mxu0 0.0
  %2454 = vmatmul.mubr.f32.gmra.mrb[0].mxu0 %v2387
  %v2455 = vpop.f32.mrb[0].mxu0
  %v2456 = vadd.f32 0.0, %v2455
  %v2457 = vpop.f32.mrb[0].mxu0
  %2458 = vdwg.mxu0
  %v2460 = vsel %vm555, %v1931, 0
  %2462 = vmatprep.subr.mxu0 0.0
  %2463 = vmatpush1.msra.mxu0 %v511
  %2464 = vmatprep.subr.mxu0 0.0
  %2465 = vmatpush1.msra.mxu0 0.0
  %2466 = vmatprep.subr.mxu0 0.0
  %2467 = vmatpush1.msra.mxu0 0.0
  %2468 = vmatprep.subr.mxu0 0.0
  %2469 = vmatpush1.msra.mxu0 0.0
  %2470 = vmatprep.subr.mxu0 0.0
  %2471 = vmatpush1.msra.mxu0 0.0
  %2472 = vmatprep.subr.mxu0 0.0
  %2473 = vmatpush1.msra.mxu0 0.0
  %2474 = vmatprep.subr.mxu0 0.0
  %2475 = vmatpush1.msra.mxu0 0.0
  %2476 = vmatprep.subr.mxu0 0.0
  %2477 = vmatpush1.msra.mxu0 0.0
  %2478 = vmatprep.subr.mxu0 0.0
  %2479 = vmatpush1.msra.mxu0 0.0
  %2480 = vmatprep.subr.mxu0 0.0
  %2481 = vmatpush1.msra.mxu0 0.0
  %2482 = vmatprep.subr.mxu0 0.0
  %2483 = vmatpush1.msra.mxu0 0.0
  %2484 = vmatprep.subr.mxu0 0.0
  %2485 = vmatpush1.msra.mxu0 0.0
  %2486 = vmatprep.subr.mxu0 0.0
  %2487 = vmatpush1.msra.mxu0 0.0
  %2488 = vmatprep.subr.mxu0 0.0
  %2489 = vmatpush1.msra.mxu0 0.0
  %2490 = vmatprep.subr.mxu0 0.0
  %2491 = vmatpush1.msra.mxu0 0.0
  %2492 = vmatprep.subr.mxu0 0.0
  %2493 = vmatpush1.msra.mxu0 0.0
  %2494 = vmatprep.subr.mxu0 0.0
  %2495 = vmatpush1.msra.mxu0 0.0
  %2496 = vmatprep.subr.mxu0 0.0
  %2497 = vmatpush1.msra.mxu0 0.0
  %2498 = vmatprep.subr.mxu0 0.0
  %2499 = vmatpush1.msra.mxu0 0.0
  %2500 = vmatprep.subr.mxu0 0.0
  %2501 = vmatpush1.msra.mxu0 0.0
  %2502 = vmatprep.subr.mxu0 0.0
  %2503 = vmatpush1.msra.mxu0 0.0
  %2504 = vmatprep.subr.mxu0 0.0
  %2505 = vmatpush1.msra.mxu0 0.0
  %2506 = vmatprep.subr.mxu0 0.0
  %2507 = vmatpush1.msra.mxu0 0.0
  %2508 = vmatprep.subr.mxu0 0.0
  %2509 = vmatpush1.msra.mxu0 0.0
  %2510 = vmatprep.subr.mxu0 0.0
  %2511 = vmatpush1.msra.mxu0 0.0
  %2512 = vmatprep.subr.mxu0 0.0
  %2513 = vmatpush1.msra.mxu0 0.0
  %2514 = vmatprep.subr.mxu0 0.0
  %2515 = vmatpush1.msra.mxu0 0.0
  %2516 = vmatprep.subr.mxu0 0.0
  %2517 = vmatpush1.msra.mxu0 0.0
  %2518 = vmatprep.subr.mxu0 0.0
  %2519 = vmatpush1.msra.mxu0 0.0
  %2520 = vmatprep.subr.mxu0 0.0
  %2521 = vmatpush1.msra.mxu0 0.0
  %2522 = vmatprep.subr.mxu0 0.0
  %2523 = vmatpush1.msra.mxu0 0.0
  %2524 = vmatprep.subr.mxu0 0.0
  %2525 = vmatpush1.msra.mxu0 0.0
  %2526 = vmatprep.mubr.f32.mxu0 0.0
  %2527 = vmatmul.mubr.f32.gmra.mrb[0].mxu0 %v2460
  %v2528 = vpop.f32.mrb[0].mxu0
  %v2529 = vadd.f32 0.0, %v2528
  %v2530 = vpop.f32.mrb[0].mxu0
  %2531 = vdwg.mxu0
  %v2533 = vsel %vm555, %v1933, 0
  %2535 = vmatprep.subr.mxu0 0.0
  %2536 = vmatpush1.msra.mxu0 %v516
  %2537 = vmatprep.subr.mxu0 0.0
  %2538 = vmatpush1.msra.mxu0 0.0
  %2539 = vmatprep.subr.mxu0 0.0
  %2540 = vmatpush1.msra.mxu0 0.0
  %2541 = vmatprep.subr.mxu0 0.0
  %2542 = vmatpush1.msra.mxu0 0.0
  %2543 = vmatprep.subr.mxu0 0.0
  %2544 = vmatpush1.msra.mxu0 0.0
  %2545 = vmatprep.subr.mxu0 0.0
  %2546 = vmatpush1.msra.mxu0 0.0
  %2547 = vmatprep.subr.mxu0 0.0
  %2548 = vmatpush1.msra.mxu0 0.0
  %2549 = vmatprep.subr.mxu0 0.0
  %2550 = vmatpush1.msra.mxu0 0.0
  %2551 = vmatprep.subr.mxu0 0.0
  %2552 = vmatpush1.msra.mxu0 0.0
  %2553 = vmatprep.subr.mxu0 0.0
  %2554 = vmatpush1.msra.mxu0 0.0
  %2555 = vmatprep.subr.mxu0 0.0
  %2556 = vmatpush1.msra.mxu0 0.0
  %2557 = vmatprep.subr.mxu0 0.0
  %2558 = vmatpush1.msra.mxu0 0.0
  %2559 = vmatprep.subr.mxu0 0.0
  %2560 = vmatpush1.msra.mxu0 0.0
  %2561 = vmatprep.subr.mxu0 0.0
  %2562 = vmatpush1.msra.mxu0 0.0
  %2563 = vmatprep.subr.mxu0 0.0
  %2564 = vmatpush1.msra.mxu0 0.0
  %2565 = vmatprep.subr.mxu0 0.0
  %2566 = vmatpush1.msra.mxu0 0.0
  %2567 = vmatprep.subr.mxu0 0.0
  %2568 = vmatpush1.msra.mxu0 0.0
  %2569 = vmatprep.subr.mxu0 0.0
  %2570 = vmatpush1.msra.mxu0 0.0
  %2571 = vmatprep.subr.mxu0 0.0
  %2572 = vmatpush1.msra.mxu0 0.0
  %2573 = vmatprep.subr.mxu0 0.0
  %2574 = vmatpush1.msra.mxu0 0.0
  %2575 = vmatprep.subr.mxu0 0.0
  %2576 = vmatpush1.msra.mxu0 0.0
  %2577 = vmatprep.subr.mxu0 0.0
  %2578 = vmatpush1.msra.mxu0 0.0
  %2579 = vmatprep.subr.mxu0 0.0
  %2580 = vmatpush1.msra.mxu0 0.0
  %2581 = vmatprep.subr.mxu0 0.0
  %2582 = vmatpush1.msra.mxu0 0.0
  %2583 = vmatprep.subr.mxu0 0.0
  %2584 = vmatpush1.msra.mxu0 0.0
  %2585 = vmatprep.subr.mxu0 0.0
  %2586 = vmatpush1.msra.mxu0 0.0
  %2587 = vmatprep.subr.mxu0 0.0
  %2588 = vmatpush1.msra.mxu0 0.0
  %2589 = vmatprep.subr.mxu0 0.0
  %2590 = vmatpush1.msra.mxu0 0.0
  %2591 = vmatprep.subr.mxu0 0.0
  %2592 = vmatpush1.msra.mxu0 0.0
  %2593 = vmatprep.subr.mxu0 0.0
  %2594 = vmatpush1.msra.mxu0 0.0
  %2595 = vmatprep.subr.mxu0 0.0
  %2596 = vmatpush1.msra.mxu0 0.0
  %2597 = vmatprep.subr.mxu0 0.0
  %2598 = vmatpush1.msra.mxu0 0.0
  %2599 = vmatprep.mubr.f32.mxu0 0.0
  %2600 = vmatmul.mubr.f32.gmra.mrb[0].mxu0 %v2533
  %v2601 = vpop.f32.mrb[0].mxu0
  %v2602 = vadd.f32 0.0, %v2601
  %v2603 = vpop.f32.mrb[0].mxu0
  %2604 = vdwg.mxu0
  %v2606 = vsel %vm555, %v1935, 0
  %2608 = vmatprep.subr.mxu0 0.0
  %2609 = vmatpush1.msra.mxu0 %v521
  %2610 = vmatprep.subr.mxu0 0.0
  %2611 = vmatpush1.msra.mxu0 0.0
  %2612 = vmatprep.subr.mxu0 0.0
  %2613 = vmatpush1.msra.mxu0 0.0
  %2614 = vmatprep.subr.mxu0 0.0
  %2615 = vmatpush1.msra.mxu0 0.0
  %2616 = vmatprep.subr.mxu0 0.0
  %2617 = vmatpush1.msra.mxu0 0.0
  %2618 = vmatprep.subr.mxu0 0.0
  %2619 = vmatpush1.msra.mxu0 0.0
  %2620 = vmatprep.subr.mxu0 0.0
  %2621 = vmatpush1.msra.mxu0 0.0
  %2622 = vmatprep.subr.mxu0 0.0
  %2623 = vmatpush1.msra.mxu0 0.0
  %2624 = vmatprep.subr.mxu0 0.0
  %2625 = vmatpush1.msra.mxu0 0.0
  %2626 = vmatprep.subr.mxu0 0.0
  %2627 = vmatpush1.msra.mxu0 0.0
  %2628 = vmatprep.subr.mxu0 0.0
  %2629 = vmatpush1.msra.mxu0 0.0
  %2630 = vmatprep.subr.mxu0 0.0
  %2631 = vmatpush1.msra.mxu0 0.0
  %2632 = vmatprep.subr.mxu0 0.0
  %2633 = vmatpush1.msra.mxu0 0.0
  %2634 = vmatprep.subr.mxu0 0.0
  %2635 = vmatpush1.msra.mxu0 0.0
  %2636 = vmatprep.subr.mxu0 0.0
  %2637 = vmatpush1.msra.mxu0 0.0
  %2638 = vmatprep.subr.mxu0 0.0
  %2639 = vmatpush1.msra.mxu0 0.0
  %2640 = vmatprep.subr.mxu0 0.0
  %2641 = vmatpush1.msra.mxu0 0.0
  %2642 = vmatprep.subr.mxu0 0.0
  %2643 = vmatpush1.msra.mxu0 0.0
  %2644 = vmatprep.subr.mxu0 0.0
  %2645 = vmatpush1.msra.mxu0 0.0
  %2646 = vmatprep.subr.mxu0 0.0
  %2647 = vmatpush1.msra.mxu0 0.0
  %2648 = vmatprep.subr.mxu0 0.0
  %2649 = vmatpush1.msra.mxu0 0.0
  %2650 = vmatprep.subr.mxu0 0.0
  %2651 = vmatpush1.msra.mxu0 0.0
  %2652 = vmatprep.subr.mxu0 0.0
  %2653 = vmatpush1.msra.mxu0 0.0
  %2654 = vmatprep.subr.mxu0 0.0
  %2655 = vmatpush1.msra.mxu0 0.0
  %2656 = vmatprep.subr.mxu0 0.0
  %2657 = vmatpush1.msra.mxu0 0.0
  %2658 = vmatprep.subr.mxu0 0.0
  %2659 = vmatpush1.msra.mxu0 0.0
  %2660 = vmatprep.subr.mxu0 0.0
  %2661 = vmatpush1.msra.mxu0 0.0
  %2662 = vmatprep.subr.mxu0 0.0
  %2663 = vmatpush1.msra.mxu0 0.0
  %2664 = vmatprep.subr.mxu0 0.0
  %2665 = vmatpush1.msra.mxu0 0.0
  %2666 = vmatprep.subr.mxu0 0.0
  %2667 = vmatpush1.msra.mxu0 0.0
  %2668 = vmatprep.subr.mxu0 0.0
  %2669 = vmatpush1.msra.mxu0 0.0
  %2670 = vmatprep.subr.mxu0 0.0
  %2671 = vmatpush1.msra.mxu0 0.0
  %2672 = vmatprep.mubr.f32.mxu0 0.0
  %2673 = vmatmul.mubr.f32.gmra.mrb[0].mxu0 %v2606
  %v2674 = vpop.f32.mrb[0].mxu0
  %v2675 = vadd.f32 0.0, %v2674
  %v2676 = vpop.f32.mrb[0].mxu0
  %2677 = vdwg.mxu0
  %v2679 = vsel %vm555, %v1937, 0
  %2681 = vmatprep.subr.mxu0 0.0
  %2682 = vmatpush1.msra.mxu0 %v526
  %2683 = vmatprep.subr.mxu0 0.0
  %2684 = vmatpush1.msra.mxu0 0.0
  %2685 = vmatprep.subr.mxu0 0.0
  %2686 = vmatpush1.msra.mxu0 0.0
  %2687 = vmatprep.subr.mxu0 0.0
  %2688 = vmatpush1.msra.mxu0 0.0
  %2689 = vmatprep.subr.mxu0 0.0
  %2690 = vmatpush1.msra.mxu0 0.0
  %2691 = vmatprep.subr.mxu0 0.0
  %2692 = vmatpush1.msra.mxu0 0.0
  %2693 = vmatprep.subr.mxu0 0.0
  %2694 = vmatpush1.msra.mxu0 0.0
  %2695 = vmatprep.subr.mxu0 0.0
  %2696 = vmatpush1.msra.mxu0 0.0
  %2697 = vmatprep.subr.mxu0 0.0
  %2698 = vmatpush1.msra.mxu0 0.0
  %2699 = vmatprep.subr.mxu0 0.0
  %2700 = vmatpush1.msra.mxu0 0.0
  %2701 = vmatprep.subr.mxu0 0.0
  %2702 = vmatpush1.msra.mxu0 0.0
  %2703 = vmatprep.subr.mxu0 0.0
  %2704 = vmatpush1.msra.mxu0 0.0
  %2705 = vmatprep.subr.mxu0 0.0
  %2706 = vmatpush1.msra.mxu0 0.0
  %2707 = vmatprep.subr.mxu0 0.0
  %2708 = vmatpush1.msra.mxu0 0.0
  %2709 = vmatprep.subr.mxu0 0.0
  %2710 = vmatpush1.msra.mxu0 0.0
  %2711 = vmatprep.subr.mxu0 0.0
  %2712 = vmatpush1.msra.mxu0 0.0
  %2713 = vmatprep.subr.mxu0 0.0
  %2714 = vmatpush1.msra.mxu0 0.0
  %2715 = vmatprep.subr.mxu0 0.0
  %2716 = vmatpush1.msra.mxu0 0.0
  %2717 = vmatprep.subr.mxu0 0.0
  %2718 = vmatpush1.msra.mxu0 0.0
  %2719 = vmatprep.subr.mxu0 0.0
  %2720 = vmatpush1.msra.mxu0 0.0
  %2721 = vmatprep.subr.mxu0 0.0
  %2722 = vmatpush1.msra.mxu0 0.0
  %2723 = vmatprep.subr.mxu0 0.0
  %2724 = vmatpush1.msra.mxu0 0.0
  %2725 = vmatprep.subr.mxu0 0.0
  %2726 = vmatpush1.msra.mxu0 0.0
  %2727 = vmatprep.subr.mxu0 0.0
  %2728 = vmatpush1.msra.mxu0 0.0
  %2729 = vmatprep.subr.mxu0 0.0
  %2730 = vmatpush1.msra.mxu0 0.0
  %2731 = vmatprep.subr.mxu0 0.0
  %2732 = vmatpush1.msra.mxu0 0.0
  %2733 = vmatprep.subr.mxu0 0.0
  %2734 = vmatpush1.msra.mxu0 0.0
  %2735 = vmatprep.subr.mxu0 0.0
  %2736 = vmatpush1.msra.mxu0 0.0
  %2737 = vmatprep.subr.mxu0 0.0
  %2738 = vmatpush1.msra.mxu0 0.0
  %2739 = vmatprep.subr.mxu0 0.0
  %2740 = vmatpush1.msra.mxu0 0.0
  %2741 = vmatprep.subr.mxu0 0.0
  %2742 = vmatpush1.msra.mxu0 0.0
  %2743 = vmatprep.subr.mxu0 0.0
  %2744 = vmatpush1.msra.mxu0 0.0
  %2745 = vmatprep.mubr.f32.mxu0 0.0
  %2746 = vmatmul.mubr.f32.gmra.mrb[0].mxu0 %v2679
  %v2747 = vpop.f32.mrb[0].mxu0
  %v2748 = vadd.f32 0.0, %v2747
  %v2749 = vpop.f32.mrb[0].mxu0
  %2750 = vdwg.mxu0
  %v2752 = vsel %vm555, %v1939, 0
  %2754 = vmatprep.subr.mxu0 0.0
  %2755 = vmatpush1.msra.mxu0 %v531
  %2756 = vmatprep.subr.mxu0 0.0
  %2757 = vmatpush1.msra.mxu0 0.0
  %2758 = vmatprep.subr.mxu0 0.0
  %2759 = vmatpush1.msra.mxu0 0.0
  %2760 = vmatprep.subr.mxu0 0.0
  %2761 = vmatpush1.msra.mxu0 0.0
  %2762 = vmatprep.subr.mxu0 0.0
  %2763 = vmatpush1.msra.mxu0 0.0
  %2764 = vmatprep.subr.mxu0 0.0
  %2765 = vmatpush1.msra.mxu0 0.0
  %2766 = vmatprep.subr.mxu0 0.0
  %2767 = vmatpush1.msra.mxu0 0.0
  %2768 = vmatprep.subr.mxu0 0.0
  %2769 = vmatpush1.msra.mxu0 0.0
  %2770 = vmatprep.subr.mxu0 0.0
  %2771 = vmatpush1.msra.mxu0 0.0
  %2772 = vmatprep.subr.mxu0 0.0
  %2773 = vmatpush1.msra.mxu0 0.0
  %2774 = vmatprep.subr.mxu0 0.0
  %2775 = vmatpush1.msra.mxu0 0.0
  %2776 = vmatprep.subr.mxu0 0.0
  %2777 = vmatpush1.msra.mxu0 0.0
  %2778 = vmatprep.subr.mxu0 0.0
  %2779 = vmatpush1.msra.mxu0 0.0
  %2780 = vmatprep.subr.mxu0 0.0
  %2781 = vmatpush1.msra.mxu0 0.0
  %2782 = vmatprep.subr.mxu0 0.0
  %2783 = vmatpush1.msra.mxu0 0.0
  %2784 = vmatprep.subr.mxu0 0.0
  %2785 = vmatpush1.msra.mxu0 0.0
  %2786 = vmatprep.subr.mxu0 0.0
  %2787 = vmatpush1.msra.mxu0 0.0
  %2788 = vmatprep.subr.mxu0 0.0
  %2789 = vmatpush1.msra.mxu0 0.0
  %2790 = vmatprep.subr.mxu0 0.0
  %2791 = vmatpush1.msra.mxu0 0.0
  %2792 = vmatprep.subr.mxu0 0.0
  %2793 = vmatpush1.msra.mxu0 0.0
  %2794 = vmatprep.subr.mxu0 0.0
  %2795 = vmatpush1.msra.mxu0 0.0
  %2796 = vmatprep.subr.mxu0 0.0
  %2797 = vmatpush1.msra.mxu0 0.0
  %2798 = vmatprep.subr.mxu0 0.0
  %2799 = vmatpush1.msra.mxu0 0.0
  %2800 = vmatprep.subr.mxu0 0.0
  %2801 = vmatpush1.msra.mxu0 0.0
  %2802 = vmatprep.subr.mxu0 0.0
  %2803 = vmatpush1.msra.mxu0 0.0
  %2804 = vmatprep.subr.mxu0 0.0
  %2805 = vmatpush1.msra.mxu0 0.0
  %2806 = vmatprep.subr.mxu0 0.0
  %2807 = vmatpush1.msra.mxu0 0.0
  %2808 = vmatprep.subr.mxu0 0.0
  %2809 = vmatpush1.msra.mxu0 0.0
  %2810 = vmatprep.subr.mxu0 0.0
  %2811 = vmatpush1.msra.mxu0 0.0
  %2812 = vmatprep.subr.mxu0 0.0
  %2813 = vmatpush1.msra.mxu0 0.0
  %2814 = vmatprep.subr.mxu0 0.0
  %2815 = vmatpush1.msra.mxu0 0.0
  %2816 = vmatprep.subr.mxu0 0.0
  %2817 = vmatpush1.msra.mxu0 0.0
  %2818 = vmatprep.mubr.f32.mxu0 0.0
  %2819 = vmatmul.mubr.f32.gmra.mrb[0].mxu0 %v2752
  %v2820 = vpop.f32.mrb[0].mxu0
  %v2821 = vadd.f32 0.0, %v2820
  %v2822 = vpop.f32.mrb[0].mxu0
  %2823 = vdwg.mxu0
  %v2825 = vsel %vm555, %v1941, 0
  %2827 = vmatprep.subr.mxu0 0.0
  %2828 = vmatpush1.msra.mxu0 %v536
  %2829 = vmatprep.subr.mxu0 0.0
  %2830 = vmatpush1.msra.mxu0 0.0
  %2831 = vmatprep.subr.mxu0 0.0
  %2832 = vmatpush1.msra.mxu0 0.0
  %2833 = vmatprep.subr.mxu0 0.0
  %2834 = vmatpush1.msra.mxu0 0.0
  %2835 = vmatprep.subr.mxu0 0.0
  %2836 = vmatpush1.msra.mxu0 0.0
  %2837 = vmatprep.subr.mxu0 0.0
  %2838 = vmatpush1.msra.mxu0 0.0
  %2839 = vmatprep.subr.mxu0 0.0
  %2840 = vmatpush1.msra.mxu0 0.0
  %2841 = vmatprep.subr.mxu0 0.0
  %2842 = vmatpush1.msra.mxu0 0.0
  %2843 = vmatprep.subr.mxu0 0.0
  %2844 = vmatpush1.msra.mxu0 0.0
  %2845 = vmatprep.subr.mxu0 0.0
  %2846 = vmatpush1.msra.mxu0 0.0
  %2847 = vmatprep.subr.mxu0 0.0
  %2848 = vmatpush1.msra.mxu0 0.0
  %2849 = vmatprep.subr.mxu0 0.0
  %2850 = vmatpush1.msra.mxu0 0.0
  %2851 = vmatprep.subr.mxu0 0.0
  %2852 = vmatpush1.msra.mxu0 0.0
  %2853 = vmatprep.subr.mxu0 0.0
  %2854 = vmatpush1.msra.mxu0 0.0
  %2855 = vmatprep.subr.mxu0 0.0
  %2856 = vmatpush1.msra.mxu0 0.0
  %2857 = vmatprep.subr.mxu0 0.0
  %2858 = vmatpush1.msra.mxu0 0.0
  %2859 = vmatprep.subr.mxu0 0.0
  %2860 = vmatpush1.msra.mxu0 0.0
  %2861 = vmatprep.subr.mxu0 0.0
  %2862 = vmatpush1.msra.mxu0 0.0
  %2863 = vmatprep.subr.mxu0 0.0
  %2864 = vmatpush1.msra.mxu0 0.0
  %2865 = vmatprep.subr.mxu0 0.0
  %2866 = vmatpush1.msra.mxu0 0.0
  %2867 = vmatprep.subr.mxu0 0.0
  %2868 = vmatpush1.msra.mxu0 0.0
  %2869 = vmatprep.subr.mxu0 0.0
  %2870 = vmatpush1.msra.mxu0 0.0
  %2871 = vmatprep.subr.mxu0 0.0
  %2872 = vmatpush1.msra.mxu0 0.0
  %2873 = vmatprep.subr.mxu0 0.0
  %2874 = vmatpush1.msra.mxu0 0.0
  %2875 = vmatprep.subr.mxu0 0.0
  %2876 = vmatpush1.msra.mxu0 0.0
  %2877 = vmatprep.subr.mxu0 0.0
  %2878 = vmatpush1.msra.mxu0 0.0
  %2879 = vmatprep.subr.mxu0 0.0
  %2880 = vmatpush1.msra.mxu0 0.0
  %2881 = vmatprep.subr.mxu0 0.0
  %2882 = vmatpush1.msra.mxu0 0.0
  %2883 = vmatprep.subr.mxu0 0.0
  %2884 = vmatpush1.msra.mxu0 0.0
  %2885 = vmatprep.subr.mxu0 0.0
  %2886 = vmatpush1.msra.mxu0 0.0
  %2887 = vmatprep.subr.mxu0 0.0
  %2888 = vmatpush1.msra.mxu0 0.0
  %2889 = vmatprep.subr.mxu0 0.0
  %2890 = vmatpush1.msra.mxu0 0.0
  %2891 = vmatprep.mubr.f32.mxu0 0.0
  %2892 = vmatmul.mubr.f32.gmra.mrb[0].mxu0 %v2825
  %v2893 = vpop.f32.mrb[0].mxu0
  %v2894 = vadd.f32 0.0, %v2893
  %v2895 = vpop.f32.mrb[0].mxu0
  %2896 = vdwg.mxu0
  %v2898 = vsel %vm555, %v1943, 0
  %2900 = vmatprep.subr.mxu0 0.0
  %2901 = vmatpush1.msra.mxu0 %v541
  %2902 = vmatprep.subr.mxu0 0.0
  %2903 = vmatpush1.msra.mxu0 0.0
  %2904 = vmatprep.subr.mxu0 0.0
  %2905 = vmatpush1.msra.mxu0 0.0
  %2906 = vmatprep.subr.mxu0 0.0
  %2907 = vmatpush1.msra.mxu0 0.0
  %2908 = vmatprep.subr.mxu0 0.0
  %2909 = vmatpush1.msra.mxu0 0.0
  %2910 = vmatprep.subr.mxu0 0.0
  %2911 = vmatpush1.msra.mxu0 0.0
  %2912 = vmatprep.subr.mxu0 0.0
  %2913 = vmatpush1.msra.mxu0 0.0
  %2914 = vmatprep.subr.mxu0 0.0
  %2915 = vmatpush1.msra.mxu0 0.0
  %2916 = vmatprep.subr.mxu0 0.0
  %2917 = vmatpush1.msra.mxu0 0.0
  %2918 = vmatprep.subr.mxu0 0.0
  %2919 = vmatpush1.msra.mxu0 0.0
  %2920 = vmatprep.subr.mxu0 0.0
  %2921 = vmatpush1.msra.mxu0 0.0
  %2922 = vmatprep.subr.mxu0 0.0
  %2923 = vmatpush1.msra.mxu0 0.0
  %2924 = vmatprep.subr.mxu0 0.0
  %2925 = vmatpush1.msra.mxu0 0.0
  %2926 = vmatprep.subr.mxu0 0.0
  %2927 = vmatpush1.msra.mxu0 0.0
  %2928 = vmatprep.subr.mxu0 0.0
  %2929 = vmatpush1.msra.mxu0 0.0
  %2930 = vmatprep.subr.mxu0 0.0
  %2931 = vmatpush1.msra.mxu0 0.0
  %2932 = vmatprep.subr.mxu0 0.0
  %2933 = vmatpush1.msra.mxu0 0.0
  %2934 = vmatprep.subr.mxu0 0.0
  %2935 = vmatpush1.msra.mxu0 0.0
  %2936 = vmatprep.subr.mxu0 0.0
  %2937 = vmatpush1.msra.mxu0 0.0
  %2938 = vmatprep.subr.mxu0 0.0
  %2939 = vmatpush1.msra.mxu0 0.0
  %2940 = vmatprep.subr.mxu0 0.0
  %2941 = vmatpush1.msra.mxu0 0.0
  %2942 = vmatprep.subr.mxu0 0.0
  %2943 = vmatpush1.msra.mxu0 0.0
  %2944 = vmatprep.subr.mxu0 0.0
  %2945 = vmatpush1.msra.mxu0 0.0
  %2946 = vmatprep.subr.mxu0 0.0
  %2947 = vmatpush1.msra.mxu0 0.0
  %2948 = vmatprep.subr.mxu0 0.0
  %2949 = vmatpush1.msra.mxu0 0.0
  %2950 = vmatprep.subr.mxu0 0.0
  %2951 = vmatpush1.msra.mxu0 0.0
  %2952 = vmatprep.subr.mxu0 0.0
  %2953 = vmatpush1.msra.mxu0 0.0
  %2954 = vmatprep.subr.mxu0 0.0
  %2955 = vmatpush1.msra.mxu0 0.0
  %2956 = vmatprep.subr.mxu0 0.0
  %2957 = vmatpush1.msra.mxu0 0.0
  %2958 = vmatprep.subr.mxu0 0.0
  %2959 = vmatpush1.msra.mxu0 0.0
  %2960 = vmatprep.subr.mxu0 0.0
  %2961 = vmatpush1.msra.mxu0 0.0
  %2962 = vmatprep.subr.mxu0 0.0
  %2963 = vmatpush1.msra.mxu0 0.0
  %2964 = vmatprep.mubr.f32.mxu0 0.0
  %2965 = vmatmul.mubr.f32.gmra.mrb[0].mxu0 %v2898
  %v2966 = vpop.f32.mrb[0].mxu0
  %v2967 = vadd.f32 0.0, %v2966
  %v2968 = vpop.f32.mrb[0].mxu0
  %2969 = vdwg.mxu0
  %v2971 = vsel %vm555, %v1945, 0
  %2973 = vmatprep.subr.mxu0 0.0
  %2974 = vmatpush1.msra.mxu0 %v546
  %2975 = vmatprep.subr.mxu0 0.0
  %2976 = vmatpush1.msra.mxu0 0.0
  %2977 = vmatprep.subr.mxu0 0.0
  %2978 = vmatpush1.msra.mxu0 0.0
  %2979 = vmatprep.subr.mxu0 0.0
  %2980 = vmatpush1.msra.mxu0 0.0
  %2981 = vmatprep.subr.mxu0 0.0
  %2982 = vmatpush1.msra.mxu0 0.0
  %2983 = vmatprep.subr.mxu0 0.0
  %2984 = vmatpush1.msra.mxu0 0.0
  %2985 = vmatprep.subr.mxu0 0.0
  %2986 = vmatpush1.msra.mxu0 0.0
  %2987 = vmatprep.subr.mxu0 0.0
  %2988 = vmatpush1.msra.mxu0 0.0
  %2989 = vmatprep.subr.mxu0 0.0
  %2990 = vmatpush1.msra.mxu0 0.0
  %2991 = vmatprep.subr.mxu0 0.0
  %2992 = vmatpush1.msra.mxu0 0.0
  %2993 = vmatprep.subr.mxu0 0.0
  %2994 = vmatpush1.msra.mxu0 0.0
  %2995 = vmatprep.subr.mxu0 0.0
  %2996 = vmatpush1.msra.mxu0 0.0
  %2997 = vmatprep.subr.mxu0 0.0
  %2998 = vmatpush1.msra.mxu0 0.0
  %2999 = vmatprep.subr.mxu0 0.0
  %3000 = vmatpush1.msra.mxu0 0.0
  %3001 = vmatprep.subr.mxu0 0.0
  %3002 = vmatpush1.msra.mxu0 0.0
  %3003 = vmatprep.subr.mxu0 0.0
  %3004 = vmatpush1.msra.mxu0 0.0
  %3005 = vmatprep.subr.mxu0 0.0
  %3006 = vmatpush1.msra.mxu0 0.0
  %3007 = vmatprep.subr.mxu0 0.0
  %3008 = vmatpush1.msra.mxu0 0.0
  %3009 = vmatprep.subr.mxu0 0.0
  %3010 = vmatpush1.msra.mxu0 0.0
  %3011 = vmatprep.subr.mxu0 0.0
  %3012 = vmatpush1.msra.mxu0 0.0
  %3013 = vmatprep.subr.mxu0 0.0
  %3014 = vmatpush1.msra.mxu0 0.0
  %3015 = vmatprep.subr.mxu0 0.0
  %3016 = vmatpush1.msra.mxu0 0.0
  %3017 = vmatprep.subr.mxu0 0.0
  %3018 = vmatpush1.msra.mxu0 0.0
  %3019 = vmatprep.subr.mxu0 0.0
  %3020 = vmatpush1.msra.mxu0 0.0
  %3021 = vmatprep.subr.mxu0 0.0
  %3022 = vmatpush1.msra.mxu0 0.0
  %3023 = vmatprep.subr.mxu0 0.0
  %3024 = vmatpush1.msra.mxu0 0.0
  %3025 = vmatprep.subr.mxu0 0.0
  %3026 = vmatpush1.msra.mxu0 0.0
  %3027 = vmatprep.subr.mxu0 0.0
  %3028 = vmatpush1.msra.mxu0 0.0
  %3029 = vmatprep.subr.mxu0 0.0
  %3030 = vmatpush1.msra.mxu0 0.0
  %3031 = vmatprep.subr.mxu0 0.0
  %3032 = vmatpush1.msra.mxu0 0.0
  %3033 = vmatprep.subr.mxu0 0.0
  %3034 = vmatpush1.msra.mxu0 0.0
  %3035 = vmatprep.subr.mxu0 0.0
  %3036 = vmatpush1.msra.mxu0 0.0
  %3037 = vmatprep.mubr.f32.mxu0 0.0
  %3038 = vmatmul.mubr.f32.gmra.mrb[0].mxu0 %v2971
  %v3039 = vpop.f32.mrb[0].mxu0
  %v3040 = vadd.f32 0.0, %v3039
  %v3041 = vpop.f32.mrb[0].mxu0
  %3042 = vdwg.mxu0
  %v3044 = vsel %vm555, %v1947, 0
  %3046 = vmatprep.subr.mxu0 0.0
  %3047 = vmatpush1.msra.mxu0 %v551
  %3048 = vmatprep.subr.mxu0 0.0
  %3049 = vmatpush1.msra.mxu0 0.0
  %3050 = vmatprep.subr.mxu0 0.0
  %3051 = vmatpush1.msra.mxu0 0.0
  %3052 = vmatprep.subr.mxu0 0.0
  %3053 = vmatpush1.msra.mxu0 0.0
  %3054 = vmatprep.subr.mxu0 0.0
  %3055 = vmatpush1.msra.mxu0 0.0
  %3056 = vmatprep.subr.mxu0 0.0
  %3057 = vmatpush1.msra.mxu0 0.0
  %3058 = vmatprep.subr.mxu0 0.0
  %3059 = vmatpush1.msra.mxu0 0.0
  %3060 = vmatprep.subr.mxu0 0.0
  %3061 = vmatpush1.msra.mxu0 0.0
  %3062 = vmatprep.subr.mxu0 0.0
  %3063 = vmatpush1.msra.mxu0 0.0
  %3064 = vmatprep.subr.mxu0 0.0
  %3065 = vmatpush1.msra.mxu0 0.0
  %3066 = vmatprep.subr.mxu0 0.0
  %3067 = vmatpush1.msra.mxu0 0.0
  %3068 = vmatprep.subr.mxu0 0.0
  %3069 = vmatpush1.msra.mxu0 0.0
  %3070 = vmatprep.subr.mxu0 0.0
  %3071 = vmatpush1.msra.mxu0 0.0
  %3072 = vmatprep.subr.mxu0 0.0
  %3073 = vmatpush1.msra.mxu0 0.0
  %3074 = vmatprep.subr.mxu0 0.0
  %3075 = vmatpush1.msra.mxu0 0.0
  %3076 = vmatprep.subr.mxu0 0.0
  %3077 = vmatpush1.msra.mxu0 0.0
  %3078 = vmatprep.subr.mxu0 0.0
  %3079 = vmatpush1.msra.mxu0 0.0
  %3080 = vmatprep.subr.mxu0 0.0
  %3081 = vmatpush1.msra.mxu0 0.0
  %3082 = vmatprep.subr.mxu0 0.0
  %3083 = vmatpush1.msra.mxu0 0.0
  %3084 = vmatprep.subr.mxu0 0.0
  %3085 = vmatpush1.msra.mxu0 0.0
  %3086 = vmatprep.subr.mxu0 0.0
  %3087 = vmatpush1.msra.mxu0 0.0
  %3088 = vmatprep.subr.mxu0 0.0
  %3089 = vmatpush1.msra.mxu0 0.0
  %3090 = vmatprep.subr.mxu0 0.0
  %3091 = vmatpush1.msra.mxu0 0.0
  %3092 = vmatprep.subr.mxu0 0.0
  %3093 = vmatpush1.msra.mxu0 0.0
  %3094 = vmatprep.subr.mxu0 0.0
  %3095 = vmatpush1.msra.mxu0 0.0
  %3096 = vmatprep.subr.mxu0 0.0
  %3097 = vmatpush1.msra.mxu0 0.0
  %3098 = vmatprep.subr.mxu0 0.0
  %3099 = vmatpush1.msra.mxu0 0.0
  %3100 = vmatprep.subr.mxu0 0.0
  %3101 = vmatpush1.msra.mxu0 0.0
  %3102 = vmatprep.subr.mxu0 0.0
  %3103 = vmatpush1.msra.mxu0 0.0
  %3104 = vmatprep.subr.mxu0 0.0
  %3105 = vmatpush1.msra.mxu0 0.0
  %3106 = vmatprep.subr.mxu0 0.0
  %3107 = vmatpush1.msra.mxu0 0.0
  %3108 = vmatprep.subr.mxu0 0.0
  %3109 = vmatpush1.msra.mxu0 0.0
  %3110 = vmatprep.mubr.f32.mxu0 0.0
  %3111 = vmatmul.mubr.f32.gmra.mrb[0].mxu0 %v3044
  %v3112 = vpop.f32.mrb[0].mxu0
  %v3113 = vadd.f32 0.0, %v3112
  %v3114 = vpop.f32.mrb[0].mxu0
  %3115 = vdwg.mxu0
  %v3116 = vld [vmem:[%s4] sm:$0xff]
  %s3117 = scalar_lea.vmem %s6, 8
  %v3118 = vld [vmem:[%s3117] sm:$0xff]
  %3119 = vrot.lane.b32.xlu0 %v240, 120
  %v3120 = vpop.permute.xlu0 %3119
  %3121 = vrot.lane.b32.xlu0 %v327, 120
  %v3122 = vpop.permute.xlu0 %3121
  %v3123 = vsel %vm555, %v3120, 0
  %v3125 = vsel %vm555, %v3122, 0
  %3127 = vmatprep.subr.mxu0 0.0
  %3128 = vmatpush1.xpose.msra.mxu0 %v3125
  %3129 = vmatprep.subr.mxu0 0.0
  %3130 = vmatpush1.xpose.msra.mxu0 0.0
  %3131 = vmatprep.subr.mxu0 0.0
  %3132 = vmatpush1.xpose.msra.mxu0 0.0
  %3133 = vmatprep.subr.mxu0 0.0
  %3134 = vmatpush1.xpose.msra.mxu0 0.0
  %3135 = vmatprep.subr.mxu0 0.0
  %3136 = vmatpush1.xpose.msra.mxu0 0.0
  %3137 = vmatprep.subr.mxu0 0.0
  %3138 = vmatpush1.xpose.msra.mxu0 0.0
  %3139 = vmatprep.subr.mxu0 0.0
  %3140 = vmatpush1.xpose.msra.mxu0 0.0
  %3141 = vmatprep.subr.mxu0 0.0
  %3142 = vmatpush1.xpose.msra.mxu0 0.0
  %3143 = vmatprep.subr.mxu0 0.0
  %3144 = vmatpush1.xpose.msra.mxu0 0.0
  %3145 = vmatprep.subr.mxu0 0.0
  %3146 = vmatpush1.xpose.msra.mxu0 0.0
  %3147 = vmatprep.subr.mxu0 0.0
  %3148 = vmatpush1.xpose.msra.mxu0 0.0
  %3149 = vmatprep.subr.mxu0 0.0
  %3150 = vmatpush1.xpose.msra.mxu0 0.0
  %3151 = vmatprep.subr.mxu0 0.0
  %3152 = vmatpush1.xpose.msra.mxu0 0.0
  %3153 = vmatprep.subr.mxu0 0.0
  %3154 = vmatpush1.xpose.msra.mxu0 0.0
  %3155 = vmatprep.subr.mxu0 0.0
  %3156 = vmatpush1.xpose.msra.mxu0 0.0
  %3157 = vmatprep.subr.mxu0 0.0
  %3158 = vmatpush1.xpose.msra.mxu0 0.0
  %3159 = vmatprep.subr.mxu0 0.0
  %3160 = vmatpush1.xpose.msra.mxu0 0.0
  %3161 = vmatprep.subr.mxu0 0.0
  %3162 = vmatpush1.xpose.msra.mxu0 0.0
  %3163 = vmatprep.subr.mxu0 0.0
  %3164 = vmatpush1.xpose.msra.mxu0 0.0
  %3165 = vmatprep.subr.mxu0 0.0
  %3166 = vmatpush1.xpose.msra.mxu0 0.0
  %3167 = vmatprep.subr.mxu0 0.0
  %3168 = vmatpush1.xpose.msra.mxu0 0.0
  %3169 = vmatprep.subr.mxu0 0.0
  %3170 = vmatpush1.xpose.msra.mxu0 0.0
  %3171 = vmatprep.subr.mxu0 0.0
  %3172 = vmatpush1.xpose.msra.mxu0 0.0
  %3173 = vmatprep.subr.mxu0 0.0
  %3174 = vmatpush1.xpose.msra.mxu0 0.0
  %3175 = vmatprep.subr.mxu0 0.0
  %3176 = vmatpush1.xpose.msra.mxu0 0.0
  %3177 = vmatprep.subr.mxu0 0.0
  %3178 = vmatpush1.xpose.msra.mxu0 0.0
  %3179 = vmatprep.subr.mxu0 0.0
  %3180 = vmatpush1.xpose.msra.mxu0 0.0
  %3181 = vmatprep.subr.mxu0 0.0
  %3182 = vmatpush1.xpose.msra.mxu0 0.0
  %3183 = vmatprep.subr.mxu0 0.0
  %3184 = vmatpush1.xpose.msra.mxu0 0.0
  %3185 = vmatprep.subr.mxu0 0.0
  %3186 = vmatpush1.xpose.msra.mxu0 0.0
  %3187 = vmatprep.subr.mxu0 0.0
  %3188 = vmatpush1.xpose.msra.mxu0 0.0
  %3189 = vmatprep.subr.mxu0 0.0
  %3190 = vmatpush1.xpose.msra.mxu0 0.0
  %3191 = vmatprep.mubr.f32.mxu0 0.0
  %3192 = vmatmul.mubr.f32.gmra.mrb[0].mxu0 %v3123
  %v3193 = vpop.f32.mrb[0].mxu0
  %v3194 = vadd.f32 %v3118, %v3193
  %v3195 = vpop.f32.mrb[0].mxu0
  %3196 = vdwg.mxu0
  %3197 = vrot.lane.b32.xlu0 %v241, 120
  %v3198 = vpop.permute.xlu0 %3197
  %3199 = vrot.lane.b32.xlu0 %v332, 120
  %v3200 = vpop.permute.xlu0 %3199
  %v3201 = vsel %vm555, %v3198, 0
  %v3203 = vsel %vm555, %v3200, 0
  %3205 = vmatprep.subr.mxu0 0.0
  %3206 = vmatpush1.xpose.msra.mxu0 %v3203
  %3207 = vmatprep.subr.mxu0 0.0
  %3208 = vmatpush1.xpose.msra.mxu0 0.0
  %3209 = vmatprep.subr.mxu0 0.0
  %3210 = vmatpush1.xpose.msra.mxu0 0.0
  %3211 = vmatprep.subr.mxu0 0.0
  %3212 = vmatpush1.xpose.msra.mxu0 0.0
  %3213 = vmatprep.subr.mxu0 0.0
  %3214 = vmatpush1.xpose.msra.mxu0 0.0
  %3215 = vmatprep.subr.mxu0 0.0
  %3216 = vmatpush1.xpose.msra.mxu0 0.0
  %3217 = vmatprep.subr.mxu0 0.0
  %3218 = vmatpush1.xpose.msra.mxu0 0.0
  %3219 = vmatprep.subr.mxu0 0.0
  %3220 = vmatpush1.xpose.msra.mxu0 0.0
  %3221 = vmatprep.subr.mxu0 0.0
  %3222 = vmatpush1.xpose.msra.mxu0 0.0
  %3223 = vmatprep.subr.mxu0 0.0
  %3224 = vmatpush1.xpose.msra.mxu0 0.0
  %3225 = vmatprep.subr.mxu0 0.0
  %3226 = vmatpush1.xpose.msra.mxu0 0.0
  %3227 = vmatprep.subr.mxu0 0.0
  %3228 = vmatpush1.xpose.msra.mxu0 0.0
  %3229 = vmatprep.subr.mxu0 0.0
  %3230 = vmatpush1.xpose.msra.mxu0 0.0
  %3231 = vmatprep.subr.mxu0 0.0
  %3232 = vmatpush1.xpose.msra.mxu0 0.0
  %3233 = vmatprep.subr.mxu0 0.0
  %3234 = vmatpush1.xpose.msra.mxu0 0.0
  %3235 = vmatprep.subr.mxu0 0.0
  %3236 = vmatpush1.xpose.msra.mxu0 0.0
  %3237 = vmatprep.subr.mxu0 0.0
  %3238 = vmatpush1.xpose.msra.mxu0 0.0
  %3239 = vmatprep.subr.mxu0 0.0
  %3240 = vmatpush1.xpose.msra.mxu0 0.0
  %3241 = vmatprep.subr.mxu0 0.0
  %3242 = vmatpush1.xpose.msra.mxu0 0.0
  %3243 = vmatprep.subr.mxu0 0.0
  %3244 = vmatpush1.xpose.msra.mxu0 0.0
  %3245 = vmatprep.subr.mxu0 0.0
  %3246 = vmatpush1.xpose.msra.mxu0 0.0
  %3247 = vmatprep.subr.mxu0 0.0
  %3248 = vmatpush1.xpose.msra.mxu0 0.0
  %3249 = vmatprep.subr.mxu0 0.0
  %3250 = vmatpush1.xpose.msra.mxu0 0.0
  %3251 = vmatprep.subr.mxu0 0.0
  %3252 = vmatpush1.xpose.msra.mxu0 0.0
  %3253 = vmatprep.subr.mxu0 0.0
  %3254 = vmatpush1.xpose.msra.mxu0 0.0
  %3255 = vmatprep.subr.mxu0 0.0
  %3256 = vmatpush1.xpose.msra.mxu0 0.0
  %3257 = vmatprep.subr.mxu0 0.0
  %3258 = vmatpush1.xpose.msra.mxu0 0.0
  %3259 = vmatprep.subr.mxu0 0.0
  %3260 = vmatpush1.xpose.msra.mxu0 0.0
  %3261 = vmatprep.subr.mxu0 0.0
  %3262 = vmatpush1.xpose.msra.mxu0 0.0
  %3263 = vmatprep.subr.mxu0 0.0
  %3264 = vmatpush1.xpose.msra.mxu0 0.0
  %3265 = vmatprep.subr.mxu0 0.0
  %3266 = vmatpush1.xpose.msra.mxu0 0.0
  %3267 = vmatprep.subr.mxu0 0.0
  %3268 = vmatpush1.xpose.msra.mxu0 0.0
  %3269 = vmatprep.mubr.f32.mxu0 0.0
  %3270 = vmatmul.mubr.f32.gmra.mrb[0].mxu0 %v3201
  %v3271 = vpop.f32.mrb[0].mxu0
  %v3272 = vadd.f32 %v3118, %v3271
  %v3273 = vpop.f32.mrb[0].mxu0
  %3274 = vdwg.mxu0
  %3275 = vrot.lane.b32.xlu0 %v242, 120
  %v3276 = vpop.permute.xlu0 %3275
  %3277 = vrot.lane.b32.xlu0 %v337, 120
  %v3278 = vpop.permute.xlu0 %3277
  %v3279 = vsel %vm555, %v3276, 0
  %v3281 = vsel %vm555, %v3278, 0
  %3283 = vmatprep.subr.mxu0 0.0
  %3284 = vmatpush1.xpose.msra.mxu0 %v3281
  %3285 = vmatprep.subr.mxu0 0.0
  %3286 = vmatpush1.xpose.msra.mxu0 0.0
  %3287 = vmatprep.subr.mxu0 0.0
  %3288 = vmatpush1.xpose.msra.mxu0 0.0
  %3289 = vmatprep.subr.mxu0 0.0
  %3290 = vmatpush1.xpose.msra.mxu0 0.0
  %3291 = vmatprep.subr.mxu0 0.0
  %3292 = vmatpush1.xpose.msra.mxu0 0.0
  %3293 = vmatprep.subr.mxu0 0.0
  %3294 = vmatpush1.xpose.msra.mxu0 0.0
  %3295 = vmatprep.subr.mxu0 0.0
  %3296 = vmatpush1.xpose.msra.mxu0 0.0
  %3297 = vmatprep.subr.mxu0 0.0
  %3298 = vmatpush1.xpose.msra.mxu0 0.0
  %3299 = vmatprep.subr.mxu0 0.0
  %3300 = vmatpush1.xpose.msra.mxu0 0.0
  %3301 = vmatprep.subr.mxu0 0.0
  %3302 = vmatpush1.xpose.msra.mxu0 0.0
  %3303 = vmatprep.subr.mxu0 0.0
  %3304 = vmatpush1.xpose.msra.mxu0 0.0
  %3305 = vmatprep.subr.mxu0 0.0
  %3306 = vmatpush1.xpose.msra.mxu0 0.0
  %3307 = vmatprep.subr.mxu0 0.0
  %3308 = vmatpush1.xpose.msra.mxu0 0.0
  %3309 = vmatprep.subr.mxu0 0.0
  %3310 = vmatpush1.xpose.msra.mxu0 0.0
  %3311 = vmatprep.subr.mxu0 0.0
  %3312 = vmatpush1.xpose.msra.mxu0 0.0
  %3313 = vmatprep.subr.mxu0 0.0
  %3314 = vmatpush1.xpose.msra.mxu0 0.0
  %3315 = vmatprep.subr.mxu0 0.0
  %3316 = vmatpush1.xpose.msra.mxu0 0.0
  %3317 = vmatprep.subr.mxu0 0.0
  %3318 = vmatpush1.xpose.msra.mxu0 0.0
  %3319 = vmatprep.subr.mxu0 0.0
  %3320 = vmatpush1.xpose.msra.mxu0 0.0
  %3321 = vmatprep.subr.mxu0 0.0
  %3322 = vmatpush1.xpose.msra.mxu0 0.0
  %3323 = vmatprep.subr.mxu0 0.0
  %3324 = vmatpush1.xpose.msra.mxu0 0.0
  %3325 = vmatprep.subr.mxu0 0.0
  %3326 = vmatpush1.xpose.msra.mxu0 0.0
  %3327 = vmatprep.subr.mxu0 0.0
  %3328 = vmatpush1.xpose.msra.mxu0 0.0
  %3329 = vmatprep.subr.mxu0 0.0
  %3330 = vmatpush1.xpose.msra.mxu0 0.0
  %3331 = vmatprep.subr.mxu0 0.0
  %3332 = vmatpush1.xpose.msra.mxu0 0.0
  %3333 = vmatprep.subr.mxu0 0.0
  %3334 = vmatpush1.xpose.msra.mxu0 0.0
  %3335 = vmatprep.subr.mxu0 0.0
  %3336 = vmatpush1.xpose.msra.mxu0 0.0
  %3337 = vmatprep.subr.mxu0 0.0
  %3338 = vmatpush1.xpose.msra.mxu0 0.0
  %3339 = vmatprep.subr.mxu0 0.0
  %3340 = vmatpush1.xpose.msra.mxu0 0.0
  %3341 = vmatprep.subr.mxu0 0.0
  %3342 = vmatpush1.xpose.msra.mxu0 0.0
  %3343 = vmatprep.subr.mxu0 0.0
  %3344 = vmatpush1.xpose.msra.mxu0 0.0
  %3345 = vmatprep.subr.mxu0 0.0
  %3346 = vmatpush1.xpose.msra.mxu0 0.0
  %3347 = vmatprep.mubr.f32.mxu0 0.0
  %3348 = vmatmul.mubr.f32.gmra.mrb[0].mxu0 %v3279
  %v3349 = vpop.f32.mrb[0].mxu0
  %v3350 = vadd.f32 %v3118, %v3349
  %v3351 = vpop.f32.mrb[0].mxu0
  %3352 = vdwg.mxu0
  %3353 = vrot.lane.b32.xlu0 %v243, 120
  %v3354 = vpop.permute.xlu0 %3353
  %3355 = vrot.lane.b32.xlu0 %v342, 120
  %v3356 = vpop.permute.xlu0 %3355
  %v3357 = vsel %vm555, %v3354, 0
  %v3359 = vsel %vm555, %v3356, 0
  %3361 = vmatprep.subr.mxu0 0.0
  %3362 = vmatpush1.xpose.msra.mxu0 %v3359
  %3363 = vmatprep.subr.mxu0 0.0
  %3364 = vmatpush1.xpose.msra.mxu0 0.0
  %3365 = vmatprep.subr.mxu0 0.0
  %3366 = vmatpush1.xpose.msra.mxu0 0.0
  %3367 = vmatprep.subr.mxu0 0.0
  %3368 = vmatpush1.xpose.msra.mxu0 0.0
  %3369 = vmatprep.subr.mxu0 0.0
  %3370 = vmatpush1.xpose.msra.mxu0 0.0
  %3371 = vmatprep.subr.mxu0 0.0
  %3372 = vmatpush1.xpose.msra.mxu0 0.0
  %3373 = vmatprep.subr.mxu0 0.0
  %3374 = vmatpush1.xpose.msra.mxu0 0.0
  %3375 = vmatprep.subr.mxu0 0.0
  %3376 = vmatpush1.xpose.msra.mxu0 0.0
  %3377 = vmatprep.subr.mxu0 0.0
  %3378 = vmatpush1.xpose.msra.mxu0 0.0
  %3379 = vmatprep.subr.mxu0 0.0
  %3380 = vmatpush1.xpose.msra.mxu0 0.0
  %3381 = vmatprep.subr.mxu0 0.0
  %3382 = vmatpush1.xpose.msra.mxu0 0.0
  %3383 = vmatprep.subr.mxu0 0.0
  %3384 = vmatpush1.xpose.msra.mxu0 0.0
  %3385 = vmatprep.subr.mxu0 0.0
  %3386 = vmatpush1.xpose.msra.mxu0 0.0
  %3387 = vmatprep.subr.mxu0 0.0
  %3388 = vmatpush1.xpose.msra.mxu0 0.0
  %3389 = vmatprep.subr.mxu0 0.0
  %3390 = vmatpush1.xpose.msra.mxu0 0.0
  %3391 = vmatprep.subr.mxu0 0.0
  %3392 = vmatpush1.xpose.msra.mxu0 0.0
  %3393 = vmatprep.subr.mxu0 0.0
  %3394 = vmatpush1.xpose.msra.mxu0 0.0
  %3395 = vmatprep.subr.mxu0 0.0
  %3396 = vmatpush1.xpose.msra.mxu0 0.0
  %3397 = vmatprep.subr.mxu0 0.0
  %3398 = vmatpush1.xpose.msra.mxu0 0.0
  %3399 = vmatprep.subr.mxu0 0.0
  %3400 = vmatpush1.xpose.msra.mxu0 0.0
  %3401 = vmatprep.subr.mxu0 0.0
  %3402 = vmatpush1.xpose.msra.mxu0 0.0
  %3403 = vmatprep.subr.mxu0 0.0
  %3404 = vmatpush1.xpose.msra.mxu0 0.0
  %3405 = vmatprep.subr.mxu0 0.0
  %3406 = vmatpush1.xpose.msra.mxu0 0.0
  %3407 = vmatprep.subr.mxu0 0.0
  %3408 = vmatpush1.xpose.msra.mxu0 0.0
  %3409 = vmatprep.subr.mxu0 0.0
  %3410 = vmatpush1.xpose.msra.mxu0 0.0
  %3411 = vmatprep.subr.mxu0 0.0
  %3412 = vmatpush1.xpose.msra.mxu0 0.0
  %3413 = vmatprep.subr.mxu0 0.0
  %3414 = vmatpush1.xpose.msra.mxu0 0.0
  %3415 = vmatprep.subr.mxu0 0.0
  %3416 = vmatpush1.xpose.msra.mxu0 0.0
  %3417 = vmatprep.subr.mxu0 0.0
  %3418 = vmatpush1.xpose.msra.mxu0 0.0
  %3419 = vmatprep.subr.mxu0 0.0
  %3420 = vmatpush1.xpose.msra.mxu0 0.0
  %3421 = vmatprep.subr.mxu0 0.0
  %3422 = vmatpush1.xpose.msra.mxu0 0.0
  %3423 = vmatprep.subr.mxu0 0.0
  %3424 = vmatpush1.xpose.msra.mxu0 0.0
  %3425 = vmatprep.mubr.f32.mxu0 0.0
  %3426 = vmatmul.mubr.f32.gmra.mrb[0].mxu0 %v3357
  %v3427 = vpop.f32.mrb[0].mxu0
  %v3428 = vadd.f32 %v3118, %v3427
  %v3429 = vpop.f32.mrb[0].mxu0
  %3430 = vdwg.mxu0
  %3431 = vrot.lane.b32.xlu0 %v244, 120
  %v3432 = vpop.permute.xlu0 %3431
  %3433 = vrot.lane.b32.xlu0 %v347, 120
  %v3434 = vpop.permute.xlu0 %3433
  %v3435 = vsel %vm555, %v3432, 0
  %v3437 = vsel %vm555, %v3434, 0
  %3439 = vmatprep.subr.mxu0 0.0
  %3440 = vmatpush1.xpose.msra.mxu0 %v3437
  %3441 = vmatprep.subr.mxu0 0.0
  %3442 = vmatpush1.xpose.msra.mxu0 0.0
  %3443 = vmatprep.subr.mxu0 0.0
  %3444 = vmatpush1.xpose.msra.mxu0 0.0
  %3445 = vmatprep.subr.mxu0 0.0
  %3446 = vmatpush1.xpose.msra.mxu0 0.0
  %3447 = vmatprep.subr.mxu0 0.0
  %3448 = vmatpush1.xpose.msra.mxu0 0.0
  %3449 = vmatprep.subr.mxu0 0.0
  %3450 = vmatpush1.xpose.msra.mxu0 0.0
  %3451 = vmatprep.subr.mxu0 0.0
  %3452 = vmatpush1.xpose.msra.mxu0 0.0
  %3453 = vmatprep.subr.mxu0 0.0
  %3454 = vmatpush1.xpose.msra.mxu0 0.0
  %3455 = vmatprep.subr.mxu0 0.0
  %3456 = vmatpush1.xpose.msra.mxu0 0.0
  %3457 = vmatprep.subr.mxu0 0.0
  %3458 = vmatpush1.xpose.msra.mxu0 0.0
  %3459 = vmatprep.subr.mxu0 0.0
  %3460 = vmatpush1.xpose.msra.mxu0 0.0
  %3461 = vmatprep.subr.mxu0 0.0
  %3462 = vmatpush1.xpose.msra.mxu0 0.0
  %3463 = vmatprep.subr.mxu0 0.0
  %3464 = vmatpush1.xpose.msra.mxu0 0.0
  %3465 = vmatprep.subr.mxu0 0.0
  %3466 = vmatpush1.xpose.msra.mxu0 0.0
  %3467 = vmatprep.subr.mxu0 0.0
  %3468 = vmatpush1.xpose.msra.mxu0 0.0
  %3469 = vmatprep.subr.mxu0 0.0
  %3470 = vmatpush1.xpose.msra.mxu0 0.0
  %3471 = vmatprep.subr.mxu0 0.0
  %3472 = vmatpush1.xpose.msra.mxu0 0.0
  %3473 = vmatprep.subr.mxu0 0.0
  %3474 = vmatpush1.xpose.msra.mxu0 0.0
  %3475 = vmatprep.subr.mxu0 0.0
  %3476 = vmatpush1.xpose.msra.mxu0 0.0
  %3477 = vmatprep.subr.mxu0 0.0
  %3478 = vmatpush1.xpose.msra.mxu0 0.0
  %3479 = vmatprep.subr.mxu0 0.0
  %3480 = vmatpush1.xpose.msra.mxu0 0.0
  %3481 = vmatprep.subr.mxu0 0.0
  %3482 = vmatpush1.xpose.msra.mxu0 0.0
  %3483 = vmatprep.subr.mxu0 0.0
  %3484 = vmatpush1.xpose.msra.mxu0 0.0
  %3485 = vmatprep.subr.mxu0 0.0
  %3486 = vmatpush1.xpose.msra.mxu0 0.0
  %3487 = vmatprep.subr.mxu0 0.0
  %3488 = vmatpush1.xpose.msra.mxu0 0.0
  %3489 = vmatprep.subr.mxu0 0.0
  %3490 = vmatpush1.xpose.msra.mxu0 0.0
  %3491 = vmatprep.subr.mxu0 0.0
  %3492 = vmatpush1.xpose.msra.mxu0 0.0
  %3493 = vmatprep.subr.mxu0 0.0
  %3494 = vmatpush1.xpose.msra.mxu0 0.0
  %3495 = vmatprep.subr.mxu0 0.0
  %3496 = vmatpush1.xpose.msra.mxu0 0.0
  %3497 = vmatprep.subr.mxu0 0.0
  %3498 = vmatpush1.xpose.msra.mxu0 0.0
  %3499 = vmatprep.subr.mxu0 0.0
  %3500 = vmatpush1.xpose.msra.mxu0 0.0
  %3501 = vmatprep.subr.mxu0 0.0
  %3502 = vmatpush1.xpose.msra.mxu0 0.0
  %3503 = vmatprep.mubr.f32.mxu0 0.0
  %3504 = vmatmul.mubr.f32.gmra.mrb[0].mxu0 %v3435
  %v3505 = vpop.f32.mrb[0].mxu0
  %v3506 = vadd.f32 %v3118, %v3505
  %v3507 = vpop.f32.mrb[0].mxu0
  %3508 = vdwg.mxu0
  %3509 = vrot.lane.b32.xlu0 %v245, 120
  %v3510 = vpop.permute.xlu0 %3509
  %3511 = vrot.lane.b32.xlu0 %v352, 120
  %v3512 = vpop.permute.xlu0 %3511
  %v3513 = vsel %vm555, %v3510, 0
  %v3515 = vsel %vm555, %v3512, 0
  %3517 = vmatprep.subr.mxu0 0.0
  %3518 = vmatpush1.xpose.msra.mxu0 %v3515
  %3519 = vmatprep.subr.mxu0 0.0
  %3520 = vmatpush1.xpose.msra.mxu0 0.0
  %3521 = vmatprep.subr.mxu0 0.0
  %3522 = vmatpush1.xpose.msra.mxu0 0.0
  %3523 = vmatprep.subr.mxu0 0.0
  %3524 = vmatpush1.xpose.msra.mxu0 0.0
  %3525 = vmatprep.subr.mxu0 0.0
  %3526 = vmatpush1.xpose.msra.mxu0 0.0
  %3527 = vmatprep.subr.mxu0 0.0
  %3528 = vmatpush1.xpose.msra.mxu0 0.0
  %3529 = vmatprep.subr.mxu0 0.0
  %3530 = vmatpush1.xpose.msra.mxu0 0.0
  %3531 = vmatprep.subr.mxu0 0.0
  %3532 = vmatpush1.xpose.msra.mxu0 0.0
  %3533 = vmatprep.subr.mxu0 0.0
  %3534 = vmatpush1.xpose.msra.mxu0 0.0
  %3535 = vmatprep.subr.mxu0 0.0
  %3536 = vmatpush1.xpose.msra.mxu0 0.0
  %3537 = vmatprep.subr.mxu0 0.0
  %3538 = vmatpush1.xpose.msra.mxu0 0.0
  %3539 = vmatprep.subr.mxu0 0.0
  %3540 = vmatpush1.xpose.msra.mxu0 0.0
  %3541 = vmatprep.subr.mxu0 0.0
  %3542 = vmatpush1.xpose.msra.mxu0 0.0
  %3543 = vmatprep.subr.mxu0 0.0
  %3544 = vmatpush1.xpose.msra.mxu0 0.0
  %3545 = vmatprep.subr.mxu0 0.0
  %3546 = vmatpush1.xpose.msra.mxu0 0.0
  %3547 = vmatprep.subr.mxu0 0.0
  %3548 = vmatpush1.xpose.msra.mxu0 0.0
  %3549 = vmatprep.subr.mxu0 0.0
  %3550 = vmatpush1.xpose.msra.mxu0 0.0
  %3551 = vmatprep.subr.mxu0 0.0
  %3552 = vmatpush1.xpose.msra.mxu0 0.0
  %3553 = vmatprep.subr.mxu0 0.0
  %3554 = vmatpush1.xpose.msra.mxu0 0.0
  %3555 = vmatprep.subr.mxu0 0.0
  %3556 = vmatpush1.xpose.msra.mxu0 0.0
  %3557 = vmatprep.subr.mxu0 0.0
  %3558 = vmatpush1.xpose.msra.mxu0 0.0
  %3559 = vmatprep.subr.mxu0 0.0
  %3560 = vmatpush1.xpose.msra.mxu0 0.0
  %3561 = vmatprep.subr.mxu0 0.0
  %3562 = vmatpush1.xpose.msra.mxu0 0.0
  %3563 = vmatprep.subr.mxu0 0.0
  %3564 = vmatpush1.xpose.msra.mxu0 0.0
  %3565 = vmatprep.subr.mxu0 0.0
  %3566 = vmatpush1.xpose.msra.mxu0 0.0
  %3567 = vmatprep.subr.mxu0 0.0
  %3568 = vmatpush1.xpose.msra.mxu0 0.0
  %3569 = vmatprep.subr.mxu0 0.0
  %3570 = vmatpush1.xpose.msra.mxu0 0.0
  %3571 = vmatprep.subr.mxu0 0.0
  %3572 = vmatpush1.xpose.msra.mxu0 0.0
  %3573 = vmatprep.subr.mxu0 0.0
  %3574 = vmatpush1.xpose.msra.mxu0 0.0
  %3575 = vmatprep.subr.mxu0 0.0
  %3576 = vmatpush1.xpose.msra.mxu0 0.0
  %3577 = vmatprep.subr.mxu0 0.0
  %3578 = vmatpush1.xpose.msra.mxu0 0.0
  %3579 = vmatprep.subr.mxu0 0.0
  %3580 = vmatpush1.xpose.msra.mxu0 0.0
  %3581 = vmatprep.mubr.f32.mxu0 0.0
  %3582 = vmatmul.mubr.f32.gmra.mrb[0].mxu0 %v3513
  %v3583 = vpop.f32.mrb[0].mxu0
  %v3584 = vadd.f32 %v3118, %v3583
  %v3585 = vpop.f32.mrb[0].mxu0
  %3586 = vdwg.mxu0
  %3587 = vrot.lane.b32.xlu0 %v246, 120
  %v3588 = vpop.permute.xlu0 %3587
  %3589 = vrot.lane.b32.xlu0 %v357, 120
  %v3590 = vpop.permute.xlu0 %3589
  %v3591 = vsel %vm555, %v3588, 0
  %v3593 = vsel %vm555, %v3590, 0
  %3595 = vmatprep.subr.mxu0 0.0
  %3596 = vmatpush1.xpose.msra.mxu0 %v3593
  %3597 = vmatprep.subr.mxu0 0.0
  %3598 = vmatpush1.xpose.msra.mxu0 0.0
  %3599 = vmatprep.subr.mxu0 0.0
  %3600 = vmatpush1.xpose.msra.mxu0 0.0
  %3601 = vmatprep.subr.mxu0 0.0
  %3602 = vmatpush1.xpose.msra.mxu0 0.0
  %3603 = vmatprep.subr.mxu0 0.0
  %3604 = vmatpush1.xpose.msra.mxu0 0.0
  %3605 = vmatprep.subr.mxu0 0.0
  %3606 = vmatpush1.xpose.msra.mxu0 0.0
  %3607 = vmatprep.subr.mxu0 0.0
  %3608 = vmatpush1.xpose.msra.mxu0 0.0
  %3609 = vmatprep.subr.mxu0 0.0
  %3610 = vmatpush1.xpose.msra.mxu0 0.0
  %3611 = vmatprep.subr.mxu0 0.0
  %3612 = vmatpush1.xpose.msra.mxu0 0.0
  %3613 = vmatprep.subr.mxu0 0.0
  %3614 = vmatpush1.xpose.msra.mxu0 0.0
  %3615 = vmatprep.subr.mxu0 0.0
  %3616 = vmatpush1.xpose.msra.mxu0 0.0
  %3617 = vmatprep.subr.mxu0 0.0
  %3618 = vmatpush1.xpose.msra.mxu0 0.0
  %3619 = vmatprep.subr.mxu0 0.0
  %3620 = vmatpush1.xpose.msra.mxu0 0.0
  %3621 = vmatprep.subr.mxu0 0.0
  %3622 = vmatpush1.xpose.msra.mxu0 0.0
  %3623 = vmatprep.subr.mxu0 0.0
  %3624 = vmatpush1.xpose.msra.mxu0 0.0
  %3625 = vmatprep.subr.mxu0 0.0
  %3626 = vmatpush1.xpose.msra.mxu0 0.0
  %3627 = vmatprep.subr.mxu0 0.0
  %3628 = vmatpush1.xpose.msra.mxu0 0.0
  %3629 = vmatprep.subr.mxu0 0.0
  %3630 = vmatpush1.xpose.msra.mxu0 0.0
  %3631 = vmatprep.subr.mxu0 0.0
  %3632 = vmatpush1.xpose.msra.mxu0 0.0
  %3633 = vmatprep.subr.mxu0 0.0
  %3634 = vmatpush1.xpose.msra.mxu0 0.0
  %3635 = vmatprep.subr.mxu0 0.0
  %3636 = vmatpush1.xpose.msra.mxu0 0.0
  %3637 = vmatprep.subr.mxu0 0.0
  %3638 = vmatpush1.xpose.msra.mxu0 0.0
  %3639 = vmatprep.subr.mxu0 0.0
  %3640 = vmatpush1.xpose.msra.mxu0 0.0
  %3641 = vmatprep.subr.mxu0 0.0
  %3642 = vmatpush1.xpose.msra.mxu0 0.0
  %3643 = vmatprep.subr.mxu0 0.0
  %3644 = vmatpush1.xpose.msra.mxu0 0.0
  %3645 = vmatprep.subr.mxu0 0.0
  %3646 = vmatpush1.xpose.msra.mxu0 0.0
  %3647 = vmatprep.subr.mxu0 0.0
  %3648 = vmatpush1.xpose.msra.mxu0 0.0
  %3649 = vmatprep.subr.mxu0 0.0
  %3650 = vmatpush1.xpose.msra.mxu0 0.0
  %3651 = vmatprep.subr.mxu0 0.0
  %3652 = vmatpush1.xpose.msra.mxu0 0.0
  %3653 = vmatprep.subr.mxu0 0.0
  %3654 = vmatpush1.xpose.msra.mxu0 0.0
  %3655 = vmatprep.subr.mxu0 0.0
  %3656 = vmatpush1.xpose.msra.mxu0 0.0
  %3657 = vmatprep.subr.mxu0 0.0
  %3658 = vmatpush1.xpose.msra.mxu0 0.0
  %3659 = vmatprep.mubr.f32.mxu0 0.0
  %3660 = vmatmul.mubr.f32.gmra.mrb[0].mxu0 %v3591
  %v3661 = vpop.f32.mrb[0].mxu0
  %v3662 = vadd.f32 %v3118, %v3661
  %v3663 = vpop.f32.mrb[0].mxu0
  %3664 = vdwg.mxu0
  %3665 = vrot.lane.b32.xlu0 %v247, 120
  %v3666 = vpop.permute.xlu0 %3665
  %3667 = vrot.lane.b32.xlu0 %v362, 120
  %v3668 = vpop.permute.xlu0 %3667
  %v3669 = vsel %vm555, %v3666, 0
  %v3671 = vsel %vm555, %v3668, 0
  %3673 = vmatprep.subr.mxu0 0.0
  %3674 = vmatpush1.xpose.msra.mxu0 %v3671
  %3675 = vmatprep.subr.mxu0 0.0
  %3676 = vmatpush1.xpose.msra.mxu0 0.0
  %3677 = vmatprep.subr.mxu0 0.0
  %3678 = vmatpush1.xpose.msra.mxu0 0.0
  %3679 = vmatprep.subr.mxu0 0.0
  %3680 = vmatpush1.xpose.msra.mxu0 0.0
  %3681 = vmatprep.subr.mxu0 0.0
  %3682 = vmatpush1.xpose.msra.mxu0 0.0
  %3683 = vmatprep.subr.mxu0 0.0
  %3684 = vmatpush1.xpose.msra.mxu0 0.0
  %3685 = vmatprep.subr.mxu0 0.0
  %3686 = vmatpush1.xpose.msra.mxu0 0.0
  %3687 = vmatprep.subr.mxu0 0.0
  %3688 = vmatpush1.xpose.msra.mxu0 0.0
  %3689 = vmatprep.subr.mxu0 0.0
  %3690 = vmatpush1.xpose.msra.mxu0 0.0
  %3691 = vmatprep.subr.mxu0 0.0
  %3692 = vmatpush1.xpose.msra.mxu0 0.0
  %3693 = vmatprep.subr.mxu0 0.0
  %3694 = vmatpush1.xpose.msra.mxu0 0.0
  %3695 = vmatprep.subr.mxu0 0.0
  %3696 = vmatpush1.xpose.msra.mxu0 0.0
  %3697 = vmatprep.subr.mxu0 0.0
  %3698 = vmatpush1.xpose.msra.mxu0 0.0
  %3699 = vmatprep.subr.mxu0 0.0
  %3700 = vmatpush1.xpose.msra.mxu0 0.0
  %3701 = vmatprep.subr.mxu0 0.0
  %3702 = vmatpush1.xpose.msra.mxu0 0.0
  %3703 = vmatprep.subr.mxu0 0.0
  %3704 = vmatpush1.xpose.msra.mxu0 0.0
  %3705 = vmatprep.subr.mxu0 0.0
  %3706 = vmatpush1.xpose.msra.mxu0 0.0
  %3707 = vmatprep.subr.mxu0 0.0
  %3708 = vmatpush1.xpose.msra.mxu0 0.0
  %3709 = vmatprep.subr.mxu0 0.0
  %3710 = vmatpush1.xpose.msra.mxu0 0.0
  %3711 = vmatprep.subr.mxu0 0.0
  %3712 = vmatpush1.xpose.msra.mxu0 0.0
  %3713 = vmatprep.subr.mxu0 0.0
  %3714 = vmatpush1.xpose.msra.mxu0 0.0
  %3715 = vmatprep.subr.mxu0 0.0
  %3716 = vmatpush1.xpose.msra.mxu0 0.0
  %3717 = vmatprep.subr.mxu0 0.0
  %3718 = vmatpush1.xpose.msra.mxu0 0.0
  %3719 = vmatprep.subr.mxu0 0.0
  %3720 = vmatpush1.xpose.msra.mxu0 0.0
  %3721 = vmatprep.subr.mxu0 0.0
  %3722 = vmatpush1.xpose.msra.mxu0 0.0
  %3723 = vmatprep.subr.mxu0 0.0
  %3724 = vmatpush1.xpose.msra.mxu0 0.0
  %3725 = vmatprep.subr.mxu0 0.0
  %3726 = vmatpush1.xpose.msra.mxu0 0.0
  %3727 = vmatprep.subr.mxu0 0.0
  %3728 = vmatpush1.xpose.msra.mxu0 0.0
  %3729 = vmatprep.subr.mxu0 0.0
  %3730 = vmatpush1.xpose.msra.mxu0 0.0
  %3731 = vmatprep.subr.mxu0 0.0
  %3732 = vmatpush1.xpose.msra.mxu0 0.0
  %3733 = vmatprep.subr.mxu0 0.0
  %3734 = vmatpush1.xpose.msra.mxu0 0.0
  %3735 = vmatprep.subr.mxu0 0.0
  %3736 = vmatpush1.xpose.msra.mxu0 0.0
  %3737 = vmatprep.mubr.f32.mxu0 0.0
  %3738 = vmatmul.mubr.f32.gmra.mrb[0].mxu0 %v3669
  %v3739 = vpop.f32.mrb[0].mxu0
  %v3740 = vadd.f32 %v3118, %v3739
  %v3741 = vpop.f32.mrb[0].mxu0
  %3742 = vdwg.mxu0
  %3743 = vrot.lane.b32.xlu0 %v248, 120
  %v3744 = vpop.permute.xlu0 %3743
  %3745 = vrot.lane.b32.xlu0 %v367, 120
  %v3746 = vpop.permute.xlu0 %3745
  %v3747 = vsel %vm555, %v3744, 0
  %v3749 = vsel %vm555, %v3746, 0
  %3751 = vmatprep.subr.mxu0 0.0
  %3752 = vmatpush1.xpose.msra.mxu0 %v3749
  %3753 = vmatprep.subr.mxu0 0.0
  %3754 = vmatpush1.xpose.msra.mxu0 0.0
  %3755 = vmatprep.subr.mxu0 0.0
  %3756 = vmatpush1.xpose.msra.mxu0 0.0
  %3757 = vmatprep.subr.mxu0 0.0
  %3758 = vmatpush1.xpose.msra.mxu0 0.0
  %3759 = vmatprep.subr.mxu0 0.0
  %3760 = vmatpush1.xpose.msra.mxu0 0.0
  %3761 = vmatprep.subr.mxu0 0.0
  %3762 = vmatpush1.xpose.msra.mxu0 0.0
  %3763 = vmatprep.subr.mxu0 0.0
  %3764 = vmatpush1.xpose.msra.mxu0 0.0
  %3765 = vmatprep.subr.mxu0 0.0
  %3766 = vmatpush1.xpose.msra.mxu0 0.0
  %3767 = vmatprep.subr.mxu0 0.0
  %3768 = vmatpush1.xpose.msra.mxu0 0.0
  %3769 = vmatprep.subr.mxu0 0.0
  %3770 = vmatpush1.xpose.msra.mxu0 0.0
  %3771 = vmatprep.subr.mxu0 0.0
  %3772 = vmatpush1.xpose.msra.mxu0 0.0
  %3773 = vmatprep.subr.mxu0 0.0
  %3774 = vmatpush1.xpose.msra.mxu0 0.0
  %3775 = vmatprep.subr.mxu0 0.0
  %3776 = vmatpush1.xpose.msra.mxu0 0.0
  %3777 = vmatprep.subr.mxu0 0.0
  %3778 = vmatpush1.xpose.msra.mxu0 0.0
  %3779 = vmatprep.subr.mxu0 0.0
  %3780 = vmatpush1.xpose.msra.mxu0 0.0
  %3781 = vmatprep.subr.mxu0 0.0
  %3782 = vmatpush1.xpose.msra.mxu0 0.0
  %3783 = vmatprep.subr.mxu0 0.0
  %3784 = vmatpush1.xpose.msra.mxu0 0.0
  %3785 = vmatprep.subr.mxu0 0.0
  %3786 = vmatpush1.xpose.msra.mxu0 0.0
  %3787 = vmatprep.subr.mxu0 0.0
  %3788 = vmatpush1.xpose.msra.mxu0 0.0
  %3789 = vmatprep.subr.mxu0 0.0
  %3790 = vmatpush1.xpose.msra.mxu0 0.0
  %3791 = vmatprep.subr.mxu0 0.0
  %3792 = vmatpush1.xpose.msra.mxu0 0.0
  %3793 = vmatprep.subr.mxu0 0.0
  %3794 = vmatpush1.xpose.msra.mxu0 0.0
  %3795 = vmatprep.subr.mxu0 0.0
  %3796 = vmatpush1.xpose.msra.mxu0 0.0
  %3797 = vmatprep.subr.mxu0 0.0
  %3798 = vmatpush1.xpose.msra.mxu0 0.0
  %3799 = vmatprep.subr.mxu0 0.0
  %3800 = vmatpush1.xpose.msra.mxu0 0.0
  %3801 = vmatprep.subr.mxu0 0.0
  %3802 = vmatpush1.xpose.msra.mxu0 0.0
  %3803 = vmatprep.subr.mxu0 0.0
  %3804 = vmatpush1.xpose.msra.mxu0 0.0
  %3805 = vmatprep.subr.mxu0 0.0
  %3806 = vmatpush1.xpose.msra.mxu0 0.0
  %3807 = vmatprep.subr.mxu0 0.0
  %3808 = vmatpush1.xpose.msra.mxu0 0.0
  %3809 = vmatprep.subr.mxu0 0.0
  %3810 = vmatpush1.xpose.msra.mxu0 0.0
  %3811 = vmatprep.subr.mxu0 0.0
  %3812 = vmatpush1.xpose.msra.mxu0 0.0
  %3813 = vmatprep.subr.mxu0 0.0
  %3814 = vmatpush1.xpose.msra.mxu0 0.0
  %3815 = vmatprep.mubr.f32.mxu0 0.0
  %3816 = vmatmul.mubr.f32.gmra.mrb[0].mxu0 %v3747
  %v3817 = vpop.f32.mrb[0].mxu0
  %v3818 = vadd.f32 %v3118, %v3817
  %v3819 = vpop.f32.mrb[0].mxu0
  %3820 = vdwg.mxu0
  %3821 = vrot.lane.b32.xlu0 %v249, 120
  %v3822 = vpop.permute.xlu0 %3821
  %3823 = vrot.lane.b32.xlu0 %v372, 120
  %v3824 = vpop.permute.xlu0 %3823
  %v3825 = vsel %vm555, %v3822, 0
  %v3827 = vsel %vm555, %v3824, 0
  %3829 = vmatprep.subr.mxu0 0.0
  %3830 = vmatpush1.xpose.msra.mxu0 %v3827
  %3831 = vmatprep.subr.mxu0 0.0
  %3832 = vmatpush1.xpose.msra.mxu0 0.0
  %3833 = vmatprep.subr.mxu0 0.0
  %3834 = vmatpush1.xpose.msra.mxu0 0.0
  %3835 = vmatprep.subr.mxu0 0.0
  %3836 = vmatpush1.xpose.msra.mxu0 0.0
  %3837 = vmatprep.subr.mxu0 0.0
  %3838 = vmatpush1.xpose.msra.mxu0 0.0
  %3839 = vmatprep.subr.mxu0 0.0
  %3840 = vmatpush1.xpose.msra.mxu0 0.0
  %3841 = vmatprep.subr.mxu0 0.0
  %3842 = vmatpush1.xpose.msra.mxu0 0.0
  %3843 = vmatprep.subr.mxu0 0.0
  %3844 = vmatpush1.xpose.msra.mxu0 0.0
  %3845 = vmatprep.subr.mxu0 0.0
  %3846 = vmatpush1.xpose.msra.mxu0 0.0
  %3847 = vmatprep.subr.mxu0 0.0
  %3848 = vmatpush1.xpose.msra.mxu0 0.0
  %3849 = vmatprep.subr.mxu0 0.0
  %3850 = vmatpush1.xpose.msra.mxu0 0.0
  %3851 = vmatprep.subr.mxu0 0.0
  %3852 = vmatpush1.xpose.msra.mxu0 0.0
  %3853 = vmatprep.subr.mxu0 0.0
  %3854 = vmatpush1.xpose.msra.mxu0 0.0
  %3855 = vmatprep.subr.mxu0 0.0
  %3856 = vmatpush1.xpose.msra.mxu0 0.0
  %3857 = vmatprep.subr.mxu0 0.0
  %3858 = vmatpush1.xpose.msra.mxu0 0.0
  %3859 = vmatprep.subr.mxu0 0.0
  %3860 = vmatpush1.xpose.msra.mxu0 0.0
  %3861 = vmatprep.subr.mxu0 0.0
  %3862 = vmatpush1.xpose.msra.mxu0 0.0
  %3863 = vmatprep.subr.mxu0 0.0
  %3864 = vmatpush1.xpose.msra.mxu0 0.0
  %3865 = vmatprep.subr.mxu0 0.0
  %3866 = vmatpush1.xpose.msra.mxu0 0.0
  %3867 = vmatprep.subr.mxu0 0.0
  %3868 = vmatpush1.xpose.msra.mxu0 0.0
  %3869 = vmatprep.subr.mxu0 0.0
  %3870 = vmatpush1.xpose.msra.mxu0 0.0
  %3871 = vmatprep.subr.mxu0 0.0
  %3872 = vmatpush1.xpose.msra.mxu0 0.0
  %3873 = vmatprep.subr.mxu0 0.0
  %3874 = vmatpush1.xpose.msra.mxu0 0.0
  %3875 = vmatprep.subr.mxu0 0.0
  %3876 = vmatpush1.xpose.msra.mxu0 0.0
  %3877 = vmatprep.subr.mxu0 0.0
  %3878 = vmatpush1.xpose.msra.mxu0 0.0
  %3879 = vmatprep.subr.mxu0 0.0
  %3880 = vmatpush1.xpose.msra.mxu0 0.0
  %3881 = vmatprep.subr.mxu0 0.0
  %3882 = vmatpush1.xpose.msra.mxu0 0.0
  %3883 = vmatprep.subr.mxu0 0.0
  %3884 = vmatpush1.xpose.msra.mxu0 0.0
  %3885 = vmatprep.subr.mxu0 0.0
  %3886 = vmatpush1.xpose.msra.mxu0 0.0
  %3887 = vmatprep.subr.mxu0 0.0
  %3888 = vmatpush1.xpose.msra.mxu0 0.0
  %3889 = vmatprep.subr.mxu0 0.0
  %3890 = vmatpush1.xpose.msra.mxu0 0.0
  %3891 = vmatprep.subr.mxu0 0.0
  %3892 = vmatpush1.xpose.msra.mxu0 0.0
  %3893 = vmatprep.mubr.f32.mxu0 0.0
  %3894 = vmatmul.mubr.f32.gmra.mrb[0].mxu0 %v3825
  %v3895 = vpop.f32.mrb[0].mxu0
  %v3896 = vadd.f32 %v3118, %v3895
  %v3897 = vpop.f32.mrb[0].mxu0
  %3898 = vdwg.mxu0
  %3899 = vrot.lane.b32.xlu0 %v250, 120
  %v3900 = vpop.permute.xlu0 %3899
  %3901 = vrot.lane.b32.xlu0 %v377, 120
  %v3902 = vpop.permute.xlu0 %3901
  %v3903 = vsel %vm555, %v3900, 0
  %v3905 = vsel %vm555, %v3902, 0
  %3907 = vmatprep.subr.mxu0 0.0
  %3908 = vmatpush1.xpose.msra.mxu0 %v3905
  %3909 = vmatprep.subr.mxu0 0.0
  %3910 = vmatpush1.xpose.msra.mxu0 0.0
  %3911 = vmatprep.subr.mxu0 0.0
  %3912 = vmatpush1.xpose.msra.mxu0 0.0
  %3913 = vmatprep.subr.mxu0 0.0
  %3914 = vmatpush1.xpose.msra.mxu0 0.0
  %3915 = vmatprep.subr.mxu0 0.0
  %3916 = vmatpush1.xpose.msra.mxu0 0.0
  %3917 = vmatprep.subr.mxu0 0.0
  %3918 = vmatpush1.xpose.msra.mxu0 0.0
  %3919 = vmatprep.subr.mxu0 0.0
  %3920 = vmatpush1.xpose.msra.mxu0 0.0
  %3921 = vmatprep.subr.mxu0 0.0
  %3922 = vmatpush1.xpose.msra.mxu0 0.0
  %3923 = vmatprep.subr.mxu0 0.0
  %3924 = vmatpush1.xpose.msra.mxu0 0.0
  %3925 = vmatprep.subr.mxu0 0.0
  %3926 = vmatpush1.xpose.msra.mxu0 0.0
  %3927 = vmatprep.subr.mxu0 0.0
  %3928 = vmatpush1.xpose.msra.mxu0 0.0
  %3929 = vmatprep.subr.mxu0 0.0
  %3930 = vmatpush1.xpose.msra.mxu0 0.0
  %3931 = vmatprep.subr.mxu0 0.0
  %3932 = vmatpush1.xpose.msra.mxu0 0.0
  %3933 = vmatprep.subr.mxu0 0.0
  %3934 = vmatpush1.xpose.msra.mxu0 0.0
  %3935 = vmatprep.subr.mxu0 0.0
  %3936 = vmatpush1.xpose.msra.mxu0 0.0
  %3937 = vmatprep.subr.mxu0 0.0
  %3938 = vmatpush1.xpose.msra.mxu0 0.0
  %3939 = vmatprep.subr.mxu0 0.0
  %3940 = vmatpush1.xpose.msra.mxu0 0.0
  %3941 = vmatprep.subr.mxu0 0.0
  %3942 = vmatpush1.xpose.msra.mxu0 0.0
  %3943 = vmatprep.subr.mxu0 0.0
  %3944 = vmatpush1.xpose.msra.mxu0 0.0
  %3945 = vmatprep.subr.mxu0 0.0
  %3946 = vmatpush1.xpose.msra.mxu0 0.0
  %3947 = vmatprep.subr.mxu0 0.0
  %3948 = vmatpush1.xpose.msra.mxu0 0.0
  %3949 = vmatprep.subr.mxu0 0.0
  %3950 = vmatpush1.xpose.msra.mxu0 0.0
  %3951 = vmatprep.subr.mxu0 0.0
  %3952 = vmatpush1.xpose.msra.mxu0 0.0
  %3953 = vmatprep.subr.mxu0 0.0
  %3954 = vmatpush1.xpose.msra.mxu0 0.0
  %3955 = vmatprep.subr.mxu0 0.0
  %3956 = vmatpush1.xpose.msra.mxu0 0.0
  %3957 = vmatprep.subr.mxu0 0.0
  %3958 = vmatpush1.xpose.msra.mxu0 0.0
  %3959 = vmatprep.subr.mxu0 0.0
  %3960 = vmatpush1.xpose.msra.mxu0 0.0
  %3961 = vmatprep.subr.mxu0 0.0
  %3962 = vmatpush1.xpose.msra.mxu0 0.0
  %3963 = vmatprep.subr.mxu0 0.0
  %3964 = vmatpush1.xpose.msra.mxu0 0.0
  %3965 = vmatprep.subr.mxu0 0.0
  %3966 = vmatpush1.xpose.msra.mxu0 0.0
  %3967 = vmatprep.subr.mxu0 0.0
  %3968 = vmatpush1.xpose.msra.mxu0 0.0
  %3969 = vmatprep.subr.mxu0 0.0
  %3970 = vmatpush1.xpose.msra.mxu0 0.0
  %3971 = vmatprep.mubr.f32.mxu0 0.0
  %3972 = vmatmul.mubr.f32.gmra.mrb[0].mxu0 %v3903
  %v3973 = vpop.f32.mrb[0].mxu0
  %v3974 = vadd.f32 %v3118, %v3973
  %v3975 = vpop.f32.mrb[0].mxu0
  %3976 = vdwg.mxu0
  %3977 = vrot.lane.b32.xlu0 %v251, 120
  %v3978 = vpop.permute.xlu0 %3977
  %3979 = vrot.lane.b32.xlu0 %v382, 120
  %v3980 = vpop.permute.xlu0 %3979
  %v3981 = vsel %vm555, %v3978, 0
  %v3983 = vsel %vm555, %v3980, 0
  %3985 = vmatprep.subr.mxu0 0.0
  %3986 = vmatpush1.xpose.msra.mxu0 %v3983
  %3987 = vmatprep.subr.mxu0 0.0
  %3988 = vmatpush1.xpose.msra.mxu0 0.0
  %3989 = vmatprep.subr.mxu0 0.0
  %3990 = vmatpush1.xpose.msra.mxu0 0.0
  %3991 = vmatprep.subr.mxu0 0.0
  %3992 = vmatpush1.xpose.msra.mxu0 0.0
  %3993 = vmatprep.subr.mxu0 0.0
  %3994 = vmatpush1.xpose.msra.mxu0 0.0
  %3995 = vmatprep.subr.mxu0 0.0
  %3996 = vmatpush1.xpose.msra.mxu0 0.0
  %3997 = vmatprep.subr.mxu0 0.0
  %3998 = vmatpush1.xpose.msra.mxu0 0.0
  %3999 = vmatprep.subr.mxu0 0.0
  %4000 = vmatpush1.xpose.msra.mxu0 0.0
  %4001 = vmatprep.subr.mxu0 0.0
  %4002 = vmatpush1.xpose.msra.mxu0 0.0
  %4003 = vmatprep.subr.mxu0 0.0
  %4004 = vmatpush1.xpose.msra.mxu0 0.0
  %4005 = vmatprep.subr.mxu0 0.0
  %4006 = vmatpush1.xpose.msra.mxu0 0.0
  %4007 = vmatprep.subr.mxu0 0.0
  %4008 = vmatpush1.xpose.msra.mxu0 0.0
  %4009 = vmatprep.subr.mxu0 0.0
  %4010 = vmatpush1.xpose.msra.mxu0 0.0
  %4011 = vmatprep.subr.mxu0 0.0
  %4012 = vmatpush1.xpose.msra.mxu0 0.0
  %4013 = vmatprep.subr.mxu0 0.0
  %4014 = vmatpush1.xpose.msra.mxu0 0.0
  %4015 = vmatprep.subr.mxu0 0.0
  %4016 = vmatpush1.xpose.msra.mxu0 0.0
  %4017 = vmatprep.subr.mxu0 0.0
  %4018 = vmatpush1.xpose.msra.mxu0 0.0
  %4019 = vmatprep.subr.mxu0 0.0
  %4020 = vmatpush1.xpose.msra.mxu0 0.0
  %4021 = vmatprep.subr.mxu0 0.0
  %4022 = vmatpush1.xpose.msra.mxu0 0.0
  %4023 = vmatprep.subr.mxu0 0.0
  %4024 = vmatpush1.xpose.msra.mxu0 0.0
  %4025 = vmatprep.subr.mxu0 0.0
  %4026 = vmatpush1.xpose.msra.mxu0 0.0
  %4027 = vmatprep.subr.mxu0 0.0
  %4028 = vmatpush1.xpose.msra.mxu0 0.0
  %4029 = vmatprep.subr.mxu0 0.0
  %4030 = vmatpush1.xpose.msra.mxu0 0.0
  %4031 = vmatprep.subr.mxu0 0.0
  %4032 = vmatpush1.xpose.msra.mxu0 0.0
  %4033 = vmatprep.subr.mxu0 0.0
  %4034 = vmatpush1.xpose.msra.mxu0 0.0
  %4035 = vmatprep.subr.mxu0 0.0
  %4036 = vmatpush1.xpose.msra.mxu0 0.0
  %4037 = vmatprep.subr.mxu0 0.0
  %4038 = vmatpush1.xpose.msra.mxu0 0.0
  %4039 = vmatprep.subr.mxu0 0.0
  %4040 = vmatpush1.xpose.msra.mxu0 0.0
  %4041 = vmatprep.subr.mxu0 0.0
  %4042 = vmatpush1.xpose.msra.mxu0 0.0
  %4043 = vmatprep.subr.mxu0 0.0
  %4044 = vmatpush1.xpose.msra.mxu0 0.0
  %4045 = vmatprep.subr.mxu0 0.0
  %4046 = vmatpush1.xpose.msra.mxu0 0.0
  %4047 = vmatprep.subr.mxu0 0.0
  %4048 = vmatpush1.xpose.msra.mxu0 0.0
  %4049 = vmatprep.mubr.f32.mxu0 0.0
  %4050 = vmatmul.mubr.f32.gmra.mrb[0].mxu0 %v3981
  %v4051 = vpop.f32.mrb[0].mxu0
  %v4052 = vadd.f32 %v3118, %v4051
  %v4053 = vpop.f32.mrb[0].mxu0
  %4054 = vdwg.mxu0
  %4055 = vrot.lane.b32.xlu0 %v252, 120
  %v4056 = vpop.permute.xlu0 %4055
  %4057 = vrot.lane.b32.xlu0 %v387, 120
  %v4058 = vpop.permute.xlu0 %4057
  %v4059 = vsel %vm555, %v4056, 0
  %v4061 = vsel %vm555, %v4058, 0
  %4063 = vmatprep.subr.mxu0 0.0
  %4064 = vmatpush1.xpose.msra.mxu0 %v4061
  %4065 = vmatprep.subr.mxu0 0.0
  %4066 = vmatpush1.xpose.msra.mxu0 0.0
  %4067 = vmatprep.subr.mxu0 0.0
  %4068 = vmatpush1.xpose.msra.mxu0 0.0
  %4069 = vmatprep.subr.mxu0 0.0
  %4070 = vmatpush1.xpose.msra.mxu0 0.0
  %4071 = vmatprep.subr.mxu0 0.0
  %4072 = vmatpush1.xpose.msra.mxu0 0.0
  %4073 = vmatprep.subr.mxu0 0.0
  %4074 = vmatpush1.xpose.msra.mxu0 0.0
  %4075 = vmatprep.subr.mxu0 0.0
  %4076 = vmatpush1.xpose.msra.mxu0 0.0
  %4077 = vmatprep.subr.mxu0 0.0
  %4078 = vmatpush1.xpose.msra.mxu0 0.0
  %4079 = vmatprep.subr.mxu0 0.0
  %4080 = vmatpush1.xpose.msra.mxu0 0.0
  %4081 = vmatprep.subr.mxu0 0.0
  %4082 = vmatpush1.xpose.msra.mxu0 0.0
  %4083 = vmatprep.subr.mxu0 0.0
  %4084 = vmatpush1.xpose.msra.mxu0 0.0
  %4085 = vmatprep.subr.mxu0 0.0
  %4086 = vmatpush1.xpose.msra.mxu0 0.0
  %4087 = vmatprep.subr.mxu0 0.0
  %4088 = vmatpush1.xpose.msra.mxu0 0.0
  %4089 = vmatprep.subr.mxu0 0.0
  %4090 = vmatpush1.xpose.msra.mxu0 0.0
  %4091 = vmatprep.subr.mxu0 0.0
  %4092 = vmatpush1.xpose.msra.mxu0 0.0
  %4093 = vmatprep.subr.mxu0 0.0
  %4094 = vmatpush1.xpose.msra.mxu0 0.0
  %4095 = vmatprep.subr.mxu0 0.0
  %4096 = vmatpush1.xpose.msra.mxu0 0.0
  %4097 = vmatprep.subr.mxu0 0.0
  %4098 = vmatpush1.xpose.msra.mxu0 0.0
  %4099 = vmatprep.subr.mxu0 0.0
  %4100 = vmatpush1.xpose.msra.mxu0 0.0
  %4101 = vmatprep.subr.mxu0 0.0
  %4102 = vmatpush1.xpose.msra.mxu0 0.0
  %4103 = vmatprep.subr.mxu0 0.0
  %4104 = vmatpush1.xpose.msra.mxu0 0.0
  %4105 = vmatprep.subr.mxu0 0.0
  %4106 = vmatpush1.xpose.msra.mxu0 0.0
  %4107 = vmatprep.subr.mxu0 0.0
  %4108 = vmatpush1.xpose.msra.mxu0 0.0
  %4109 = vmatprep.subr.mxu0 0.0
  %4110 = vmatpush1.xpose.msra.mxu0 0.0
  %4111 = vmatprep.subr.mxu0 0.0
  %4112 = vmatpush1.xpose.msra.mxu0 0.0
  %4113 = vmatprep.subr.mxu0 0.0
  %4114 = vmatpush1.xpose.msra.mxu0 0.0
  %4115 = vmatprep.subr.mxu0 0.0
  %4116 = vmatpush1.xpose.msra.mxu0 0.0
  %4117 = vmatprep.subr.mxu0 0.0
  %4118 = vmatpush1.xpose.msra.mxu0 0.0
  %4119 = vmatprep.subr.mxu0 0.0
  %4120 = vmatpush1.xpose.msra.mxu0 0.0
  %4121 = vmatprep.subr.mxu0 0.0
  %4122 = vmatpush1.xpose.msra.mxu0 0.0
  %4123 = vmatprep.subr.mxu0 0.0
  %4124 = vmatpush1.xpose.msra.mxu0 0.0
  %4125 = vmatprep.subr.mxu0 0.0
  %4126 = vmatpush1.xpose.msra.mxu0 0.0
  %4127 = vmatprep.mubr.f32.mxu0 0.0
  %4128 = vmatmul.mubr.f32.gmra.mrb[0].mxu0 %v4059
  %v4129 = vpop.f32.mrb[0].mxu0
  %v4130 = vadd.f32 %v3118, %v4129
  %v4131 = vpop.f32.mrb[0].mxu0
  %4132 = vdwg.mxu0
  %4133 = vrot.lane.b32.xlu0 %v253, 120
  %v4134 = vpop.permute.xlu0 %4133
  %4135 = vrot.lane.b32.xlu0 %v392, 120
  %v4136 = vpop.permute.xlu0 %4135
  %v4137 = vsel %vm555, %v4134, 0
  %v4139 = vsel %vm555, %v4136, 0
  %4141 = vmatprep.subr.mxu0 0.0
  %4142 = vmatpush1.xpose.msra.mxu0 %v4139
  %4143 = vmatprep.subr.mxu0 0.0
  %4144 = vmatpush1.xpose.msra.mxu0 0.0
  %4145 = vmatprep.subr.mxu0 0.0
  %4146 = vmatpush1.xpose.msra.mxu0 0.0
  %4147 = vmatprep.subr.mxu0 0.0
  %4148 = vmatpush1.xpose.msra.mxu0 0.0
  %4149 = vmatprep.subr.mxu0 0.0
  %4150 = vmatpush1.xpose.msra.mxu0 0.0
  %4151 = vmatprep.subr.mxu0 0.0
  %4152 = vmatpush1.xpose.msra.mxu0 0.0
  %4153 = vmatprep.subr.mxu0 0.0
  %4154 = vmatpush1.xpose.msra.mxu0 0.0
  %4155 = vmatprep.subr.mxu0 0.0
  %4156 = vmatpush1.xpose.msra.mxu0 0.0
  %4157 = vmatprep.subr.mxu0 0.0
  %4158 = vmatpush1.xpose.msra.mxu0 0.0
  %4159 = vmatprep.subr.mxu0 0.0
  %4160 = vmatpush1.xpose.msra.mxu0 0.0
  %4161 = vmatprep.subr.mxu0 0.0
  %4162 = vmatpush1.xpose.msra.mxu0 0.0
  %4163 = vmatprep.subr.mxu0 0.0
  %4164 = vmatpush1.xpose.msra.mxu0 0.0
  %4165 = vmatprep.subr.mxu0 0.0
  %4166 = vmatpush1.xpose.msra.mxu0 0.0
  %4167 = vmatprep.subr.mxu0 0.0
  %4168 = vmatpush1.xpose.msra.mxu0 0.0
  %4169 = vmatprep.subr.mxu0 0.0
  %4170 = vmatpush1.xpose.msra.mxu0 0.0
  %4171 = vmatprep.subr.mxu0 0.0
  %4172 = vmatpush1.xpose.msra.mxu0 0.0
  %4173 = vmatprep.subr.mxu0 0.0
  %4174 = vmatpush1.xpose.msra.mxu0 0.0
  %4175 = vmatprep.subr.mxu0 0.0
  %4176 = vmatpush1.xpose.msra.mxu0 0.0
  %4177 = vmatprep.subr.mxu0 0.0
  %4178 = vmatpush1.xpose.msra.mxu0 0.0
  %4179 = vmatprep.subr.mxu0 0.0
  %4180 = vmatpush1.xpose.msra.mxu0 0.0
  %4181 = vmatprep.subr.mxu0 0.0
  %4182 = vmatpush1.xpose.msra.mxu0 0.0
  %4183 = vmatprep.subr.mxu0 0.0
  %4184 = vmatpush1.xpose.msra.mxu0 0.0
  %4185 = vmatprep.subr.mxu0 0.0
  %4186 = vmatpush1.xpose.msra.mxu0 0.0
  %4187 = vmatprep.subr.mxu0 0.0
  %4188 = vmatpush1.xpose.msra.mxu0 0.0
  %4189 = vmatprep.subr.mxu0 0.0
  %4190 = vmatpush1.xpose.msra.mxu0 0.0
  %4191 = vmatprep.subr.mxu0 0.0
  %4192 = vmatpush1.xpose.msra.mxu0 0.0
  %4193 = vmatprep.subr.mxu0 0.0
  %4194 = vmatpush1.xpose.msra.mxu0 0.0
  %4195 = vmatprep.subr.mxu0 0.0
  %4196 = vmatpush1.xpose.msra.mxu0 0.0
  %4197 = vmatprep.subr.mxu0 0.0
  %4198 = vmatpush1.xpose.msra.mxu0 0.0
  %4199 = vmatprep.subr.mxu0 0.0
  %4200 = vmatpush1.xpose.msra.mxu0 0.0
  %4201 = vmatprep.subr.mxu0 0.0
  %4202 = vmatpush1.xpose.msra.mxu0 0.0
  %4203 = vmatprep.subr.mxu0 0.0
  %4204 = vmatpush1.xpose.msra.mxu0 0.0
  %4205 = vmatprep.mubr.f32.mxu0 0.0
  %4206 = vmatmul.mubr.f32.gmra.mrb[0].mxu0 %v4137
  %v4207 = vpop.f32.mrb[0].mxu0
  %v4208 = vadd.f32 %v3118, %v4207
  %v4209 = vpop.f32.mrb[0].mxu0
  %4210 = vdwg.mxu0
  %4211 = vrot.lane.b32.xlu0 %v254, 120
  %v4212 = vpop.permute.xlu0 %4211
  %4213 = vrot.lane.b32.xlu0 %v397, 120
  %v4214 = vpop.permute.xlu0 %4213
  %v4215 = vsel %vm555, %v4212, 0
  %v4217 = vsel %vm555, %v4214, 0
  %4219 = vmatprep.subr.mxu0 0.0
  %4220 = vmatpush1.xpose.msra.mxu0 %v4217
  %4221 = vmatprep.subr.mxu0 0.0
  %4222 = vmatpush1.xpose.msra.mxu0 0.0
  %4223 = vmatprep.subr.mxu0 0.0
  %4224 = vmatpush1.xpose.msra.mxu0 0.0
  %4225 = vmatprep.subr.mxu0 0.0
  %4226 = vmatpush1.xpose.msra.mxu0 0.0
  %4227 = vmatprep.subr.mxu0 0.0
  %4228 = vmatpush1.xpose.msra.mxu0 0.0
  %4229 = vmatprep.subr.mxu0 0.0
  %4230 = vmatpush1.xpose.msra.mxu0 0.0
  %4231 = vmatprep.subr.mxu0 0.0
  %4232 = vmatpush1.xpose.msra.mxu0 0.0
  %4233 = vmatprep.subr.mxu0 0.0
  %4234 = vmatpush1.xpose.msra.mxu0 0.0
  %4235 = vmatprep.subr.mxu0 0.0
  %4236 = vmatpush1.xpose.msra.mxu0 0.0
  %4237 = vmatprep.subr.mxu0 0.0
  %4238 = vmatpush1.xpose.msra.mxu0 0.0
  %4239 = vmatprep.subr.mxu0 0.0
  %4240 = vmatpush1.xpose.msra.mxu0 0.0
  %4241 = vmatprep.subr.mxu0 0.0
  %4242 = vmatpush1.xpose.msra.mxu0 0.0
  %4243 = vmatprep.subr.mxu0 0.0
  %4244 = vmatpush1.xpose.msra.mxu0 0.0
  %4245 = vmatprep.subr.mxu0 0.0
  %4246 = vmatpush1.xpose.msra.mxu0 0.0
  %4247 = vmatprep.subr.mxu0 0.0
  %4248 = vmatpush1.xpose.msra.mxu0 0.0
  %4249 = vmatprep.subr.mxu0 0.0
  %4250 = vmatpush1.xpose.msra.mxu0 0.0
  %4251 = vmatprep.subr.mxu0 0.0
  %4252 = vmatpush1.xpose.msra.mxu0 0.0
  %4253 = vmatprep.subr.mxu0 0.0
  %4254 = vmatpush1.xpose.msra.mxu0 0.0
  %4255 = vmatprep.subr.mxu0 0.0
  %4256 = vmatpush1.xpose.msra.mxu0 0.0
  %4257 = vmatprep.subr.mxu0 0.0
  %4258 = vmatpush1.xpose.msra.mxu0 0.0
  %4259 = vmatprep.subr.mxu0 0.0
  %4260 = vmatpush1.xpose.msra.mxu0 0.0
  %4261 = vmatprep.subr.mxu0 0.0
  %4262 = vmatpush1.xpose.msra.mxu0 0.0
  %4263 = vmatprep.subr.mxu0 0.0
  %4264 = vmatpush1.xpose.msra.mxu0 0.0
  %4265 = vmatprep.subr.mxu0 0.0
  %4266 = vmatpush1.xpose.msra.mxu0 0.0
  %4267 = vmatprep.subr.mxu0 0.0
  %4268 = vmatpush1.xpose.msra.mxu0 0.0
  %4269 = vmatprep.subr.mxu0 0.0
  %4270 = vmatpush1.xpose.msra.mxu0 0.0
  %4271 = vmatprep.subr.mxu0 0.0
  %4272 = vmatpush1.xpose.msra.mxu0 0.0
  %4273 = vmatprep.subr.mxu0 0.0
  %4274 = vmatpush1.xpose.msra.mxu0 0.0
  %4275 = vmatprep.subr.mxu0 0.0
  %4276 = vmatpush1.xpose.msra.mxu0 0.0
  %4277 = vmatprep.subr.mxu0 0.0
  %4278 = vmatpush1.xpose.msra.mxu0 0.0
  %4279 = vmatprep.subr.mxu0 0.0
  %4280 = vmatpush1.xpose.msra.mxu0 0.0
  %4281 = vmatprep.subr.mxu0 0.0
  %4282 = vmatpush1.xpose.msra.mxu0 0.0
  %4283 = vmatprep.mubr.f32.mxu0 0.0
  %4284 = vmatmul.mubr.f32.gmra.mrb[0].mxu0 %v4215
  %v4285 = vpop.f32.mrb[0].mxu0
  %v4286 = vadd.f32 %v3118, %v4285
  %v4287 = vpop.f32.mrb[0].mxu0
  %4288 = vdwg.mxu0
  %4289 = vrot.lane.b32.xlu0 %v255, 120
  %v4290 = vpop.permute.xlu0 %4289
  %4291 = vrot.lane.b32.xlu0 %v402, 120
  %v4292 = vpop.permute.xlu0 %4291
  %v4293 = vsel %vm555, %v4290, 0
  %v4295 = vsel %vm555, %v4292, 0
  %4297 = vmatprep.subr.mxu0 0.0
  %4298 = vmatpush1.xpose.msra.mxu0 %v4295
  %4299 = vmatprep.subr.mxu0 0.0
  %4300 = vmatpush1.xpose.msra.mxu0 0.0
  %4301 = vmatprep.subr.mxu0 0.0
  %4302 = vmatpush1.xpose.msra.mxu0 0.0
  %4303 = vmatprep.subr.mxu0 0.0
  %4304 = vmatpush1.xpose.msra.mxu0 0.0
  %4305 = vmatprep.subr.mxu0 0.0
  %4306 = vmatpush1.xpose.msra.mxu0 0.0
  %4307 = vmatprep.subr.mxu0 0.0
  %4308 = vmatpush1.xpose.msra.mxu0 0.0
  %4309 = vmatprep.subr.mxu0 0.0
  %4310 = vmatpush1.xpose.msra.mxu0 0.0
  %4311 = vmatprep.subr.mxu0 0.0
  %4312 = vmatpush1.xpose.msra.mxu0 0.0
  %4313 = vmatprep.subr.mxu0 0.0
  %4314 = vmatpush1.xpose.msra.mxu0 0.0
  %4315 = vmatprep.subr.mxu0 0.0
  %4316 = vmatpush1.xpose.msra.mxu0 0.0
  %4317 = vmatprep.subr.mxu0 0.0
  %4318 = vmatpush1.xpose.msra.mxu0 0.0
  %4319 = vmatprep.subr.mxu0 0.0
  %4320 = vmatpush1.xpose.msra.mxu0 0.0
  %4321 = vmatprep.subr.mxu0 0.0
  %4322 = vmatpush1.xpose.msra.mxu0 0.0
  %4323 = vmatprep.subr.mxu0 0.0
  %4324 = vmatpush1.xpose.msra.mxu0 0.0
  %4325 = vmatprep.subr.mxu0 0.0
  %4326 = vmatpush1.xpose.msra.mxu0 0.0
  %4327 = vmatprep.subr.mxu0 0.0
  %4328 = vmatpush1.xpose.msra.mxu0 0.0
  %4329 = vmatprep.subr.mxu0 0.0
  %4330 = vmatpush1.xpose.msra.mxu0 0.0
  %4331 = vmatprep.subr.mxu0 0.0
  %4332 = vmatpush1.xpose.msra.mxu0 0.0
  %4333 = vmatprep.subr.mxu0 0.0
  %4334 = vmatpush1.xpose.msra.mxu0 0.0
  %4335 = vmatprep.subr.mxu0 0.0
  %4336 = vmatpush1.xpose.msra.mxu0 0.0
  %4337 = vmatprep.subr.mxu0 0.0
  %4338 = vmatpush1.xpose.msra.mxu0 0.0
  %4339 = vmatprep.subr.mxu0 0.0
  %4340 = vmatpush1.xpose.msra.mxu0 0.0
  %4341 = vmatprep.subr.mxu0 0.0
  %4342 = vmatpush1.xpose.msra.mxu0 0.0
  %4343 = vmatprep.subr.mxu0 0.0
  %4344 = vmatpush1.xpose.msra.mxu0 0.0
  %4345 = vmatprep.subr.mxu0 0.0
  %4346 = vmatpush1.xpose.msra.mxu0 0.0
  %4347 = vmatprep.subr.mxu0 0.0
  %4348 = vmatpush1.xpose.msra.mxu0 0.0
  %4349 = vmatprep.subr.mxu0 0.0
  %4350 = vmatpush1.xpose.msra.mxu0 0.0
  %4351 = vmatprep.subr.mxu0 0.0
  %4352 = vmatpush1.xpose.msra.mxu0 0.0
  %4353 = vmatprep.subr.mxu0 0.0
  %4354 = vmatpush1.xpose.msra.mxu0 0.0
  %4355 = vmatprep.subr.mxu0 0.0
  %4356 = vmatpush1.xpose.msra.mxu0 0.0
  %4357 = vmatprep.subr.mxu0 0.0
  %4358 = vmatpush1.xpose.msra.mxu0 0.0
  %4359 = vmatprep.subr.mxu0 0.0
  %4360 = vmatpush1.xpose.msra.mxu0 0.0
  %4361 = vmatprep.mubr.f32.mxu0 0.0
  %4362 = vmatmul.mubr.f32.gmra.mrb[0].mxu0 %v4293
  %v4363 = vpop.f32.mrb[0].mxu0
  %v4364 = vadd.f32 %v3118, %v4363
  %v4365 = vpop.f32.mrb[0].mxu0
  %4366 = vdwg.mxu0
  %v4367 = vsel %vm555, %v3194, -inf
  %4368 = vmax.xlane.f32.xlu0 %v4367
  %v4369 = vpop.xlane.xlu0 %4368
  %v4370 = vsel %vm555, %v3272, -inf
  %4371 = vmax.xlane.f32.xlu0 %v4370
  %v4372 = vpop.xlane.xlu0 %4371
  %v4373 = vsel %vm555, %v3350, -inf
  %4374 = vmax.xlane.f32.xlu0 %v4373
  %v4375 = vpop.xlane.xlu0 %4374
  %v4376 = vsel %vm555, %v3428, -inf
  %4377 = vmax.xlane.f32.xlu0 %v4376
  %v4378 = vpop.xlane.xlu0 %4377
  %v4379 = vsel %vm555, %v3506, -inf
  %4380 = vmax.xlane.f32.xlu0 %v4379
  %v4381 = vpop.xlane.xlu0 %4380
  %v4382 = vsel %vm555, %v3584, -inf
  %4383 = vmax.xlane.f32.xlu0 %v4382
  %v4384 = vpop.xlane.xlu0 %4383
  %v4385 = vsel %vm555, %v3662, -inf
  %4386 = vmax.xlane.f32.xlu0 %v4385
  %v4387 = vpop.xlane.xlu0 %4386
  %v4388 = vsel %vm555, %v3740, -inf
  %4389 = vmax.xlane.f32.xlu0 %v4388
  %v4390 = vpop.xlane.xlu0 %4389
  %v4391 = vsel %vm555, %v3818, -inf
  %4392 = vmax.xlane.f32.xlu0 %v4391
  %v4393 = vpop.xlane.xlu0 %4392
  %v4394 = vsel %vm555, %v3896, -inf
  %4395 = vmax.xlane.f32.xlu0 %v4394
  %v4396 = vpop.xlane.xlu0 %4395
  %v4397 = vsel %vm555, %v3974, -inf
  %4398 = vmax.xlane.f32.xlu0 %v4397
  %v4399 = vpop.xlane.xlu0 %4398
  %v4400 = vsel %vm555, %v4052, -inf
  %4401 = vmax.xlane.f32.xlu0 %v4400
  %v4402 = vpop.xlane.xlu0 %4401
  %v4403 = vsel %vm555, %v4130, -inf
  %4404 = vmax.xlane.f32.xlu0 %v4403
  %v4405 = vpop.xlane.xlu0 %4404
  %v4406 = vsel %vm555, %v4208, -inf
  %4407 = vmax.xlane.f32.xlu0 %v4406
  %v4408 = vpop.xlane.xlu0 %4407
  %v4409 = vsel %vm555, %v4286, -inf
  %4410 = vmax.xlane.f32.xlu0 %v4409
  %v4411 = vpop.xlane.xlu0 %4410
  %v4412 = vsel %vm555, %v4364, -inf
  %4413 = vmax.xlane.f32.xlu0 %v4412
  %v4414 = vpop.xlane.xlu0 %4413
  %v4415 = vsub.f32 %v3194, %v4369
  %v4416 = vsub.f32 %v3272, %v4372
  %v4417 = vsub.f32 %v3350, %v4375
  %v4418 = vsub.f32 %v3428, %v4378
  %v4419 = vsub.f32 %v3506, %v4381
  %v4420 = vsub.f32 %v3584, %v4384
  %v4421 = vsub.f32 %v3662, %v4387
  %v4422 = vsub.f32 %v3740, %v4390
  %v4423 = vsub.f32 %v3818, %v4393
  %v4424 = vsub.f32 %v3896, %v4396
  %v4425 = vsub.f32 %v3974, %v4399
  %v4426 = vsub.f32 %v4052, %v4402
  %v4427 = vsub.f32 %v4130, %v4405
  %v4428 = vsub.f32 %v4208, %v4408
  %v4429 = vsub.f32 %v4286, %v4411
  %v4430 = vsub.f32 %v4364, %v4414
  %v4431 = vmul.f32 %v4415, 1.442695
  %v4432 = vpow.pop %v4431
  %v4433 = vmul.f32 %v4416, 1.442695
  %v4434 = vpow.pop %v4433
  %v4435 = vmul.f32 %v4417, 1.442695
  %v4436 = vpow.pop %v4435
  %v4437 = vmul.f32 %v4418, 1.442695
  %v4438 = vpow.pop %v4437
  %v4439 = vmul.f32 %v4419, 1.442695
  %v4440 = vpow.pop %v4439
  %v4441 = vmul.f32 %v4420, 1.442695
  %v4442 = vpow.pop %v4441
  %v4443 = vmul.f32 %v4421, 1.442695
  %v4444 = vpow.pop %v4443
  %v4445 = vmul.f32 %v4422, 1.442695
  %v4446 = vpow.pop %v4445
  %v4447 = vmul.f32 %v4423, 1.442695
  %v4448 = vpow.pop %v4447
  %v4449 = vmul.f32 %v4424, 1.442695
  %v4450 = vpow.pop %v4449
  %v4451 = vmul.f32 %v4425, 1.442695
  %v4452 = vpow.pop %v4451
  %v4453 = vmul.f32 %v4426, 1.442695
  %v4454 = vpow.pop %v4453
  %v4455 = vmul.f32 %v4427, 1.442695
  %v4456 = vpow.pop %v4455
  %v4457 = vmul.f32 %v4428, 1.442695
  %v4458 = vpow.pop %v4457
  %v4459 = vmul.f32 %v4429, 1.442695
  %v4460 = vpow.pop %v4459
  %v4461 = vmul.f32 %v4430, 1.442695
  %v4462 = vpow.pop %v4461
  %v4463 = vsel %vm555, %v4432, 0.0
  %4464 = vadd.xlane.f32.xlu0 %v4463
  %v4465 = vpop.xlane.xlu0 %4464
  %v4466 = vsel %vm555, %v4434, 0.0
  %4467 = vadd.xlane.f32.xlu0 %v4466
  %v4468 = vpop.xlane.xlu0 %4467
  %v4469 = vsel %vm555, %v4436, 0.0
  %4470 = vadd.xlane.f32.xlu0 %v4469
  %v4471 = vpop.xlane.xlu0 %4470
  %v4472 = vsel %vm555, %v4438, 0.0
  %4473 = vadd.xlane.f32.xlu0 %v4472
  %v4474 = vpop.xlane.xlu0 %4473
  %v4475 = vsel %vm555, %v4440, 0.0
  %4476 = vadd.xlane.f32.xlu0 %v4475
  %v4477 = vpop.xlane.xlu0 %4476
  %v4478 = vsel %vm555, %v4442, 0.0
  %4479 = vadd.xlane.f32.xlu0 %v4478
  %v4480 = vpop.xlane.xlu0 %4479
  %v4481 = vsel %vm555, %v4444, 0.0
  %4482 = vadd.xlane.f32.xlu0 %v4481
  %v4483 = vpop.xlane.xlu0 %4482
  %v4484 = vsel %vm555, %v4446, 0.0
  %4485 = vadd.xlane.f32.xlu0 %v4484
  %v4486 = vpop.xlane.xlu0 %4485
  %v4487 = vsel %vm555, %v4448, 0.0
  %4488 = vadd.xlane.f32.xlu0 %v4487
  %v4489 = vpop.xlane.xlu0 %4488
  %v4490 = vsel %vm555, %v4450, 0.0
  %4491 = vadd.xlane.f32.xlu0 %v4490
  %v4492 = vpop.xlane.xlu0 %4491
  %v4493 = vsel %vm555, %v4452, 0.0
  %4494 = vadd.xlane.f32.xlu0 %v4493
  %v4495 = vpop.xlane.xlu0 %4494
  %v4496 = vsel %vm555, %v4454, 0.0
  %4497 = vadd.xlane.f32.xlu0 %v4496
  %v4498 = vpop.xlane.xlu0 %4497
  %v4499 = vsel %vm555, %v4456, 0.0
  %4500 = vadd.xlane.f32.xlu0 %v4499
  %v4501 = vpop.xlane.xlu0 %4500
  %v4502 = vsel %vm555, %v4458, 0.0
  %4503 = vadd.xlane.f32.xlu0 %v4502
  %v4504 = vpop.xlane.xlu0 %4503
  %v4505 = vsel %vm555, %v4460, 0.0
  %4506 = vadd.xlane.f32.xlu0 %v4505
  %v4507 = vpop.xlane.xlu0 %4506
  %v4508 = vsel %vm555, %v4462, 0.0
  %4509 = vadd.xlane.f32.xlu0 %v4508
  %v4510 = vpop.xlane.xlu0 %4509
  %v4511 = vrcp.pop %v4465
  %v4512 = vmul.f32 %v4432, %v4511
  %v4513 = vrcp.pop %v4468
  %v4514 = vmul.f32 %v4434, %v4513
  %v4515 = vrcp.pop %v4471
  %v4516 = vmul.f32 %v4436, %v4515
  %v4517 = vrcp.pop %v4474
  %v4518 = vmul.f32 %v4438, %v4517
  %v4519 = vrcp.pop %v4477
  %v4520 = vmul.f32 %v4440, %v4519
  %v4521 = vrcp.pop %v4480
  %v4522 = vmul.f32 %v4442, %v4521
  %v4523 = vrcp.pop %v4483
  %v4524 = vmul.f32 %v4444, %v4523
  %v4525 = vrcp.pop %v4486
  %v4526 = vmul.f32 %v4446, %v4525
  %v4527 = vrcp.pop %v4489
  %v4528 = vmul.f32 %v4448, %v4527
  %v4529 = vrcp.pop %v4492
  %v4530 = vmul.f32 %v4450, %v4529
  %v4531 = vrcp.pop %v4495
  %v4532 = vmul.f32 %v4452, %v4531
  %v4533 = vrcp.pop %v4498
  %v4534 = vmul.f32 %v4454, %v4533
  %v4535 = vrcp.pop %v4501
  %v4536 = vmul.f32 %v4456, %v4535
  %v4537 = vrcp.pop %v4504
  %v4538 = vmul.f32 %v4458, %v4537
  %v4539 = vrcp.pop %v4507
  %v4540 = vmul.f32 %v4460, %v4539
  %v4541 = vrcp.pop %v4510
  %v4542 = vmul.f32 %v4462, %v4541
  %4544 = vrot.lane.b32.xlu0 %v476, 120
  %v4545 = vpop.permute.xlu0 %4544
  %v4548 = vsel %vm555, %v4512, 0
  %4550 = vmatprep.subr.mxu0 0.0
  %4551 = vmatpush1.msra.mxu0 %v4545
  %4552 = vmatprep.subr.mxu0 0.0
  %4553 = vmatpush1.msra.mxu0 0.0
  %4554 = vmatprep.subr.mxu0 0.0
  %4555 = vmatpush1.msra.mxu0 0.0
  %4556 = vmatprep.subr.mxu0 0.0
  %4557 = vmatpush1.msra.mxu0 0.0
  %4558 = vmatprep.subr.mxu0 0.0
  %4559 = vmatpush1.msra.mxu0 0.0
  %4560 = vmatprep.subr.mxu0 0.0
  %4561 = vmatpush1.msra.mxu0 0.0
  %4562 = vmatprep.subr.mxu0 0.0
  %4563 = vmatpush1.msra.mxu0 0.0
  %4564 = vmatprep.subr.mxu0 0.0
  %4565 = vmatpush1.msra.mxu0 0.0
  %4566 = vmatprep.subr.mxu0 0.0
  %4567 = vmatpush1.msra.mxu0 0.0
  %4568 = vmatprep.subr.mxu0 0.0
  %4569 = vmatpush1.msra.mxu0 0.0
  %4570 = vmatprep.subr.mxu0 0.0
  %4571 = vmatpush1.msra.mxu0 0.0
  %4572 = vmatprep.subr.mxu0 0.0
  %4573 = vmatpush1.msra.mxu0 0.0
  %4574 = vmatprep.subr.mxu0 0.0
  %4575 = vmatpush1.msra.mxu0 0.0
  %4576 = vmatprep.subr.mxu0 0.0
  %4577 = vmatpush1.msra.mxu0 0.0
  %4578 = vmatprep.subr.mxu0 0.0
  %4579 = vmatpush1.msra.mxu0 0.0
  %4580 = vmatprep.subr.mxu0 0.0
  %4581 = vmatpush1.msra.mxu0 0.0
  %4582 = vmatprep.subr.mxu0 0.0
  %4583 = vmatpush1.msra.mxu0 0.0
  %4584 = vmatprep.subr.mxu0 0.0
  %4585 = vmatpush1.msra.mxu0 0.0
  %4586 = vmatprep.subr.mxu0 0.0
  %4587 = vmatpush1.msra.mxu0 0.0
  %4588 = vmatprep.subr.mxu0 0.0
  %4589 = vmatpush1.msra.mxu0 0.0
  %4590 = vmatprep.subr.mxu0 0.0
  %4591 = vmatpush1.msra.mxu0 0.0
  %4592 = vmatprep.subr.mxu0 0.0
  %4593 = vmatpush1.msra.mxu0 0.0
  %4594 = vmatprep.subr.mxu0 0.0
  %4595 = vmatpush1.msra.mxu0 0.0
  %4596 = vmatprep.subr.mxu0 0.0
  %4597 = vmatpush1.msra.mxu0 0.0
  %4598 = vmatprep.subr.mxu0 0.0
  %4599 = vmatpush1.msra.mxu0 0.0
  %4600 = vmatprep.subr.mxu0 0.0
  %4601 = vmatpush1.msra.mxu0 0.0
  %4602 = vmatprep.subr.mxu0 0.0
  %4603 = vmatpush1.msra.mxu0 0.0
  %4604 = vmatprep.subr.mxu0 0.0
  %4605 = vmatpush1.msra.mxu0 0.0
  %4606 = vmatprep.subr.mxu0 0.0
  %4607 = vmatpush1.msra.mxu0 0.0
  %4608 = vmatprep.subr.mxu0 0.0
  %4609 = vmatpush1.msra.mxu0 0.0
  %4610 = vmatprep.subr.mxu0 0.0
  %4611 = vmatpush1.msra.mxu0 0.0
  %4612 = vmatprep.subr.mxu0 0.0
  %4613 = vmatpush1.msra.mxu0 0.0
  %4614 = vmatprep.mubr.f32.mxu0 0.0
  %4615 = vmatmul.mubr.f32.gmra.mrb[0].mxu0 %v4548
  %v4616 = vpop.f32.mrb[0].mxu0
  %v4617 = vadd.f32 0.0, %v4616
  %v4618 = vpop.f32.mrb[0].mxu0
  %4619 = vdwg.mxu0
  %4621 = vrot.lane.b32.xlu0 %v481, 120
  %v4622 = vpop.permute.xlu0 %4621
  %v4625 = vsel %vm555, %v4514, 0
  %4627 = vmatprep.subr.mxu0 0.0
  %4628 = vmatpush1.msra.mxu0 %v4622
  %4629 = vmatprep.subr.mxu0 0.0
  %4630 = vmatpush1.msra.mxu0 0.0
  %4631 = vmatprep.subr.mxu0 0.0
  %4632 = vmatpush1.msra.mxu0 0.0
  %4633 = vmatprep.subr.mxu0 0.0
  %4634 = vmatpush1.msra.mxu0 0.0
  %4635 = vmatprep.subr.mxu0 0.0
  %4636 = vmatpush1.msra.mxu0 0.0
  %4637 = vmatprep.subr.mxu0 0.0
  %4638 = vmatpush1.msra.mxu0 0.0
  %4639 = vmatprep.subr.mxu0 0.0
  %4640 = vmatpush1.msra.mxu0 0.0
  %4641 = vmatprep.subr.mxu0 0.0
  %4642 = vmatpush1.msra.mxu0 0.0
  %4643 = vmatprep.subr.mxu0 0.0
  %4644 = vmatpush1.msra.mxu0 0.0
  %4645 = vmatprep.subr.mxu0 0.0
  %4646 = vmatpush1.msra.mxu0 0.0
  %4647 = vmatprep.subr.mxu0 0.0
  %4648 = vmatpush1.msra.mxu0 0.0
  %4649 = vmatprep.subr.mxu0 0.0
  %4650 = vmatpush1.msra.mxu0 0.0
  %4651 = vmatprep.subr.mxu0 0.0
  %4652 = vmatpush1.msra.mxu0 0.0
  %4653 = vmatprep.subr.mxu0 0.0
  %4654 = vmatpush1.msra.mxu0 0.0
  %4655 = vmatprep.subr.mxu0 0.0
  %4656 = vmatpush1.msra.mxu0 0.0
  %4657 = vmatprep.subr.mxu0 0.0
  %4658 = vmatpush1.msra.mxu0 0.0
  %4659 = vmatprep.subr.mxu0 0.0
  %4660 = vmatpush1.msra.mxu0 0.0
  %4661 = vmatprep.subr.mxu0 0.0
  %4662 = vmatpush1.msra.mxu0 0.0
  %4663 = vmatprep.subr.mxu0 0.0
  %4664 = vmatpush1.msra.mxu0 0.0
  %4665 = vmatprep.subr.mxu0 0.0
  %4666 = vmatpush1.msra.mxu0 0.0
  %4667 = vmatprep.subr.mxu0 0.0
  %4668 = vmatpush1.msra.mxu0 0.0
  %4669 = vmatprep.subr.mxu0 0.0
  %4670 = vmatpush1.msra.mxu0 0.0
  %4671 = vmatprep.subr.mxu0 0.0
  %4672 = vmatpush1.msra.mxu0 0.0
  %4673 = vmatprep.subr.mxu0 0.0
  %4674 = vmatpush1.msra.mxu0 0.0
  %4675 = vmatprep.subr.mxu0 0.0
  %4676 = vmatpush1.msra.mxu0 0.0
  %4677 = vmatprep.subr.mxu0 0.0
  %4678 = vmatpush1.msra.mxu0 0.0
  %4679 = vmatprep.subr.mxu0 0.0
  %4680 = vmatpush1.msra.mxu0 0.0
  %4681 = vmatprep.subr.mxu0 0.0
  %4682 = vmatpush1.msra.mxu0 0.0
  %4683 = vmatprep.subr.mxu0 0.0
  %4684 = vmatpush1.msra.mxu0 0.0
  %4685 = vmatprep.subr.mxu0 0.0
  %4686 = vmatpush1.msra.mxu0 0.0
  %4687 = vmatprep.subr.mxu0 0.0
  %4688 = vmatpush1.msra.mxu0 0.0
  %4689 = vmatprep.subr.mxu0 0.0
  %4690 = vmatpush1.msra.mxu0 0.0
  %4691 = vmatprep.mubr.f32.mxu0 0.0
  %4692 = vmatmul.mubr.f32.gmra.mrb[0].mxu0 %v4625
  %v4693 = vpop.f32.mrb[0].mxu0
  %v4694 = vadd.f32 0.0, %v4693
  %v4695 = vpop.f32.mrb[0].mxu0
  %4696 = vdwg.mxu0
  %4698 = vrot.lane.b32.xlu0 %v486, 120
  %v4699 = vpop.permute.xlu0 %4698
  %v4702 = vsel %vm555, %v4516, 0
  %4704 = vmatprep.subr.mxu0 0.0
  %4705 = vmatpush1.msra.mxu0 %v4699
  %4706 = vmatprep.subr.mxu0 0.0
  %4707 = vmatpush1.msra.mxu0 0.0
  %4708 = vmatprep.subr.mxu0 0.0
  %4709 = vmatpush1.msra.mxu0 0.0
  %4710 = vmatprep.subr.mxu0 0.0
  %4711 = vmatpush1.msra.mxu0 0.0
  %4712 = vmatprep.subr.mxu0 0.0
  %4713 = vmatpush1.msra.mxu0 0.0
  %4714 = vmatprep.subr.mxu0 0.0
  %4715 = vmatpush1.msra.mxu0 0.0
  %4716 = vmatprep.subr.mxu0 0.0
  %4717 = vmatpush1.msra.mxu0 0.0
  %4718 = vmatprep.subr.mxu0 0.0
  %4719 = vmatpush1.msra.mxu0 0.0
  %4720 = vmatprep.subr.mxu0 0.0
  %4721 = vmatpush1.msra.mxu0 0.0
  %4722 = vmatprep.subr.mxu0 0.0
  %4723 = vmatpush1.msra.mxu0 0.0
  %4724 = vmatprep.subr.mxu0 0.0
  %4725 = vmatpush1.msra.mxu0 0.0
  %4726 = vmatprep.subr.mxu0 0.0
  %4727 = vmatpush1.msra.mxu0 0.0
  %4728 = vmatprep.subr.mxu0 0.0
  %4729 = vmatpush1.msra.mxu0 0.0
  %4730 = vmatprep.subr.mxu0 0.0
  %4731 = vmatpush1.msra.mxu0 0.0
  %4732 = vmatprep.subr.mxu0 0.0
  %4733 = vmatpush1.msra.mxu0 0.0
  %4734 = vmatprep.subr.mxu0 0.0
  %4735 = vmatpush1.msra.mxu0 0.0
  %4736 = vmatprep.subr.mxu0 0.0
  %4737 = vmatpush1.msra.mxu0 0.0
  %4738 = vmatprep.subr.mxu0 0.0
  %4739 = vmatpush1.msra.mxu0 0.0
  %4740 = vmatprep.subr.mxu0 0.0
  %4741 = vmatpush1.msra.mxu0 0.0
  %4742 = vmatprep.subr.mxu0 0.0
  %4743 = vmatpush1.msra.mxu0 0.0
  %4744 = vmatprep.subr.mxu0 0.0
  %4745 = vmatpush1.msra.mxu0 0.0
  %4746 = vmatprep.subr.mxu0 0.0
  %4747 = vmatpush1.msra.mxu0 0.0
  %4748 = vmatprep.subr.mxu0 0.0
  %4749 = vmatpush1.msra.mxu0 0.0
  %4750 = vmatprep.subr.mxu0 0.0
  %4751 = vmatpush1.msra.mxu0 0.0
  %4752 = vmatprep.subr.mxu0 0.0
  %4753 = vmatpush1.msra.mxu0 0.0
  %4754 = vmatprep.subr.mxu0 0.0
  %4755 = vmatpush1.msra.mxu0 0.0
  %4756 = vmatprep.subr.mxu0 0.0
  %4757 = vmatpush1.msra.mxu0 0.0
  %4758 = vmatprep.subr.mxu0 0.0
  %4759 = vmatpush1.msra.mxu0 0.0
  %4760 = vmatprep.subr.mxu0 0.0
  %4761 = vmatpush1.msra.mxu0 0.0
  %4762 = vmatprep.subr.mxu0 0.0
  %4763 = vmatpush1.msra.mxu0 0.0
  %4764 = vmatprep.subr.mxu0 0.0
  %4765 = vmatpush1.msra.mxu0 0.0
  %4766 = vmatprep.subr.mxu0 0.0
  %4767 = vmatpush1.msra.mxu0 0.0
  %4768 = vmatprep.mubr.f32.mxu0 0.0
  %4769 = vmatmul.mubr.f32.gmra.mrb[0].mxu0 %v4702
  %v4770 = vpop.f32.mrb[0].mxu0
  %v4771 = vadd.f32 0.0, %v4770
  %v4772 = vpop.f32.mrb[0].mxu0
  %4773 = vdwg.mxu0
  %4775 = vrot.lane.b32.xlu0 %v491, 120
  %v4776 = vpop.permute.xlu0 %4775
  %v4779 = vsel %vm555, %v4518, 0
  %4781 = vmatprep.subr.mxu0 0.0
  %4782 = vmatpush1.msra.mxu0 %v4776
  %4783 = vmatprep.subr.mxu0 0.0
  %4784 = vmatpush1.msra.mxu0 0.0
  %4785 = vmatprep.subr.mxu0 0.0
  %4786 = vmatpush1.msra.mxu0 0.0
  %4787 = vmatprep.subr.mxu0 0.0
  %4788 = vmatpush1.msra.mxu0 0.0
  %4789 = vmatprep.subr.mxu0 0.0
  %4790 = vmatpush1.msra.mxu0 0.0
  %4791 = vmatprep.subr.mxu0 0.0
  %4792 = vmatpush1.msra.mxu0 0.0
  %4793 = vmatprep.subr.mxu0 0.0
  %4794 = vmatpush1.msra.mxu0 0.0
  %4795 = vmatprep.subr.mxu0 0.0
  %4796 = vmatpush1.msra.mxu0 0.0
  %4797 = vmatprep.subr.mxu0 0.0
  %4798 = vmatpush1.msra.mxu0 0.0
  %4799 = vmatprep.subr.mxu0 0.0
  %4800 = vmatpush1.msra.mxu0 0.0
  %4801 = vmatprep.subr.mxu0 0.0
  %4802 = vmatpush1.msra.mxu0 0.0
  %4803 = vmatprep.subr.mxu0 0.0
  %4804 = vmatpush1.msra.mxu0 0.0
  %4805 = vmatprep.subr.mxu0 0.0
  %4806 = vmatpush1.msra.mxu0 0.0
  %4807 = vmatprep.subr.mxu0 0.0
  %4808 = vmatpush1.msra.mxu0 0.0
  %4809 = vmatprep.subr.mxu0 0.0
  %4810 = vmatpush1.msra.mxu0 0.0
  %4811 = vmatprep.subr.mxu0 0.0
  %4812 = vmatpush1.msra.mxu0 0.0
  %4813 = vmatprep.subr.mxu0 0.0
  %4814 = vmatpush1.msra.mxu0 0.0
  %4815 = vmatprep.subr.mxu0 0.0
  %4816 = vmatpush1.msra.mxu0 0.0
  %4817 = vmatprep.subr.mxu0 0.0
  %4818 = vmatpush1.msra.mxu0 0.0
  %4819 = vmatprep.subr.mxu0 0.0
  %4820 = vmatpush1.msra.mxu0 0.0
  %4821 = vmatprep.subr.mxu0 0.0
  %4822 = vmatpush1.msra.mxu0 0.0
  %4823 = vmatprep.subr.mxu0 0.0
  %4824 = vmatpush1.msra.mxu0 0.0
  %4825 = vmatprep.subr.mxu0 0.0
  %4826 = vmatpush1.msra.mxu0 0.0
  %4827 = vmatprep.subr.mxu0 0.0
  %4828 = vmatpush1.msra.mxu0 0.0
  %4829 = vmatprep.subr.mxu0 0.0
  %4830 = vmatpush1.msra.mxu0 0.0
  %4831 = vmatprep.subr.mxu0 0.0
  %4832 = vmatpush1.msra.mxu0 0.0
  %4833 = vmatprep.subr.mxu0 0.0
  %4834 = vmatpush1.msra.mxu0 0.0
  %4835 = vmatprep.subr.mxu0 0.0
  %4836 = vmatpush1.msra.mxu0 0.0
  %4837 = vmatprep.subr.mxu0 0.0
  %4838 = vmatpush1.msra.mxu0 0.0
  %4839 = vmatprep.subr.mxu0 0.0
  %4840 = vmatpush1.msra.mxu0 0.0
  %4841 = vmatprep.subr.mxu0 0.0
  %4842 = vmatpush1.msra.mxu0 0.0
  %4843 = vmatprep.subr.mxu0 0.0
  %4844 = vmatpush1.msra.mxu0 0.0
  %4845 = vmatprep.mubr.f32.mxu0 0.0
  %4846 = vmatmul.mubr.f32.gmra.mrb[0].mxu0 %v4779
  %v4847 = vpop.f32.mrb[0].mxu0
  %v4848 = vadd.f32 0.0, %v4847
  %v4849 = vpop.f32.mrb[0].mxu0
  %4850 = vdwg.mxu0
  %4852 = vrot.lane.b32.xlu0 %v496, 120
  %v4853 = vpop.permute.xlu0 %4852
  %v4856 = vsel %vm555, %v4520, 0
  %4858 = vmatprep.subr.mxu0 0.0
  %4859 = vmatpush1.msra.mxu0 %v4853
  %4860 = vmatprep.subr.mxu0 0.0
  %4861 = vmatpush1.msra.mxu0 0.0
  %4862 = vmatprep.subr.mxu0 0.0
  %4863 = vmatpush1.msra.mxu0 0.0
  %4864 = vmatprep.subr.mxu0 0.0
  %4865 = vmatpush1.msra.mxu0 0.0
  %4866 = vmatprep.subr.mxu0 0.0
  %4867 = vmatpush1.msra.mxu0 0.0
  %4868 = vmatprep.subr.mxu0 0.0
  %4869 = vmatpush1.msra.mxu0 0.0
  %4870 = vmatprep.subr.mxu0 0.0
  %4871 = vmatpush1.msra.mxu0 0.0
  %4872 = vmatprep.subr.mxu0 0.0
  %4873 = vmatpush1.msra.mxu0 0.0
  %4874 = vmatprep.subr.mxu0 0.0
  %4875 = vmatpush1.msra.mxu0 0.0
  %4876 = vmatprep.subr.mxu0 0.0
  %4877 = vmatpush1.msra.mxu0 0.0
  %4878 = vmatprep.subr.mxu0 0.0
  %4879 = vmatpush1.msra.mxu0 0.0
  %4880 = vmatprep.subr.mxu0 0.0
  %4881 = vmatpush1.msra.mxu0 0.0
  %4882 = vmatprep.subr.mxu0 0.0
  %4883 = vmatpush1.msra.mxu0 0.0
  %4884 = vmatprep.subr.mxu0 0.0
  %4885 = vmatpush1.msra.mxu0 0.0
  %4886 = vmatprep.subr.mxu0 0.0
  %4887 = vmatpush1.msra.mxu0 0.0
  %4888 = vmatprep.subr.mxu0 0.0
  %4889 = vmatpush1.msra.mxu0 0.0
  %4890 = vmatprep.subr.mxu0 0.0
  %4891 = vmatpush1.msra.mxu0 0.0
  %4892 = vmatprep.subr.mxu0 0.0
  %4893 = vmatpush1.msra.mxu0 0.0
  %4894 = vmatprep.subr.mxu0 0.0
  %4895 = vmatpush1.msra.mxu0 0.0
  %4896 = vmatprep.subr.mxu0 0.0
  %4897 = vmatpush1.msra.mxu0 0.0
  %4898 = vmatprep.subr.mxu0 0.0
  %4899 = vmatpush1.msra.mxu0 0.0
  %4900 = vmatprep.subr.mxu0 0.0
  %4901 = vmatpush1.msra.mxu0 0.0
  %4902 = vmatprep.subr.mxu0 0.0
  %4903 = vmatpush1.msra.mxu0 0.0
  %4904 = vmatprep.subr.mxu0 0.0
  %4905 = vmatpush1.msra.mxu0 0.0
  %4906 = vmatprep.subr.mxu0 0.0
  %4907 = vmatpush1.msra.mxu0 0.0
  %4908 = vmatprep.subr.mxu0 0.0
  %4909 = vmatpush1.msra.mxu0 0.0
  %4910 = vmatprep.subr.mxu0 0.0
  %4911 = vmatpush1.msra.mxu0 0.0
  %4912 = vmatprep.subr.mxu0 0.0
  %4913 = vmatpush1.msra.mxu0 0.0
  %4914 = vmatprep.subr.mxu0 0.0
  %4915 = vmatpush1.msra.mxu0 0.0
  %4916 = vmatprep.subr.mxu0 0.0
  %4917 = vmatpush1.msra.mxu0 0.0
  %4918 = vmatprep.subr.mxu0 0.0
  %4919 = vmatpush1.msra.mxu0 0.0
  %4920 = vmatprep.subr.mxu0 0.0
  %4921 = vmatpush1.msra.mxu0 0.0
  %4922 = vmatprep.mubr.f32.mxu0 0.0
  %4923 = vmatmul.mubr.f32.gmra.mrb[0].mxu0 %v4856
  %v4924 = vpop.f32.mrb[0].mxu0
  %v4925 = vadd.f32 0.0, %v4924
  %v4926 = vpop.f32.mrb[0].mxu0
  %4927 = vdwg.mxu0
  %4929 = vrot.lane.b32.xlu0 %v501, 120
  %v4930 = vpop.permute.xlu0 %4929
  %v4933 = vsel %vm555, %v4522, 0
  %4935 = vmatprep.subr.mxu0 0.0
  %4936 = vmatpush1.msra.mxu0 %v4930
  %4937 = vmatprep.subr.mxu0 0.0
  %4938 = vmatpush1.msra.mxu0 0.0
  %4939 = vmatprep.subr.mxu0 0.0
  %4940 = vmatpush1.msra.mxu0 0.0
  %4941 = vmatprep.subr.mxu0 0.0
  %4942 = vmatpush1.msra.mxu0 0.0
  %4943 = vmatprep.subr.mxu0 0.0
  %4944 = vmatpush1.msra.mxu0 0.0
  %4945 = vmatprep.subr.mxu0 0.0
  %4946 = vmatpush1.msra.mxu0 0.0
  %4947 = vmatprep.subr.mxu0 0.0
  %4948 = vmatpush1.msra.mxu0 0.0
  %4949 = vmatprep.subr.mxu0 0.0
  %4950 = vmatpush1.msra.mxu0 0.0
  %4951 = vmatprep.subr.mxu0 0.0
  %4952 = vmatpush1.msra.mxu0 0.0
  %4953 = vmatprep.subr.mxu0 0.0
  %4954 = vmatpush1.msra.mxu0 0.0
  %4955 = vmatprep.subr.mxu0 0.0
  %4956 = vmatpush1.msra.mxu0 0.0
  %4957 = vmatprep.subr.mxu0 0.0
  %4958 = vmatpush1.msra.mxu0 0.0
  %4959 = vmatprep.subr.mxu0 0.0
  %4960 = vmatpush1.msra.mxu0 0.0
  %4961 = vmatprep.subr.mxu0 0.0
  %4962 = vmatpush1.msra.mxu0 0.0
  %4963 = vmatprep.subr.mxu0 0.0
  %4964 = vmatpush1.msra.mxu0 0.0
  %4965 = vmatprep.subr.mxu0 0.0
  %4966 = vmatpush1.msra.mxu0 0.0
  %4967 = vmatprep.subr.mxu0 0.0
  %4968 = vmatpush1.msra.mxu0 0.0
  %4969 = vmatprep.subr.mxu0 0.0
  %4970 = vmatpush1.msra.mxu0 0.0
  %4971 = vmatprep.subr.mxu0 0.0
  %4972 = vmatpush1.msra.mxu0 0.0
  %4973 = vmatprep.subr.mxu0 0.0
  %4974 = vmatpush1.msra.mxu0 0.0
  %4975 = vmatprep.subr.mxu0 0.0
  %4976 = vmatpush1.msra.mxu0 0.0
  %4977 = vmatprep.subr.mxu0 0.0
  %4978 = vmatpush1.msra.mxu0 0.0
  %4979 = vmatprep.subr.mxu0 0.0
  %4980 = vmatpush1.msra.mxu0 0.0
  %4981 = vmatprep.subr.mxu0 0.0
  %4982 = vmatpush1.msra.mxu0 0.0
  %4983 = vmatprep.subr.mxu0 0.0
  %4984 = vmatpush1.msra.mxu0 0.0
  %4985 = vmatprep.subr.mxu0 0.0
  %4986 = vmatpush1.msra.mxu0 0.0
  %4987 = vmatprep.subr.mxu0 0.0
  %4988 = vmatpush1.msra.mxu0 0.0
  %4989 = vmatprep.subr.mxu0 0.0
  %4990 = vmatpush1.msra.mxu0 0.0
  %4991 = vmatprep.subr.mxu0 0.0
  %4992 = vmatpush1.msra.mxu0 0.0
  %4993 = vmatprep.subr.mxu0 0.0
  %4994 = vmatpush1.msra.mxu0 0.0
  %4995 = vmatprep.subr.mxu0 0.0
  %4996 = vmatpush1.msra.mxu0 0.0
  %4997 = vmatprep.subr.mxu0 0.0
  %4998 = vmatpush1.msra.mxu0 0.0
  %4999 = vmatprep.mubr.f32.mxu0 0.0
  %5000 = vmatmul.mubr.f32.gmra.mrb[0].mxu0 %v4933
  %v5001 = vpop.f32.mrb[0].mxu0
  %v5002 = vadd.f32 0.0, %v5001
  %v5003 = vpop.f32.mrb[0].mxu0
  %5004 = vdwg.mxu0
  %5006 = vrot.lane.b32.xlu0 %v506, 120
  %v5007 = vpop.permute.xlu0 %5006
  %v5010 = vsel %vm555, %v4524, 0
  %5012 = vmatprep.subr.mxu0 0.0
  %5013 = vmatpush1.msra.mxu0 %v5007
  %5014 = vmatprep.subr.mxu0 0.0
  %5015 = vmatpush1.msra.mxu0 0.0
  %5016 = vmatprep.subr.mxu0 0.0
  %5017 = vmatpush1.msra.mxu0 0.0
  %5018 = vmatprep.subr.mxu0 0.0
  %5019 = vmatpush1.msra.mxu0 0.0
  %5020 = vmatprep.subr.mxu0 0.0
  %5021 = vmatpush1.msra.mxu0 0.0
  %5022 = vmatprep.subr.mxu0 0.0
  %5023 = vmatpush1.msra.mxu0 0.0
  %5024 = vmatprep.subr.mxu0 0.0
  %5025 = vmatpush1.msra.mxu0 0.0
  %5026 = vmatprep.subr.mxu0 0.0
  %5027 = vmatpush1.msra.mxu0 0.0
  %5028 = vmatprep.subr.mxu0 0.0
  %5029 = vmatpush1.msra.mxu0 0.0
  %5030 = vmatprep.subr.mxu0 0.0
  %5031 = vmatpush1.msra.mxu0 0.0
  %5032 = vmatprep.subr.mxu0 0.0
  %5033 = vmatpush1.msra.mxu0 0.0
  %5034 = vmatprep.subr.mxu0 0.0
  %5035 = vmatpush1.msra.mxu0 0.0
  %5036 = vmatprep.subr.mxu0 0.0
  %5037 = vmatpush1.msra.mxu0 0.0
  %5038 = vmatprep.subr.mxu0 0.0
  %5039 = vmatpush1.msra.mxu0 0.0
  %5040 = vmatprep.subr.mxu0 0.0
  %5041 = vmatpush1.msra.mxu0 0.0
  %5042 = vmatprep.subr.mxu0 0.0
  %5043 = vmatpush1.msra.mxu0 0.0
  %5044 = vmatprep.subr.mxu0 0.0
  %5045 = vmatpush1.msra.mxu0 0.0
  %5046 = vmatprep.subr.mxu0 0.0
  %5047 = vmatpush1.msra.mxu0 0.0
  %5048 = vmatprep.subr.mxu0 0.0
  %5049 = vmatpush1.msra.mxu0 0.0
  %5050 = vmatprep.subr.mxu0 0.0
  %5051 = vmatpush1.msra.mxu0 0.0
  %5052 = vmatprep.subr.mxu0 0.0
  %5053 = vmatpush1.msra.mxu0 0.0
  %5054 = vmatprep.subr.mxu0 0.0
  %5055 = vmatpush1.msra.mxu0 0.0
  %5056 = vmatprep.subr.mxu0 0.0
  %5057 = vmatpush1.msra.mxu0 0.0
  %5058 = vmatprep.subr.mxu0 0.0
  %5059 = vmatpush1.msra.mxu0 0.0
  %5060 = vmatprep.subr.mxu0 0.0
  %5061 = vmatpush1.msra.mxu0 0.0
  %5062 = vmatprep.subr.mxu0 0.0
  %5063 = vmatpush1.msra.mxu0 0.0
  %5064 = vmatprep.subr.mxu0 0.0
  %5065 = vmatpush1.msra.mxu0 0.0
  %5066 = vmatprep.subr.mxu0 0.0
  %5067 = vmatpush1.msra.mxu0 0.0
  %5068 = vmatprep.subr.mxu0 0.0
  %5069 = vmatpush1.msra.mxu0 0.0
  %5070 = vmatprep.subr.mxu0 0.0
  %5071 = vmatpush1.msra.mxu0 0.0
  %5072 = vmatprep.subr.mxu0 0.0
  %5073 = vmatpush1.msra.mxu0 0.0
  %5074 = vmatprep.subr.mxu0 0.0
  %5075 = vmatpush1.msra.mxu0 0.0
  %5076 = vmatprep.mubr.f32.mxu0 0.0
  %5077 = vmatmul.mubr.f32.gmra.mrb[0].mxu0 %v5010
  %v5078 = vpop.f32.mrb[0].mxu0
  %v5079 = vadd.f32 0.0, %v5078
  %v5080 = vpop.f32.mrb[0].mxu0
  %5081 = vdwg.mxu0
  %5083 = vrot.lane.b32.xlu0 %v511, 120
  %v5084 = vpop.permute.xlu0 %5083
  %v5087 = vsel %vm555, %v4526, 0
  %5089 = vmatprep.subr.mxu0 0.0
  %5090 = vmatpush1.msra.mxu0 %v5084
  %5091 = vmatprep.subr.mxu0 0.0
  %5092 = vmatpush1.msra.mxu0 0.0
  %5093 = vmatprep.subr.mxu0 0.0
  %5094 = vmatpush1.msra.mxu0 0.0
  %5095 = vmatprep.subr.mxu0 0.0
  %5096 = vmatpush1.msra.mxu0 0.0
  %5097 = vmatprep.subr.mxu0 0.0
  %5098 = vmatpush1.msra.mxu0 0.0
  %5099 = vmatprep.subr.mxu0 0.0
  %5100 = vmatpush1.msra.mxu0 0.0
  %5101 = vmatprep.subr.mxu0 0.0
  %5102 = vmatpush1.msra.mxu0 0.0
  %5103 = vmatprep.subr.mxu0 0.0
  %5104 = vmatpush1.msra.mxu0 0.0
  %5105 = vmatprep.subr.mxu0 0.0
  %5106 = vmatpush1.msra.mxu0 0.0
  %5107 = vmatprep.subr.mxu0 0.0
  %5108 = vmatpush1.msra.mxu0 0.0
  %5109 = vmatprep.subr.mxu0 0.0
  %5110 = vmatpush1.msra.mxu0 0.0
  %5111 = vmatprep.subr.mxu0 0.0
  %5112 = vmatpush1.msra.mxu0 0.0
  %5113 = vmatprep.subr.mxu0 0.0
  %5114 = vmatpush1.msra.mxu0 0.0
  %5115 = vmatprep.subr.mxu0 0.0
  %5116 = vmatpush1.msra.mxu0 0.0
  %5117 = vmatprep.subr.mxu0 0.0
  %5118 = vmatpush1.msra.mxu0 0.0
  %5119 = vmatprep.subr.mxu0 0.0
  %5120 = vmatpush1.msra.mxu0 0.0
  %5121 = vmatprep.subr.mxu0 0.0
  %5122 = vmatpush1.msra.mxu0 0.0
  %5123 = vmatprep.subr.mxu0 0.0
  %5124 = vmatpush1.msra.mxu0 0.0
  %5125 = vmatprep.subr.mxu0 0.0
  %5126 = vmatpush1.msra.mxu0 0.0
  %5127 = vmatprep.subr.mxu0 0.0
  %5128 = vmatpush1.msra.mxu0 0.0
  %5129 = vmatprep.subr.mxu0 0.0
  %5130 = vmatpush1.msra.mxu0 0.0
  %5131 = vmatprep.subr.mxu0 0.0
  %5132 = vmatpush1.msra.mxu0 0.0
  %5133 = vmatprep.subr.mxu0 0.0
  %5134 = vmatpush1.msra.mxu0 0.0
  %5135 = vmatprep.subr.mxu0 0.0
  %5136 = vmatpush1.msra.mxu0 0.0
  %5137 = vmatprep.subr.mxu0 0.0
  %5138 = vmatpush1.msra.mxu0 0.0
  %5139 = vmatprep.subr.mxu0 0.0
  %5140 = vmatpush1.msra.mxu0 0.0
  %5141 = vmatprep.subr.mxu0 0.0
  %5142 = vmatpush1.msra.mxu0 0.0
  %5143 = vmatprep.subr.mxu0 0.0
  %5144 = vmatpush1.msra.mxu0 0.0
  %5145 = vmatprep.subr.mxu0 0.0
  %5146 = vmatpush1.msra.mxu0 0.0
  %5147 = vmatprep.subr.mxu0 0.0
  %5148 = vmatpush1.msra.mxu0 0.0
  %5149 = vmatprep.subr.mxu0 0.0
  %5150 = vmatpush1.msra.mxu0 0.0
  %5151 = vmatprep.subr.mxu0 0.0
  %5152 = vmatpush1.msra.mxu0 0.0
  %5153 = vmatprep.mubr.f32.mxu0 0.0
  %5154 = vmatmul.mubr.f32.gmra.mrb[0].mxu0 %v5087
  %v5155 = vpop.f32.mrb[0].mxu0
  %v5156 = vadd.f32 0.0, %v5155
  %v5157 = vpop.f32.mrb[0].mxu0
  %5158 = vdwg.mxu0
  %5160 = vrot.lane.b32.xlu0 %v516, 120
  %v5161 = vpop.permute.xlu0 %5160
  %v5164 = vsel %vm555, %v4528, 0
  %5166 = vmatprep.subr.mxu0 0.0
  %5167 = vmatpush1.msra.mxu0 %v5161
  %5168 = vmatprep.subr.mxu0 0.0
  %5169 = vmatpush1.msra.mxu0 0.0
  %5170 = vmatprep.subr.mxu0 0.0
  %5171 = vmatpush1.msra.mxu0 0.0
  %5172 = vmatprep.subr.mxu0 0.0
  %5173 = vmatpush1.msra.mxu0 0.0
  %5174 = vmatprep.subr.mxu0 0.0
  %5175 = vmatpush1.msra.mxu0 0.0
  %5176 = vmatprep.subr.mxu0 0.0
  %5177 = vmatpush1.msra.mxu0 0.0
  %5178 = vmatprep.subr.mxu0 0.0
  %5179 = vmatpush1.msra.mxu0 0.0
  %5180 = vmatprep.subr.mxu0 0.0
  %5181 = vmatpush1.msra.mxu0 0.0
  %5182 = vmatprep.subr.mxu0 0.0
  %5183 = vmatpush1.msra.mxu0 0.0
  %5184 = vmatprep.subr.mxu0 0.0
  %5185 = vmatpush1.msra.mxu0 0.0
  %5186 = vmatprep.subr.mxu0 0.0
  %5187 = vmatpush1.msra.mxu0 0.0
  %5188 = vmatprep.subr.mxu0 0.0
  %5189 = vmatpush1.msra.mxu0 0.0
  %5190 = vmatprep.subr.mxu0 0.0
  %5191 = vmatpush1.msra.mxu0 0.0
  %5192 = vmatprep.subr.mxu0 0.0
  %5193 = vmatpush1.msra.mxu0 0.0
  %5194 = vmatprep.subr.mxu0 0.0
  %5195 = vmatpush1.msra.mxu0 0.0
  %5196 = vmatprep.subr.mxu0 0.0
  %5197 = vmatpush1.msra.mxu0 0.0
  %5198 = vmatprep.subr.mxu0 0.0
  %5199 = vmatpush1.msra.mxu0 0.0
  %5200 = vmatprep.subr.mxu0 0.0
  %5201 = vmatpush1.msra.mxu0 0.0
  %5202 = vmatprep.subr.mxu0 0.0
  %5203 = vmatpush1.msra.mxu0 0.0
  %5204 = vmatprep.subr.mxu0 0.0
  %5205 = vmatpush1.msra.mxu0 0.0
  %5206 = vmatprep.subr.mxu0 0.0
  %5207 = vmatpush1.msra.mxu0 0.0
  %5208 = vmatprep.subr.mxu0 0.0
  %5209 = vmatpush1.msra.mxu0 0.0
  %5210 = vmatprep.subr.mxu0 0.0
  %5211 = vmatpush1.msra.mxu0 0.0
  %5212 = vmatprep.subr.mxu0 0.0
  %5213 = vmatpush1.msra.mxu0 0.0
  %5214 = vmatprep.subr.mxu0 0.0
  %5215 = vmatpush1.msra.mxu0 0.0
  %5216 = vmatprep.subr.mxu0 0.0
  %5217 = vmatpush1.msra.mxu0 0.0
  %5218 = vmatprep.subr.mxu0 0.0
  %5219 = vmatpush1.msra.mxu0 0.0
  %5220 = vmatprep.subr.mxu0 0.0
  %5221 = vmatpush1.msra.mxu0 0.0
  %5222 = vmatprep.subr.mxu0 0.0
  %5223 = vmatpush1.msra.mxu0 0.0
  %5224 = vmatprep.subr.mxu0 0.0
  %5225 = vmatpush1.msra.mxu0 0.0
  %5226 = vmatprep.subr.mxu0 0.0
  %5227 = vmatpush1.msra.mxu0 0.0
  %5228 = vmatprep.subr.mxu0 0.0
  %5229 = vmatpush1.msra.mxu0 0.0
  %5230 = vmatprep.mubr.f32.mxu0 0.0
  %5231 = vmatmul.mubr.f32.gmra.mrb[0].mxu0 %v5164
  %v5232 = vpop.f32.mrb[0].mxu0
  %v5233 = vadd.f32 0.0, %v5232
  %v5234 = vpop.f32.mrb[0].mxu0
  %5235 = vdwg.mxu0
  %5237 = vrot.lane.b32.xlu0 %v521, 120
  %v5238 = vpop.permute.xlu0 %5237
  %v5241 = vsel %vm555, %v4530, 0
  %5243 = vmatprep.subr.mxu0 0.0
  %5244 = vmatpush1.msra.mxu0 %v5238
  %5245 = vmatprep.subr.mxu0 0.0
  %5246 = vmatpush1.msra.mxu0 0.0
  %5247 = vmatprep.subr.mxu0 0.0
  %5248 = vmatpush1.msra.mxu0 0.0
  %5249 = vmatprep.subr.mxu0 0.0
  %5250 = vmatpush1.msra.mxu0 0.0
  %5251 = vmatprep.subr.mxu0 0.0
  %5252 = vmatpush1.msra.mxu0 0.0
  %5253 = vmatprep.subr.mxu0 0.0
  %5254 = vmatpush1.msra.mxu0 0.0
  %5255 = vmatprep.subr.mxu0 0.0
  %5256 = vmatpush1.msra.mxu0 0.0
  %5257 = vmatprep.subr.mxu0 0.0
  %5258 = vmatpush1.msra.mxu0 0.0
  %5259 = vmatprep.subr.mxu0 0.0
  %5260 = vmatpush1.msra.mxu0 0.0
  %5261 = vmatprep.subr.mxu0 0.0
  %5262 = vmatpush1.msra.mxu0 0.0
  %5263 = vmatprep.subr.mxu0 0.0
  %5264 = vmatpush1.msra.mxu0 0.0
  %5265 = vmatprep.subr.mxu0 0.0
  %5266 = vmatpush1.msra.mxu0 0.0
  %5267 = vmatprep.subr.mxu0 0.0
  %5268 = vmatpush1.msra.mxu0 0.0
  %5269 = vmatprep.subr.mxu0 0.0
  %5270 = vmatpush1.msra.mxu0 0.0
  %5271 = vmatprep.subr.mxu0 0.0
  %5272 = vmatpush1.msra.mxu0 0.0
  %5273 = vmatprep.subr.mxu0 0.0
  %5274 = vmatpush1.msra.mxu0 0.0
  %5275 = vmatprep.subr.mxu0 0.0
  %5276 = vmatpush1.msra.mxu0 0.0
  %5277 = vmatprep.subr.mxu0 0.0
  %5278 = vmatpush1.msra.mxu0 0.0
  %5279 = vmatprep.subr.mxu0 0.0
  %5280 = vmatpush1.msra.mxu0 0.0
  %5281 = vmatprep.subr.mxu0 0.0
  %5282 = vmatpush1.msra.mxu0 0.0
  %5283 = vmatprep.subr.mxu0 0.0
  %5284 = vmatpush1.msra.mxu0 0.0
  %5285 = vmatprep.subr.mxu0 0.0
  %5286 = vmatpush1.msra.mxu0 0.0
  %5287 = vmatprep.subr.mxu0 0.0
  %5288 = vmatpush1.msra.mxu0 0.0
  %5289 = vmatprep.subr.mxu0 0.0
  %5290 = vmatpush1.msra.mxu0 0.0
  %5291 = vmatprep.subr.mxu0 0.0
  %5292 = vmatpush1.msra.mxu0 0.0
  %5293 = vmatprep.subr.mxu0 0.0
  %5294 = vmatpush1.msra.mxu0 0.0
  %5295 = vmatprep.subr.mxu0 0.0
  %5296 = vmatpush1.msra.mxu0 0.0
  %5297 = vmatprep.subr.mxu0 0.0
  %5298 = vmatpush1.msra.mxu0 0.0
  %5299 = vmatprep.subr.mxu0 0.0
  %5300 = vmatpush1.msra.mxu0 0.0
  %5301 = vmatprep.subr.mxu0 0.0
  %5302 = vmatpush1.msra.mxu0 0.0
  %5303 = vmatprep.subr.mxu0 0.0
  %5304 = vmatpush1.msra.mxu0 0.0
  %5305 = vmatprep.subr.mxu0 0.0
  %5306 = vmatpush1.msra.mxu0 0.0
  %5307 = vmatprep.mubr.f32.mxu0 0.0
  %5308 = vmatmul.mubr.f32.gmra.mrb[0].mxu0 %v5241
  %v5309 = vpop.f32.mrb[0].mxu0
  %v5310 = vadd.f32 0.0, %v5309
  %v5311 = vpop.f32.mrb[0].mxu0
  %5312 = vdwg.mxu0
  %5314 = vrot.lane.b32.xlu0 %v526, 120
  %v5315 = vpop.permute.xlu0 %5314
  %v5318 = vsel %vm555, %v4532, 0
  %5320 = vmatprep.subr.mxu0 0.0
  %5321 = vmatpush1.msra.mxu0 %v5315
  %5322 = vmatprep.subr.mxu0 0.0
  %5323 = vmatpush1.msra.mxu0 0.0
  %5324 = vmatprep.subr.mxu0 0.0
  %5325 = vmatpush1.msra.mxu0 0.0
  %5326 = vmatprep.subr.mxu0 0.0
  %5327 = vmatpush1.msra.mxu0 0.0
  %5328 = vmatprep.subr.mxu0 0.0
  %5329 = vmatpush1.msra.mxu0 0.0
  %5330 = vmatprep.subr.mxu0 0.0
  %5331 = vmatpush1.msra.mxu0 0.0
  %5332 = vmatprep.subr.mxu0 0.0
  %5333 = vmatpush1.msra.mxu0 0.0
  %5334 = vmatprep.subr.mxu0 0.0
  %5335 = vmatpush1.msra.mxu0 0.0
  %5336 = vmatprep.subr.mxu0 0.0
  %5337 = vmatpush1.msra.mxu0 0.0
  %5338 = vmatprep.subr.mxu0 0.0
  %5339 = vmatpush1.msra.mxu0 0.0
  %5340 = vmatprep.subr.mxu0 0.0
  %5341 = vmatpush1.msra.mxu0 0.0
  %5342 = vmatprep.subr.mxu0 0.0
  %5343 = vmatpush1.msra.mxu0 0.0
  %5344 = vmatprep.subr.mxu0 0.0
  %5345 = vmatpush1.msra.mxu0 0.0
  %5346 = vmatprep.subr.mxu0 0.0
  %5347 = vmatpush1.msra.mxu0 0.0
  %5348 = vmatprep.subr.mxu0 0.0
  %5349 = vmatpush1.msra.mxu0 0.0
  %5350 = vmatprep.subr.mxu0 0.0
  %5351 = vmatpush1.msra.mxu0 0.0
  %5352 = vmatprep.subr.mxu0 0.0
  %5353 = vmatpush1.msra.mxu0 0.0
  %5354 = vmatprep.subr.mxu0 0.0
  %5355 = vmatpush1.msra.mxu0 0.0
  %5356 = vmatprep.subr.mxu0 0.0
  %5357 = vmatpush1.msra.mxu0 0.0
  %5358 = vmatprep.subr.mxu0 0.0
  %5359 = vmatpush1.msra.mxu0 0.0
  %5360 = vmatprep.subr.mxu0 0.0
  %5361 = vmatpush1.msra.mxu0 0.0
  %5362 = vmatprep.subr.mxu0 0.0
  %5363 = vmatpush1.msra.mxu0 0.0
  %5364 = vmatprep.subr.mxu0 0.0
  %5365 = vmatpush1.msra.mxu0 0.0
  %5366 = vmatprep.subr.mxu0 0.0
  %5367 = vmatpush1.msra.mxu0 0.0
  %5368 = vmatprep.subr.mxu0 0.0
  %5369 = vmatpush1.msra.mxu0 0.0
  %5370 = vmatprep.subr.mxu0 0.0
  %5371 = vmatpush1.msra.mxu0 0.0
  %5372 = vmatprep.subr.mxu0 0.0
  %5373 = vmatpush1.msra.mxu0 0.0
  %5374 = vmatprep.subr.mxu0 0.0
  %5375 = vmatpush1.msra.mxu0 0.0
  %5376 = vmatprep.subr.mxu0 0.0
  %5377 = vmatpush1.msra.mxu0 0.0
  %5378 = vmatprep.subr.mxu0 0.0
  %5379 = vmatpush1.msra.mxu0 0.0
  %5380 = vmatprep.subr.mxu0 0.0
  %5381 = vmatpush1.msra.mxu0 0.0
  %5382 = vmatprep.subr.mxu0 0.0
  %5383 = vmatpush1.msra.mxu0 0.0
  %5384 = vmatprep.mubr.f32.mxu0 0.0
  %5385 = vmatmul.mubr.f32.gmra.mrb[0].mxu0 %v5318
  %v5386 = vpop.f32.mrb[0].mxu0
  %v5387 = vadd.f32 0.0, %v5386
  %v5388 = vpop.f32.mrb[0].mxu0
  %5389 = vdwg.mxu0
  %5391 = vrot.lane.b32.xlu0 %v531, 120
  %v5392 = vpop.permute.xlu0 %5391
  %v5395 = vsel %vm555, %v4534, 0
  %5397 = vmatprep.subr.mxu0 0.0
  %5398 = vmatpush1.msra.mxu0 %v5392
  %5399 = vmatprep.subr.mxu0 0.0
  %5400 = vmatpush1.msra.mxu0 0.0
  %5401 = vmatprep.subr.mxu0 0.0
  %5402 = vmatpush1.msra.mxu0 0.0
  %5403 = vmatprep.subr.mxu0 0.0
  %5404 = vmatpush1.msra.mxu0 0.0
  %5405 = vmatprep.subr.mxu0 0.0
  %5406 = vmatpush1.msra.mxu0 0.0
  %5407 = vmatprep.subr.mxu0 0.0
  %5408 = vmatpush1.msra.mxu0 0.0
  %5409 = vmatprep.subr.mxu0 0.0
  %5410 = vmatpush1.msra.mxu0 0.0
  %5411 = vmatprep.subr.mxu0 0.0
  %5412 = vmatpush1.msra.mxu0 0.0
  %5413 = vmatprep.subr.mxu0 0.0
  %5414 = vmatpush1.msra.mxu0 0.0
  %5415 = vmatprep.subr.mxu0 0.0
  %5416 = vmatpush1.msra.mxu0 0.0
  %5417 = vmatprep.subr.mxu0 0.0
  %5418 = vmatpush1.msra.mxu0 0.0
  %5419 = vmatprep.subr.mxu0 0.0
  %5420 = vmatpush1.msra.mxu0 0.0
  %5421 = vmatprep.subr.mxu0 0.0
  %5422 = vmatpush1.msra.mxu0 0.0
  %5423 = vmatprep.subr.mxu0 0.0
  %5424 = vmatpush1.msra.mxu0 0.0
  %5425 = vmatprep.subr.mxu0 0.0
  %5426 = vmatpush1.msra.mxu0 0.0
  %5427 = vmatprep.subr.mxu0 0.0
  %5428 = vmatpush1.msra.mxu0 0.0
  %5429 = vmatprep.subr.mxu0 0.0
  %5430 = vmatpush1.msra.mxu0 0.0
  %5431 = vmatprep.subr.mxu0 0.0
  %5432 = vmatpush1.msra.mxu0 0.0
  %5433 = vmatprep.subr.mxu0 0.0
  %5434 = vmatpush1.msra.mxu0 0.0
  %5435 = vmatprep.subr.mxu0 0.0
  %5436 = vmatpush1.msra.mxu0 0.0
  %5437 = vmatprep.subr.mxu0 0.0
  %5438 = vmatpush1.msra.mxu0 0.0
  %5439 = vmatprep.subr.mxu0 0.0
  %5440 = vmatpush1.msra.mxu0 0.0
  %5441 = vmatprep.subr.mxu0 0.0
  %5442 = vmatpush1.msra.mxu0 0.0
  %5443 = vmatprep.subr.mxu0 0.0
  %5444 = vmatpush1.msra.mxu0 0.0
  %5445 = vmatprep.subr.mxu0 0.0
  %5446 = vmatpush1.msra.mxu0 0.0
  %5447 = vmatprep.subr.mxu0 0.0
  %5448 = vmatpush1.msra.mxu0 0.0
  %5449 = vmatprep.subr.mxu0 0.0
  %5450 = vmatpush1.msra.mxu0 0.0
  %5451 = vmatprep.subr.mxu0 0.0
  %5452 = vmatpush1.msra.mxu0 0.0
  %5453 = vmatprep.subr.mxu0 0.0
  %5454 = vmatpush1.msra.mxu0 0.0
  %5455 = vmatprep.subr.mxu0 0.0
  %5456 = vmatpush1.msra.mxu0 0.0
  %5457 = vmatprep.subr.mxu0 0.0
  %5458 = vmatpush1.msra.mxu0 0.0
  %5459 = vmatprep.subr.mxu0 0.0
  %5460 = vmatpush1.msra.mxu0 0.0
  %5461 = vmatprep.mubr.f32.mxu0 0.0
  %5462 = vmatmul.mubr.f32.gmra.mrb[0].mxu0 %v5395
  %v5463 = vpop.f32.mrb[0].mxu0
  %v5464 = vadd.f32 0.0, %v5463
  %v5465 = vpop.f32.mrb[0].mxu0
  %5466 = vdwg.mxu0
  %5468 = vrot.lane.b32.xlu0 %v536, 120
  %v5469 = vpop.permute.xlu0 %5468
  %v5472 = vsel %vm555, %v4536, 0
  %5474 = vmatprep.subr.mxu0 0.0
  %5475 = vmatpush1.msra.mxu0 %v5469
  %5476 = vmatprep.subr.mxu0 0.0
  %5477 = vmatpush1.msra.mxu0 0.0
  %5478 = vmatprep.subr.mxu0 0.0
  %5479 = vmatpush1.msra.mxu0 0.0
  %5480 = vmatprep.subr.mxu0 0.0
  %5481 = vmatpush1.msra.mxu0 0.0
  %5482 = vmatprep.subr.mxu0 0.0
  %5483 = vmatpush1.msra.mxu0 0.0
  %5484 = vmatprep.subr.mxu0 0.0
  %5485 = vmatpush1.msra.mxu0 0.0
  %5486 = vmatprep.subr.mxu0 0.0
  %5487 = vmatpush1.msra.mxu0 0.0
  %5488 = vmatprep.subr.mxu0 0.0
  %5489 = vmatpush1.msra.mxu0 0.0
  %5490 = vmatprep.subr.mxu0 0.0
  %5491 = vmatpush1.msra.mxu0 0.0
  %5492 = vmatprep.subr.mxu0 0.0
  %5493 = vmatpush1.msra.mxu0 0.0
  %5494 = vmatprep.subr.mxu0 0.0
  %5495 = vmatpush1.msra.mxu0 0.0
  %5496 = vmatprep.subr.mxu0 0.0
  %5497 = vmatpush1.msra.mxu0 0.0
  %5498 = vmatprep.subr.mxu0 0.0
  %5499 = vmatpush1.msra.mxu0 0.0
  %5500 = vmatprep.subr.mxu0 0.0
  %5501 = vmatpush1.msra.mxu0 0.0
  %5502 = vmatprep.subr.mxu0 0.0
  %5503 = vmatpush1.msra.mxu0 0.0
  %5504 = vmatprep.subr.mxu0 0.0
  %5505 = vmatpush1.msra.mxu0 0.0
  %5506 = vmatprep.subr.mxu0 0.0
  %5507 = vmatpush1.msra.mxu0 0.0
  %5508 = vmatprep.subr.mxu0 0.0
  %5509 = vmatpush1.msra.mxu0 0.0
  %5510 = vmatprep.subr.mxu0 0.0
  %5511 = vmatpush1.msra.mxu0 0.0
  %5512 = vmatprep.subr.mxu0 0.0
  %5513 = vmatpush1.msra.mxu0 0.0
  %5514 = vmatprep.subr.mxu0 0.0
  %5515 = vmatpush1.msra.mxu0 0.0
  %5516 = vmatprep.subr.mxu0 0.0
  %5517 = vmatpush1.msra.mxu0 0.0
  %5518 = vmatprep.subr.mxu0 0.0
  %5519 = vmatpush1.msra.mxu0 0.0
  %5520 = vmatprep.subr.mxu0 0.0
  %5521 = vmatpush1.msra.mxu0 0.0
  %5522 = vmatprep.subr.mxu0 0.0
  %5523 = vmatpush1.msra.mxu0 0.0
  %5524 = vmatprep.subr.mxu0 0.0
  %5525 = vmatpush1.msra.mxu0 0.0
  %5526 = vmatprep.subr.mxu0 0.0
  %5527 = vmatpush1.msra.mxu0 0.0
  %5528 = vmatprep.subr.mxu0 0.0
  %5529 = vmatpush1.msra.mxu0 0.0
  %5530 = vmatprep.subr.mxu0 0.0
  %5531 = vmatpush1.msra.mxu0 0.0
  %5532 = vmatprep.subr.mxu0 0.0
  %5533 = vmatpush1.msra.mxu0 0.0
  %5534 = vmatprep.subr.mxu0 0.0
  %5535 = vmatpush1.msra.mxu0 0.0
  %5536 = vmatprep.subr.mxu0 0.0
  %5537 = vmatpush1.msra.mxu0 0.0
  %5538 = vmatprep.mubr.f32.mxu0 0.0
  %5539 = vmatmul.mubr.f32.gmra.mrb[0].mxu0 %v5472
  %v5540 = vpop.f32.mrb[0].mxu0
  %v5541 = vadd.f32 0.0, %v5540
  %v5542 = vpop.f32.mrb[0].mxu0
  %5543 = vdwg.mxu0
  %5545 = vrot.lane.b32.xlu0 %v541, 120
  %v5546 = vpop.permute.xlu0 %5545
  %v5549 = vsel %vm555, %v4538, 0
  %5551 = vmatprep.subr.mxu0 0.0
  %5552 = vmatpush1.msra.mxu0 %v5546
  %5553 = vmatprep.subr.mxu0 0.0
  %5554 = vmatpush1.msra.mxu0 0.0
  %5555 = vmatprep.subr.mxu0 0.0
  %5556 = vmatpush1.msra.mxu0 0.0
  %5557 = vmatprep.subr.mxu0 0.0
  %5558 = vmatpush1.msra.mxu0 0.0
  %5559 = vmatprep.subr.mxu0 0.0
  %5560 = vmatpush1.msra.mxu0 0.0
  %5561 = vmatprep.subr.mxu0 0.0
  %5562 = vmatpush1.msra.mxu0 0.0
  %5563 = vmatprep.subr.mxu0 0.0
  %5564 = vmatpush1.msra.mxu0 0.0
  %5565 = vmatprep.subr.mxu0 0.0
  %5566 = vmatpush1.msra.mxu0 0.0
  %5567 = vmatprep.subr.mxu0 0.0
  %5568 = vmatpush1.msra.mxu0 0.0
  %5569 = vmatprep.subr.mxu0 0.0
  %5570 = vmatpush1.msra.mxu0 0.0
  %5571 = vmatprep.subr.mxu0 0.0
  %5572 = vmatpush1.msra.mxu0 0.0
  %5573 = vmatprep.subr.mxu0 0.0
  %5574 = vmatpush1.msra.mxu0 0.0
  %5575 = vmatprep.subr.mxu0 0.0
  %5576 = vmatpush1.msra.mxu0 0.0
  %5577 = vmatprep.subr.mxu0 0.0
  %5578 = vmatpush1.msra.mxu0 0.0
  %5579 = vmatprep.subr.mxu0 0.0
  %5580 = vmatpush1.msra.mxu0 0.0
  %5581 = vmatprep.subr.mxu0 0.0
  %5582 = vmatpush1.msra.mxu0 0.0
  %5583 = vmatprep.subr.mxu0 0.0
  %5584 = vmatpush1.msra.mxu0 0.0
  %5585 = vmatprep.subr.mxu0 0.0
  %5586 = vmatpush1.msra.mxu0 0.0
  %5587 = vmatprep.subr.mxu0 0.0
  %5588 = vmatpush1.msra.mxu0 0.0
  %5589 = vmatprep.subr.mxu0 0.0
  %5590 = vmatpush1.msra.mxu0 0.0
  %5591 = vmatprep.subr.mxu0 0.0
  %5592 = vmatpush1.msra.mxu0 0.0
  %5593 = vmatprep.subr.mxu0 0.0
  %5594 = vmatpush1.msra.mxu0 0.0
  %5595 = vmatprep.subr.mxu0 0.0
  %5596 = vmatpush1.msra.mxu0 0.0
  %5597 = vmatprep.subr.mxu0 0.0
  %5598 = vmatpush1.msra.mxu0 0.0
  %5599 = vmatprep.subr.mxu0 0.0
  %5600 = vmatpush1.msra.mxu0 0.0
  %5601 = vmatprep.subr.mxu0 0.0
  %5602 = vmatpush1.msra.mxu0 0.0
  %5603 = vmatprep.subr.mxu0 0.0
  %5604 = vmatpush1.msra.mxu0 0.0
  %5605 = vmatprep.subr.mxu0 0.0
  %5606 = vmatpush1.msra.mxu0 0.0
  %5607 = vmatprep.subr.mxu0 0.0
  %5608 = vmatpush1.msra.mxu0 0.0
  %5609 = vmatprep.subr.mxu0 0.0
  %5610 = vmatpush1.msra.mxu0 0.0
  %5611 = vmatprep.subr.mxu0 0.0
  %5612 = vmatpush1.msra.mxu0 0.0
  %5613 = vmatprep.subr.mxu0 0.0
  %5614 = vmatpush1.msra.mxu0 0.0
  %5615 = vmatprep.mubr.f32.mxu0 0.0
  %5616 = vmatmul.mubr.f32.gmra.mrb[0].mxu0 %v5549
  %v5617 = vpop.f32.mrb[0].mxu0
  %v5618 = vadd.f32 0.0, %v5617
  %v5619 = vpop.f32.mrb[0].mxu0
  %5620 = vdwg.mxu0
  %5622 = vrot.lane.b32.xlu0 %v546, 120
  %v5623 = vpop.permute.xlu0 %5622
  %v5626 = vsel %vm555, %v4540, 0
  %5628 = vmatprep.subr.mxu0 0.0
  %5629 = vmatpush1.msra.mxu0 %v5623
  %5630 = vmatprep.subr.mxu0 0.0
  %5631 = vmatpush1.msra.mxu0 0.0
  %5632 = vmatprep.subr.mxu0 0.0
  %5633 = vmatpush1.msra.mxu0 0.0
  %5634 = vmatprep.subr.mxu0 0.0
  %5635 = vmatpush1.msra.mxu0 0.0
  %5636 = vmatprep.subr.mxu0 0.0
  %5637 = vmatpush1.msra.mxu0 0.0
  %5638 = vmatprep.subr.mxu0 0.0
  %5639 = vmatpush1.msra.mxu0 0.0
  %5640 = vmatprep.subr.mxu0 0.0
  %5641 = vmatpush1.msra.mxu0 0.0
  %5642 = vmatprep.subr.mxu0 0.0
  %5643 = vmatpush1.msra.mxu0 0.0
  %5644 = vmatprep.subr.mxu0 0.0
  %5645 = vmatpush1.msra.mxu0 0.0
  %5646 = vmatprep.subr.mxu0 0.0
  %5647 = vmatpush1.msra.mxu0 0.0
  %5648 = vmatprep.subr.mxu0 0.0
  %5649 = vmatpush1.msra.mxu0 0.0
  %5650 = vmatprep.subr.mxu0 0.0
  %5651 = vmatpush1.msra.mxu0 0.0
  %5652 = vmatprep.subr.mxu0 0.0
  %5653 = vmatpush1.msra.mxu0 0.0
  %5654 = vmatprep.subr.mxu0 0.0
  %5655 = vmatpush1.msra.mxu0 0.0
  %5656 = vmatprep.subr.mxu0 0.0
  %5657 = vmatpush1.msra.mxu0 0.0
  %5658 = vmatprep.subr.mxu0 0.0
  %5659 = vmatpush1.msra.mxu0 0.0
  %5660 = vmatprep.subr.mxu0 0.0
  %5661 = vmatpush1.msra.mxu0 0.0
  %5662 = vmatprep.subr.mxu0 0.0
  %5663 = vmatpush1.msra.mxu0 0.0
  %5664 = vmatprep.subr.mxu0 0.0
  %5665 = vmatpush1.msra.mxu0 0.0
  %5666 = vmatprep.subr.mxu0 0.0
  %5667 = vmatpush1.msra.mxu0 0.0
  %5668 = vmatprep.subr.mxu0 0.0
  %5669 = vmatpush1.msra.mxu0 0.0
  %5670 = vmatprep.subr.mxu0 0.0
  %5671 = vmatpush1.msra.mxu0 0.0
  %5672 = vmatprep.subr.mxu0 0.0
  %5673 = vmatpush1.msra.mxu0 0.0
  %5674 = vmatprep.subr.mxu0 0.0
  %5675 = vmatpush1.msra.mxu0 0.0
  %5676 = vmatprep.subr.mxu0 0.0
  %5677 = vmatpush1.msra.mxu0 0.0
  %5678 = vmatprep.subr.mxu0 0.0
  %5679 = vmatpush1.msra.mxu0 0.0
  %5680 = vmatprep.subr.mxu0 0.0
  %5681 = vmatpush1.msra.mxu0 0.0
  %5682 = vmatprep.subr.mxu0 0.0
  %5683 = vmatpush1.msra.mxu0 0.0
  %5684 = vmatprep.subr.mxu0 0.0
  %5685 = vmatpush1.msra.mxu0 0.0
  %5686 = vmatprep.subr.mxu0 0.0
  %5687 = vmatpush1.msra.mxu0 0.0
  %5688 = vmatprep.subr.mxu0 0.0
  %5689 = vmatpush1.msra.mxu0 0.0
  %5690 = vmatprep.subr.mxu0 0.0
  %5691 = vmatpush1.msra.mxu0 0.0
  %5692 = vmatprep.mubr.f32.mxu0 0.0
  %5693 = vmatmul.mubr.f32.gmra.mrb[0].mxu0 %v5626
  %v5694 = vpop.f32.mrb[0].mxu0
  %v5695 = vadd.f32 0.0, %v5694
  %v5696 = vpop.f32.mrb[0].mxu0
  %5697 = vdwg.mxu0
  %5699 = vrot.lane.b32.xlu0 %v551, 120
  %v5700 = vpop.permute.xlu0 %5699
  %v5703 = vsel %vm555, %v4542, 0
  %5705 = vmatprep.subr.mxu0 0.0
  %5706 = vmatpush1.msra.mxu0 %v5700
  %5707 = vmatprep.subr.mxu0 0.0
  %5708 = vmatpush1.msra.mxu0 0.0
  %5709 = vmatprep.subr.mxu0 0.0
  %5710 = vmatpush1.msra.mxu0 0.0
  %5711 = vmatprep.subr.mxu0 0.0
  %5712 = vmatpush1.msra.mxu0 0.0
  %5713 = vmatprep.subr.mxu0 0.0
  %5714 = vmatpush1.msra.mxu0 0.0
  %5715 = vmatprep.subr.mxu0 0.0
  %5716 = vmatpush1.msra.mxu0 0.0
  %5717 = vmatprep.subr.mxu0 0.0
  %5718 = vmatpush1.msra.mxu0 0.0
  %5719 = vmatprep.subr.mxu0 0.0
  %5720 = vmatpush1.msra.mxu0 0.0
  %5721 = vmatprep.subr.mxu0 0.0
  %5722 = vmatpush1.msra.mxu0 0.0
  %5723 = vmatprep.subr.mxu0 0.0
  %5724 = vmatpush1.msra.mxu0 0.0
  %5725 = vmatprep.subr.mxu0 0.0
  %5726 = vmatpush1.msra.mxu0 0.0
  %5727 = vmatprep.subr.mxu0 0.0
  %5728 = vmatpush1.msra.mxu0 0.0
  %5729 = vmatprep.subr.mxu0 0.0
  %5730 = vmatpush1.msra.mxu0 0.0
  %5731 = vmatprep.subr.mxu0 0.0
  %5732 = vmatpush1.msra.mxu0 0.0
  %5733 = vmatprep.subr.mxu0 0.0
  %5734 = vmatpush1.msra.mxu0 0.0
  %5735 = vmatprep.subr.mxu0 0.0
  %5736 = vmatpush1.msra.mxu0 0.0
  %5737 = vmatprep.subr.mxu0 0.0
  %5738 = vmatpush1.msra.mxu0 0.0
  %5739 = vmatprep.subr.mxu0 0.0
  %5740 = vmatpush1.msra.mxu0 0.0
  %5741 = vmatprep.subr.mxu0 0.0
  %5742 = vmatpush1.msra.mxu0 0.0
  %5743 = vmatprep.subr.mxu0 0.0
  %5744 = vmatpush1.msra.mxu0 0.0
  %5745 = vmatprep.subr.mxu0 0.0
  %5746 = vmatpush1.msra.mxu0 0.0
  %5747 = vmatprep.subr.mxu0 0.0
  %5748 = vmatpush1.msra.mxu0 0.0
  %5749 = vmatprep.subr.mxu0 0.0
  %5750 = vmatpush1.msra.mxu0 0.0
  %5751 = vmatprep.subr.mxu0 0.0
  %5752 = vmatpush1.msra.mxu0 0.0
  %5753 = vmatprep.subr.mxu0 0.0
  %5754 = vmatpush1.msra.mxu0 0.0
  %5755 = vmatprep.subr.mxu0 0.0
  %5756 = vmatpush1.msra.mxu0 0.0
  %5757 = vmatprep.subr.mxu0 0.0
  %5758 = vmatpush1.msra.mxu0 0.0
  %5759 = vmatprep.subr.mxu0 0.0
  %5760 = vmatpush1.msra.mxu0 0.0
  %5761 = vmatprep.subr.mxu0 0.0
  %5762 = vmatpush1.msra.mxu0 0.0
  %5763 = vmatprep.subr.mxu0 0.0
  %5764 = vmatpush1.msra.mxu0 0.0
  %5765 = vmatprep.subr.mxu0 0.0
  %5766 = vmatpush1.msra.mxu0 0.0
  %5767 = vmatprep.subr.mxu0 0.0
  %5768 = vmatpush1.msra.mxu0 0.0
  %5769 = vmatprep.mubr.f32.mxu0 0.0
  %5770 = vmatmul.mubr.f32.gmra.mrb[0].mxu0 %v5703
  %v5771 = vpop.f32.mrb[0].mxu0
  %v5772 = vadd.f32 0.0, %v5771
  %v5773 = vpop.f32.mrb[0].mxu0
  %5774 = vdwg.mxu0
  %v5775 = vld [vmem:[%s4 + $0x8] sm:$0xff]
  %v5777 = vsel %vm555, %v4617, 0
  %v5780 = vsel %vm555, %v4694, 0
  %v5783 = vsel %vm555, %v4771, 0
  %v5786 = vsel %vm555, %v4848, 0
  %v5789 = vsel %vm555, %v4925, 0
  %v5792 = vsel %vm555, %v5002, 0
  %v5795 = vsel %vm555, %v5079, 0
  %v5798 = vsel %vm555, %v5156, 0
  %v5801 = vsel %vm555, %v5233, 0
  %v5804 = vsel %vm555, %v5310, 0
  %v5807 = vsel %vm555, %v5387, 0
  %v5810 = vsel %vm555, %v5464, 0
  %v5813 = vsel %vm555, %v5541, 0
  %v5816 = vsel %vm555, %v5618, 0
  %v5819 = vsel %vm555, %v5695, 0
  %v5822 = vsel %vm555, %v5772, 0
  %5824 = vmatprep.subr.mxu0 0.0
  %5825 = vmatpush1.msra.mxu0 %v5775
  %5826 = vmatprep.subr.mxu0 0.0
  %5827 = vmatpush1.msra.mxu0 0.0
  %5828 = vmatprep.subr.mxu0 0.0
  %5829 = vmatpush1.msra.mxu0 0.0
  %5830 = vmatprep.subr.mxu0 0.0
  %5831 = vmatpush1.msra.mxu0 0.0
  %5832 = vmatprep.subr.mxu0 0.0
  %5833 = vmatpush1.msra.mxu0 0.0
  %5834 = vmatprep.subr.mxu0 0.0
  %5835 = vmatpush1.msra.mxu0 0.0
  %5836 = vmatprep.subr.mxu0 0.0
  %5837 = vmatpush1.msra.mxu0 0.0
  %5838 = vmatprep.subr.mxu0 0.0
  %5839 = vmatpush1.msra.mxu0 0.0
  %5840 = vmatprep.subr.mxu0 0.0
  %5841 = vmatpush1.msra.mxu0 0.0
  %5842 = vmatprep.subr.mxu0 0.0
  %5843 = vmatpush1.msra.mxu0 0.0
  %5844 = vmatprep.subr.mxu0 0.0
  %5845 = vmatpush1.msra.mxu0 0.0
  %5846 = vmatprep.subr.mxu0 0.0
  %5847 = vmatpush1.msra.mxu0 0.0
  %5848 = vmatprep.subr.mxu0 0.0
  %5849 = vmatpush1.msra.mxu0 0.0
  %5850 = vmatprep.subr.mxu0 0.0
  %5851 = vmatpush1.msra.mxu0 0.0
  %5852 = vmatprep.subr.mxu0 0.0
  %5853 = vmatpush1.msra.mxu0 0.0
  %5854 = vmatprep.subr.mxu0 0.0
  %5855 = vmatpush1.msra.mxu0 0.0
  %5856 = vmatprep.subr.mxu0 0.0
  %5857 = vmatpush1.msra.mxu0 0.0
  %5858 = vmatprep.subr.mxu0 0.0
  %5859 = vmatpush1.msra.mxu0 0.0
  %5860 = vmatprep.subr.mxu0 0.0
  %5861 = vmatpush1.msra.mxu0 0.0
  %5862 = vmatprep.subr.mxu0 0.0
  %5863 = vmatpush1.msra.mxu0 0.0
  %5864 = vmatprep.subr.mxu0 0.0
  %5865 = vmatpush1.msra.mxu0 0.0
  %5866 = vmatprep.subr.mxu0 0.0
  %5867 = vmatpush1.msra.mxu0 0.0
  %5868 = vmatprep.subr.mxu0 0.0
  %5869 = vmatpush1.msra.mxu0 0.0
  %5870 = vmatprep.subr.mxu0 0.0
  %5871 = vmatpush1.msra.mxu0 0.0
  %5872 = vmatprep.subr.mxu0 0.0
  %5873 = vmatpush1.msra.mxu0 0.0
  %5874 = vmatprep.subr.mxu0 0.0
  %5875 = vmatpush1.msra.mxu0 0.0
  %5876 = vmatprep.subr.mxu0 0.0
  %5877 = vmatpush1.msra.mxu0 0.0
  %5878 = vmatprep.subr.mxu0 0.0
  %5879 = vmatpush1.msra.mxu0 0.0
  %5880 = vmatprep.subr.mxu0 0.0
  %5881 = vmatpush1.msra.mxu0 0.0
  %5882 = vmatprep.subr.mxu0 0.0
  %5883 = vmatpush1.msra.mxu0 0.0
  %5884 = vmatprep.subr.mxu0 0.0
  %5885 = vmatpush1.msra.mxu0 0.0
  %5886 = vmatprep.subr.mxu0 0.0
  %5887 = vmatpush1.msra.mxu0 0.0
  %5888 = vmatprep.mubr.f32.mxu0 0.0
  %5889 = vmatmul.mubr.f32.gmra.mrb[0].mxu0 %v5777
  %v5890 = vpop.f32.mrb[0].mxu0
  %v5891 = vadd.f32 0.0, %v5890
  %v5892 = vpop.f32.mrb[0].mxu0
  %5893 = vmatprep.mubr.f32.mxu0 0.0
  %5894 = vmatmul.mubr.f32.gmra.mrb[0].mxu0 %v5780
  %v5895 = vpop.f32.mrb[0].mxu0
  %v5896 = vadd.f32 0.0, %v5895
  %v5897 = vpop.f32.mrb[0].mxu0
  %5898 = vmatprep.mubr.f32.mxu0 0.0
  %5899 = vmatmul.mubr.f32.gmra.mrb[0].mxu0 %v5783
  %v5900 = vpop.f32.mrb[0].mxu0
  %v5901 = vadd.f32 0.0, %v5900
  %v5902 = vpop.f32.mrb[0].mxu0
  %5903 = vmatprep.mubr.f32.mxu0 0.0
  %5904 = vmatmul.mubr.f32.gmra.mrb[0].mxu0 %v5786
  %v5905 = vpop.f32.mrb[0].mxu0
  %v5906 = vadd.f32 0.0, %v5905
  %v5907 = vpop.f32.mrb[0].mxu0
  %5908 = vmatprep.mubr.f32.mxu0 0.0
  %5909 = vmatmul.mubr.f32.gmra.mrb[0].mxu0 %v5789
  %v5910 = vpop.f32.mrb[0].mxu0
  %v5911 = vadd.f32 0.0, %v5910
  %v5912 = vpop.f32.mrb[0].mxu0
  %5913 = vmatprep.mubr.f32.mxu0 0.0
  %5914 = vmatmul.mubr.f32.gmra.mrb[0].mxu0 %v5792
  %v5915 = vpop.f32.mrb[0].mxu0
  %v5916 = vadd.f32 0.0, %v5915
  %v5917 = vpop.f32.mrb[0].mxu0
  %5918 = vmatprep.mubr.f32.mxu0 0.0
  %5919 = vmatmul.mubr.f32.gmra.mrb[0].mxu0 %v5795
  %v5920 = vpop.f32.mrb[0].mxu0
  %v5921 = vadd.f32 0.0, %v5920
  %v5922 = vpop.f32.mrb[0].mxu0
  %5923 = vmatprep.mubr.f32.mxu0 0.0
  %5924 = vmatmul.mubr.f32.gmra.mrb[0].mxu0 %v5798
  %v5925 = vpop.f32.mrb[0].mxu0
  %v5926 = vadd.f32 0.0, %v5925
  %v5927 = vpop.f32.mrb[0].mxu0
  %5928 = vmatprep.mubr.f32.mxu0 0.0
  %5929 = vmatmul.mubr.f32.gmra.mrb[0].mxu0 %v5801
  %v5930 = vpop.f32.mrb[0].mxu0
  %v5931 = vadd.f32 0.0, %v5930
  %v5932 = vpop.f32.mrb[0].mxu0
  %5933 = vmatprep.mubr.f32.mxu0 0.0
  %5934 = vmatmul.mubr.f32.gmra.mrb[0].mxu0 %v5804
  %v5935 = vpop.f32.mrb[0].mxu0
  %v5936 = vadd.f32 0.0, %v5935
  %v5937 = vpop.f32.mrb[0].mxu0
  %5938 = vmatprep.mubr.f32.mxu0 0.0
  %5939 = vmatmul.mubr.f32.gmra.mrb[0].mxu0 %v5807
  %v5940 = vpop.f32.mrb[0].mxu0
  %v5941 = vadd.f32 0.0, %v5940
  %v5942 = vpop.f32.mrb[0].mxu0
  %5943 = vmatprep.mubr.f32.mxu0 0.0
  %5944 = vmatmul.mubr.f32.gmra.mrb[0].mxu0 %v5810
  %v5945 = vpop.f32.mrb[0].mxu0
  %v5946 = vadd.f32 0.0, %v5945
  %v5947 = vpop.f32.mrb[0].mxu0
  %5948 = vmatprep.mubr.f32.mxu0 0.0
  %5949 = vmatmul.mubr.f32.gmra.mrb[0].mxu0 %v5813
  %v5950 = vpop.f32.mrb[0].mxu0
  %v5951 = vadd.f32 0.0, %v5950
  %v5952 = vpop.f32.mrb[0].mxu0
  %5953 = vmatprep.mubr.f32.mxu0 0.0
  %5954 = vmatmul.mubr.f32.gmra.mrb[0].mxu0 %v5816
  %v5955 = vpop.f32.mrb[0].mxu0
  %v5956 = vadd.f32 0.0, %v5955
  %v5957 = vpop.f32.mrb[0].mxu0
  %5958 = vmatprep.mubr.f32.mxu0 0.0
  %5959 = vmatmul.mubr.f32.gmra.mrb[0].mxu0 %v5819
  %v5960 = vpop.f32.mrb[0].mxu0
  %v5961 = vadd.f32 0.0, %v5960
  %v5962 = vpop.f32.mrb[0].mxu0
  %5963 = vmatprep.mubr.f32.mxu0 0.0
  %5964 = vmatmul.mubr.f32.gmra.mrb[0].mxu0 %v5822
  %v5965 = vpop.f32.mrb[0].mxu0
  %v5966 = vadd.f32 0.0, %v5965
  %v5967 = vpop.f32.mrb[0].mxu0
  %5968 = vdwg.mxu0
  %v5970 = vsel %vm555, %v2018, 0
  %v5973 = vsel %vm555, %v2091, 0
  %v5976 = vsel %vm555, %v2164, 0
  %v5979 = vsel %vm555, %v2237, 0
  %v5982 = vsel %vm555, %v2310, 0
  %v5985 = vsel %vm555, %v2383, 0
  %v5988 = vsel %vm555, %v2456, 0
  %v5991 = vsel %vm555, %v2529, 0
  %v5994 = vsel %vm555, %v2602, 0
  %v5997 = vsel %vm555, %v2675, 0
  %v6000 = vsel %vm555, %v2748, 0
  %v6003 = vsel %vm555, %v2821, 0
  %v6006 = vsel %vm555, %v2894, 0
  %v6009 = vsel %vm555, %v2967, 0
  %v6012 = vsel %vm555, %v3040, 0
  %v6015 = vsel %vm555, %v3113, 0
  %6017 = vmatprep.subr.mxu0 0.0
  %6018 = vmatpush1.msra.mxu0 %v3116
  %6019 = vmatprep.subr.mxu0 0.0
  %6020 = vmatpush1.msra.mxu0 0.0
  %6021 = vmatprep.subr.mxu0 0.0
  %6022 = vmatpush1.msra.mxu0 0.0
  %6023 = vmatprep.subr.mxu0 0.0
  %6024 = vmatpush1.msra.mxu0 0.0
  %6025 = vmatprep.subr.mxu0 0.0
  %6026 = vmatpush1.msra.mxu0 0.0
  %6027 = vmatprep.subr.mxu0 0.0
  %6028 = vmatpush1.msra.mxu0 0.0
  %6029 = vmatprep.subr.mxu0 0.0
  %6030 = vmatpush1.msra.mxu0 0.0
  %6031 = vmatprep.subr.mxu0 0.0
  %6032 = vmatpush1.msra.mxu0 0.0
  %6033 = vmatprep.subr.mxu0 0.0
  %6034 = vmatpush1.msra.mxu0 0.0
  %6035 = vmatprep.subr.mxu0 0.0
  %6036 = vmatpush1.msra.mxu0 0.0
  %6037 = vmatprep.subr.mxu0 0.0
  %6038 = vmatpush1.msra.mxu0 0.0
  %6039 = vmatprep.subr.mxu0 0.0
  %6040 = vmatpush1.msra.mxu0 0.0
  %6041 = vmatprep.subr.mxu0 0.0
  %6042 = vmatpush1.msra.mxu0 0.0
  %6043 = vmatprep.subr.mxu0 0.0
  %6044 = vmatpush1.msra.mxu0 0.0
  %6045 = vmatprep.subr.mxu0 0.0
  %6046 = vmatpush1.msra.mxu0 0.0
  %6047 = vmatprep.subr.mxu0 0.0
  %6048 = vmatpush1.msra.mxu0 0.0
  %6049 = vmatprep.subr.mxu0 0.0
  %6050 = vmatpush1.msra.mxu0 0.0
  %6051 = vmatprep.subr.mxu0 0.0
  %6052 = vmatpush1.msra.mxu0 0.0
  %6053 = vmatprep.subr.mxu0 0.0
  %6054 = vmatpush1.msra.mxu0 0.0
  %6055 = vmatprep.subr.mxu0 0.0
  %6056 = vmatpush1.msra.mxu0 0.0
  %6057 = vmatprep.subr.mxu0 0.0
  %6058 = vmatpush1.msra.mxu0 0.0
  %6059 = vmatprep.subr.mxu0 0.0
  %6060 = vmatpush1.msra.mxu0 0.0
  %6061 = vmatprep.subr.mxu0 0.0
  %6062 = vmatpush1.msra.mxu0 0.0
  %6063 = vmatprep.subr.mxu0 0.0
  %6064 = vmatpush1.msra.mxu0 0.0
  %6065 = vmatprep.subr.mxu0 0.0
  %6066 = vmatpush1.msra.mxu0 0.0
  %6067 = vmatprep.subr.mxu0 0.0
  %6068 = vmatpush1.msra.mxu0 0.0
  %6069 = vmatprep.subr.mxu0 0.0
  %6070 = vmatpush1.msra.mxu0 0.0
  %6071 = vmatprep.subr.mxu0 0.0
  %6072 = vmatpush1.msra.mxu0 0.0
  %6073 = vmatprep.subr.mxu0 0.0
  %6074 = vmatpush1.msra.mxu0 0.0
  %6075 = vmatprep.subr.mxu0 0.0
  %6076 = vmatpush1.msra.mxu0 0.0
  %6077 = vmatprep.subr.mxu0 0.0
  %6078 = vmatpush1.msra.mxu0 0.0
  %6079 = vmatprep.subr.mxu0 0.0
  %6080 = vmatpush1.msra.mxu0 0.0
  %6081 = vmatprep.mubr.f32.mxu0 0.0
  %6082 = vmatmul.mubr.f32.gmra.mrb[0].mxu0 %v5970
  %v6083 = vpop.f32.mrb[0].mxu0
  %v6084 = vadd.f32 %v5891, %v6083
  %v6085 = vpop.f32.mrb[0].mxu0
  %6086 = vmatprep.mubr.f32.mxu0 0.0
  %6087 = vmatmul.mubr.f32.gmra.mrb[0].mxu0 %v5973
  %v6088 = vpop.f32.mrb[0].mxu0
  %v6089 = vadd.f32 %v5896, %v6088
  %v6090 = vpop.f32.mrb[0].mxu0
  %6091 = vmatprep.mubr.f32.mxu0 0.0
  %6092 = vmatmul.mubr.f32.gmra.mrb[0].mxu0 %v5976
  %v6093 = vpop.f32.mrb[0].mxu0
  %v6094 = vadd.f32 %v5901, %v6093
  %v6095 = vpop.f32.mrb[0].mxu0
  %6096 = vmatprep.mubr.f32.mxu0 0.0
  %6097 = vmatmul.mubr.f32.gmra.mrb[0].mxu0 %v5979
  %v6098 = vpop.f32.mrb[0].mxu0
  %v6099 = vadd.f32 %v5906, %v6098
  %v6100 = vpop.f32.mrb[0].mxu0
  %6101 = vmatprep.mubr.f32.mxu0 0.0
  %6102 = vmatmul.mubr.f32.gmra.mrb[0].mxu0 %v5982
  %v6103 = vpop.f32.mrb[0].mxu0
  %v6104 = vadd.f32 %v5911, %v6103
  %v6105 = vpop.f32.mrb[0].mxu0
  %6106 = vmatprep.mubr.f32.mxu0 0.0
  %6107 = vmatmul.mubr.f32.gmra.mrb[0].mxu0 %v5985
  %v6108 = vpop.f32.mrb[0].mxu0
  %v6109 = vadd.f32 %v5916, %v6108
  %v6110 = vpop.f32.mrb[0].mxu0
  %6111 = vmatprep.mubr.f32.mxu0 0.0
  %6112 = vmatmul.mubr.f32.gmra.mrb[0].mxu0 %v5988
  %v6113 = vpop.f32.mrb[0].mxu0
  %v6114 = vadd.f32 %v5921, %v6113
  %v6115 = vpop.f32.mrb[0].mxu0
  %6116 = vmatprep.mubr.f32.mxu0 0.0
  %6117 = vmatmul.mubr.f32.gmra.mrb[0].mxu0 %v5991
  %v6118 = vpop.f32.mrb[0].mxu0
  %v6119 = vadd.f32 %v5926, %v6118
  %v6120 = vpop.f32.mrb[0].mxu0
  %6121 = vmatprep.mubr.f32.mxu0 0.0
  %6122 = vmatmul.mubr.f32.gmra.mrb[0].mxu0 %v5994
  %v6123 = vpop.f32.mrb[0].mxu0
  %v6124 = vadd.f32 %v5931, %v6123
  %v6125 = vpop.f32.mrb[0].mxu0
  %6126 = vmatprep.mubr.f32.mxu0 0.0
  %6127 = vmatmul.mubr.f32.gmra.mrb[0].mxu0 %v5997
  %v6128 = vpop.f32.mrb[0].mxu0
  %v6129 = vadd.f32 %v5936, %v6128
  %v6130 = vpop.f32.mrb[0].mxu0
  %6131 = vmatprep.mubr.f32.mxu0 0.0
  %6132 = vmatmul.mubr.f32.gmra.mrb[0].mxu0 %v6000
  %v6133 = vpop.f32.mrb[0].mxu0
  %v6134 = vadd.f32 %v5941, %v6133
  %v6135 = vpop.f32.mrb[0].mxu0
  %6136 = vmatprep.mubr.f32.mxu0 0.0
  %6137 = vmatmul.mubr.f32.gmra.mrb[0].mxu0 %v6003
  %v6138 = vpop.f32.mrb[0].mxu0
  %v6139 = vadd.f32 %v5946, %v6138
  %v6140 = vpop.f32.mrb[0].mxu0
  %6141 = vmatprep.mubr.f32.mxu0 0.0
  %6142 = vmatmul.mubr.f32.gmra.mrb[0].mxu0 %v6006
  %v6143 = vpop.f32.mrb[0].mxu0
  %v6144 = vadd.f32 %v5951, %v6143
  %v6145 = vpop.f32.mrb[0].mxu0
  %6146 = vmatprep.mubr.f32.mxu0 0.0
  %6147 = vmatmul.mubr.f32.gmra.mrb[0].mxu0 %v6009
  %v6148 = vpop.f32.mrb[0].mxu0
  %v6149 = vadd.f32 %v5956, %v6148
  %v6150 = vpop.f32.mrb[0].mxu0
  %6151 = vmatprep.mubr.f32.mxu0 0.0
  %6152 = vmatmul.mubr.f32.gmra.mrb[0].mxu0 %v6012
  %v6153 = vpop.f32.mrb[0].mxu0
  %v6154 = vadd.f32 %v5961, %v6153
  %v6155 = vpop.f32.mrb[0].mxu0
  %6156 = vmatprep.mubr.f32.mxu0 0.0
  %6157 = vmatmul.mubr.f32.gmra.mrb[0].mxu0 %v6015
  %v6158 = vpop.f32.mrb[0].mxu0
  %v6159 = vadd.f32 %v5966, %v6158
  %v6160 = vpop.f32.mrb[0].mxu0
  %6161 = vdwg.mxu0
  %s6162 = scalar_lea.vmem %s6, 16
  %v6163 = vld [vmem:[%s6162] sm:$0xff]
  %6164 = vrot.lane.b32.xlu0 %v240, 112
  %v6165 = vpop.permute.xlu0 %6164
  %6166 = vrot.lane.b32.xlu0 %v327, 112
  %v6167 = vpop.permute.xlu0 %6166
  %v6168 = vsel %vm555, %v6165, 0
  %v6170 = vsel %vm555, %v6167, 0
  %6172 = vmatprep.subr.mxu0 0.0
  %6173 = vmatpush1.xpose.msra.mxu0 %v6170
  %6174 = vmatprep.subr.mxu0 0.0
  %6175 = vmatpush1.xpose.msra.mxu0 0.0
  %6176 = vmatprep.subr.mxu0 0.0
  %6177 = vmatpush1.xpose.msra.mxu0 0.0
  %6178 = vmatprep.subr.mxu0 0.0
  %6179 = vmatpush1.xpose.msra.mxu0 0.0
  %6180 = vmatprep.subr.mxu0 0.0
  %6181 = vmatpush1.xpose.msra.mxu0 0.0
  %6182 = vmatprep.subr.mxu0 0.0
  %6183 = vmatpush1.xpose.msra.mxu0 0.0
  %6184 = vmatprep.subr.mxu0 0.0
  %6185 = vmatpush1.xpose.msra.mxu0 0.0
  %6186 = vmatprep.subr.mxu0 0.0
  %6187 = vmatpush1.xpose.msra.mxu0 0.0
  %6188 = vmatprep.subr.mxu0 0.0
  %6189 = vmatpush1.xpose.msra.mxu0 0.0
  %6190 = vmatprep.subr.mxu0 0.0
  %6191 = vmatpush1.xpose.msra.mxu0 0.0
  %6192 = vmatprep.subr.mxu0 0.0
  %6193 = vmatpush1.xpose.msra.mxu0 0.0
  %6194 = vmatprep.subr.mxu0 0.0
  %6195 = vmatpush1.xpose.msra.mxu0 0.0
  %6196 = vmatprep.subr.mxu0 0.0
  %6197 = vmatpush1.xpose.msra.mxu0 0.0
  %6198 = vmatprep.subr.mxu0 0.0
  %6199 = vmatpush1.xpose.msra.mxu0 0.0
  %6200 = vmatprep.subr.mxu0 0.0
  %6201 = vmatpush1.xpose.msra.mxu0 0.0
  %6202 = vmatprep.subr.mxu0 0.0
  %6203 = vmatpush1.xpose.msra.mxu0 0.0
  %6204 = vmatprep.subr.mxu0 0.0
  %6205 = vmatpush1.xpose.msra.mxu0 0.0
  %6206 = vmatprep.subr.mxu0 0.0
  %6207 = vmatpush1.xpose.msra.mxu0 0.0
  %6208 = vmatprep.subr.mxu0 0.0
  %6209 = vmatpush1.xpose.msra.mxu0 0.0
  %6210 = vmatprep.subr.mxu0 0.0
  %6211 = vmatpush1.xpose.msra.mxu0 0.0
  %6212 = vmatprep.subr.mxu0 0.0
  %6213 = vmatpush1.xpose.msra.mxu0 0.0
  %6214 = vmatprep.subr.mxu0 0.0
  %6215 = vmatpush1.xpose.msra.mxu0 0.0
  %6216 = vmatprep.subr.mxu0 0.0
  %6217 = vmatpush1.xpose.msra.mxu0 0.0
  %6218 = vmatprep.subr.mxu0 0.0
  %6219 = vmatpush1.xpose.msra.mxu0 0.0
  %6220 = vmatprep.subr.mxu0 0.0
  %6221 = vmatpush1.xpose.msra.mxu0 0.0
  %6222 = vmatprep.subr.mxu0 0.0
  %6223 = vmatpush1.xpose.msra.mxu0 0.0
  %6224 = vmatprep.subr.mxu0 0.0
  %6225 = vmatpush1.xpose.msra.mxu0 0.0
  %6226 = vmatprep.subr.mxu0 0.0
  %6227 = vmatpush1.xpose.msra.mxu0 0.0
  %6228 = vmatprep.subr.mxu0 0.0
  %6229 = vmatpush1.xpose.msra.mxu0 0.0
  %6230 = vmatprep.subr.mxu0 0.0
  %6231 = vmatpush1.xpose.msra.mxu0 0.0
  %6232 = vmatprep.subr.mxu0 0.0
  %6233 = vmatpush1.xpose.msra.mxu0 0.0
  %6234 = vmatprep.subr.mxu0 0.0
  %6235 = vmatpush1.xpose.msra.mxu0 0.0
  %6236 = vmatprep.mubr.f32.mxu0 0.0
  %6237 = vmatmul.mubr.f32.gmra.mrb[0].mxu0 %v6168
  %v6238 = vpop.f32.mrb[0].mxu0
  %v6239 = vadd.f32 %v6163, %v6238
  %v6240 = vpop.f32.mrb[0].mxu0
  %6241 = vdwg.mxu0
  %6242 = vrot.lane.b32.xlu0 %v241, 112
  %v6243 = vpop.permute.xlu0 %6242
  %6244 = vrot.lane.b32.xlu0 %v332, 112
  %v6245 = vpop.permute.xlu0 %6244
  %v6246 = vsel %vm555, %v6243, 0
  %v6248 = vsel %vm555, %v6245, 0
  %6250 = vmatprep.subr.mxu0 0.0
  %6251 = vmatpush1.xpose.msra.mxu0 %v6248
  %6252 = vmatprep.subr.mxu0 0.0
  %6253 = vmatpush1.xpose.msra.mxu0 0.0
  %6254 = vmatprep.subr.mxu0 0.0
  %6255 = vmatpush1.xpose.msra.mxu0 0.0
  %6256 = vmatprep.subr.mxu0 0.0
  %6257 = vmatpush1.xpose.msra.mxu0 0.0
  %6258 = vmatprep.subr.mxu0 0.0
  %6259 = vmatpush1.xpose.msra.mxu0 0.0
  %6260 = vmatprep.subr.mxu0 0.0
  %6261 = vmatpush1.xpose.msra.mxu0 0.0
  %6262 = vmatprep.subr.mxu0 0.0
  %6263 = vmatpush1.xpose.msra.mxu0 0.0
  %6264 = vmatprep.subr.mxu0 0.0
  %6265 = vmatpush1.xpose.msra.mxu0 0.0
  %6266 = vmatprep.subr.mxu0 0.0
  %6267 = vmatpush1.xpose.msra.mxu0 0.0
  %6268 = vmatprep.subr.mxu0 0.0
  %6269 = vmatpush1.xpose.msra.mxu0 0.0
  %6270 = vmatprep.subr.mxu0 0.0
  %6271 = vmatpush1.xpose.msra.mxu0 0.0
  %6272 = vmatprep.subr.mxu0 0.0
  %6273 = vmatpush1.xpose.msra.mxu0 0.0
  %6274 = vmatprep.subr.mxu0 0.0
  %6275 = vmatpush1.xpose.msra.mxu0 0.0
  %6276 = vmatprep.subr.mxu0 0.0
  %6277 = vmatpush1.xpose.msra.mxu0 0.0
  %6278 = vmatprep.subr.mxu0 0.0
  %6279 = vmatpush1.xpose.msra.mxu0 0.0
  %6280 = vmatprep.subr.mxu0 0.0
  %6281 = vmatpush1.xpose.msra.mxu0 0.0
  %6282 = vmatprep.subr.mxu0 0.0
  %6283 = vmatpush1.xpose.msra.mxu0 0.0
  %6284 = vmatprep.subr.mxu0 0.0
  %6285 = vmatpush1.xpose.msra.mxu0 0.0
  %6286 = vmatprep.subr.mxu0 0.0
  %6287 = vmatpush1.xpose.msra.mxu0 0.0
  %6288 = vmatprep.subr.mxu0 0.0
  %6289 = vmatpush1.xpose.msra.mxu0 0.0
  %6290 = vmatprep.subr.mxu0 0.0
  %6291 = vmatpush1.xpose.msra.mxu0 0.0
  %6292 = vmatprep.subr.mxu0 0.0
  %6293 = vmatpush1.xpose.msra.mxu0 0.0
  %6294 = vmatprep.subr.mxu0 0.0
  %6295 = vmatpush1.xpose.msra.mxu0 0.0
  %6296 = vmatprep.subr.mxu0 0.0
  %6297 = vmatpush1.xpose.msra.mxu0 0.0
  %6298 = vmatprep.subr.mxu0 0.0
  %6299 = vmatpush1.xpose.msra.mxu0 0.0
  %6300 = vmatprep.subr.mxu0 0.0
  %6301 = vmatpush1.xpose.msra.mxu0 0.0
  %6302 = vmatprep.subr.mxu0 0.0
  %6303 = vmatpush1.xpose.msra.mxu0 0.0
  %6304 = vmatprep.subr.mxu0 0.0
  %6305 = vmatpush1.xpose.msra.mxu0 0.0
  %6306 = vmatprep.subr.mxu0 0.0
  %6307 = vmatpush1.xpose.msra.mxu0 0.0
  %6308 = vmatprep.subr.mxu0 0.0
  %6309 = vmatpush1.xpose.msra.mxu0 0.0
  %6310 = vmatprep.subr.mxu0 0.0
  %6311 = vmatpush1.xpose.msra.mxu0 0.0
  %6312 = vmatprep.subr.mxu0 0.0
  %6313 = vmatpush1.xpose.msra.mxu0 0.0
  %6314 = vmatprep.mubr.f32.mxu0 0.0
  %6315 = vmatmul.mubr.f32.gmra.mrb[0].mxu0 %v6246
  %v6316 = vpop.f32.mrb[0].mxu0
  %v6317 = vadd.f32 %v6163, %v6316
  %v6318 = vpop.f32.mrb[0].mxu0
  %6319 = vdwg.mxu0
  %6320 = vrot.lane.b32.xlu0 %v242, 112
  %v6321 = vpop.permute.xlu0 %6320
  %6322 = vrot.lane.b32.xlu0 %v337, 112
  %v6323 = vpop.permute.xlu0 %6322
  %v6324 = vsel %vm555, %v6321, 0
  %v6326 = vsel %vm555, %v6323, 0
  %6328 = vmatprep.subr.mxu0 0.0
  %6329 = vmatpush1.xpose.msra.mxu0 %v6326
  %6330 = vmatprep.subr.mxu0 0.0
  %6331 = vmatpush1.xpose.msra.mxu0 0.0
  %6332 = vmatprep.subr.mxu0 0.0
  %6333 = vmatpush1.xpose.msra.mxu0 0.0
  %6334 = vmatprep.subr.mxu0 0.0
  %6335 = vmatpush1.xpose.msra.mxu0 0.0
  %6336 = vmatprep.subr.mxu0 0.0
  %6337 = vmatpush1.xpose.msra.mxu0 0.0
  %6338 = vmatprep.subr.mxu0 0.0
  %6339 = vmatpush1.xpose.msra.mxu0 0.0
  %6340 = vmatprep.subr.mxu0 0.0
  %6341 = vmatpush1.xpose.msra.mxu0 0.0
  %6342 = vmatprep.subr.mxu0 0.0
  %6343 = vmatpush1.xpose.msra.mxu0 0.0
  %6344 = vmatprep.subr.mxu0 0.0
  %6345 = vmatpush1.xpose.msra.mxu0 0.0
  %6346 = vmatprep.subr.mxu0 0.0
  %6347 = vmatpush1.xpose.msra.mxu0 0.0
  %6348 = vmatprep.subr.mxu0 0.0
  %6349 = vmatpush1.xpose.msra.mxu0 0.0
  %6350 = vmatprep.subr.mxu0 0.0
  %6351 = vmatpush1.xpose.msra.mxu0 0.0
  %6352 = vmatprep.subr.mxu0 0.0
  %6353 = vmatpush1.xpose.msra.mxu0 0.0
  %6354 = vmatprep.subr.mxu0 0.0
  %6355 = vmatpush1.xpose.msra.mxu0 0.0
  %6356 = vmatprep.subr.mxu0 0.0
  %6357 = vmatpush1.xpose.msra.mxu0 0.0
  %6358 = vmatprep.subr.mxu0 0.0
  %6359 = vmatpush1.xpose.msra.mxu0 0.0
  %6360 = vmatprep.subr.mxu0 0.0
  %6361 = vmatpush1.xpose.msra.mxu0 0.0
  %6362 = vmatprep.subr.mxu0 0.0
  %6363 = vmatpush1.xpose.msra.mxu0 0.0
  %6364 = vmatprep.subr.mxu0 0.0
  %6365 = vmatpush1.xpose.msra.mxu0 0.0
  %6366 = vmatprep.subr.mxu0 0.0
  %6367 = vmatpush1.xpose.msra.mxu0 0.0
  %6368 = vmatprep.subr.mxu0 0.0
  %6369 = vmatpush1.xpose.msra.mxu0 0.0
  %6370 = vmatprep.subr.mxu0 0.0
  %6371 = vmatpush1.xpose.msra.mxu0 0.0
  %6372 = vmatprep.subr.mxu0 0.0
  %6373 = vmatpush1.xpose.msra.mxu0 0.0
  %6374 = vmatprep.subr.mxu0 0.0
  %6375 = vmatpush1.xpose.msra.mxu0 0.0
  %6376 = vmatprep.subr.mxu0 0.0
  %6377 = vmatpush1.xpose.msra.mxu0 0.0
  %6378 = vmatprep.subr.mxu0 0.0
  %6379 = vmatpush1.xpose.msra.mxu0 0.0
  %6380 = vmatprep.subr.mxu0 0.0
  %6381 = vmatpush1.xpose.msra.mxu0 0.0
  %6382 = vmatprep.subr.mxu0 0.0
  %6383 = vmatpush1.xpose.msra.mxu0 0.0
  %6384 = vmatprep.subr.mxu0 0.0
  %6385 = vmatpush1.xpose.msra.mxu0 0.0
  %6386 = vmatprep.subr.mxu0 0.0
  %6387 = vmatpush1.xpose.msra.mxu0 0.0
  %6388 = vmatprep.subr.mxu0 0.0
  %6389 = vmatpush1.xpose.msra.mxu0 0.0
  %6390 = vmatprep.subr.mxu0 0.0
  %6391 = vmatpush1.xpose.msra.mxu0 0.0
  %6392 = vmatprep.mubr.f32.mxu0 0.0
  %6393 = vmatmul.mubr.f32.gmra.mrb[0].mxu0 %v6324
  %v6394 = vpop.f32.mrb[0].mxu0
  %v6395 = vadd.f32 %v6163, %v6394
  %v6396 = vpop.f32.mrb[0].mxu0
  %6397 = vdwg.mxu0
  %6398 = vrot.lane.b32.xlu0 %v243, 112
  %v6399 = vpop.permute.xlu0 %6398
  %6400 = vrot.lane.b32.xlu0 %v342, 112
  %v6401 = vpop.permute.xlu0 %6400
  %v6402 = vsel %vm555, %v6399, 0
  %v6404 = vsel %vm555, %v6401, 0
  %6406 = vmatprep.subr.mxu0 0.0
  %6407 = vmatpush1.xpose.msra.mxu0 %v6404
  %6408 = vmatprep.subr.mxu0 0.0
  %6409 = vmatpush1.xpose.msra.mxu0 0.0
  %6410 = vmatprep.subr.mxu0 0.0
  %6411 = vmatpush1.xpose.msra.mxu0 0.0
  %6412 = vmatprep.subr.mxu0 0.0
  %6413 = vmatpush1.xpose.msra.mxu0 0.0
  %6414 = vmatprep.subr.mxu0 0.0
  %6415 = vmatpush1.xpose.msra.mxu0 0.0
  %6416 = vmatprep.subr.mxu0 0.0
  %6417 = vmatpush1.xpose.msra.mxu0 0.0
  %6418 = vmatprep.subr.mxu0 0.0
  %6419 = vmatpush1.xpose.msra.mxu0 0.0
  %6420 = vmatprep.subr.mxu0 0.0
  %6421 = vmatpush1.xpose.msra.mxu0 0.0
  %6422 = vmatprep.subr.mxu0 0.0
  %6423 = vmatpush1.xpose.msra.mxu0 0.0
  %6424 = vmatprep.subr.mxu0 0.0
  %6425 = vmatpush1.xpose.msra.mxu0 0.0
  %6426 = vmatprep.subr.mxu0 0.0
  %6427 = vmatpush1.xpose.msra.mxu0 0.0
  %6428 = vmatprep.subr.mxu0 0.0
  %6429 = vmatpush1.xpose.msra.mxu0 0.0
  %6430 = vmatprep.subr.mxu0 0.0
  %6431 = vmatpush1.xpose.msra.mxu0 0.0
  %6432 = vmatprep.subr.mxu0 0.0
  %6433 = vmatpush1.xpose.msra.mxu0 0.0
  %6434 = vmatprep.subr.mxu0 0.0
  %6435 = vmatpush1.xpose.msra.mxu0 0.0
  %6436 = vmatprep.subr.mxu0 0.0
  %6437 = vmatpush1.xpose.msra.mxu0 0.0
  %6438 = vmatprep.subr.mxu0 0.0
  %6439 = vmatpush1.xpose.msra.mxu0 0.0
  %6440 = vmatprep.subr.mxu0 0.0
  %6441 = vmatpush1.xpose.msra.mxu0 0.0
  %6442 = vmatprep.subr.mxu0 0.0
  %6443 = vmatpush1.xpose.msra.mxu0 0.0
  %6444 = vmatprep.subr.mxu0 0.0
  %6445 = vmatpush1.xpose.msra.mxu0 0.0
  %6446 = vmatprep.subr.mxu0 0.0
  %6447 = vmatpush1.xpose.msra.mxu0 0.0
  %6448 = vmatprep.subr.mxu0 0.0
  %6449 = vmatpush1.xpose.msra.mxu0 0.0
  %6450 = vmatprep.subr.mxu0 0.0
  %6451 = vmatpush1.xpose.msra.mxu0 0.0
  %6452 = vmatprep.subr.mxu0 0.0
  %6453 = vmatpush1.xpose.msra.mxu0 0.0
  %6454 = vmatprep.subr.mxu0 0.0
  %6455 = vmatpush1.xpose.msra.mxu0 0.0
  %6456 = vmatprep.subr.mxu0 0.0
  %6457 = vmatpush1.xpose.msra.mxu0 0.0
  %6458 = vmatprep.subr.mxu0 0.0
  %6459 = vmatpush1.xpose.msra.mxu0 0.0
  %6460 = vmatprep.subr.mxu0 0.0
  %6461 = vmatpush1.xpose.msra.mxu0 0.0
  %6462 = vmatprep.subr.mxu0 0.0
  %6463 = vmatpush1.xpose.msra.mxu0 0.0
  %6464 = vmatprep.subr.mxu0 0.0
  %6465 = vmatpush1.xpose.msra.mxu0 0.0
  %6466 = vmatprep.subr.mxu0 0.0
  %6467 = vmatpush1.xpose.msra.mxu0 0.0
  %6468 = vmatprep.subr.mxu0 0.0
  %6469 = vmatpush1.xpose.msra.mxu0 0.0
  %6470 = vmatprep.mubr.f32.mxu0 0.0
  %6471 = vmatmul.mubr.f32.gmra.mrb[0].mxu0 %v6402
  %v6472 = vpop.f32.mrb[0].mxu0
  %v6473 = vadd.f32 %v6163, %v6472
  %v6474 = vpop.f32.mrb[0].mxu0
  %6475 = vdwg.mxu0
  %6476 = vrot.lane.b32.xlu0 %v244, 112
  %v6477 = vpop.permute.xlu0 %6476
  %6478 = vrot.lane.b32.xlu0 %v347, 112
  %v6479 = vpop.permute.xlu0 %6478
  %v6480 = vsel %vm555, %v6477, 0
  %v6482 = vsel %vm555, %v6479, 0
  %6484 = vmatprep.subr.mxu0 0.0
  %6485 = vmatpush1.xpose.msra.mxu0 %v6482
  %6486 = vmatprep.subr.mxu0 0.0
  %6487 = vmatpush1.xpose.msra.mxu0 0.0
  %6488 = vmatprep.subr.mxu0 0.0
  %6489 = vmatpush1.xpose.msra.mxu0 0.0
  %6490 = vmatprep.subr.mxu0 0.0
  %6491 = vmatpush1.xpose.msra.mxu0 0.0
  %6492 = vmatprep.subr.mxu0 0.0
  %6493 = vmatpush1.xpose.msra.mxu0 0.0
  %6494 = vmatprep.subr.mxu0 0.0
  %6495 = vmatpush1.xpose.msra.mxu0 0.0
  %6496 = vmatprep.subr.mxu0 0.0
  %6497 = vmatpush1.xpose.msra.mxu0 0.0
  %6498 = vmatprep.subr.mxu0 0.0
  %6499 = vmatpush1.xpose.msra.mxu0 0.0
  %6500 = vmatprep.subr.mxu0 0.0
  %6501 = vmatpush1.xpose.msra.mxu0 0.0
  %6502 = vmatprep.subr.mxu0 0.0
  %6503 = vmatpush1.xpose.msra.mxu0 0.0
  %6504 = vmatprep.subr.mxu0 0.0
  %6505 = vmatpush1.xpose.msra.mxu0 0.0
  %6506 = vmatprep.subr.mxu0 0.0
  %6507 = vmatpush1.xpose.msra.mxu0 0.0
  %6508 = vmatprep.subr.mxu0 0.0
  %6509 = vmatpush1.xpose.msra.mxu0 0.0
  %6510 = vmatprep.subr.mxu0 0.0
  %6511 = vmatpush1.xpose.msra.mxu0 0.0
  %6512 = vmatprep.subr.mxu0 0.0
  %6513 = vmatpush1.xpose.msra.mxu0 0.0
  %6514 = vmatprep.subr.mxu0 0.0
  %6515 = vmatpush1.xpose.msra.mxu0 0.0
  %6516 = vmatprep.subr.mxu0 0.0
  %6517 = vmatpush1.xpose.msra.mxu0 0.0
  %6518 = vmatprep.subr.mxu0 0.0
  %6519 = vmatpush1.xpose.msra.mxu0 0.0
  %6520 = vmatprep.subr.mxu0 0.0
  %6521 = vmatpush1.xpose.msra.mxu0 0.0
  %6522 = vmatprep.subr.mxu0 0.0
  %6523 = vmatpush1.xpose.msra.mxu0 0.0
  %6524 = vmatprep.subr.mxu0 0.0
  %6525 = vmatpush1.xpose.msra.mxu0 0.0
  %6526 = vmatprep.subr.mxu0 0.0
  %6527 = vmatpush1.xpose.msra.mxu0 0.0
  %6528 = vmatprep.subr.mxu0 0.0
  %6529 = vmatpush1.xpose.msra.mxu0 0.0
  %6530 = vmatprep.subr.mxu0 0.0
  %6531 = vmatpush1.xpose.msra.mxu0 0.0
  %6532 = vmatprep.subr.mxu0 0.0
  %6533 = vmatpush1.xpose.msra.mxu0 0.0
  %6534 = vmatprep.subr.mxu0 0.0
  %6535 = vmatpush1.xpose.msra.mxu0 0.0
  %6536 = vmatprep.subr.mxu0 0.0
  %6537 = vmatpush1.xpose.msra.mxu0 0.0
  %6538 = vmatprep.subr.mxu0 0.0
  %6539 = vmatpush1.xpose.msra.mxu0 0.0
  %6540 = vmatprep.subr.mxu0 0.0
  %6541 = vmatpush1.xpose.msra.mxu0 0.0
  %6542 = vmatprep.subr.mxu0 0.0
  %6543 = vmatpush1.xpose.msra.mxu0 0.0
  %6544 = vmatprep.subr.mxu0 0.0
  %6545 = vmatpush1.xpose.msra.mxu0 0.0
  %6546 = vmatprep.subr.mxu0 0.0
  %6547 = vmatpush1.xpose.msra.mxu0 0.0
  %6548 = vmatprep.mubr.f32.mxu0 0.0
  %6549 = vmatmul.mubr.f32.gmra.mrb[0].mxu0 %v6480
  %v6550 = vpop.f32.mrb[0].mxu0
  %v6551 = vadd.f32 %v6163, %v6550
  %v6552 = vpop.f32.mrb[0].mxu0
  %6553 = vdwg.mxu0
  %6554 = vrot.lane.b32.xlu0 %v245, 112
  %v6555 = vpop.permute.xlu0 %6554
  %6556 = vrot.lane.b32.xlu0 %v352, 112
  %v6557 = vpop.permute.xlu0 %6556
  %v6558 = vsel %vm555, %v6555, 0
  %v6560 = vsel %vm555, %v6557, 0
  %6562 = vmatprep.subr.mxu0 0.0
  %6563 = vmatpush1.xpose.msra.mxu0 %v6560
  %6564 = vmatprep.subr.mxu0 0.0
  %6565 = vmatpush1.xpose.msra.mxu0 0.0
  %6566 = vmatprep.subr.mxu0 0.0
  %6567 = vmatpush1.xpose.msra.mxu0 0.0
  %6568 = vmatprep.subr.mxu0 0.0
  %6569 = vmatpush1.xpose.msra.mxu0 0.0
  %6570 = vmatprep.subr.mxu0 0.0
  %6571 = vmatpush1.xpose.msra.mxu0 0.0
  %6572 = vmatprep.subr.mxu0 0.0
  %6573 = vmatpush1.xpose.msra.mxu0 0.0
  %6574 = vmatprep.subr.mxu0 0.0
  %6575 = vmatpush1.xpose.msra.mxu0 0.0
  %6576 = vmatprep.subr.mxu0 0.0
  %6577 = vmatpush1.xpose.msra.mxu0 0.0
  %6578 = vmatprep.subr.mxu0 0.0
  %6579 = vmatpush1.xpose.msra.mxu0 0.0
  %6580 = vmatprep.subr.mxu0 0.0
  %6581 = vmatpush1.xpose.msra.mxu0 0.0
  %6582 = vmatprep.subr.mxu0 0.0
  %6583 = vmatpush1.xpose.msra.mxu0 0.0
  %6584 = vmatprep.subr.mxu0 0.0
  %6585 = vmatpush1.xpose.msra.mxu0 0.0
  %6586 = vmatprep.subr.mxu0 0.0
  %6587 = vmatpush1.xpose.msra.mxu0 0.0
  %6588 = vmatprep.subr.mxu0 0.0
  %6589 = vmatpush1.xpose.msra.mxu0 0.0
  %6590 = vmatprep.subr.mxu0 0.0
  %6591 = vmatpush1.xpose.msra.mxu0 0.0
  %6592 = vmatprep.subr.mxu0 0.0
  %6593 = vmatpush1.xpose.msra.mxu0 0.0
  %6594 = vmatprep.subr.mxu0 0.0
  %6595 = vmatpush1.xpose.msra.mxu0 0.0
  %6596 = vmatprep.subr.mxu0 0.0
  %6597 = vmatpush1.xpose.msra.mxu0 0.0
  %6598 = vmatprep.subr.mxu0 0.0
  %6599 = vmatpush1.xpose.msra.mxu0 0.0
  %6600 = vmatprep.subr.mxu0 0.0
  %6601 = vmatpush1.xpose.msra.mxu0 0.0
  %6602 = vmatprep.subr.mxu0 0.0
  %6603 = vmatpush1.xpose.msra.mxu0 0.0
  %6604 = vmatprep.subr.mxu0 0.0
  %6605 = vmatpush1.xpose.msra.mxu0 0.0
  %6606 = vmatprep.subr.mxu0 0.0
  %6607 = vmatpush1.xpose.msra.mxu0 0.0
  %6608 = vmatprep.subr.mxu0 0.0
  %6609 = vmatpush1.xpose.msra.mxu0 0.0
  %6610 = vmatprep.subr.mxu0 0.0
  %6611 = vmatpush1.xpose.msra.mxu0 0.0
  %6612 = vmatprep.subr.mxu0 0.0
  %6613 = vmatpush1.xpose.msra.mxu0 0.0
  %6614 = vmatprep.subr.mxu0 0.0
  %6615 = vmatpush1.xpose.msra.mxu0 0.0
  %6616 = vmatprep.subr.mxu0 0.0
  %6617 = vmatpush1.xpose.msra.mxu0 0.0
  %6618 = vmatprep.subr.mxu0 0.0
  %6619 = vmatpush1.xpose.msra.mxu0 0.0
  %6620 = vmatprep.subr.mxu0 0.0
  %6621 = vmatpush1.xpose.msra.mxu0 0.0
  %6622 = vmatprep.subr.mxu0 0.0
  %6623 = vmatpush1.xpose.msra.mxu0 0.0
  %6624 = vmatprep.subr.mxu0 0.0
  %6625 = vmatpush1.xpose.msra.mxu0 0.0
  %6626 = vmatprep.mubr.f32.mxu0 0.0
  %6627 = vmatmul.mubr.f32.gmra.mrb[0].mxu0 %v6558
  %v6628 = vpop.f32.mrb[0].mxu0
  %v6629 = vadd.f32 %v6163, %v6628
  %v6630 = vpop.f32.mrb[0].mxu0
  %6631 = vdwg.mxu0
  %6632 = vrot.lane.b32.xlu0 %v246, 112
  %v6633 = vpop.permute.xlu0 %6632
  %6634 = vrot.lane.b32.xlu0 %v357, 112
  %v6635 = vpop.permute.xlu0 %6634
  %v6636 = vsel %vm555, %v6633, 0
  %v6638 = vsel %vm555, %v6635, 0
  %6640 = vmatprep.subr.mxu0 0.0
  %6641 = vmatpush1.xpose.msra.mxu0 %v6638
  %6642 = vmatprep.subr.mxu0 0.0
  %6643 = vmatpush1.xpose.msra.mxu0 0.0
  %6644 = vmatprep.subr.mxu0 0.0
  %6645 = vmatpush1.xpose.msra.mxu0 0.0
  %6646 = vmatprep.subr.mxu0 0.0
  %6647 = vmatpush1.xpose.msra.mxu0 0.0
  %6648 = vmatprep.subr.mxu0 0.0
  %6649 = vmatpush1.xpose.msra.mxu0 0.0
  %6650 = vmatprep.subr.mxu0 0.0
  %6651 = vmatpush1.xpose.msra.mxu0 0.0
  %6652 = vmatprep.subr.mxu0 0.0
  %6653 = vmatpush1.xpose.msra.mxu0 0.0
  %6654 = vmatprep.subr.mxu0 0.0
  %6655 = vmatpush1.xpose.msra.mxu0 0.0
  %6656 = vmatprep.subr.mxu0 0.0
  %6657 = vmatpush1.xpose.msra.mxu0 0.0
  %6658 = vmatprep.subr.mxu0 0.0
  %6659 = vmatpush1.xpose.msra.mxu0 0.0
  %6660 = vmatprep.subr.mxu0 0.0
  %6661 = vmatpush1.xpose.msra.mxu0 0.0
  %6662 = vmatprep.subr.mxu0 0.0
  %6663 = vmatpush1.xpose.msra.mxu0 0.0
  %6664 = vmatprep.subr.mxu0 0.0
  %6665 = vmatpush1.xpose.msra.mxu0 0.0
  %6666 = vmatprep.subr.mxu0 0.0
  %6667 = vmatpush1.xpose.msra.mxu0 0.0
  %6668 = vmatprep.subr.mxu0 0.0
  %6669 = vmatpush1.xpose.msra.mxu0 0.0
  %6670 = vmatprep.subr.mxu0 0.0
  %6671 = vmatpush1.xpose.msra.mxu0 0.0
  %6672 = vmatprep.subr.mxu0 0.0
  %6673 = vmatpush1.xpose.msra.mxu0 0.0
  %6674 = vmatprep.subr.mxu0 0.0
  %6675 = vmatpush1.xpose.msra.mxu0 0.0
  %6676 = vmatprep.subr.mxu0 0.0
  %6677 = vmatpush1.xpose.msra.mxu0 0.0
  %6678 = vmatprep.subr.mxu0 0.0
  %6679 = vmatpush1.xpose.msra.mxu0 0.0
  %6680 = vmatprep.subr.mxu0 0.0
  %6681 = vmatpush1.xpose.msra.mxu0 0.0
  %6682 = vmatprep.subr.mxu0 0.0
  %6683 = vmatpush1.xpose.msra.mxu0 0.0
  %6684 = vmatprep.subr.mxu0 0.0
  %6685 = vmatpush1.xpose.msra.mxu0 0.0
  %6686 = vmatprep.subr.mxu0 0.0
  %6687 = vmatpush1.xpose.msra.mxu0 0.0
  %6688 = vmatprep.subr.mxu0 0.0
  %6689 = vmatpush1.xpose.msra.mxu0 0.0
  %6690 = vmatprep.subr.mxu0 0.0
  %6691 = vmatpush1.xpose.msra.mxu0 0.0
  %6692 = vmatprep.subr.mxu0 0.0
  %6693 = vmatpush1.xpose.msra.mxu0 0.0
  %6694 = vmatprep.subr.mxu0 0.0
  %6695 = vmatpush1.xpose.msra.mxu0 0.0
  %6696 = vmatprep.subr.mxu0 0.0
  %6697 = vmatpush1.xpose.msra.mxu0 0.0
  %6698 = vmatprep.subr.mxu0 0.0
  %6699 = vmatpush1.xpose.msra.mxu0 0.0
  %6700 = vmatprep.subr.mxu0 0.0
  %6701 = vmatpush1.xpose.msra.mxu0 0.0
  %6702 = vmatprep.subr.mxu0 0.0
  %6703 = vmatpush1.xpose.msra.mxu0 0.0
  %6704 = vmatprep.mubr.f32.mxu0 0.0
  %6705 = vmatmul.mubr.f32.gmra.mrb[0].mxu0 %v6636
  %v6706 = vpop.f32.mrb[0].mxu0
  %v6707 = vadd.f32 %v6163, %v6706
  %v6708 = vpop.f32.mrb[0].mxu0
  %6709 = vdwg.mxu0
  %6710 = vrot.lane.b32.xlu0 %v247, 112
  %v6711 = vpop.permute.xlu0 %6710
  %6712 = vrot.lane.b32.xlu0 %v362, 112
  %v6713 = vpop.permute.xlu0 %6712
  %v6714 = vsel %vm555, %v6711, 0
  %v6716 = vsel %vm555, %v6713, 0
  %6718 = vmatprep.subr.mxu0 0.0
  %6719 = vmatpush1.xpose.msra.mxu0 %v6716
  %6720 = vmatprep.subr.mxu0 0.0
  %6721 = vmatpush1.xpose.msra.mxu0 0.0
  %6722 = vmatprep.subr.mxu0 0.0
  %6723 = vmatpush1.xpose.msra.mxu0 0.0
  %6724 = vmatprep.subr.mxu0 0.0
  %6725 = vmatpush1.xpose.msra.mxu0 0.0
  %6726 = vmatprep.subr.mxu0 0.0
  %6727 = vmatpush1.xpose.msra.mxu0 0.0
  %6728 = vmatprep.subr.mxu0 0.0
  %6729 = vmatpush1.xpose.msra.mxu0 0.0
  %6730 = vmatprep.subr.mxu0 0.0
  %6731 = vmatpush1.xpose.msra.mxu0 0.0
  %6732 = vmatprep.subr.mxu0 0.0
  %6733 = vmatpush1.xpose.msra.mxu0 0.0
  %6734 = vmatprep.subr.mxu0 0.0
  %6735 = vmatpush1.xpose.msra.mxu0 0.0
  %6736 = vmatprep.subr.mxu0 0.0
  %6737 = vmatpush1.xpose.msra.mxu0 0.0
  %6738 = vmatprep.subr.mxu0 0.0
  %6739 = vmatpush1.xpose.msra.mxu0 0.0
  %6740 = vmatprep.subr.mxu0 0.0
  %6741 = vmatpush1.xpose.msra.mxu0 0.0
  %6742 = vmatprep.subr.mxu0 0.0
  %6743 = vmatpush1.xpose.msra.mxu0 0.0
  %6744 = vmatprep.subr.mxu0 0.0
  %6745 = vmatpush1.xpose.msra.mxu0 0.0
  %6746 = vmatprep.subr.mxu0 0.0
  %6747 = vmatpush1.xpose.msra.mxu0 0.0
  %6748 = vmatprep.subr.mxu0 0.0
  %6749 = vmatpush1.xpose.msra.mxu0 0.0
  %6750 = vmatprep.subr.mxu0 0.0
  %6751 = vmatpush1.xpose.msra.mxu0 0.0
  %6752 = vmatprep.subr.mxu0 0.0
  %6753 = vmatpush1.xpose.msra.mxu0 0.0
  %6754 = vmatprep.subr.mxu0 0.0
  %6755 = vmatpush1.xpose.msra.mxu0 0.0
  %6756 = vmatprep.subr.mxu0 0.0
  %6757 = vmatpush1.xpose.msra.mxu0 0.0
  %6758 = vmatprep.subr.mxu0 0.0
  %6759 = vmatpush1.xpose.msra.mxu0 0.0
  %6760 = vmatprep.subr.mxu0 0.0
  %6761 = vmatpush1.xpose.msra.mxu0 0.0
  %6762 = vmatprep.subr.mxu0 0.0
  %6763 = vmatpush1.xpose.msra.mxu0 0.0
  %6764 = vmatprep.subr.mxu0 0.0
  %6765 = vmatpush1.xpose.msra.mxu0 0.0
  %6766 = vmatprep.subr.mxu0 0.0
  %6767 = vmatpush1.xpose.msra.mxu0 0.0
  %6768 = vmatprep.subr.mxu0 0.0
  %6769 = vmatpush1.xpose.msra.mxu0 0.0
  %6770 = vmatprep.subr.mxu0 0.0
  %6771 = vmatpush1.xpose.msra.mxu0 0.0
  %6772 = vmatprep.subr.mxu0 0.0
  %6773 = vmatpush1.xpose.msra.mxu0 0.0
  %6774 = vmatprep.subr.mxu0 0.0
  %6775 = vmatpush1.xpose.msra.mxu0 0.0
  %6776 = vmatprep.subr.mxu0 0.0
  %6777 = vmatpush1.xpose.msra.mxu0 0.0
  %6778 = vmatprep.subr.mxu0 0.0
  %6779 = vmatpush1.xpose.msra.mxu0 0.0
  %6780 = vmatprep.subr.mxu0 0.0
  %6781 = vmatpush1.xpose.msra.mxu0 0.0
  %6782 = vmatprep.mubr.f32.mxu0 0.0
  %6783 = vmatmul.mubr.f32.gmra.mrb[0].mxu0 %v6714
  %v6784 = vpop.f32.mrb[0].mxu0
  %v6785 = vadd.f32 %v6163, %v6784
  %v6786 = vpop.f32.mrb[0].mxu0
  %6787 = vdwg.mxu0
  %6788 = vrot.lane.b32.xlu0 %v248, 112
  %v6789 = vpop.permute.xlu0 %6788
  %6790 = vrot.lane.b32.xlu0 %v367, 112
  %v6791 = vpop.permute.xlu0 %6790
  %v6792 = vsel %vm555, %v6789, 0
  %v6794 = vsel %vm555, %v6791, 0
  %6796 = vmatprep.subr.mxu0 0.0
  %6797 = vmatpush1.xpose.msra.mxu0 %v6794
  %6798 = vmatprep.subr.mxu0 0.0
  %6799 = vmatpush1.xpose.msra.mxu0 0.0
  %6800 = vmatprep.subr.mxu0 0.0
  %6801 = vmatpush1.xpose.msra.mxu0 0.0
  %6802 = vmatprep.subr.mxu0 0.0
  %6803 = vmatpush1.xpose.msra.mxu0 0.0
  %6804 = vmatprep.subr.mxu0 0.0
  %6805 = vmatpush1.xpose.msra.mxu0 0.0
  %6806 = vmatprep.subr.mxu0 0.0
  %6807 = vmatpush1.xpose.msra.mxu0 0.0
  %6808 = vmatprep.subr.mxu0 0.0
  %6809 = vmatpush1.xpose.msra.mxu0 0.0
  %6810 = vmatprep.subr.mxu0 0.0
  %6811 = vmatpush1.xpose.msra.mxu0 0.0
  %6812 = vmatprep.subr.mxu0 0.0
  %6813 = vmatpush1.xpose.msra.mxu0 0.0
  %6814 = vmatprep.subr.mxu0 0.0
  %6815 = vmatpush1.xpose.msra.mxu0 0.0
  %6816 = vmatprep.subr.mxu0 0.0
  %6817 = vmatpush1.xpose.msra.mxu0 0.0
  %6818 = vmatprep.subr.mxu0 0.0
  %6819 = vmatpush1.xpose.msra.mxu0 0.0
  %6820 = vmatprep.subr.mxu0 0.0
  %6821 = vmatpush1.xpose.msra.mxu0 0.0
  %6822 = vmatprep.subr.mxu0 0.0
  %6823 = vmatpush1.xpose.msra.mxu0 0.0
  %6824 = vmatprep.subr.mxu0 0.0
  %6825 = vmatpush1.xpose.msra.mxu0 0.0
  %6826 = vmatprep.subr.mxu0 0.0
  %6827 = vmatpush1.xpose.msra.mxu0 0.0
  %6828 = vmatprep.subr.mxu0 0.0
  %6829 = vmatpush1.xpose.msra.mxu0 0.0
  %6830 = vmatprep.subr.mxu0 0.0
  %6831 = vmatpush1.xpose.msra.mxu0 0.0
  %6832 = vmatprep.subr.mxu0 0.0
  %6833 = vmatpush1.xpose.msra.mxu0 0.0
  %6834 = vmatprep.subr.mxu0 0.0
  %6835 = vmatpush1.xpose.msra.mxu0 0.0
  %6836 = vmatprep.subr.mxu0 0.0
  %6837 = vmatpush1.xpose.msra.mxu0 0.0
  %6838 = vmatprep.subr.mxu0 0.0
  %6839 = vmatpush1.xpose.msra.mxu0 0.0
  %6840 = vmatprep.subr.mxu0 0.0
  %6841 = vmatpush1.xpose.msra.mxu0 0.0
  %6842 = vmatprep.subr.mxu0 0.0
  %6843 = vmatpush1.xpose.msra.mxu0 0.0
  %6844 = vmatprep.subr.mxu0 0.0
  %6845 = vmatpush1.xpose.msra.mxu0 0.0
  %6846 = vmatprep.subr.mxu0 0.0
  %6847 = vmatpush1.xpose.msra.mxu0 0.0
  %6848 = vmatprep.subr.mxu0 0.0
  %6849 = vmatpush1.xpose.msra.mxu0 0.0
  %6850 = vmatprep.subr.mxu0 0.0
  %6851 = vmatpush1.xpose.msra.mxu0 0.0
  %6852 = vmatprep.subr.mxu0 0.0
  %6853 = vmatpush1.xpose.msra.mxu0 0.0
  %6854 = vmatprep.subr.mxu0 0.0
  %6855 = vmatpush1.xpose.msra.mxu0 0.0
  %6856 = vmatprep.subr.mxu0 0.0
  %6857 = vmatpush1.xpose.msra.mxu0 0.0
  %6858 = vmatprep.subr.mxu0 0.0
  %6859 = vmatpush1.xpose.msra.mxu0 0.0
  %6860 = vmatprep.mubr.f32.mxu0 0.0
  %6861 = vmatmul.mubr.f32.gmra.mrb[0].mxu0 %v6792
  %v6862 = vpop.f32.mrb[0].mxu0
  %v6863 = vadd.f32 %v6163, %v6862
  %v6864 = vpop.f32.mrb[0].mxu0
  %6865 = vdwg.mxu0
  %6866 = vrot.lane.b32.xlu0 %v249, 112
  %v6867 = vpop.permute.xlu0 %6866
  %6868 = vrot.lane.b32.xlu0 %v372, 112
  %v6869 = vpop.permute.xlu0 %6868
  %v6870 = vsel %vm555, %v6867, 0
  %v6872 = vsel %vm555, %v6869, 0
  %6874 = vmatprep.subr.mxu0 0.0
  %6875 = vmatpush1.xpose.msra.mxu0 %v6872
  %6876 = vmatprep.subr.mxu0 0.0
  %6877 = vmatpush1.xpose.msra.mxu0 0.0
  %6878 = vmatprep.subr.mxu0 0.0
  %6879 = vmatpush1.xpose.msra.mxu0 0.0
  %6880 = vmatprep.subr.mxu0 0.0
  %6881 = vmatpush1.xpose.msra.mxu0 0.0
  %6882 = vmatprep.subr.mxu0 0.0
  %6883 = vmatpush1.xpose.msra.mxu0 0.0
  %6884 = vmatprep.subr.mxu0 0.0
  %6885 = vmatpush1.xpose.msra.mxu0 0.0
  %6886 = vmatprep.subr.mxu0 0.0
  %6887 = vmatpush1.xpose.msra.mxu0 0.0
  %6888 = vmatprep.subr.mxu0 0.0
  %6889 = vmatpush1.xpose.msra.mxu0 0.0
  %6890 = vmatprep.subr.mxu0 0.0
  %6891 = vmatpush1.xpose.msra.mxu0 0.0
  %6892 = vmatprep.subr.mxu0 0.0
  %6893 = vmatpush1.xpose.msra.mxu0 0.0
  %6894 = vmatprep.subr.mxu0 0.0
  %6895 = vmatpush1.xpose.msra.mxu0 0.0
  %6896 = vmatprep.subr.mxu0 0.0
  %6897 = vmatpush1.xpose.msra.mxu0 0.0
  %6898 = vmatprep.subr.mxu0 0.0
  %6899 = vmatpush1.xpose.msra.mxu0 0.0
  %6900 = vmatprep.subr.mxu0 0.0
  %6901 = vmatpush1.xpose.msra.mxu0 0.0
  %6902 = vmatprep.subr.mxu0 0.0
  %6903 = vmatpush1.xpose.msra.mxu0 0.0
  %6904 = vmatprep.subr.mxu0 0.0
  %6905 = vmatpush1.xpose.msra.mxu0 0.0
  %6906 = vmatprep.subr.mxu0 0.0
  %6907 = vmatpush1.xpose.msra.mxu0 0.0
  %6908 = vmatprep.subr.mxu0 0.0
  %6909 = vmatpush1.xpose.msra.mxu0 0.0
  %6910 = vmatprep.subr.mxu0 0.0
  %6911 = vmatpush1.xpose.msra.mxu0 0.0
  %6912 = vmatprep.subr.mxu0 0.0
  %6913 = vmatpush1.xpose.msra.mxu0 0.0
  %6914 = vmatprep.subr.mxu0 0.0
  %6915 = vmatpush1.xpose.msra.mxu0 0.0
  %6916 = vmatprep.subr.mxu0 0.0
  %6917 = vmatpush1.xpose.msra.mxu0 0.0
  %6918 = vmatprep.subr.mxu0 0.0
  %6919 = vmatpush1.xpose.msra.mxu0 0.0
  %6920 = vmatprep.subr.mxu0 0.0
  %6921 = vmatpush1.xpose.msra.mxu0 0.0
  %6922 = vmatprep.subr.mxu0 0.0
  %6923 = vmatpush1.xpose.msra.mxu0 0.0
  %6924 = vmatprep.subr.mxu0 0.0
  %6925 = vmatpush1.xpose.msra.mxu0 0.0
  %6926 = vmatprep.subr.mxu0 0.0
  %6927 = vmatpush1.xpose.msra.mxu0 0.0
  %6928 = vmatprep.subr.mxu0 0.0
  %6929 = vmatpush1.xpose.msra.mxu0 0.0
  %6930 = vmatprep.subr.mxu0 0.0
  %6931 = vmatpush1.xpose.msra.mxu0 0.0
  %6932 = vmatprep.subr.mxu0 0.0
  %6933 = vmatpush1.xpose.msra.mxu0 0.0
  %6934 = vmatprep.subr.mxu0 0.0
  %6935 = vmatpush1.xpose.msra.mxu0 0.0
  %6936 = vmatprep.subr.mxu0 0.0
  %6937 = vmatpush1.xpose.msra.mxu0 0.0
  %6938 = vmatprep.mubr.f32.mxu0 0.0
  %6939 = vmatmul.mubr.f32.gmra.mrb[0].mxu0 %v6870
  %v6940 = vpop.f32.mrb[0].mxu0
  %v6941 = vadd.f32 %v6163, %v6940
  %v6942 = vpop.f32.mrb[0].mxu0
  %6943 = vdwg.mxu0
  %6944 = vrot.lane.b32.xlu0 %v250, 112
  %v6945 = vpop.permute.xlu0 %6944
  %6946 = vrot.lane.b32.xlu0 %v377, 112
  %v6947 = vpop.permute.xlu0 %6946
  %v6948 = vsel %vm555, %v6945, 0
  %v6950 = vsel %vm555, %v6947, 0
  %6952 = vmatprep.subr.mxu0 0.0
  %6953 = vmatpush1.xpose.msra.mxu0 %v6950
  %6954 = vmatprep.subr.mxu0 0.0
  %6955 = vmatpush1.xpose.msra.mxu0 0.0
  %6956 = vmatprep.subr.mxu0 0.0
  %6957 = vmatpush1.xpose.msra.mxu0 0.0
  %6958 = vmatprep.subr.mxu0 0.0
  %6959 = vmatpush1.xpose.msra.mxu0 0.0
  %6960 = vmatprep.subr.mxu0 0.0
  %6961 = vmatpush1.xpose.msra.mxu0 0.0
  %6962 = vmatprep.subr.mxu0 0.0
  %6963 = vmatpush1.xpose.msra.mxu0 0.0
  %6964 = vmatprep.subr.mxu0 0.0
  %6965 = vmatpush1.xpose.msra.mxu0 0.0
  %6966 = vmatprep.subr.mxu0 0.0
  %6967 = vmatpush1.xpose.msra.mxu0 0.0
  %6968 = vmatprep.subr.mxu0 0.0
  %6969 = vmatpush1.xpose.msra.mxu0 0.0
  %6970 = vmatprep.subr.mxu0 0.0
  %6971 = vmatpush1.xpose.msra.mxu0 0.0
  %6972 = vmatprep.subr.mxu0 0.0
  %6973 = vmatpush1.xpose.msra.mxu0 0.0
  %6974 = vmatprep.subr.mxu0 0.0
  %6975 = vmatpush1.xpose.msra.mxu0 0.0
  %6976 = vmatprep.subr.mxu0 0.0
  %6977 = vmatpush1.xpose.msra.mxu0 0.0
  %6978 = vmatprep.subr.mxu0 0.0
  %6979 = vmatpush1.xpose.msra.mxu0 0.0
  %6980 = vmatprep.subr.mxu0 0.0
  %6981 = vmatpush1.xpose.msra.mxu0 0.0
  %6982 = vmatprep.subr.mxu0 0.0
  %6983 = vmatpush1.xpose.msra.mxu0 0.0
  %6984 = vmatprep.subr.mxu0 0.0
  %6985 = vmatpush1.xpose.msra.mxu0 0.0
  %6986 = vmatprep.subr.mxu0 0.0
  %6987 = vmatpush1.xpose.msra.mxu0 0.0
  %6988 = vmatprep.subr.mxu0 0.0
  %6989 = vmatpush1.xpose.msra.mxu0 0.0
  %6990 = vmatprep.subr.mxu0 0.0
  %6991 = vmatpush1.xpose.msra.mxu0 0.0
  %6992 = vmatprep.subr.mxu0 0.0
  %6993 = vmatpush1.xpose.msra.mxu0 0.0
  %6994 = vmatprep.subr.mxu0 0.0
  %6995 = vmatpush1.xpose.msra.mxu0 0.0
  %6996 = vmatprep.subr.mxu0 0.0
  %6997 = vmatpush1.xpose.msra.mxu0 0.0
  %6998 = vmatprep.subr.mxu0 0.0
  %6999 = vmatpush1.xpose.msra.mxu0 0.0
  %7000 = vmatprep.subr.mxu0 0.0
  %7001 = vmatpush1.xpose.msra.mxu0 0.0
  %7002 = vmatprep.subr.mxu0 0.0
  %7003 = vmatpush1.xpose.msra.mxu0 0.0
  %7004 = vmatprep.subr.mxu0 0.0
  %7005 = vmatpush1.xpose.msra.mxu0 0.0
  %7006 = vmatprep.subr.mxu0 0.0
  %7007 = vmatpush1.xpose.msra.mxu0 0.0
  %7008 = vmatprep.subr.mxu0 0.0
  %7009 = vmatpush1.xpose.msra.mxu0 0.0
  %7010 = vmatprep.subr.mxu0 0.0
  %7011 = vmatpush1.xpose.msra.mxu0 0.0
  %7012 = vmatprep.subr.mxu0 0.0
  %7013 = vmatpush1.xpose.msra.mxu0 0.0
  %7014 = vmatprep.subr.mxu0 0.0
  %7015 = vmatpush1.xpose.msra.mxu0 0.0
  %7016 = vmatprep.mubr.f32.mxu0 0.0
  %7017 = vmatmul.mubr.f32.gmra.mrb[0].mxu0 %v6948
  %v7018 = vpop.f32.mrb[0].mxu0
  %v7019 = vadd.f32 %v6163, %v7018
  %v7020 = vpop.f32.mrb[0].mxu0
  %7021 = vdwg.mxu0
  %7022 = vrot.lane.b32.xlu0 %v251, 112
  %v7023 = vpop.permute.xlu0 %7022
  %7024 = vrot.lane.b32.xlu0 %v382, 112
  %v7025 = vpop.permute.xlu0 %7024
  %v7026 = vsel %vm555, %v7023, 0
  %v7028 = vsel %vm555, %v7025, 0
  %7030 = vmatprep.subr.mxu0 0.0
  %7031 = vmatpush1.xpose.msra.mxu0 %v7028
  %7032 = vmatprep.subr.mxu0 0.0
  %7033 = vmatpush1.xpose.msra.mxu0 0.0
  %7034 = vmatprep.subr.mxu0 0.0
  %7035 = vmatpush1.xpose.msra.mxu0 0.0
  %7036 = vmatprep.subr.mxu0 0.0
  %7037 = vmatpush1.xpose.msra.mxu0 0.0
  %7038 = vmatprep.subr.mxu0 0.0
  %7039 = vmatpush1.xpose.msra.mxu0 0.0
  %7040 = vmatprep.subr.mxu0 0.0
  %7041 = vmatpush1.xpose.msra.mxu0 0.0
  %7042 = vmatprep.subr.mxu0 0.0
  %7043 = vmatpush1.xpose.msra.mxu0 0.0
  %7044 = vmatprep.subr.mxu0 0.0
  %7045 = vmatpush1.xpose.msra.mxu0 0.0
  %7046 = vmatprep.subr.mxu0 0.0
  %7047 = vmatpush1.xpose.msra.mxu0 0.0
  %7048 = vmatprep.subr.mxu0 0.0
  %7049 = vmatpush1.xpose.msra.mxu0 0.0
  %7050 = vmatprep.subr.mxu0 0.0
  %7051 = vmatpush1.xpose.msra.mxu0 0.0
  %7052 = vmatprep.subr.mxu0 0.0
  %7053 = vmatpush1.xpose.msra.mxu0 0.0
  %7054 = vmatprep.subr.mxu0 0.0
  %7055 = vmatpush1.xpose.msra.mxu0 0.0
  %7056 = vmatprep.subr.mxu0 0.0
  %7057 = vmatpush1.xpose.msra.mxu0 0.0
  %7058 = vmatprep.subr.mxu0 0.0
  %7059 = vmatpush1.xpose.msra.mxu0 0.0
  %7060 = vmatprep.subr.mxu0 0.0
  %7061 = vmatpush1.xpose.msra.mxu0 0.0
  %7062 = vmatprep.subr.mxu0 0.0
  %7063 = vmatpush1.xpose.msra.mxu0 0.0
  %7064 = vmatprep.subr.mxu0 0.0
  %7065 = vmatpush1.xpose.msra.mxu0 0.0
  %7066 = vmatprep.subr.mxu0 0.0
  %7067 = vmatpush1.xpose.msra.mxu0 0.0
  %7068 = vmatprep.subr.mxu0 0.0
  %7069 = vmatpush1.xpose.msra.mxu0 0.0
  %7070 = vmatprep.subr.mxu0 0.0
  %7071 = vmatpush1.xpose.msra.mxu0 0.0
  %7072 = vmatprep.subr.mxu0 0.0
  %7073 = vmatpush1.xpose.msra.mxu0 0.0
  %7074 = vmatprep.subr.mxu0 0.0
  %7075 = vmatpush1.xpose.msra.mxu0 0.0
  %7076 = vmatprep.subr.mxu0 0.0
  %7077 = vmatpush1.xpose.msra.mxu0 0.0
  %7078 = vmatprep.subr.mxu0 0.0
  %7079 = vmatpush1.xpose.msra.mxu0 0.0
  %7080 = vmatprep.subr.mxu0 0.0
  %7081 = vmatpush1.xpose.msra.mxu0 0.0
  %7082 = vmatprep.subr.mxu0 0.0
  %7083 = vmatpush1.xpose.msra.mxu0 0.0
  %7084 = vmatprep.subr.mxu0 0.0
  %7085 = vmatpush1.xpose.msra.mxu0 0.0
  %7086 = vmatprep.subr.mxu0 0.0
  %7087 = vmatpush1.xpose.msra.mxu0 0.0
  %7088 = vmatprep.subr.mxu0 0.0
  %7089 = vmatpush1.xpose.msra.mxu0 0.0
  %7090 = vmatprep.subr.mxu0 0.0
  %7091 = vmatpush1.xpose.msra.mxu0 0.0
  %7092 = vmatprep.subr.mxu0 0.0
  %7093 = vmatpush1.xpose.msra.mxu0 0.0
  %7094 = vmatprep.mubr.f32.mxu0 0.0
  %7095 = vmatmul.mubr.f32.gmra.mrb[0].mxu0 %v7026
  %v7096 = vpop.f32.mrb[0].mxu0
  %v7097 = vadd.f32 %v6163, %v7096
  %v7098 = vpop.f32.mrb[0].mxu0
  %7099 = vdwg.mxu0
  %7100 = vrot.lane.b32.xlu0 %v252, 112
  %v7101 = vpop.permute.xlu0 %7100
  %7102 = vrot.lane.b32.xlu0 %v387, 112
  %v7103 = vpop.permute.xlu0 %7102
  %v7104 = vsel %vm555, %v7101, 0
  %v7106 = vsel %vm555, %v7103, 0
  %7108 = vmatprep.subr.mxu0 0.0
  %7109 = vmatpush1.xpose.msra.mxu0 %v7106
  %7110 = vmatprep.subr.mxu0 0.0
  %7111 = vmatpush1.xpose.msra.mxu0 0.0
  %7112 = vmatprep.subr.mxu0 0.0
  %7113 = vmatpush1.xpose.msra.mxu0 0.0
  %7114 = vmatprep.subr.mxu0 0.0
  %7115 = vmatpush1.xpose.msra.mxu0 0.0
  %7116 = vmatprep.subr.mxu0 0.0
  %7117 = vmatpush1.xpose.msra.mxu0 0.0
  %7118 = vmatprep.subr.mxu0 0.0
  %7119 = vmatpush1.xpose.msra.mxu0 0.0
  %7120 = vmatprep.subr.mxu0 0.0
  %7121 = vmatpush1.xpose.msra.mxu0 0.0
  %7122 = vmatprep.subr.mxu0 0.0
  %7123 = vmatpush1.xpose.msra.mxu0 0.0
  %7124 = vmatprep.subr.mxu0 0.0
  %7125 = vmatpush1.xpose.msra.mxu0 0.0
  %7126 = vmatprep.subr.mxu0 0.0
  %7127 = vmatpush1.xpose.msra.mxu0 0.0
  %7128 = vmatprep.subr.mxu0 0.0
  %7129 = vmatpush1.xpose.msra.mxu0 0.0
  %7130 = vmatprep.subr.mxu0 0.0
  %7131 = vmatpush1.xpose.msra.mxu0 0.0
  %7132 = vmatprep.subr.mxu0 0.0
  %7133 = vmatpush1.xpose.msra.mxu0 0.0
  %7134 = vmatprep.subr.mxu0 0.0
  %7135 = vmatpush1.xpose.msra.mxu0 0.0
  %7136 = vmatprep.subr.mxu0 0.0
  %7137 = vmatpush1.xpose.msra.mxu0 0.0
  %7138 = vmatprep.subr.mxu0 0.0
  %7139 = vmatpush1.xpose.msra.mxu0 0.0
  %7140 = vmatprep.subr.mxu0 0.0
  %7141 = vmatpush1.xpose.msra.mxu0 0.0
  %7142 = vmatprep.subr.mxu0 0.0
  %7143 = vmatpush1.xpose.msra.mxu0 0.0
  %7144 = vmatprep.subr.mxu0 0.0
  %7145 = vmatpush1.xpose.msra.mxu0 0.0
  %7146 = vmatprep.subr.mxu0 0.0
  %7147 = vmatpush1.xpose.msra.mxu0 0.0
  %7148 = vmatprep.subr.mxu0 0.0
  %7149 = vmatpush1.xpose.msra.mxu0 0.0
  %7150 = vmatprep.subr.mxu0 0.0
  %7151 = vmatpush1.xpose.msra.mxu0 0.0
  %7152 = vmatprep.subr.mxu0 0.0
  %7153 = vmatpush1.xpose.msra.mxu0 0.0
  %7154 = vmatprep.subr.mxu0 0.0
  %7155 = vmatpush1.xpose.msra.mxu0 0.0
  %7156 = vmatprep.subr.mxu0 0.0
  %7157 = vmatpush1.xpose.msra.mxu0 0.0
  %7158 = vmatprep.subr.mxu0 0.0
  %7159 = vmatpush1.xpose.msra.mxu0 0.0
  %7160 = vmatprep.subr.mxu0 0.0
  %7161 = vmatpush1.xpose.msra.mxu0 0.0
  %7162 = vmatprep.subr.mxu0 0.0
  %7163 = vmatpush1.xpose.msra.mxu0 0.0
  %7164 = vmatprep.subr.mxu0 0.0
  %7165 = vmatpush1.xpose.msra.mxu0 0.0
  %7166 = vmatprep.subr.mxu0 0.0
  %7167 = vmatpush1.xpose.msra.mxu0 0.0
  %7168 = vmatprep.subr.mxu0 0.0
  %7169 = vmatpush1.xpose.msra.mxu0 0.0
  %7170 = vmatprep.subr.mxu0 0.0
  %7171 = vmatpush1.xpose.msra.mxu0 0.0
  %7172 = vmatprep.mubr.f32.mxu0 0.0
  %7173 = vmatmul.mubr.f32.gmra.mrb[0].mxu0 %v7104
  %v7174 = vpop.f32.mrb[0].mxu0
  %v7175 = vadd.f32 %v6163, %v7174
  %v7176 = vpop.f32.mrb[0].mxu0
  %7177 = vdwg.mxu0
  %7178 = vrot.lane.b32.xlu0 %v253, 112
  %v7179 = vpop.permute.xlu0 %7178
  %7180 = vrot.lane.b32.xlu0 %v392, 112
  %v7181 = vpop.permute.xlu0 %7180
  %v7182 = vsel %vm555, %v7179, 0
  %v7184 = vsel %vm555, %v7181, 0
  %7186 = vmatprep.subr.mxu0 0.0
  %7187 = vmatpush1.xpose.msra.mxu0 %v7184
  %7188 = vmatprep.subr.mxu0 0.0
  %7189 = vmatpush1.xpose.msra.mxu0 0.0
  %7190 = vmatprep.subr.mxu0 0.0
  %7191 = vmatpush1.xpose.msra.mxu0 0.0
  %7192 = vmatprep.subr.mxu0 0.0
  %7193 = vmatpush1.xpose.msra.mxu0 0.0
  %7194 = vmatprep.subr.mxu0 0.0
  %7195 = vmatpush1.xpose.msra.mxu0 0.0
  %7196 = vmatprep.subr.mxu0 0.0
  %7197 = vmatpush1.xpose.msra.mxu0 0.0
  %7198 = vmatprep.subr.mxu0 0.0
  %7199 = vmatpush1.xpose.msra.mxu0 0.0
  %7200 = vmatprep.subr.mxu0 0.0
  %7201 = vmatpush1.xpose.msra.mxu0 0.0
  %7202 = vmatprep.subr.mxu0 0.0
  %7203 = vmatpush1.xpose.msra.mxu0 0.0
  %7204 = vmatprep.subr.mxu0 0.0
  %7205 = vmatpush1.xpose.msra.mxu0 0.0
  %7206 = vmatprep.subr.mxu0 0.0
  %7207 = vmatpush1.xpose.msra.mxu0 0.0
  %7208 = vmatprep.subr.mxu0 0.0
  %7209 = vmatpush1.xpose.msra.mxu0 0.0
  %7210 = vmatprep.subr.mxu0 0.0
  %7211 = vmatpush1.xpose.msra.mxu0 0.0
  %7212 = vmatprep.subr.mxu0 0.0
  %7213 = vmatpush1.xpose.msra.mxu0 0.0
  %7214 = vmatprep.subr.mxu0 0.0
  %7215 = vmatpush1.xpose.msra.mxu0 0.0
  %7216 = vmatprep.subr.mxu0 0.0
  %7217 = vmatpush1.xpose.msra.mxu0 0.0
  %7218 = vmatprep.subr.mxu0 0.0
  %7219 = vmatpush1.xpose.msra.mxu0 0.0
  %7220 = vmatprep.subr.mxu0 0.0
  %7221 = vmatpush1.xpose.msra.mxu0 0.0
  %7222 = vmatprep.subr.mxu0 0.0
  %7223 = vmatpush1.xpose.msra.mxu0 0.0
  %7224 = vmatprep.subr.mxu0 0.0
  %7225 = vmatpush1.xpose.msra.mxu0 0.0
  %7226 = vmatprep.subr.mxu0 0.0
  %7227 = vmatpush1.xpose.msra.mxu0 0.0
  %7228 = vmatprep.subr.mxu0 0.0
  %7229 = vmatpush1.xpose.msra.mxu0 0.0
  %7230 = vmatprep.subr.mxu0 0.0
  %7231 = vmatpush1.xpose.msra.mxu0 0.0
  %7232 = vmatprep.subr.mxu0 0.0
  %7233 = vmatpush1.xpose.msra.mxu0 0.0
  %7234 = vmatprep.subr.mxu0 0.0
  %7235 = vmatpush1.xpose.msra.mxu0 0.0
  %7236 = vmatprep.subr.mxu0 0.0
  %7237 = vmatpush1.xpose.msra.mxu0 0.0
  %7238 = vmatprep.subr.mxu0 0.0
  %7239 = vmatpush1.xpose.msra.mxu0 0.0
  %7240 = vmatprep.subr.mxu0 0.0
  %7241 = vmatpush1.xpose.msra.mxu0 0.0
  %7242 = vmatprep.subr.mxu0 0.0
  %7243 = vmatpush1.xpose.msra.mxu0 0.0
  %7244 = vmatprep.subr.mxu0 0.0
  %7245 = vmatpush1.xpose.msra.mxu0 0.0
  %7246 = vmatprep.subr.mxu0 0.0
  %7247 = vmatpush1.xpose.msra.mxu0 0.0
  %7248 = vmatprep.subr.mxu0 0.0
  %7249 = vmatpush1.xpose.msra.mxu0 0.0
  %7250 = vmatprep.mubr.f32.mxu0 0.0
  %7251 = vmatmul.mubr.f32.gmra.mrb[0].mxu0 %v7182
  %v7252 = vpop.f32.mrb[0].mxu0
  %v7253 = vadd.f32 %v6163, %v7252
  %v7254 = vpop.f32.mrb[0].mxu0
  %7255 = vdwg.mxu0
  %7256 = vrot.lane.b32.xlu0 %v254, 112
  %v7257 = vpop.permute.xlu0 %7256
  %7258 = vrot.lane.b32.xlu0 %v397, 112
  %v7259 = vpop.permute.xlu0 %7258
  %v7260 = vsel %vm555, %v7257, 0
  %v7262 = vsel %vm555, %v7259, 0
  %7264 = vmatprep.subr.mxu0 0.0
  %7265 = vmatpush1.xpose.msra.mxu0 %v7262
  %7266 = vmatprep.subr.mxu0 0.0
  %7267 = vmatpush1.xpose.msra.mxu0 0.0
  %7268 = vmatprep.subr.mxu0 0.0
  %7269 = vmatpush1.xpose.msra.mxu0 0.0
  %7270 = vmatprep.subr.mxu0 0.0
  %7271 = vmatpush1.xpose.msra.mxu0 0.0
  %7272 = vmatprep.subr.mxu0 0.0
  %7273 = vmatpush1.xpose.msra.mxu0 0.0
  %7274 = vmatprep.subr.mxu0 0.0
  %7275 = vmatpush1.xpose.msra.mxu0 0.0
  %7276 = vmatprep.subr.mxu0 0.0
  %7277 = vmatpush1.xpose.msra.mxu0 0.0
  %7278 = vmatprep.subr.mxu0 0.0
  %7279 = vmatpush1.xpose.msra.mxu0 0.0
  %7280 = vmatprep.subr.mxu0 0.0
  %7281 = vmatpush1.xpose.msra.mxu0 0.0
  %7282 = vmatprep.subr.mxu0 0.0
  %7283 = vmatpush1.xpose.msra.mxu0 0.0
  %7284 = vmatprep.subr.mxu0 0.0
  %7285 = vmatpush1.xpose.msra.mxu0 0.0
  %7286 = vmatprep.subr.mxu0 0.0
  %7287 = vmatpush1.xpose.msra.mxu0 0.0
  %7288 = vmatprep.subr.mxu0 0.0
  %7289 = vmatpush1.xpose.msra.mxu0 0.0
  %7290 = vmatprep.subr.mxu0 0.0
  %7291 = vmatpush1.xpose.msra.mxu0 0.0
  %7292 = vmatprep.subr.mxu0 0.0
  %7293 = vmatpush1.xpose.msra.mxu0 0.0
  %7294 = vmatprep.subr.mxu0 0.0
  %7295 = vmatpush1.xpose.msra.mxu0 0.0
  %7296 = vmatprep.subr.mxu0 0.0
  %7297 = vmatpush1.xpose.msra.mxu0 0.0
  %7298 = vmatprep.subr.mxu0 0.0
  %7299 = vmatpush1.xpose.msra.mxu0 0.0
  %7300 = vmatprep.subr.mxu0 0.0
  %7301 = vmatpush1.xpose.msra.mxu0 0.0
  %7302 = vmatprep.subr.mxu0 0.0
  %7303 = vmatpush1.xpose.msra.mxu0 0.0
  %7304 = vmatprep.subr.mxu0 0.0
  %7305 = vmatpush1.xpose.msra.mxu0 0.0
  %7306 = vmatprep.subr.mxu0 0.0
  %7307 = vmatpush1.xpose.msra.mxu0 0.0
  %7308 = vmatprep.subr.mxu0 0.0
  %7309 = vmatpush1.xpose.msra.mxu0 0.0
  %7310 = vmatprep.subr.mxu0 0.0
  %7311 = vmatpush1.xpose.msra.mxu0 0.0
  %7312 = vmatprep.subr.mxu0 0.0
  %7313 = vmatpush1.xpose.msra.mxu0 0.0
  %7314 = vmatprep.subr.mxu0 0.0
  %7315 = vmatpush1.xpose.msra.mxu0 0.0
  %7316 = vmatprep.subr.mxu0 0.0
  %7317 = vmatpush1.xpose.msra.mxu0 0.0
  %7318 = vmatprep.subr.mxu0 0.0
  %7319 = vmatpush1.xpose.msra.mxu0 0.0
  %7320 = vmatprep.subr.mxu0 0.0
  %7321 = vmatpush1.xpose.msra.mxu0 0.0
  %7322 = vmatprep.subr.mxu0 0.0
  %7323 = vmatpush1.xpose.msra.mxu0 0.0
  %7324 = vmatprep.subr.mxu0 0.0
  %7325 = vmatpush1.xpose.msra.mxu0 0.0
  %7326 = vmatprep.subr.mxu0 0.0
  %7327 = vmatpush1.xpose.msra.mxu0 0.0
  %7328 = vmatprep.mubr.f32.mxu0 0.0
  %7329 = vmatmul.mubr.f32.gmra.mrb[0].mxu0 %v7260
  %v7330 = vpop.f32.mrb[0].mxu0
  %v7331 = vadd.f32 %v6163, %v7330
  %v7332 = vpop.f32.mrb[0].mxu0
  %7333 = vdwg.mxu0
  %7334 = vrot.lane.b32.xlu0 %v255, 112
  %v7335 = vpop.permute.xlu0 %7334
  %7336 = vrot.lane.b32.xlu0 %v402, 112
  %v7337 = vpop.permute.xlu0 %7336
  %v7338 = vsel %vm555, %v7335, 0
  %v7340 = vsel %vm555, %v7337, 0
  %7342 = vmatprep.subr.mxu0 0.0
  %7343 = vmatpush1.xpose.msra.mxu0 %v7340
  %7344 = vmatprep.subr.mxu0 0.0
  %7345 = vmatpush1.xpose.msra.mxu0 0.0
  %7346 = vmatprep.subr.mxu0 0.0
  %7347 = vmatpush1.xpose.msra.mxu0 0.0
  %7348 = vmatprep.subr.mxu0 0.0
  %7349 = vmatpush1.xpose.msra.mxu0 0.0
  %7350 = vmatprep.subr.mxu0 0.0
  %7351 = vmatpush1.xpose.msra.mxu0 0.0
  %7352 = vmatprep.subr.mxu0 0.0
  %7353 = vmatpush1.xpose.msra.mxu0 0.0
  %7354 = vmatprep.subr.mxu0 0.0
  %7355 = vmatpush1.xpose.msra.mxu0 0.0
  %7356 = vmatprep.subr.mxu0 0.0
  %7357 = vmatpush1.xpose.msra.mxu0 0.0
  %7358 = vmatprep.subr.mxu0 0.0
  %7359 = vmatpush1.xpose.msra.mxu0 0.0
  %7360 = vmatprep.subr.mxu0 0.0
  %7361 = vmatpush1.xpose.msra.mxu0 0.0
  %7362 = vmatprep.subr.mxu0 0.0
  %7363 = vmatpush1.xpose.msra.mxu0 0.0
  %7364 = vmatprep.subr.mxu0 0.0
  %7365 = vmatpush1.xpose.msra.mxu0 0.0
  %7366 = vmatprep.subr.mxu0 0.0
  %7367 = vmatpush1.xpose.msra.mxu0 0.0
  %7368 = vmatprep.subr.mxu0 0.0
  %7369 = vmatpush1.xpose.msra.mxu0 0.0
  %7370 = vmatprep.subr.mxu0 0.0
  %7371 = vmatpush1.xpose.msra.mxu0 0.0
  %7372 = vmatprep.subr.mxu0 0.0
  %7373 = vmatpush1.xpose.msra.mxu0 0.0
  %7374 = vmatprep.subr.mxu0 0.0
  %7375 = vmatpush1.xpose.msra.mxu0 0.0
  %7376 = vmatprep.subr.mxu0 0.0
  %7377 = vmatpush1.xpose.msra.mxu0 0.0
  %7378 = vmatprep.subr.mxu0 0.0
  %7379 = vmatpush1.xpose.msra.mxu0 0.0
  %7380 = vmatprep.subr.mxu0 0.0
  %7381 = vmatpush1.xpose.msra.mxu0 0.0
  %7382 = vmatprep.subr.mxu0 0.0
  %7383 = vmatpush1.xpose.msra.mxu0 0.0
  %7384 = vmatprep.subr.mxu0 0.0
  %7385 = vmatpush1.xpose.msra.mxu0 0.0
  %7386 = vmatprep.subr.mxu0 0.0
  %7387 = vmatpush1.xpose.msra.mxu0 0.0
  %7388 = vmatprep.subr.mxu0 0.0
  %7389 = vmatpush1.xpose.msra.mxu0 0.0
  %7390 = vmatprep.subr.mxu0 0.0
  %7391 = vmatpush1.xpose.msra.mxu0 0.0
  %7392 = vmatprep.subr.mxu0 0.0
  %7393 = vmatpush1.xpose.msra.mxu0 0.0
  %7394 = vmatprep.subr.mxu0 0.0
  %7395 = vmatpush1.xpose.msra.mxu0 0.0
  %7396 = vmatprep.subr.mxu0 0.0
  %7397 = vmatpush1.xpose.msra.mxu0 0.0
  %7398 = vmatprep.subr.mxu0 0.0
  %7399 = vmatpush1.xpose.msra.mxu0 0.0
  %7400 = vmatprep.subr.mxu0 0.0
  %7401 = vmatpush1.xpose.msra.mxu0 0.0
  %7402 = vmatprep.subr.mxu0 0.0
  %7403 = vmatpush1.xpose.msra.mxu0 0.0
  %7404 = vmatprep.subr.mxu0 0.0
  %7405 = vmatpush1.xpose.msra.mxu0 0.0
  %7406 = vmatprep.mubr.f32.mxu0 0.0
  %7407 = vmatmul.mubr.f32.gmra.mrb[0].mxu0 %v7338
  %v7408 = vpop.f32.mrb[0].mxu0
  %v7409 = vadd.f32 %v6163, %v7408
  %v7410 = vpop.f32.mrb[0].mxu0
  %7411 = vdwg.mxu0
  %v7412 = vsel %vm555, %v6239, -inf
  %7413 = vmax.xlane.f32.xlu0 %v7412
  %v7414 = vpop.xlane.xlu0 %7413
  %v7415 = vsel %vm555, %v6317, -inf
  %7416 = vmax.xlane.f32.xlu0 %v7415
  %v7417 = vpop.xlane.xlu0 %7416
  %v7418 = vsel %vm555, %v6395, -inf
  %7419 = vmax.xlane.f32.xlu0 %v7418
  %v7420 = vpop.xlane.xlu0 %7419
  %v7421 = vsel %vm555, %v6473, -inf
  %7422 = vmax.xlane.f32.xlu0 %v7421
  %v7423 = vpop.xlane.xlu0 %7422
  %v7424 = vsel %vm555, %v6551, -inf
  %7425 = vmax.xlane.f32.xlu0 %v7424
  %v7426 = vpop.xlane.xlu0 %7425
  %v7427 = vsel %vm555, %v6629, -inf
  %7428 = vmax.xlane.f32.xlu0 %v7427
  %v7429 = vpop.xlane.xlu0 %7428
  %v7430 = vsel %vm555, %v6707, -inf
  %7431 = vmax.xlane.f32.xlu0 %v7430
  %v7432 = vpop.xlane.xlu0 %7431
  %v7433 = vsel %vm555, %v6785, -inf
  %7434 = vmax.xlane.f32.xlu0 %v7433
  %v7435 = vpop.xlane.xlu0 %7434
  %v7436 = vsel %vm555, %v6863, -inf
  %7437 = vmax.xlane.f32.xlu0 %v7436
  %v7438 = vpop.xlane.xlu0 %7437
  %v7439 = vsel %vm555, %v6941, -inf
  %7440 = vmax.xlane.f32.xlu0 %v7439
  %v7441 = vpop.xlane.xlu0 %7440
  %v7442 = vsel %vm555, %v7019, -inf
  %7443 = vmax.xlane.f32.xlu0 %v7442
  %v7444 = vpop.xlane.xlu0 %7443
  %v7445 = vsel %vm555, %v7097, -inf
  %7446 = vmax.xlane.f32.xlu0 %v7445
  %v7447 = vpop.xlane.xlu0 %7446
  %v7448 = vsel %vm555, %v7175, -inf
  %7449 = vmax.xlane.f32.xlu0 %v7448
  %v7450 = vpop.xlane.xlu0 %7449
  %v7451 = vsel %vm555, %v7253, -inf
  %7452 = vmax.xlane.f32.xlu0 %v7451
  %v7453 = vpop.xlane.xlu0 %7452
  %v7454 = vsel %vm555, %v7331, -inf
  %7455 = vmax.xlane.f32.xlu0 %v7454
  %v7456 = vpop.xlane.xlu0 %7455
  %v7457 = vsel %vm555, %v7409, -inf
  %7458 = vmax.xlane.f32.xlu0 %v7457
  %v7459 = vpop.xlane.xlu0 %7458
  %v7460 = vsub.f32 %v6239, %v7414
  %v7461 = vsub.f32 %v6317, %v7417
  %v7462 = vsub.f32 %v6395, %v7420
  %v7463 = vsub.f32 %v6473, %v7423
  %v7464 = vsub.f32 %v6551, %v7426
  %v7465 = vsub.f32 %v6629, %v7429
  %v7466 = vsub.f32 %v6707, %v7432
  %v7467 = vsub.f32 %v6785, %v7435
  %v7468 = vsub.f32 %v6863, %v7438
  %v7469 = vsub.f32 %v6941, %v7441
  %v7470 = vsub.f32 %v7019, %v7444
  %v7471 = vsub.f32 %v7097, %v7447
  %v7472 = vsub.f32 %v7175, %v7450
  %v7473 = vsub.f32 %v7253, %v7453
  %v7474 = vsub.f32 %v7331, %v7456
  %v7475 = vsub.f32 %v7409, %v7459
  %v7476 = vmul.f32 %v7460, 1.442695
  %v7477 = vpow.pop %v7476
  %v7478 = vmul.f32 %v7461, 1.442695
  %v7479 = vpow.pop %v7478
  %v7480 = vmul.f32 %v7462, 1.442695
  %v7481 = vpow.pop %v7480
  %v7482 = vmul.f32 %v7463, 1.442695
  %v7483 = vpow.pop %v7482
  %v7484 = vmul.f32 %v7464, 1.442695
  %v7485 = vpow.pop %v7484
  %v7486 = vmul.f32 %v7465, 1.442695
  %v7487 = vpow.pop %v7486
  %v7488 = vmul.f32 %v7466, 1.442695
  %v7489 = vpow.pop %v7488
  %v7490 = vmul.f32 %v7467, 1.442695
  %v7491 = vpow.pop %v7490
  %v7492 = vmul.f32 %v7468, 1.442695
  %v7493 = vpow.pop %v7492
  %v7494 = vmul.f32 %v7469, 1.442695
  %v7495 = vpow.pop %v7494
  %v7496 = vmul.f32 %v7470, 1.442695
  %v7497 = vpow.pop %v7496
  %v7498 = vmul.f32 %v7471, 1.442695
  %v7499 = vpow.pop %v7498
  %v7500 = vmul.f32 %v7472, 1.442695
  %v7501 = vpow.pop %v7500
  %v7502 = vmul.f32 %v7473, 1.442695
  %v7503 = vpow.pop %v7502
  %v7504 = vmul.f32 %v7474, 1.442695
  %v7505 = vpow.pop %v7504
  %v7506 = vmul.f32 %v7475, 1.442695
  %v7507 = vpow.pop %v7506
  %v7508 = vsel %vm555, %v7477, 0.0
  %7509 = vadd.xlane.f32.xlu0 %v7508
  %v7510 = vpop.xlane.xlu0 %7509
  %v7511 = vsel %vm555, %v7479, 0.0
  %7512 = vadd.xlane.f32.xlu0 %v7511
  %v7513 = vpop.xlane.xlu0 %7512
  %v7514 = vsel %vm555, %v7481, 0.0
  %7515 = vadd.xlane.f32.xlu0 %v7514
  %v7516 = vpop.xlane.xlu0 %7515
  %v7517 = vsel %vm555, %v7483, 0.0
  %7518 = vadd.xlane.f32.xlu0 %v7517
  %v7519 = vpop.xlane.xlu0 %7518
  %v7520 = vsel %vm555, %v7485, 0.0
  %7521 = vadd.xlane.f32.xlu0 %v7520
  %v7522 = vpop.xlane.xlu0 %7521
  %v7523 = vsel %vm555, %v7487, 0.0
  %7524 = vadd.xlane.f32.xlu0 %v7523
  %v7525 = vpop.xlane.xlu0 %7524
  %v7526 = vsel %vm555, %v7489, 0.0
  %7527 = vadd.xlane.f32.xlu0 %v7526
  %v7528 = vpop.xlane.xlu0 %7527
  %v7529 = vsel %vm555, %v7491, 0.0
  %7530 = vadd.xlane.f32.xlu0 %v7529
  %v7531 = vpop.xlane.xlu0 %7530
  %v7532 = vsel %vm555, %v7493, 0.0
  %7533 = vadd.xlane.f32.xlu0 %v7532
  %v7534 = vpop.xlane.xlu0 %7533
  %v7535 = vsel %vm555, %v7495, 0.0
  %7536 = vadd.xlane.f32.xlu0 %v7535
  %v7537 = vpop.xlane.xlu0 %7536
  %v7538 = vsel %vm555, %v7497, 0.0
  %7539 = vadd.xlane.f32.xlu0 %v7538
  %v7540 = vpop.xlane.xlu0 %7539
  %v7541 = vsel %vm555, %v7499, 0.0
  %7542 = vadd.xlane.f32.xlu0 %v7541
  %v7543 = vpop.xlane.xlu0 %7542
  %v7544 = vsel %vm555, %v7501, 0.0
  %7545 = vadd.xlane.f32.xlu0 %v7544
  %v7546 = vpop.xlane.xlu0 %7545
  %v7547 = vsel %vm555, %v7503, 0.0
  %7548 = vadd.xlane.f32.xlu0 %v7547
  %v7549 = vpop.xlane.xlu0 %7548
  %v7550 = vsel %vm555, %v7505, 0.0
  %7551 = vadd.xlane.f32.xlu0 %v7550
  %v7552 = vpop.xlane.xlu0 %7551
  %v7553 = vsel %vm555, %v7507, 0.0
  %7554 = vadd.xlane.f32.xlu0 %v7553
  %v7555 = vpop.xlane.xlu0 %7554
  %v7556 = vrcp.pop %v7510
  %v7557 = vmul.f32 %v7477, %v7556
  %v7558 = vrcp.pop %v7513
  %v7559 = vmul.f32 %v7479, %v7558
  %v7560 = vrcp.pop %v7516
  %v7561 = vmul.f32 %v7481, %v7560
  %v7562 = vrcp.pop %v7519
  %v7563 = vmul.f32 %v7483, %v7562
  %v7564 = vrcp.pop %v7522
  %v7565 = vmul.f32 %v7485, %v7564
  %v7566 = vrcp.pop %v7525
  %v7567 = vmul.f32 %v7487, %v7566
  %v7568 = vrcp.pop %v7528
  %v7569 = vmul.f32 %v7489, %v7568
  %v7570 = vrcp.pop %v7531
  %v7571 = vmul.f32 %v7491, %v7570
  %v7572 = vrcp.pop %v7534
  %v7573 = vmul.f32 %v7493, %v7572
  %v7574 = vrcp.pop %v7537
  %v7575 = vmul.f32 %v7495, %v7574
  %v7576 = vrcp.pop %v7540
  %v7577 = vmul.f32 %v7497, %v7576
  %v7578 = vrcp.pop %v7543
  %v7579 = vmul.f32 %v7499, %v7578
  %v7580 = vrcp.pop %v7546
  %v7581 = vmul.f32 %v7501, %v7580
  %v7582 = vrcp.pop %v7549
  %v7583 = vmul.f32 %v7503, %v7582
  %v7584 = vrcp.pop %v7552
  %v7585 = vmul.f32 %v7505, %v7584
  %v7586 = vrcp.pop %v7555
  %v7587 = vmul.f32 %v7507, %v7586
  %7588 = vrot.lane.b32.xlu0 %v476, 112
  %v7589 = vpop.permute.xlu0 %7588
  %v7592 = vsel %vm555, %v7557, 0
  %7594 = vmatprep.subr.mxu0 0.0
  %7595 = vmatpush1.msra.mxu0 %v7589
  %7596 = vmatprep.subr.mxu0 0.0
  %7597 = vmatpush1.msra.mxu0 0.0
  %7598 = vmatprep.subr.mxu0 0.0
  %7599 = vmatpush1.msra.mxu0 0.0
  %7600 = vmatprep.subr.mxu0 0.0
  %7601 = vmatpush1.msra.mxu0 0.0
  %7602 = vmatprep.subr.mxu0 0.0
  %7603 = vmatpush1.msra.mxu0 0.0
  %7604 = vmatprep.subr.mxu0 0.0
  %7605 = vmatpush1.msra.mxu0 0.0
  %7606 = vmatprep.subr.mxu0 0.0
  %7607 = vmatpush1.msra.mxu0 0.0
  %7608 = vmatprep.subr.mxu0 0.0
  %7609 = vmatpush1.msra.mxu0 0.0
  %7610 = vmatprep.subr.mxu0 0.0
  %7611 = vmatpush1.msra.mxu0 0.0
  %7612 = vmatprep.subr.mxu0 0.0
  %7613 = vmatpush1.msra.mxu0 0.0
  %7614 = vmatprep.subr.mxu0 0.0
  %7615 = vmatpush1.msra.mxu0 0.0
  %7616 = vmatprep.subr.mxu0 0.0
  %7617 = vmatpush1.msra.mxu0 0.0
  %7618 = vmatprep.subr.mxu0 0.0
  %7619 = vmatpush1.msra.mxu0 0.0
  %7620 = vmatprep.subr.mxu0 0.0
  %7621 = vmatpush1.msra.mxu0 0.0
  %7622 = vmatprep.subr.mxu0 0.0
  %7623 = vmatpush1.msra.mxu0 0.0
  %7624 = vmatprep.subr.mxu0 0.0
  %7625 = vmatpush1.msra.mxu0 0.0
  %7626 = vmatprep.subr.mxu0 0.0
  %7627 = vmatpush1.msra.mxu0 0.0
  %7628 = vmatprep.subr.mxu0 0.0
  %7629 = vmatpush1.msra.mxu0 0.0
  %7630 = vmatprep.subr.mxu0 0.0
  %7631 = vmatpush1.msra.mxu0 0.0
  %7632 = vmatprep.subr.mxu0 0.0
  %7633 = vmatpush1.msra.mxu0 0.0
  %7634 = vmatprep.subr.mxu0 0.0
  %7635 = vmatpush1.msra.mxu0 0.0
  %7636 = vmatprep.subr.mxu0 0.0
  %7637 = vmatpush1.msra.mxu0 0.0
  %7638 = vmatprep.subr.mxu0 0.0
  %7639 = vmatpush1.msra.mxu0 0.0
  %7640 = vmatprep.subr.mxu0 0.0
  %7641 = vmatpush1.msra.mxu0 0.0
  %7642 = vmatprep.subr.mxu0 0.0
  %7643 = vmatpush1.msra.mxu0 0.0
  %7644 = vmatprep.subr.mxu0 0.0
  %7645 = vmatpush1.msra.mxu0 0.0
  %7646 = vmatprep.subr.mxu0 0.0
  %7647 = vmatpush1.msra.mxu0 0.0
  %7648 = vmatprep.subr.mxu0 0.0
  %7649 = vmatpush1.msra.mxu0 0.0
  %7650 = vmatprep.subr.mxu0 0.0
  %7651 = vmatpush1.msra.mxu0 0.0
  %7652 = vmatprep.subr.mxu0 0.0
  %7653 = vmatpush1.msra.mxu0 0.0
  %7654 = vmatprep.subr.mxu0 0.0
  %7655 = vmatpush1.msra.mxu0 0.0
  %7656 = vmatprep.subr.mxu0 0.0
  %7657 = vmatpush1.msra.mxu0 0.0
  %7658 = vmatprep.mubr.f32.mxu0 0.0
  %7659 = vmatmul.mubr.f32.gmra.mrb[0].mxu0 %v7592
  %v7660 = vpop.f32.mrb[0].mxu0
  %v7661 = vadd.f32 0.0, %v7660
  %v7662 = vpop.f32.mrb[0].mxu0
  %7663 = vdwg.mxu0
  %7664 = vrot.lane.b32.xlu0 %v481, 112
  %v7665 = vpop.permute.xlu0 %7664
  %v7668 = vsel %vm555, %v7559, 0
  %7670 = vmatprep.subr.mxu0 0.0
  %7671 = vmatpush1.msra.mxu0 %v7665
  %7672 = vmatprep.subr.mxu0 0.0
  %7673 = vmatpush1.msra.mxu0 0.0
  %7674 = vmatprep.subr.mxu0 0.0
  %7675 = vmatpush1.msra.mxu0 0.0
  %7676 = vmatprep.subr.mxu0 0.0
  %7677 = vmatpush1.msra.mxu0 0.0
  %7678 = vmatprep.subr.mxu0 0.0
  %7679 = vmatpush1.msra.mxu0 0.0
  %7680 = vmatprep.subr.mxu0 0.0
  %7681 = vmatpush1.msra.mxu0 0.0
  %7682 = vmatprep.subr.mxu0 0.0
  %7683 = vmatpush1.msra.mxu0 0.0
  %7684 = vmatprep.subr.mxu0 0.0
  %7685 = vmatpush1.msra.mxu0 0.0
  %7686 = vmatprep.subr.mxu0 0.0
  %7687 = vmatpush1.msra.mxu0 0.0
  %7688 = vmatprep.subr.mxu0 0.0
  %7689 = vmatpush1.msra.mxu0 0.0
  %7690 = vmatprep.subr.mxu0 0.0
  %7691 = vmatpush1.msra.mxu0 0.0
  %7692 = vmatprep.subr.mxu0 0.0
  %7693 = vmatpush1.msra.mxu0 0.0
  %7694 = vmatprep.subr.mxu0 0.0
  %7695 = vmatpush1.msra.mxu0 0.0
  %7696 = vmatprep.subr.mxu0 0.0
  %7697 = vmatpush1.msra.mxu0 0.0
  %7698 = vmatprep.subr.mxu0 0.0
  %7699 = vmatpush1.msra.mxu0 0.0
  %7700 = vmatprep.subr.mxu0 0.0
  %7701 = vmatpush1.msra.mxu0 0.0
  %7702 = vmatprep.subr.mxu0 0.0
  %7703 = vmatpush1.msra.mxu0 0.0
  %7704 = vmatprep.subr.mxu0 0.0
  %7705 = vmatpush1.msra.mxu0 0.0
  %7706 = vmatprep.subr.mxu0 0.0
  %7707 = vmatpush1.msra.mxu0 0.0
  %7708 = vmatprep.subr.mxu0 0.0
  %7709 = vmatpush1.msra.mxu0 0.0
  %7710 = vmatprep.subr.mxu0 0.0
  %7711 = vmatpush1.msra.mxu0 0.0
  %7712 = vmatprep.subr.mxu0 0.0
  %7713 = vmatpush1.msra.mxu0 0.0
  %7714 = vmatprep.subr.mxu0 0.0
  %7715 = vmatpush1.msra.mxu0 0.0
  %7716 = vmatprep.subr.mxu0 0.0
  %7717 = vmatpush1.msra.mxu0 0.0
  %7718 = vmatprep.subr.mxu0 0.0
  %7719 = vmatpush1.msra.mxu0 0.0
  %7720 = vmatprep.subr.mxu0 0.0
  %7721 = vmatpush1.msra.mxu0 0.0
  %7722 = vmatprep.subr.mxu0 0.0
  %7723 = vmatpush1.msra.mxu0 0.0
  %7724 = vmatprep.subr.mxu0 0.0
  %7725 = vmatpush1.msra.mxu0 0.0
  %7726 = vmatprep.subr.mxu0 0.0
  %7727 = vmatpush1.msra.mxu0 0.0
  %7728 = vmatprep.subr.mxu0 0.0
  %7729 = vmatpush1.msra.mxu0 0.0
  %7730 = vmatprep.subr.mxu0 0.0
  %7731 = vmatpush1.msra.mxu0 0.0
  %7732 = vmatprep.subr.mxu0 0.0
  %7733 = vmatpush1.msra.mxu0 0.0
  %7734 = vmatprep.mubr.f32.mxu0 0.0
  %7735 = vmatmul.mubr.f32.gmra.mrb[0].mxu0 %v7668
  %v7736 = vpop.f32.mrb[0].mxu0
  %v7737 = vadd.f32 0.0, %v7736
  %v7738 = vpop.f32.mrb[0].mxu0
  %7739 = vdwg.mxu0
  %7740 = vrot.lane.b32.xlu0 %v486, 112
  %v7741 = vpop.permute.xlu0 %7740
  %v7744 = vsel %vm555, %v7561, 0
  %7746 = vmatprep.subr.mxu0 0.0
  %7747 = vmatpush1.msra.mxu0 %v7741
  %7748 = vmatprep.subr.mxu0 0.0
  %7749 = vmatpush1.msra.mxu0 0.0
  %7750 = vmatprep.subr.mxu0 0.0
  %7751 = vmatpush1.msra.mxu0 0.0
  %7752 = vmatprep.subr.mxu0 0.0
  %7753 = vmatpush1.msra.mxu0 0.0
  %7754 = vmatprep.subr.mxu0 0.0
  %7755 = vmatpush1.msra.mxu0 0.0
  %7756 = vmatprep.subr.mxu0 0.0
  %7757 = vmatpush1.msra.mxu0 0.0
  %7758 = vmatprep.subr.mxu0 0.0
  %7759 = vmatpush1.msra.mxu0 0.0
  %7760 = vmatprep.subr.mxu0 0.0
  %7761 = vmatpush1.msra.mxu0 0.0
  %7762 = vmatprep.subr.mxu0 0.0
  %7763 = vmatpush1.msra.mxu0 0.0
  %7764 = vmatprep.subr.mxu0 0.0
  %7765 = vmatpush1.msra.mxu0 0.0
  %7766 = vmatprep.subr.mxu0 0.0
  %7767 = vmatpush1.msra.mxu0 0.0
  %7768 = vmatprep.subr.mxu0 0.0
  %7769 = vmatpush1.msra.mxu0 0.0
  %7770 = vmatprep.subr.mxu0 0.0
  %7771 = vmatpush1.msra.mxu0 0.0
  %7772 = vmatprep.subr.mxu0 0.0
  %7773 = vmatpush1.msra.mxu0 0.0
  %7774 = vmatprep.subr.mxu0 0.0
  %7775 = vmatpush1.msra.mxu0 0.0
  %7776 = vmatprep.subr.mxu0 0.0
  %7777 = vmatpush1.msra.mxu0 0.0
  %7778 = vmatprep.subr.mxu0 0.0
  %7779 = vmatpush1.msra.mxu0 0.0
  %7780 = vmatprep.subr.mxu0 0.0
  %7781 = vmatpush1.msra.mxu0 0.0
  %7782 = vmatprep.subr.mxu0 0.0
  %7783 = vmatpush1.msra.mxu0 0.0
  %7784 = vmatprep.subr.mxu0 0.0
  %7785 = vmatpush1.msra.mxu0 0.0
  %7786 = vmatprep.subr.mxu0 0.0
  %7787 = vmatpush1.msra.mxu0 0.0
  %7788 = vmatprep.subr.mxu0 0.0
  %7789 = vmatpush1.msra.mxu0 0.0
  %7790 = vmatprep.subr.mxu0 0.0
  %7791 = vmatpush1.msra.mxu0 0.0
  %7792 = vmatprep.subr.mxu0 0.0
  %7793 = vmatpush1.msra.mxu0 0.0
  %7794 = vmatprep.subr.mxu0 0.0
  %7795 = vmatpush1.msra.mxu0 0.0
  %7796 = vmatprep.subr.mxu0 0.0
  %7797 = vmatpush1.msra.mxu0 0.0
  %7798 = vmatprep.subr.mxu0 0.0
  %7799 = vmatpush1.msra.mxu0 0.0
  %7800 = vmatprep.subr.mxu0 0.0
  %7801 = vmatpush1.msra.mxu0 0.0
  %7802 = vmatprep.subr.mxu0 0.0
  %7803 = vmatpush1.msra.mxu0 0.0
  %7804 = vmatprep.subr.mxu0 0.0
  %7805 = vmatpush1.msra.mxu0 0.0
  %7806 = vmatprep.subr.mxu0 0.0
  %7807 = vmatpush1.msra.mxu0 0.0
  %7808 = vmatprep.subr.mxu0 0.0
  %7809 = vmatpush1.msra.mxu0 0.0
  %7810 = vmatprep.mubr.f32.mxu0 0.0
  %7811 = vmatmul.mubr.f32.gmra.mrb[0].mxu0 %v7744
  %v7812 = vpop.f32.mrb[0].mxu0
  %v7813 = vadd.f32 0.0, %v7812
  %v7814 = vpop.f32.mrb[0].mxu0
  %7815 = vdwg.mxu0
  %7816 = vrot.lane.b32.xlu0 %v491, 112
  %v7817 = vpop.permute.xlu0 %7816
  %v7820 = vsel %vm555, %v7563, 0
  %7822 = vmatprep.subr.mxu0 0.0
  %7823 = vmatpush1.msra.mxu0 %v7817
  %7824 = vmatprep.subr.mxu0 0.0
  %7825 = vmatpush1.msra.mxu0 0.0
  %7826 = vmatprep.subr.mxu0 0.0
  %7827 = vmatpush1.msra.mxu0 0.0
  %7828 = vmatprep.subr.mxu0 0.0
  %7829 = vmatpush1.msra.mxu0 0.0
  %7830 = vmatprep.subr.mxu0 0.0
  %7831 = vmatpush1.msra.mxu0 0.0
  %7832 = vmatprep.subr.mxu0 0.0
  %7833 = vmatpush1.msra.mxu0 0.0
  %7834 = vmatprep.subr.mxu0 0.0
  %7835 = vmatpush1.msra.mxu0 0.0
  %7836 = vmatprep.subr.mxu0 0.0
  %7837 = vmatpush1.msra.mxu0 0.0
  %7838 = vmatprep.subr.mxu0 0.0
  %7839 = vmatpush1.msra.mxu0 0.0
  %7840 = vmatprep.subr.mxu0 0.0
  %7841 = vmatpush1.msra.mxu0 0.0
  %7842 = vmatprep.subr.mxu0 0.0
  %7843 = vmatpush1.msra.mxu0 0.0
  %7844 = vmatprep.subr.mxu0 0.0
  %7845 = vmatpush1.msra.mxu0 0.0
  %7846 = vmatprep.subr.mxu0 0.0
  %7847 = vmatpush1.msra.mxu0 0.0
  %7848 = vmatprep.subr.mxu0 0.0
  %7849 = vmatpush1.msra.mxu0 0.0
  %7850 = vmatprep.subr.mxu0 0.0
  %7851 = vmatpush1.msra.mxu0 0.0
  %7852 = vmatprep.subr.mxu0 0.0
  %7853 = vmatpush1.msra.mxu0 0.0
  %7854 = vmatprep.subr.mxu0 0.0
  %7855 = vmatpush1.msra.mxu0 0.0
  %7856 = vmatprep.subr.mxu0 0.0
  %7857 = vmatpush1.msra.mxu0 0.0
  %7858 = vmatprep.subr.mxu0 0.0
  %7859 = vmatpush1.msra.mxu0 0.0
  %7860 = vmatprep.subr.mxu0 0.0
  %7861 = vmatpush1.msra.mxu0 0.0
  %7862 = vmatprep.subr.mxu0 0.0
  %7863 = vmatpush1.msra.mxu0 0.0
  %7864 = vmatprep.subr.mxu0 0.0
  %7865 = vmatpush1.msra.mxu0 0.0
  %7866 = vmatprep.subr.mxu0 0.0
  %7867 = vmatpush1.msra.mxu0 0.0
  %7868 = vmatprep.subr.mxu0 0.0
  %7869 = vmatpush1.msra.mxu0 0.0
  %7870 = vmatprep.subr.mxu0 0.0
  %7871 = vmatpush1.msra.mxu0 0.0
  %7872 = vmatprep.subr.mxu0 0.0
  %7873 = vmatpush1.msra.mxu0 0.0
  %7874 = vmatprep.subr.mxu0 0.0
  %7875 = vmatpush1.msra.mxu0 0.0
  %7876 = vmatprep.subr.mxu0 0.0
  %7877 = vmatpush1.msra.mxu0 0.0
  %7878 = vmatprep.subr.mxu0 0.0
  %7879 = vmatpush1.msra.mxu0 0.0
  %7880 = vmatprep.subr.mxu0 0.0
  %7881 = vmatpush1.msra.mxu0 0.0
  %7882 = vmatprep.subr.mxu0 0.0
  %7883 = vmatpush1.msra.mxu0 0.0
  %7884 = vmatprep.subr.mxu0 0.0
  %7885 = vmatpush1.msra.mxu0 0.0
  %7886 = vmatprep.mubr.f32.mxu0 0.0
  %7887 = vmatmul.mubr.f32.gmra.mrb[0].mxu0 %v7820
  %v7888 = vpop.f32.mrb[0].mxu0
  %v7889 = vadd.f32 0.0, %v7888
  %v7890 = vpop.f32.mrb[0].mxu0
  %7891 = vdwg.mxu0
  %7892 = vrot.lane.b32.xlu0 %v496, 112
  %v7893 = vpop.permute.xlu0 %7892
  %v7896 = vsel %vm555, %v7565, 0
  %7898 = vmatprep.subr.mxu0 0.0
  %7899 = vmatpush1.msra.mxu0 %v7893
  %7900 = vmatprep.subr.mxu0 0.0
  %7901 = vmatpush1.msra.mxu0 0.0
  %7902 = vmatprep.subr.mxu0 0.0
  %7903 = vmatpush1.msra.mxu0 0.0
  %7904 = vmatprep.subr.mxu0 0.0
  %7905 = vmatpush1.msra.mxu0 0.0
  %7906 = vmatprep.subr.mxu0 0.0
  %7907 = vmatpush1.msra.mxu0 0.0
  %7908 = vmatprep.subr.mxu0 0.0
  %7909 = vmatpush1.msra.mxu0 0.0
  %7910 = vmatprep.subr.mxu0 0.0
  %7911 = vmatpush1.msra.mxu0 0.0
  %7912 = vmatprep.subr.mxu0 0.0
  %7913 = vmatpush1.msra.mxu0 0.0
  %7914 = vmatprep.subr.mxu0 0.0
  %7915 = vmatpush1.msra.mxu0 0.0
  %7916 = vmatprep.subr.mxu0 0.0
  %7917 = vmatpush1.msra.mxu0 0.0
  %7918 = vmatprep.subr.mxu0 0.0
  %7919 = vmatpush1.msra.mxu0 0.0
  %7920 = vmatprep.subr.mxu0 0.0
  %7921 = vmatpush1.msra.mxu0 0.0
  %7922 = vmatprep.subr.mxu0 0.0
  %7923 = vmatpush1.msra.mxu0 0.0
  %7924 = vmatprep.subr.mxu0 0.0
  %7925 = vmatpush1.msra.mxu0 0.0
  %7926 = vmatprep.subr.mxu0 0.0
  %7927 = vmatpush1.msra.mxu0 0.0
  %7928 = vmatprep.subr.mxu0 0.0
  %7929 = vmatpush1.msra.mxu0 0.0
  %7930 = vmatprep.subr.mxu0 0.0
  %7931 = vmatpush1.msra.mxu0 0.0
  %7932 = vmatprep.subr.mxu0 0.0
  %7933 = vmatpush1.msra.mxu0 0.0
  %7934 = vmatprep.subr.mxu0 0.0
  %7935 = vmatpush1.msra.mxu0 0.0
  %7936 = vmatprep.subr.mxu0 0.0
  %7937 = vmatpush1.msra.mxu0 0.0
  %7938 = vmatprep.subr.mxu0 0.0
  %7939 = vmatpush1.msra.mxu0 0.0
  %7940 = vmatprep.subr.mxu0 0.0
  %7941 = vmatpush1.msra.mxu0 0.0
  %7942 = vmatprep.subr.mxu0 0.0
  %7943 = vmatpush1.msra.mxu0 0.0
  %7944 = vmatprep.subr.mxu0 0.0
  %7945 = vmatpush1.msra.mxu0 0.0
  %7946 = vmatprep.subr.mxu0 0.0
  %7947 = vmatpush1.msra.mxu0 0.0
  %7948 = vmatprep.subr.mxu0 0.0
  %7949 = vmatpush1.msra.mxu0 0.0
  %7950 = vmatprep.subr.mxu0 0.0
  %7951 = vmatpush1.msra.mxu0 0.0
  %7952 = vmatprep.subr.mxu0 0.0
  %7953 = vmatpush1.msra.mxu0 0.0
  %7954 = vmatprep.subr.mxu0 0.0
  %7955 = vmatpush1.msra.mxu0 0.0
  %7956 = vmatprep.subr.mxu0 0.0
  %7957 = vmatpush1.msra.mxu0 0.0
  %7958 = vmatprep.subr.mxu0 0.0
  %7959 = vmatpush1.msra.mxu0 0.0
  %7960 = vmatprep.subr.mxu0 0.0
  %7961 = vmatpush1.msra.mxu0 0.0
  %7962 = vmatprep.mubr.f32.mxu0 0.0
  %7963 = vmatmul.mubr.f32.gmra.mrb[0].mxu0 %v7896
  %v7964 = vpop.f32.mrb[0].mxu0
  %v7965 = vadd.f32 0.0, %v7964
  %v7966 = vpop.f32.mrb[0].mxu0
  %7967 = vdwg.mxu0
  %7968 = vrot.lane.b32.xlu0 %v501, 112
  %v7969 = vpop.permute.xlu0 %7968
  %v7972 = vsel %vm555, %v7567, 0
  %7974 = vmatprep.subr.mxu0 0.0
  %7975 = vmatpush1.msra.mxu0 %v7969
  %7976 = vmatprep.subr.mxu0 0.0
  %7977 = vmatpush1.msra.mxu0 0.0
  %7978 = vmatprep.subr.mxu0 0.0
  %7979 = vmatpush1.msra.mxu0 0.0
  %7980 = vmatprep.subr.mxu0 0.0
  %7981 = vmatpush1.msra.mxu0 0.0
  %7982 = vmatprep.subr.mxu0 0.0
  %7983 = vmatpush1.msra.mxu0 0.0
  %7984 = vmatprep.subr.mxu0 0.0
  %7985 = vmatpush1.msra.mxu0 0.0
  %7986 = vmatprep.subr.mxu0 0.0
  %7987 = vmatpush1.msra.mxu0 0.0
  %7988 = vmatprep.subr.mxu0 0.0
  %7989 = vmatpush1.msra.mxu0 0.0
  %7990 = vmatprep.subr.mxu0 0.0
  %7991 = vmatpush1.msra.mxu0 0.0
  %7992 = vmatprep.subr.mxu0 0.0
  %7993 = vmatpush1.msra.mxu0 0.0
  %7994 = vmatprep.subr.mxu0 0.0
  %7995 = vmatpush1.msra.mxu0 0.0
  %7996 = vmatprep.subr.mxu0 0.0
  %7997 = vmatpush1.msra.mxu0 0.0
  %7998 = vmatprep.subr.mxu0 0.0
  %7999 = vmatpush1.msra.mxu0 0.0
  %8000 = vmatprep.subr.mxu0 0.0
  %8001 = vmatpush1.msra.mxu0 0.0
  %8002 = vmatprep.subr.mxu0 0.0
  %8003 = vmatpush1.msra.mxu0 0.0
  %8004 = vmatprep.subr.mxu0 0.0
  %8005 = vmatpush1.msra.mxu0 0.0
  %8006 = vmatprep.subr.mxu0 0.0
  %8007 = vmatpush1.msra.mxu0 0.0
  %8008 = vmatprep.subr.mxu0 0.0
  %8009 = vmatpush1.msra.mxu0 0.0
  %8010 = vmatprep.subr.mxu0 0.0
  %8011 = vmatpush1.msra.mxu0 0.0
  %8012 = vmatprep.subr.mxu0 0.0
  %8013 = vmatpush1.msra.mxu0 0.0
  %8014 = vmatprep.subr.mxu0 0.0
  %8015 = vmatpush1.msra.mxu0 0.0
  %8016 = vmatprep.subr.mxu0 0.0
  %8017 = vmatpush1.msra.mxu0 0.0
  %8018 = vmatprep.subr.mxu0 0.0
  %8019 = vmatpush1.msra.mxu0 0.0
  %8020 = vmatprep.subr.mxu0 0.0
  %8021 = vmatpush1.msra.mxu0 0.0
  %8022 = vmatprep.subr.mxu0 0.0
  %8023 = vmatpush1.msra.mxu0 0.0
  %8024 = vmatprep.subr.mxu0 0.0
  %8025 = vmatpush1.msra.mxu0 0.0
  %8026 = vmatprep.subr.mxu0 0.0
  %8027 = vmatpush1.msra.mxu0 0.0
  %8028 = vmatprep.subr.mxu0 0.0
  %8029 = vmatpush1.msra.mxu0 0.0
  %8030 = vmatprep.subr.mxu0 0.0
  %8031 = vmatpush1.msra.mxu0 0.0
  %8032 = vmatprep.subr.mxu0 0.0
  %8033 = vmatpush1.msra.mxu0 0.0
  %8034 = vmatprep.subr.mxu0 0.0
  %8035 = vmatpush1.msra.mxu0 0.0
  %8036 = vmatprep.subr.mxu0 0.0
  %8037 = vmatpush1.msra.mxu0 0.0
  %8038 = vmatprep.mubr.f32.mxu0 0.0
  %8039 = vmatmul.mubr.f32.gmra.mrb[0].mxu0 %v7972
  %v8040 = vpop.f32.mrb[0].mxu0
  %v8041 = vadd.f32 0.0, %v8040
  %v8042 = vpop.f32.mrb[0].mxu0
  %8043 = vdwg.mxu0
  %8044 = vrot.lane.b32.xlu0 %v506, 112
  %v8045 = vpop.permute.xlu0 %8044
  %v8048 = vsel %vm555, %v7569, 0
  %8050 = vmatprep.subr.mxu0 0.0
  %8051 = vmatpush1.msra.mxu0 %v8045
  %8052 = vmatprep.subr.mxu0 0.0
  %8053 = vmatpush1.msra.mxu0 0.0
  %8054 = vmatprep.subr.mxu0 0.0
  %8055 = vmatpush1.msra.mxu0 0.0
  %8056 = vmatprep.subr.mxu0 0.0
  %8057 = vmatpush1.msra.mxu0 0.0
  %8058 = vmatprep.subr.mxu0 0.0
  %8059 = vmatpush1.msra.mxu0 0.0
  %8060 = vmatprep.subr.mxu0 0.0
  %8061 = vmatpush1.msra.mxu0 0.0
  %8062 = vmatprep.subr.mxu0 0.0
  %8063 = vmatpush1.msra.mxu0 0.0
  %8064 = vmatprep.subr.mxu0 0.0
  %8065 = vmatpush1.msra.mxu0 0.0
  %8066 = vmatprep.subr.mxu0 0.0
  %8067 = vmatpush1.msra.mxu0 0.0
  %8068 = vmatprep.subr.mxu0 0.0
  %8069 = vmatpush1.msra.mxu0 0.0
  %8070 = vmatprep.subr.mxu0 0.0
  %8071 = vmatpush1.msra.mxu0 0.0
  %8072 = vmatprep.subr.mxu0 0.0
  %8073 = vmatpush1.msra.mxu0 0.0
  %8074 = vmatprep.subr.mxu0 0.0
  %8075 = vmatpush1.msra.mxu0 0.0
  %8076 = vmatprep.subr.mxu0 0.0
  %8077 = vmatpush1.msra.mxu0 0.0
  %8078 = vmatprep.subr.mxu0 0.0
  %8079 = vmatpush1.msra.mxu0 0.0
  %8080 = vmatprep.subr.mxu0 0.0
  %8081 = vmatpush1.msra.mxu0 0.0
  %8082 = vmatprep.subr.mxu0 0.0
  %8083 = vmatpush1.msra.mxu0 0.0
  %8084 = vmatprep.subr.mxu0 0.0
  %8085 = vmatpush1.msra.mxu0 0.0
  %8086 = vmatprep.subr.mxu0 0.0
  %8087 = vmatpush1.msra.mxu0 0.0
  %8088 = vmatprep.subr.mxu0 0.0
  %8089 = vmatpush1.msra.mxu0 0.0
  %8090 = vmatprep.subr.mxu0 0.0
  %8091 = vmatpush1.msra.mxu0 0.0
  %8092 = vmatprep.subr.mxu0 0.0
  %8093 = vmatpush1.msra.mxu0 0.0
  %8094 = vmatprep.subr.mxu0 0.0
  %8095 = vmatpush1.msra.mxu0 0.0
  %8096 = vmatprep.subr.mxu0 0.0
  %8097 = vmatpush1.msra.mxu0 0.0
  %8098 = vmatprep.subr.mxu0 0.0
  %8099 = vmatpush1.msra.mxu0 0.0
  %8100 = vmatprep.subr.mxu0 0.0
  %8101 = vmatpush1.msra.mxu0 0.0
  %8102 = vmatprep.subr.mxu0 0.0
  %8103 = vmatpush1.msra.mxu0 0.0
  %8104 = vmatprep.subr.mxu0 0.0
  %8105 = vmatpush1.msra.mxu0 0.0
  %8106 = vmatprep.subr.mxu0 0.0
  %8107 = vmatpush1.msra.mxu0 0.0
  %8108 = vmatprep.subr.mxu0 0.0
  %8109 = vmatpush1.msra.mxu0 0.0
  %8110 = vmatprep.subr.mxu0 0.0
  %8111 = vmatpush1.msra.mxu0 0.0
  %8112 = vmatprep.subr.mxu0 0.0
  %8113 = vmatpush1.msra.mxu0 0.0
  %8114 = vmatprep.mubr.f32.mxu0 0.0
  %8115 = vmatmul.mubr.f32.gmra.mrb[0].mxu0 %v8048
  %v8116 = vpop.f32.mrb[0].mxu0
  %v8117 = vadd.f32 0.0, %v8116
  %v8118 = vpop.f32.mrb[0].mxu0
  %8119 = vdwg.mxu0
  %8120 = vrot.lane.b32.xlu0 %v511, 112
  %v8121 = vpop.permute.xlu0 %8120
  %v8124 = vsel %vm555, %v7571, 0
  %8126 = vmatprep.subr.mxu0 0.0
  %8127 = vmatpush1.msra.mxu0 %v8121
  %8128 = vmatprep.subr.mxu0 0.0
  %8129 = vmatpush1.msra.mxu0 0.0
  %8130 = vmatprep.subr.mxu0 0.0
  %8131 = vmatpush1.msra.mxu0 0.0
  %8132 = vmatprep.subr.mxu0 0.0
  %8133 = vmatpush1.msra.mxu0 0.0
  %8134 = vmatprep.subr.mxu0 0.0
  %8135 = vmatpush1.msra.mxu0 0.0
  %8136 = vmatprep.subr.mxu0 0.0
  %8137 = vmatpush1.msra.mxu0 0.0
  %8138 = vmatprep.subr.mxu0 0.0
  %8139 = vmatpush1.msra.mxu0 0.0
  %8140 = vmatprep.subr.mxu0 0.0
  %8141 = vmatpush1.msra.mxu0 0.0
  %8142 = vmatprep.subr.mxu0 0.0
  %8143 = vmatpush1.msra.mxu0 0.0
  %8144 = vmatprep.subr.mxu0 0.0
  %8145 = vmatpush1.msra.mxu0 0.0
  %8146 = vmatprep.subr.mxu0 0.0
  %8147 = vmatpush1.msra.mxu0 0.0
  %8148 = vmatprep.subr.mxu0 0.0
  %8149 = vmatpush1.msra.mxu0 0.0
  %8150 = vmatprep.subr.mxu0 0.0
  %8151 = vmatpush1.msra.mxu0 0.0
  %8152 = vmatprep.subr.mxu0 0.0
  %8153 = vmatpush1.msra.mxu0 0.0
  %8154 = vmatprep.subr.mxu0 0.0
  %8155 = vmatpush1.msra.mxu0 0.0
  %8156 = vmatprep.subr.mxu0 0.0
  %8157 = vmatpush1.msra.mxu0 0.0
  %8158 = vmatprep.subr.mxu0 0.0
  %8159 = vmatpush1.msra.mxu0 0.0
  %8160 = vmatprep.subr.mxu0 0.0
  %8161 = vmatpush1.msra.mxu0 0.0
  %8162 = vmatprep.subr.mxu0 0.0
  %8163 = vmatpush1.msra.mxu0 0.0
  %8164 = vmatprep.subr.mxu0 0.0
  %8165 = vmatpush1.msra.mxu0 0.0
  %8166 = vmatprep.subr.mxu0 0.0
  %8167 = vmatpush1.msra.mxu0 0.0
  %8168 = vmatprep.subr.mxu0 0.0
  %8169 = vmatpush1.msra.mxu0 0.0
  %8170 = vmatprep.subr.mxu0 0.0
  %8171 = vmatpush1.msra.mxu0 0.0
  %8172 = vmatprep.subr.mxu0 0.0
  %8173 = vmatpush1.msra.mxu0 0.0
  %8174 = vmatprep.subr.mxu0 0.0
  %8175 = vmatpush1.msra.mxu0 0.0
  %8176 = vmatprep.subr.mxu0 0.0
  %8177 = vmatpush1.msra.mxu0 0.0
  %8178 = vmatprep.subr.mxu0 0.0
  %8179 = vmatpush1.msra.mxu0 0.0
  %8180 = vmatprep.subr.mxu0 0.0
  %8181 = vmatpush1.msra.mxu0 0.0
  %8182 = vmatprep.subr.mxu0 0.0
  %8183 = vmatpush1.msra.mxu0 0.0
  %8184 = vmatprep.subr.mxu0 0.0
  %8185 = vmatpush1.msra.mxu0 0.0
  %8186 = vmatprep.subr.mxu0 0.0
  %8187 = vmatpush1.msra.mxu0 0.0
  %8188 = vmatprep.subr.mxu0 0.0
  %8189 = vmatpush1.msra.mxu0 0.0
  %8190 = vmatprep.mubr.f32.mxu0 0.0
  %8191 = vmatmul.mubr.f32.gmra.mrb[0].mxu0 %v8124
  %v8192 = vpop.f32.mrb[0].mxu0
  %v8193 = vadd.f32 0.0, %v8192
  %v8194 = vpop.f32.mrb[0].mxu0
  %8195 = vdwg.mxu0
  %8196 = vrot.lane.b32.xlu0 %v516, 112
  %v8197 = vpop.permute.xlu0 %8196
  %v8200 = vsel %vm555, %v7573, 0
  %8202 = vmatprep.subr.mxu0 0.0
  %8203 = vmatpush1.msra.mxu0 %v8197
  %8204 = vmatprep.subr.mxu0 0.0
  %8205 = vmatpush1.msra.mxu0 0.0
  %8206 = vmatprep.subr.mxu0 0.0
  %8207 = vmatpush1.msra.mxu0 0.0
  %8208 = vmatprep.subr.mxu0 0.0
  %8209 = vmatpush1.msra.mxu0 0.0
  %8210 = vmatprep.subr.mxu0 0.0
  %8211 = vmatpush1.msra.mxu0 0.0
  %8212 = vmatprep.subr.mxu0 0.0
  %8213 = vmatpush1.msra.mxu0 0.0
  %8214 = vmatprep.subr.mxu0 0.0
  %8215 = vmatpush1.msra.mxu0 0.0
  %8216 = vmatprep.subr.mxu0 0.0
  %8217 = vmatpush1.msra.mxu0 0.0
  %8218 = vmatprep.subr.mxu0 0.0
  %8219 = vmatpush1.msra.mxu0 0.0
  %8220 = vmatprep.subr.mxu0 0.0
  %8221 = vmatpush1.msra.mxu0 0.0
  %8222 = vmatprep.subr.mxu0 0.0
  %8223 = vmatpush1.msra.mxu0 0.0
  %8224 = vmatprep.subr.mxu0 0.0
  %8225 = vmatpush1.msra.mxu0 0.0
  %8226 = vmatprep.subr.mxu0 0.0
  %8227 = vmatpush1.msra.mxu0 0.0
  %8228 = vmatprep.subr.mxu0 0.0
  %8229 = vmatpush1.msra.mxu0 0.0
  %8230 = vmatprep.subr.mxu0 0.0
  %8231 = vmatpush1.msra.mxu0 0.0
  %8232 = vmatprep.subr.mxu0 0.0
  %8233 = vmatpush1.msra.mxu0 0.0
  %8234 = vmatprep.subr.mxu0 0.0
  %8235 = vmatpush1.msra.mxu0 0.0
  %8236 = vmatprep.subr.mxu0 0.0
  %8237 = vmatpush1.msra.mxu0 0.0
  %8238 = vmatprep.subr.mxu0 0.0
  %8239 = vmatpush1.msra.mxu0 0.0
  %8240 = vmatprep.subr.mxu0 0.0
  %8241 = vmatpush1.msra.mxu0 0.0
  %8242 = vmatprep.subr.mxu0 0.0
  %8243 = vmatpush1.msra.mxu0 0.0
  %8244 = vmatprep.subr.mxu0 0.0
  %8245 = vmatpush1.msra.mxu0 0.0
  %8246 = vmatprep.subr.mxu0 0.0
  %8247 = vmatpush1.msra.mxu0 0.0
  %8248 = vmatprep.subr.mxu0 0.0
  %8249 = vmatpush1.msra.mxu0 0.0
  %8250 = vmatprep.subr.mxu0 0.0
  %8251 = vmatpush1.msra.mxu0 0.0
  %8252 = vmatprep.subr.mxu0 0.0
  %8253 = vmatpush1.msra.mxu0 0.0
  %8254 = vmatprep.subr.mxu0 0.0
  %8255 = vmatpush1.msra.mxu0 0.0
  %8256 = vmatprep.subr.mxu0 0.0
  %8257 = vmatpush1.msra.mxu0 0.0
  %8258 = vmatprep.subr.mxu0 0.0
  %8259 = vmatpush1.msra.mxu0 0.0
  %8260 = vmatprep.subr.mxu0 0.0
  %8261 = vmatpush1.msra.mxu0 0.0
  %8262 = vmatprep.subr.mxu0 0.0
  %8263 = vmatpush1.msra.mxu0 0.0
  %8264 = vmatprep.subr.mxu0 0.0
  %8265 = vmatpush1.msra.mxu0 0.0
  %8266 = vmatprep.mubr.f32.mxu0 0.0
  %8267 = vmatmul.mubr.f32.gmra.mrb[0].mxu0 %v8200
  %v8268 = vpop.f32.mrb[0].mxu0
  %v8269 = vadd.f32 0.0, %v8268
  %v8270 = vpop.f32.mrb[0].mxu0
  %8271 = vdwg.mxu0
  %8272 = vrot.lane.b32.xlu0 %v521, 112
  %v8273 = vpop.permute.xlu0 %8272
  %v8276 = vsel %vm555, %v7575, 0
  %8278 = vmatprep.subr.mxu0 0.0
  %8279 = vmatpush1.msra.mxu0 %v8273
  %8280 = vmatprep.subr.mxu0 0.0
  %8281 = vmatpush1.msra.mxu0 0.0
  %8282 = vmatprep.subr.mxu0 0.0
  %8283 = vmatpush1.msra.mxu0 0.0
  %8284 = vmatprep.subr.mxu0 0.0
  %8285 = vmatpush1.msra.mxu0 0.0
  %8286 = vmatprep.subr.mxu0 0.0
  %8287 = vmatpush1.msra.mxu0 0.0
  %8288 = vmatprep.subr.mxu0 0.0
  %8289 = vmatpush1.msra.mxu0 0.0
  %8290 = vmatprep.subr.mxu0 0.0
  %8291 = vmatpush1.msra.mxu0 0.0
  %8292 = vmatprep.subr.mxu0 0.0
  %8293 = vmatpush1.msra.mxu0 0.0
  %8294 = vmatprep.subr.mxu0 0.0
  %8295 = vmatpush1.msra.mxu0 0.0
  %8296 = vmatprep.subr.mxu0 0.0
  %8297 = vmatpush1.msra.mxu0 0.0
  %8298 = vmatprep.subr.mxu0 0.0
  %8299 = vmatpush1.msra.mxu0 0.0
  %8300 = vmatprep.subr.mxu0 0.0
  %8301 = vmatpush1.msra.mxu0 0.0
  %8302 = vmatprep.subr.mxu0 0.0
  %8303 = vmatpush1.msra.mxu0 0.0
  %8304 = vmatprep.subr.mxu0 0.0
  %8305 = vmatpush1.msra.mxu0 0.0
  %8306 = vmatprep.subr.mxu0 0.0
  %8307 = vmatpush1.msra.mxu0 0.0
  %8308 = vmatprep.subr.mxu0 0.0
  %8309 = vmatpush1.msra.mxu0 0.0
  %8310 = vmatprep.subr.mxu0 0.0
  %8311 = vmatpush1.msra.mxu0 0.0
  %8312 = vmatprep.subr.mxu0 0.0
  %8313 = vmatpush1.msra.mxu0 0.0
  %8314 = vmatprep.subr.mxu0 0.0
  %8315 = vmatpush1.msra.mxu0 0.0
  %8316 = vmatprep.subr.mxu0 0.0
  %8317 = vmatpush1.msra.mxu0 0.0
  %8318 = vmatprep.subr.mxu0 0.0
  %8319 = vmatpush1.msra.mxu0 0.0
  %8320 = vmatprep.subr.mxu0 0.0
  %8321 = vmatpush1.msra.mxu0 0.0
  %8322 = vmatprep.subr.mxu0 0.0
  %8323 = vmatpush1.msra.mxu0 0.0
  %8324 = vmatprep.subr.mxu0 0.0
  %8325 = vmatpush1.msra.mxu0 0.0
  %8326 = vmatprep.subr.mxu0 0.0
  %8327 = vmatpush1.msra.mxu0 0.0
  %8328 = vmatprep.subr.mxu0 0.0
  %8329 = vmatpush1.msra.mxu0 0.0
  %8330 = vmatprep.subr.mxu0 0.0
  %8331 = vmatpush1.msra.mxu0 0.0
  %8332 = vmatprep.subr.mxu0 0.0
  %8333 = vmatpush1.msra.mxu0 0.0
  %8334 = vmatprep.subr.mxu0 0.0
  %8335 = vmatpush1.msra.mxu0 0.0
  %8336 = vmatprep.subr.mxu0 0.0
  %8337 = vmatpush1.msra.mxu0 0.0
  %8338 = vmatprep.subr.mxu0 0.0
  %8339 = vmatpush1.msra.mxu0 0.0
  %8340 = vmatprep.subr.mxu0 0.0
  %8341 = vmatpush1.msra.mxu0 0.0
  %8342 = vmatprep.mubr.f32.mxu0 0.0
  %8343 = vmatmul.mubr.f32.gmra.mrb[0].mxu0 %v8276
  %v8344 = vpop.f32.mrb[0].mxu0
  %v8345 = vadd.f32 0.0, %v8344
  %v8346 = vpop.f32.mrb[0].mxu0
  %8347 = vdwg.mxu0
  %8348 = vrot.lane.b32.xlu0 %v526, 112
  %v8349 = vpop.permute.xlu0 %8348
  %v8352 = vsel %vm555, %v7577, 0
  %8354 = vmatprep.subr.mxu0 0.0
  %8355 = vmatpush1.msra.mxu0 %v8349
  %8356 = vmatprep.subr.mxu0 0.0
  %8357 = vmatpush1.msra.mxu0 0.0
  %8358 = vmatprep.subr.mxu0 0.0
  %8359 = vmatpush1.msra.mxu0 0.0
  %8360 = vmatprep.subr.mxu0 0.0
  %8361 = vmatpush1.msra.mxu0 0.0
  %8362 = vmatprep.subr.mxu0 0.0
  %8363 = vmatpush1.msra.mxu0 0.0
  %8364 = vmatprep.subr.mxu0 0.0
  %8365 = vmatpush1.msra.mxu0 0.0
  %8366 = vmatprep.subr.mxu0 0.0
  %8367 = vmatpush1.msra.mxu0 0.0
  %8368 = vmatprep.subr.mxu0 0.0
  %8369 = vmatpush1.msra.mxu0 0.0
  %8370 = vmatprep.subr.mxu0 0.0
  %8371 = vmatpush1.msra.mxu0 0.0
  %8372 = vmatprep.subr.mxu0 0.0
  %8373 = vmatpush1.msra.mxu0 0.0
  %8374 = vmatprep.subr.mxu0 0.0
  %8375 = vmatpush1.msra.mxu0 0.0
  %8376 = vmatprep.subr.mxu0 0.0
  %8377 = vmatpush1.msra.mxu0 0.0
  %8378 = vmatprep.subr.mxu0 0.0
  %8379 = vmatpush1.msra.mxu0 0.0
  %8380 = vmatprep.subr.mxu0 0.0
  %8381 = vmatpush1.msra.mxu0 0.0
  %8382 = vmatprep.subr.mxu0 0.0
  %8383 = vmatpush1.msra.mxu0 0.0
  %8384 = vmatprep.subr.mxu0 0.0
  %8385 = vmatpush1.msra.mxu0 0.0
  %8386 = vmatprep.subr.mxu0 0.0
  %8387 = vmatpush1.msra.mxu0 0.0
  %8388 = vmatprep.subr.mxu0 0.0
  %8389 = vmatpush1.msra.mxu0 0.0
  %8390 = vmatprep.subr.mxu0 0.0
  %8391 = vmatpush1.msra.mxu0 0.0
  %8392 = vmatprep.subr.mxu0 0.0
  %8393 = vmatpush1.msra.mxu0 0.0
  %8394 = vmatprep.subr.mxu0 0.0
  %8395 = vmatpush1.msra.mxu0 0.0
  %8396 = vmatprep.subr.mxu0 0.0
  %8397 = vmatpush1.msra.mxu0 0.0
  %8398 = vmatprep.subr.mxu0 0.0
  %8399 = vmatpush1.msra.mxu0 0.0
  %8400 = vmatprep.subr.mxu0 0.0
  %8401 = vmatpush1.msra.mxu0 0.0
  %8402 = vmatprep.subr.mxu0 0.0
  %8403 = vmatpush1.msra.mxu0 0.0
  %8404 = vmatprep.subr.mxu0 0.0
  %8405 = vmatpush1.msra.mxu0 0.0
  %8406 = vmatprep.subr.mxu0 0.0
  %8407 = vmatpush1.msra.mxu0 0.0
  %8408 = vmatprep.subr.mxu0 0.0
  %8409 = vmatpush1.msra.mxu0 0.0
  %8410 = vmatprep.subr.mxu0 0.0
  %8411 = vmatpush1.msra.mxu0 0.0
  %8412 = vmatprep.subr.mxu0 0.0
  %8413 = vmatpush1.msra.mxu0 0.0
  %8414 = vmatprep.subr.mxu0 0.0
  %8415 = vmatpush1.msra.mxu0 0.0
  %8416 = vmatprep.subr.mxu0 0.0
  %8417 = vmatpush1.msra.mxu0 0.0
  %8418 = vmatprep.mubr.f32.mxu0 0.0
  %8419 = vmatmul.mubr.f32.gmra.mrb[0].mxu0 %v8352
  %v8420 = vpop.f32.mrb[0].mxu0
  %v8421 = vadd.f32 0.0, %v8420
  %v8422 = vpop.f32.mrb[0].mxu0
  %8423 = vdwg.mxu0
  %8424 = vrot.lane.b32.xlu0 %v531, 112
  %v8425 = vpop.permute.xlu0 %8424
  %v8428 = vsel %vm555, %v7579, 0
  %8430 = vmatprep.subr.mxu0 0.0
  %8431 = vmatpush1.msra.mxu0 %v8425
  %8432 = vmatprep.subr.mxu0 0.0
  %8433 = vmatpush1.msra.mxu0 0.0
  %8434 = vmatprep.subr.mxu0 0.0
  %8435 = vmatpush1.msra.mxu0 0.0
  %8436 = vmatprep.subr.mxu0 0.0
  %8437 = vmatpush1.msra.mxu0 0.0
  %8438 = vmatprep.subr.mxu0 0.0
  %8439 = vmatpush1.msra.mxu0 0.0
  %8440 = vmatprep.subr.mxu0 0.0
  %8441 = vmatpush1.msra.mxu0 0.0
  %8442 = vmatprep.subr.mxu0 0.0
  %8443 = vmatpush1.msra.mxu0 0.0
  %8444 = vmatprep.subr.mxu0 0.0
  %8445 = vmatpush1.msra.mxu0 0.0
  %8446 = vmatprep.subr.mxu0 0.0
  %8447 = vmatpush1.msra.mxu0 0.0
  %8448 = vmatprep.subr.mxu0 0.0
  %8449 = vmatpush1.msra.mxu0 0.0
  %8450 = vmatprep.subr.mxu0 0.0
  %8451 = vmatpush1.msra.mxu0 0.0
  %8452 = vmatprep.subr.mxu0 0.0
  %8453 = vmatpush1.msra.mxu0 0.0
  %8454 = vmatprep.subr.mxu0 0.0
  %8455 = vmatpush1.msra.mxu0 0.0
  %8456 = vmatprep.subr.mxu0 0.0
  %8457 = vmatpush1.msra.mxu0 0.0
  %8458 = vmatprep.subr.mxu0 0.0
  %8459 = vmatpush1.msra.mxu0 0.0
  %8460 = vmatprep.subr.mxu0 0.0
  %8461 = vmatpush1.msra.mxu0 0.0
  %8462 = vmatprep.subr.mxu0 0.0
  %8463 = vmatpush1.msra.mxu0 0.0
  %8464 = vmatprep.subr.mxu0 0.0
  %8465 = vmatpush1.msra.mxu0 0.0
  %8466 = vmatprep.subr.mxu0 0.0
  %8467 = vmatpush1.msra.mxu0 0.0
  %8468 = vmatprep.subr.mxu0 0.0
  %8469 = vmatpush1.msra.mxu0 0.0
  %8470 = vmatprep.subr.mxu0 0.0
  %8471 = vmatpush1.msra.mxu0 0.0
  %8472 = vmatprep.subr.mxu0 0.0
  %8473 = vmatpush1.msra.mxu0 0.0
  %8474 = vmatprep.subr.mxu0 0.0
  %8475 = vmatpush1.msra.mxu0 0.0
  %8476 = vmatprep.subr.mxu0 0.0
  %8477 = vmatpush1.msra.mxu0 0.0
  %8478 = vmatprep.subr.mxu0 0.0
  %8479 = vmatpush1.msra.mxu0 0.0
  %8480 = vmatprep.subr.mxu0 0.0
  %8481 = vmatpush1.msra.mxu0 0.0
  %8482 = vmatprep.subr.mxu0 0.0
  %8483 = vmatpush1.msra.mxu0 0.0
  %8484 = vmatprep.subr.mxu0 0.0
  %8485 = vmatpush1.msra.mxu0 0.0
  %8486 = vmatprep.subr.mxu0 0.0
  %8487 = vmatpush1.msra.mxu0 0.0
  %8488 = vmatprep.subr.mxu0 0.0
  %8489 = vmatpush1.msra.mxu0 0.0
  %8490 = vmatprep.subr.mxu0 0.0
  %8491 = vmatpush1.msra.mxu0 0.0
  %8492 = vmatprep.subr.mxu0 0.0
  %8493 = vmatpush1.msra.mxu0 0.0
  %8494 = vmatprep.mubr.f32.mxu0 0.0
  %8495 = vmatmul.mubr.f32.gmra.mrb[0].mxu0 %v8428
  %v8496 = vpop.f32.mrb[0].mxu0
  %v8497 = vadd.f32 0.0, %v8496
  %v8498 = vpop.f32.mrb[0].mxu0
  %8499 = vdwg.mxu0
  %8500 = vrot.lane.b32.xlu0 %v536, 112
  %v8501 = vpop.permute.xlu0 %8500
  %v8504 = vsel %vm555, %v7581, 0
  %8506 = vmatprep.subr.mxu0 0.0
  %8507 = vmatpush1.msra.mxu0 %v8501
  %8508 = vmatprep.subr.mxu0 0.0
  %8509 = vmatpush1.msra.mxu0 0.0
  %8510 = vmatprep.subr.mxu0 0.0
  %8511 = vmatpush1.msra.mxu0 0.0
  %8512 = vmatprep.subr.mxu0 0.0
  %8513 = vmatpush1.msra.mxu0 0.0
  %8514 = vmatprep.subr.mxu0 0.0
  %8515 = vmatpush1.msra.mxu0 0.0
  %8516 = vmatprep.subr.mxu0 0.0
  %8517 = vmatpush1.msra.mxu0 0.0
  %8518 = vmatprep.subr.mxu0 0.0
  %8519 = vmatpush1.msra.mxu0 0.0
  %8520 = vmatprep.subr.mxu0 0.0
  %8521 = vmatpush1.msra.mxu0 0.0
  %8522 = vmatprep.subr.mxu0 0.0
  %8523 = vmatpush1.msra.mxu0 0.0
  %8524 = vmatprep.subr.mxu0 0.0
  %8525 = vmatpush1.msra.mxu0 0.0
  %8526 = vmatprep.subr.mxu0 0.0
  %8527 = vmatpush1.msra.mxu0 0.0
  %8528 = vmatprep.subr.mxu0 0.0
  %8529 = vmatpush1.msra.mxu0 0.0
  %8530 = vmatprep.subr.mxu0 0.0
  %8531 = vmatpush1.msra.mxu0 0.0
  %8532 = vmatprep.subr.mxu0 0.0
  %8533 = vmatpush1.msra.mxu0 0.0
  %8534 = vmatprep.subr.mxu0 0.0
  %8535 = vmatpush1.msra.mxu0 0.0
  %8536 = vmatprep.subr.mxu0 0.0
  %8537 = vmatpush1.msra.mxu0 0.0
  %8538 = vmatprep.subr.mxu0 0.0
  %8539 = vmatpush1.msra.mxu0 0.0
  %8540 = vmatprep.subr.mxu0 0.0
  %8541 = vmatpush1.msra.mxu0 0.0
  %8542 = vmatprep.subr.mxu0 0.0
  %8543 = vmatpush1.msra.mxu0 0.0
  %8544 = vmatprep.subr.mxu0 0.0
  %8545 = vmatpush1.msra.mxu0 0.0
  %8546 = vmatprep.subr.mxu0 0.0
  %8547 = vmatpush1.msra.mxu0 0.0
  %8548 = vmatprep.subr.mxu0 0.0
  %8549 = vmatpush1.msra.mxu0 0.0
  %8550 = vmatprep.subr.mxu0 0.0
  %8551 = vmatpush1.msra.mxu0 0.0
  %8552 = vmatprep.subr.mxu0 0.0
  %8553 = vmatpush1.msra.mxu0 0.0
  %8554 = vmatprep.subr.mxu0 0.0
  %8555 = vmatpush1.msra.mxu0 0.0
  %8556 = vmatprep.subr.mxu0 0.0
  %8557 = vmatpush1.msra.mxu0 0.0
  %8558 = vmatprep.subr.mxu0 0.0
  %8559 = vmatpush1.msra.mxu0 0.0
  %8560 = vmatprep.subr.mxu0 0.0
  %8561 = vmatpush1.msra.mxu0 0.0
  %8562 = vmatprep.subr.mxu0 0.0
  %8563 = vmatpush1.msra.mxu0 0.0
  %8564 = vmatprep.subr.mxu0 0.0
  %8565 = vmatpush1.msra.mxu0 0.0
  %8566 = vmatprep.subr.mxu0 0.0
  %8567 = vmatpush1.msra.mxu0 0.0
  %8568 = vmatprep.subr.mxu0 0.0
  %8569 = vmatpush1.msra.mxu0 0.0
  %8570 = vmatprep.mubr.f32.mxu0 0.0
  %8571 = vmatmul.mubr.f32.gmra.mrb[0].mxu0 %v8504
  %v8572 = vpop.f32.mrb[0].mxu0
  %v8573 = vadd.f32 0.0, %v8572
  %v8574 = vpop.f32.mrb[0].mxu0
  %8575 = vdwg.mxu0
  %8576 = vrot.lane.b32.xlu0 %v541, 112
  %v8577 = vpop.permute.xlu0 %8576
  %v8580 = vsel %vm555, %v7583, 0
  %8582 = vmatprep.subr.mxu0 0.0
  %8583 = vmatpush1.msra.mxu0 %v8577
  %8584 = vmatprep.subr.mxu0 0.0
  %8585 = vmatpush1.msra.mxu0 0.0
  %8586 = vmatprep.subr.mxu0 0.0
  %8587 = vmatpush1.msra.mxu0 0.0
  %8588 = vmatprep.subr.mxu0 0.0
  %8589 = vmatpush1.msra.mxu0 0.0
  %8590 = vmatprep.subr.mxu0 0.0
  %8591 = vmatpush1.msra.mxu0 0.0
  %8592 = vmatprep.subr.mxu0 0.0
  %8593 = vmatpush1.msra.mxu0 0.0
  %8594 = vmatprep.subr.mxu0 0.0
  %8595 = vmatpush1.msra.mxu0 0.0
  %8596 = vmatprep.subr.mxu0 0.0
  %8597 = vmatpush1.msra.mxu0 0.0
  %8598 = vmatprep.subr.mxu0 0.0
  %8599 = vmatpush1.msra.mxu0 0.0
  %8600 = vmatprep.subr.mxu0 0.0
  %8601 = vmatpush1.msra.mxu0 0.0
  %8602 = vmatprep.subr.mxu0 0.0
  %8603 = vmatpush1.msra.mxu0 0.0
  %8604 = vmatprep.subr.mxu0 0.0
  %8605 = vmatpush1.msra.mxu0 0.0
  %8606 = vmatprep.subr.mxu0 0.0
  %8607 = vmatpush1.msra.mxu0 0.0
  %8608 = vmatprep.subr.mxu0 0.0
  %8609 = vmatpush1.msra.mxu0 0.0
  %8610 = vmatprep.subr.mxu0 0.0
  %8611 = vmatpush1.msra.mxu0 0.0
  %8612 = vmatprep.subr.mxu0 0.0
  %8613 = vmatpush1.msra.mxu0 0.0
  %8614 = vmatprep.subr.mxu0 0.0
  %8615 = vmatpush1.msra.mxu0 0.0
  %8616 = vmatprep.subr.mxu0 0.0
  %8617 = vmatpush1.msra.mxu0 0.0
  %8618 = vmatprep.subr.mxu0 0.0
  %8619 = vmatpush1.msra.mxu0 0.0
  %8620 = vmatprep.subr.mxu0 0.0
  %8621 = vmatpush1.msra.mxu0 0.0
  %8622 = vmatprep.subr.mxu0 0.0
  %8623 = vmatpush1.msra.mxu0 0.0
  %8624 = vmatprep.subr.mxu0 0.0
  %8625 = vmatpush1.msra.mxu0 0.0
  %8626 = vmatprep.subr.mxu0 0.0
  %8627 = vmatpush1.msra.mxu0 0.0
  %8628 = vmatprep.subr.mxu0 0.0
  %8629 = vmatpush1.msra.mxu0 0.0
  %8630 = vmatprep.subr.mxu0 0.0
  %8631 = vmatpush1.msra.mxu0 0.0
  %8632 = vmatprep.subr.mxu0 0.0
  %8633 = vmatpush1.msra.mxu0 0.0
  %8634 = vmatprep.subr.mxu0 0.0
  %8635 = vmatpush1.msra.mxu0 0.0
  %8636 = vmatprep.subr.mxu0 0.0
  %8637 = vmatpush1.msra.mxu0 0.0
  %8638 = vmatprep.subr.mxu0 0.0
  %8639 = vmatpush1.msra.mxu0 0.0
  %8640 = vmatprep.subr.mxu0 0.0
  %8641 = vmatpush1.msra.mxu0 0.0
  %8642 = vmatprep.subr.mxu0 0.0
  %8643 = vmatpush1.msra.mxu0 0.0
  %8644 = vmatprep.subr.mxu0 0.0
  %8645 = vmatpush1.msra.mxu0 0.0
  %8646 = vmatprep.mubr.f32.mxu0 0.0
  %8647 = vmatmul.mubr.f32.gmra.mrb[0].mxu0 %v8580
  %v8648 = vpop.f32.mrb[0].mxu0
  %v8649 = vadd.f32 0.0, %v8648
  %v8650 = vpop.f32.mrb[0].mxu0
  %8651 = vdwg.mxu0
  %8652 = vrot.lane.b32.xlu0 %v546, 112
  %v8653 = vpop.permute.xlu0 %8652
  %v8656 = vsel %vm555, %v7585, 0
  %8658 = vmatprep.subr.mxu0 0.0
  %8659 = vmatpush1.msra.mxu0 %v8653
  %8660 = vmatprep.subr.mxu0 0.0
  %8661 = vmatpush1.msra.mxu0 0.0
  %8662 = vmatprep.subr.mxu0 0.0
  %8663 = vmatpush1.msra.mxu0 0.0
  %8664 = vmatprep.subr.mxu0 0.0
  %8665 = vmatpush1.msra.mxu0 0.0
  %8666 = vmatprep.subr.mxu0 0.0
  %8667 = vmatpush1.msra.mxu0 0.0
  %8668 = vmatprep.subr.mxu0 0.0
  %8669 = vmatpush1.msra.mxu0 0.0
  %8670 = vmatprep.subr.mxu0 0.0
  %8671 = vmatpush1.msra.mxu0 0.0
  %8672 = vmatprep.subr.mxu0 0.0
  %8673 = vmatpush1.msra.mxu0 0.0
  %8674 = vmatprep.subr.mxu0 0.0
  %8675 = vmatpush1.msra.mxu0 0.0
  %8676 = vmatprep.subr.mxu0 0.0
  %8677 = vmatpush1.msra.mxu0 0.0
  %8678 = vmatprep.subr.mxu0 0.0
  %8679 = vmatpush1.msra.mxu0 0.0
  %8680 = vmatprep.subr.mxu0 0.0
  %8681 = vmatpush1.msra.mxu0 0.0
  %8682 = vmatprep.subr.mxu0 0.0
  %8683 = vmatpush1.msra.mxu0 0.0
  %8684 = vmatprep.subr.mxu0 0.0
  %8685 = vmatpush1.msra.mxu0 0.0
  %8686 = vmatprep.subr.mxu0 0.0
  %8687 = vmatpush1.msra.mxu0 0.0
  %8688 = vmatprep.subr.mxu0 0.0
  %8689 = vmatpush1.msra.mxu0 0.0
  %8690 = vmatprep.subr.mxu0 0.0
  %8691 = vmatpush1.msra.mxu0 0.0
  %8692 = vmatprep.subr.mxu0 0.0
  %8693 = vmatpush1.msra.mxu0 0.0
  %8694 = vmatprep.subr.mxu0 0.0
  %8695 = vmatpush1.msra.mxu0 0.0
  %8696 = vmatprep.subr.mxu0 0.0
  %8697 = vmatpush1.msra.mxu0 0.0
  %8698 = vmatprep.subr.mxu0 0.0
  %8699 = vmatpush1.msra.mxu0 0.0
  %8700 = vmatprep.subr.mxu0 0.0
  %8701 = vmatpush1.msra.mxu0 0.0
  %8702 = vmatprep.subr.mxu0 0.0
  %8703 = vmatpush1.msra.mxu0 0.0
  %8704 = vmatprep.subr.mxu0 0.0
  %8705 = vmatpush1.msra.mxu0 0.0
  %8706 = vmatprep.subr.mxu0 0.0
  %8707 = vmatpush1.msra.mxu0 0.0
  %8708 = vmatprep.subr.mxu0 0.0
  %8709 = vmatpush1.msra.mxu0 0.0
  %8710 = vmatprep.subr.mxu0 0.0
  %8711 = vmatpush1.msra.mxu0 0.0
  %8712 = vmatprep.subr.mxu0 0.0
  %8713 = vmatpush1.msra.mxu0 0.0
  %8714 = vmatprep.subr.mxu0 0.0
  %8715 = vmatpush1.msra.mxu0 0.0
  %8716 = vmatprep.subr.mxu0 0.0
  %8717 = vmatpush1.msra.mxu0 0.0
  %8718 = vmatprep.subr.mxu0 0.0
  %8719 = vmatpush1.msra.mxu0 0.0
  %8720 = vmatprep.subr.mxu0 0.0
  %8721 = vmatpush1.msra.mxu0 0.0
  %8722 = vmatprep.mubr.f32.mxu0 0.0
  %8723 = vmatmul.mubr.f32.gmra.mrb[0].mxu0 %v8656
  %v8724 = vpop.f32.mrb[0].mxu0
  %v8725 = vadd.f32 0.0, %v8724
  %v8726 = vpop.f32.mrb[0].mxu0
  %8727 = vdwg.mxu0
  %8728 = vrot.lane.b32.xlu0 %v551, 112
  %v8729 = vpop.permute.xlu0 %8728
  %v8732 = vsel %vm555, %v7587, 0
  %8734 = vmatprep.subr.mxu0 0.0
  %8735 = vmatpush1.msra.mxu0 %v8729
  %8736 = vmatprep.subr.mxu0 0.0
  %8737 = vmatpush1.msra.mxu0 0.0
  %8738 = vmatprep.subr.mxu0 0.0
  %8739 = vmatpush1.msra.mxu0 0.0
  %8740 = vmatprep.subr.mxu0 0.0
  %8741 = vmatpush1.msra.mxu0 0.0
  %8742 = vmatprep.subr.mxu0 0.0
  %8743 = vmatpush1.msra.mxu0 0.0
  %8744 = vmatprep.subr.mxu0 0.0
  %8745 = vmatpush1.msra.mxu0 0.0
  %8746 = vmatprep.subr.mxu0 0.0
  %8747 = vmatpush1.msra.mxu0 0.0
  %8748 = vmatprep.subr.mxu0 0.0
  %8749 = vmatpush1.msra.mxu0 0.0
  %8750 = vmatprep.subr.mxu0 0.0
  %8751 = vmatpush1.msra.mxu0 0.0
  %8752 = vmatprep.subr.mxu0 0.0
  %8753 = vmatpush1.msra.mxu0 0.0
  %8754 = vmatprep.subr.mxu0 0.0
  %8755 = vmatpush1.msra.mxu0 0.0
  %8756 = vmatprep.subr.mxu0 0.0
  %8757 = vmatpush1.msra.mxu0 0.0
  %8758 = vmatprep.subr.mxu0 0.0
  %8759 = vmatpush1.msra.mxu0 0.0
  %8760 = vmatprep.subr.mxu0 0.0
  %8761 = vmatpush1.msra.mxu0 0.0
  %8762 = vmatprep.subr.mxu0 0.0
  %8763 = vmatpush1.msra.mxu0 0.0
  %8764 = vmatprep.subr.mxu0 0.0
  %8765 = vmatpush1.msra.mxu0 0.0
  %8766 = vmatprep.subr.mxu0 0.0
  %8767 = vmatpush1.msra.mxu0 0.0
  %8768 = vmatprep.subr.mxu0 0.0
  %8769 = vmatpush1.msra.mxu0 0.0
  %8770 = vmatprep.subr.mxu0 0.0
  %8771 = vmatpush1.msra.mxu0 0.0
  %8772 = vmatprep.subr.mxu0 0.0
  %8773 = vmatpush1.msra.mxu0 0.0
  %8774 = vmatprep.subr.mxu0 0.0
  %8775 = vmatpush1.msra.mxu0 0.0
  %8776 = vmatprep.subr.mxu0 0.0
  %8777 = vmatpush1.msra.mxu0 0.0
  %8778 = vmatprep.subr.mxu0 0.0
  %8779 = vmatpush1.msra.mxu0 0.0
  %8780 = vmatprep.subr.mxu0 0.0
  %8781 = vmatpush1.msra.mxu0 0.0
  %8782 = vmatprep.subr.mxu0 0.0
  %8783 = vmatpush1.msra.mxu0 0.0
  %8784 = vmatprep.subr.mxu0 0.0
  %8785 = vmatpush1.msra.mxu0 0.0
  %8786 = vmatprep.subr.mxu0 0.0
  %8787 = vmatpush1.msra.mxu0 0.0
  %8788 = vmatprep.subr.mxu0 0.0
  %8789 = vmatpush1.msra.mxu0 0.0
  %8790 = vmatprep.subr.mxu0 0.0
  %8791 = vmatpush1.msra.mxu0 0.0
  %8792 = vmatprep.subr.mxu0 0.0
  %8793 = vmatpush1.msra.mxu0 0.0
  %8794 = vmatprep.subr.mxu0 0.0
  %8795 = vmatpush1.msra.mxu0 0.0
  %8796 = vmatprep.subr.mxu0 0.0
  %8797 = vmatpush1.msra.mxu0 0.0
  %8798 = vmatprep.mubr.f32.mxu0 0.0
  %8799 = vmatmul.mubr.f32.gmra.mrb[0].mxu0 %v8732
  %v8800 = vpop.f32.mrb[0].mxu0
  %v8801 = vadd.f32 0.0, %v8800
  %v8802 = vpop.f32.mrb[0].mxu0
  %8803 = vdwg.mxu0
  %v8804 = vld [vmem:[%s4 + $0x10] sm:$0xff]
  %v8806 = vsel %vm555, %v7661, 0
  %v8809 = vsel %vm555, %v7737, 0
  %v8812 = vsel %vm555, %v7813, 0
  %v8815 = vsel %vm555, %v7889, 0
  %v8818 = vsel %vm555, %v7965, 0
  %v8821 = vsel %vm555, %v8041, 0
  %v8824 = vsel %vm555, %v8117, 0
  %v8827 = vsel %vm555, %v8193, 0
  %v8830 = vsel %vm555, %v8269, 0
  %v8833 = vsel %vm555, %v8345, 0
  %v8836 = vsel %vm555, %v8421, 0
  %v8839 = vsel %vm555, %v8497, 0
  %v8842 = vsel %vm555, %v8573, 0
  %v8845 = vsel %vm555, %v8649, 0
  %v8848 = vsel %vm555, %v8725, 0
  %v8851 = vsel %vm555, %v8801, 0
  %8853 = vmatprep.subr.mxu0 0.0
  %8854 = vmatpush1.msra.mxu0 %v8804
  %8855 = vmatprep.subr.mxu0 0.0
  %8856 = vmatpush1.msra.mxu0 0.0
  %8857 = vmatprep.subr.mxu0 0.0
  %8858 = vmatpush1.msra.mxu0 0.0
  %8859 = vmatprep.subr.mxu0 0.0
  %8860 = vmatpush1.msra.mxu0 0.0
  %8861 = vmatprep.subr.mxu0 0.0
  %8862 = vmatpush1.msra.mxu0 0.0
  %8863 = vmatprep.subr.mxu0 0.0
  %8864 = vmatpush1.msra.mxu0 0.0
  %8865 = vmatprep.subr.mxu0 0.0
  %8866 = vmatpush1.msra.mxu0 0.0
  %8867 = vmatprep.subr.mxu0 0.0
  %8868 = vmatpush1.msra.mxu0 0.0
  %8869 = vmatprep.subr.mxu0 0.0
  %8870 = vmatpush1.msra.mxu0 0.0
  %8871 = vmatprep.subr.mxu0 0.0
  %8872 = vmatpush1.msra.mxu0 0.0
  %8873 = vmatprep.subr.mxu0 0.0
  %8874 = vmatpush1.msra.mxu0 0.0
  %8875 = vmatprep.subr.mxu0 0.0
  %8876 = vmatpush1.msra.mxu0 0.0
  %8877 = vmatprep.subr.mxu0 0.0
  %8878 = vmatpush1.msra.mxu0 0.0
  %8879 = vmatprep.subr.mxu0 0.0
  %8880 = vmatpush1.msra.mxu0 0.0
  %8881 = vmatprep.subr.mxu0 0.0
  %8882 = vmatpush1.msra.mxu0 0.0
  %8883 = vmatprep.subr.mxu0 0.0
  %8884 = vmatpush1.msra.mxu0 0.0
  %8885 = vmatprep.subr.mxu0 0.0
  %8886 = vmatpush1.msra.mxu0 0.0
  %8887 = vmatprep.subr.mxu0 0.0
  %8888 = vmatpush1.msra.mxu0 0.0
  %8889 = vmatprep.subr.mxu0 0.0
  %8890 = vmatpush1.msra.mxu0 0.0
  %8891 = vmatprep.subr.mxu0 0.0
  %8892 = vmatpush1.msra.mxu0 0.0
  %8893 = vmatprep.subr.mxu0 0.0
  %8894 = vmatpush1.msra.mxu0 0.0
  %8895 = vmatprep.subr.mxu0 0.0
  %8896 = vmatpush1.msra.mxu0 0.0
  %8897 = vmatprep.subr.mxu0 0.0
  %8898 = vmatpush1.msra.mxu0 0.0
  %8899 = vmatprep.subr.mxu0 0.0
  %8900 = vmatpush1.msra.mxu0 0.0
  %8901 = vmatprep.subr.mxu0 0.0
  %8902 = vmatpush1.msra.mxu0 0.0
  %8903 = vmatprep.subr.mxu0 0.0
  %8904 = vmatpush1.msra.mxu0 0.0
  %8905 = vmatprep.subr.mxu0 0.0
  %8906 = vmatpush1.msra.mxu0 0.0
  %8907 = vmatprep.subr.mxu0 0.0
  %8908 = vmatpush1.msra.mxu0 0.0
  %8909 = vmatprep.subr.mxu0 0.0
  %8910 = vmatpush1.msra.mxu0 0.0
  %8911 = vmatprep.subr.mxu0 0.0
  %8912 = vmatpush1.msra.mxu0 0.0
  %8913 = vmatprep.subr.mxu0 0.0
  %8914 = vmatpush1.msra.mxu0 0.0
  %8915 = vmatprep.subr.mxu0 0.0
  %8916 = vmatpush1.msra.mxu0 0.0
  %8917 = vmatprep.mubr.f32.mxu0 0.0
  %8918 = vmatmul.mubr.f32.gmra.mrb[0].mxu0 %v8806
  %v8919 = vpop.f32.mrb[0].mxu0
  %v8920 = vadd.f32 0.0, %v8919
  %v8921 = vpop.f32.mrb[0].mxu0
  %8922 = vmatprep.mubr.f32.mxu0 0.0
  %8923 = vmatmul.mubr.f32.gmra.mrb[0].mxu0 %v8809
  %v8924 = vpop.f32.mrb[0].mxu0
  %v8925 = vadd.f32 0.0, %v8924
  %v8926 = vpop.f32.mrb[0].mxu0
  %8927 = vmatprep.mubr.f32.mxu0 0.0
  %8928 = vmatmul.mubr.f32.gmra.mrb[0].mxu0 %v8812
  %v8929 = vpop.f32.mrb[0].mxu0
  %v8930 = vadd.f32 0.0, %v8929
  %v8931 = vpop.f32.mrb[0].mxu0
  %8932 = vmatprep.mubr.f32.mxu0 0.0
  %8933 = vmatmul.mubr.f32.gmra.mrb[0].mxu0 %v8815
  %v8934 = vpop.f32.mrb[0].mxu0
  %v8935 = vadd.f32 0.0, %v8934
  %v8936 = vpop.f32.mrb[0].mxu0
  %8937 = vmatprep.mubr.f32.mxu0 0.0
  %8938 = vmatmul.mubr.f32.gmra.mrb[0].mxu0 %v8818
  %v8939 = vpop.f32.mrb[0].mxu0
  %v8940 = vadd.f32 0.0, %v8939
  %v8941 = vpop.f32.mrb[0].mxu0
  %8942 = vmatprep.mubr.f32.mxu0 0.0
  %8943 = vmatmul.mubr.f32.gmra.mrb[0].mxu0 %v8821
  %v8944 = vpop.f32.mrb[0].mxu0
  %v8945 = vadd.f32 0.0, %v8944
  %v8946 = vpop.f32.mrb[0].mxu0
  %8947 = vmatprep.mubr.f32.mxu0 0.0
  %8948 = vmatmul.mubr.f32.gmra.mrb[0].mxu0 %v8824
  %v8949 = vpop.f32.mrb[0].mxu0
  %v8950 = vadd.f32 0.0, %v8949
  %v8951 = vpop.f32.mrb[0].mxu0
  %8952 = vmatprep.mubr.f32.mxu0 0.0
  %8953 = vmatmul.mubr.f32.gmra.mrb[0].mxu0 %v8827
  %v8954 = vpop.f32.mrb[0].mxu0
  %v8955 = vadd.f32 0.0, %v8954
  %v8956 = vpop.f32.mrb[0].mxu0
  %8957 = vmatprep.mubr.f32.mxu0 0.0
  %8958 = vmatmul.mubr.f32.gmra.mrb[0].mxu0 %v8830
  %v8959 = vpop.f32.mrb[0].mxu0
  %v8960 = vadd.f32 0.0, %v8959
  %v8961 = vpop.f32.mrb[0].mxu0
  %8962 = vmatprep.mubr.f32.mxu0 0.0
  %8963 = vmatmul.mubr.f32.gmra.mrb[0].mxu0 %v8833
  %v8964 = vpop.f32.mrb[0].mxu0
  %v8965 = vadd.f32 0.0, %v8964
  %v8966 = vpop.f32.mrb[0].mxu0
  %8967 = vmatprep.mubr.f32.mxu0 0.0
  %8968 = vmatmul.mubr.f32.gmra.mrb[0].mxu0 %v8836
  %v8969 = vpop.f32.mrb[0].mxu0
  %v8970 = vadd.f32 0.0, %v8969
  %v8971 = vpop.f32.mrb[0].mxu0
  %8972 = vmatprep.mubr.f32.mxu0 0.0
  %8973 = vmatmul.mubr.f32.gmra.mrb[0].mxu0 %v8839
  %v8974 = vpop.f32.mrb[0].mxu0
  %v8975 = vadd.f32 0.0, %v8974
  %v8976 = vpop.f32.mrb[0].mxu0
  %8977 = vmatprep.mubr.f32.mxu0 0.0
  %8978 = vmatmul.mubr.f32.gmra.mrb[0].mxu0 %v8842
  %v8979 = vpop.f32.mrb[0].mxu0
  %v8980 = vadd.f32 0.0, %v8979
  %v8981 = vpop.f32.mrb[0].mxu0
  %8982 = vmatprep.mubr.f32.mxu0 0.0
  %8983 = vmatmul.mubr.f32.gmra.mrb[0].mxu0 %v8845
  %v8984 = vpop.f32.mrb[0].mxu0
  %v8985 = vadd.f32 0.0, %v8984
  %v8986 = vpop.f32.mrb[0].mxu0
  %8987 = vmatprep.mubr.f32.mxu0 0.0
  %8988 = vmatmul.mubr.f32.gmra.mrb[0].mxu0 %v8848
  %v8989 = vpop.f32.mrb[0].mxu0
  %v8990 = vadd.f32 0.0, %v8989
  %v8991 = vpop.f32.mrb[0].mxu0
  %8992 = vmatprep.mubr.f32.mxu0 0.0
  %8993 = vmatmul.mubr.f32.gmra.mrb[0].mxu0 %v8851
  %v8994 = vpop.f32.mrb[0].mxu0
  %v8995 = vadd.f32 0.0, %v8994
  %v8996 = vpop.f32.mrb[0].mxu0
  %8997 = vdwg.mxu0
  %v8998 = vadd.f32 %v6084, %v8920
  %v8999 = vadd.f32 %v6089, %v8925
  %v9000 = vadd.f32 %v6094, %v8930
  %v9001 = vadd.f32 %v6099, %v8935
  %v9002 = vadd.f32 %v6104, %v8940
  %v9003 = vadd.f32 %v6109, %v8945
  %v9004 = vadd.f32 %v6114, %v8950
  %v9005 = vadd.f32 %v6119, %v8955
  %v9006 = vadd.f32 %v6124, %v8960
  %v9007 = vadd.f32 %v6129, %v8965
  %v9008 = vadd.f32 %v6134, %v8970
  %v9009 = vadd.f32 %v6139, %v8975
  %v9010 = vadd.f32 %v6144, %v8980
  %v9011 = vadd.f32 %v6149, %v8985
  %v9012 = vadd.f32 %v6154, %v8990
  %v9013 = vadd.f32 %v6159, %v8995
  %s9014 = scalar_lea.vmem %s6, 24
  %v9015 = vld [vmem:[%s9014] sm:$0xff]
  %9016 = vrot.lane.b32.xlu0 %v240, 104
  %v9017 = vpop.permute.xlu0 %9016
  %9018 = vrot.lane.b32.xlu0 %v327, 104
  %v9019 = vpop.permute.xlu0 %9018
  %v9020 = vsel %vm555, %v9017, 0
  %v9022 = vsel %vm555, %v9019, 0
  %9024 = vmatprep.subr.mxu0 0.0
  %9025 = vmatpush1.xpose.msra.mxu0 %v9022
  %9026 = vmatprep.subr.mxu0 0.0
  %9027 = vmatpush1.xpose.msra.mxu0 0.0
  %9028 = vmatprep.subr.mxu0 0.0
  %9029 = vmatpush1.xpose.msra.mxu0 0.0
  %9030 = vmatprep.subr.mxu0 0.0
  %9031 = vmatpush1.xpose.msra.mxu0 0.0
  %9032 = vmatprep.subr.mxu0 0.0
  %9033 = vmatpush1.xpose.msra.mxu0 0.0
  %9034 = vmatprep.subr.mxu0 0.0
  %9035 = vmatpush1.xpose.msra.mxu0 0.0
  %9036 = vmatprep.subr.mxu0 0.0
  %9037 = vmatpush1.xpose.msra.mxu0 0.0
  %9038 = vmatprep.subr.mxu0 0.0
  %9039 = vmatpush1.xpose.msra.mxu0 0.0
  %9040 = vmatprep.subr.mxu0 0.0
  %9041 = vmatpush1.xpose.msra.mxu0 0.0
  %9042 = vmatprep.subr.mxu0 0.0
  %9043 = vmatpush1.xpose.msra.mxu0 0.0
  %9044 = vmatprep.subr.mxu0 0.0
  %9045 = vmatpush1.xpose.msra.mxu0 0.0
  %9046 = vmatprep.subr.mxu0 0.0
  %9047 = vmatpush1.xpose.msra.mxu0 0.0
  %9048 = vmatprep.subr.mxu0 0.0
  %9049 = vmatpush1.xpose.msra.mxu0 0.0
  %9050 = vmatprep.subr.mxu0 0.0
  %9051 = vmatpush1.xpose.msra.mxu0 0.0
  %9052 = vmatprep.subr.mxu0 0.0
  %9053 = vmatpush1.xpose.msra.mxu0 0.0
  %9054 = vmatprep.subr.mxu0 0.0
  %9055 = vmatpush1.xpose.msra.mxu0 0.0
  %9056 = vmatprep.subr.mxu0 0.0
  %9057 = vmatpush1.xpose.msra.mxu0 0.0
  %9058 = vmatprep.subr.mxu0 0.0
  %9059 = vmatpush1.xpose.msra.mxu0 0.0
  %9060 = vmatprep.subr.mxu0 0.0
  %9061 = vmatpush1.xpose.msra.mxu0 0.0
  %9062 = vmatprep.subr.mxu0 0.0
  %9063 = vmatpush1.xpose.msra.mxu0 0.0
  %9064 = vmatprep.subr.mxu0 0.0
  %9065 = vmatpush1.xpose.msra.mxu0 0.0
  %9066 = vmatprep.subr.mxu0 0.0
  %9067 = vmatpush1.xpose.msra.mxu0 0.0
  %9068 = vmatprep.subr.mxu0 0.0
  %9069 = vmatpush1.xpose.msra.mxu0 0.0
  %9070 = vmatprep.subr.mxu0 0.0
  %9071 = vmatpush1.xpose.msra.mxu0 0.0
  %9072 = vmatprep.subr.mxu0 0.0
  %9073 = vmatpush1.xpose.msra.mxu0 0.0
  %9074 = vmatprep.subr.mxu0 0.0
  %9075 = vmatpush1.xpose.msra.mxu0 0.0
  %9076 = vmatprep.subr.mxu0 0.0
  %9077 = vmatpush1.xpose.msra.mxu0 0.0
  %9078 = vmatprep.subr.mxu0 0.0
  %9079 = vmatpush1.xpose.msra.mxu0 0.0
  %9080 = vmatprep.subr.mxu0 0.0
  %9081 = vmatpush1.xpose.msra.mxu0 0.0
  %9082 = vmatprep.subr.mxu0 0.0
  %9083 = vmatpush1.xpose.msra.mxu0 0.0
  %9084 = vmatprep.subr.mxu0 0.0
  %9085 = vmatpush1.xpose.msra.mxu0 0.0
  %9086 = vmatprep.subr.mxu0 0.0
  %9087 = vmatpush1.xpose.msra.mxu0 0.0
  %9088 = vmatprep.mubr.f32.mxu0 0.0
  %9089 = vmatmul.mubr.f32.gmra.mrb[0].mxu0 %v9020
  %v9090 = vpop.f32.mrb[0].mxu0
  %v9091 = vadd.f32 %v9015, %v9090
  %v9092 = vpop.f32.mrb[0].mxu0
  %9093 = vdwg.mxu0
  %9094 = vrot.lane.b32.xlu0 %v241, 104
  %v9095 = vpop.permute.xlu0 %9094
  %9096 = vrot.lane.b32.xlu0 %v332, 104
  %v9097 = vpop.permute.xlu0 %9096
  %v9098 = vsel %vm555, %v9095, 0
  %v9100 = vsel %vm555, %v9097, 0
  %9102 = vmatprep.subr.mxu0 0.0
  %9103 = vmatpush1.xpose.msra.mxu0 %v9100
  %9104 = vmatprep.subr.mxu0 0.0
  %9105 = vmatpush1.xpose.msra.mxu0 0.0
  %9106 = vmatprep.subr.mxu0 0.0
  %9107 = vmatpush1.xpose.msra.mxu0 0.0
  %9108 = vmatprep.subr.mxu0 0.0
  %9109 = vmatpush1.xpose.msra.mxu0 0.0
  %9110 = vmatprep.subr.mxu0 0.0
  %9111 = vmatpush1.xpose.msra.mxu0 0.0
  %9112 = vmatprep.subr.mxu0 0.0
  %9113 = vmatpush1.xpose.msra.mxu0 0.0
  %9114 = vmatprep.subr.mxu0 0.0
  %9115 = vmatpush1.xpose.msra.mxu0 0.0
  %9116 = vmatprep.subr.mxu0 0.0
  %9117 = vmatpush1.xpose.msra.mxu0 0.0
  %9118 = vmatprep.subr.mxu0 0.0
  %9119 = vmatpush1.xpose.msra.mxu0 0.0
  %9120 = vmatprep.subr.mxu0 0.0
  %9121 = vmatpush1.xpose.msra.mxu0 0.0
  %9122 = vmatprep.subr.mxu0 0.0
  %9123 = vmatpush1.xpose.msra.mxu0 0.0
  %9124 = vmatprep.subr.mxu0 0.0
  %9125 = vmatpush1.xpose.msra.mxu0 0.0
  %9126 = vmatprep.subr.mxu0 0.0
  %9127 = vmatpush1.xpose.msra.mxu0 0.0
  %9128 = vmatprep.subr.mxu0 0.0
  %9129 = vmatpush1.xpose.msra.mxu0 0.0
  %9130 = vmatprep.subr.mxu0 0.0
  %9131 = vmatpush1.xpose.msra.mxu0 0.0
  %9132 = vmatprep.subr.mxu0 0.0
  %9133 = vmatpush1.xpose.msra.mxu0 0.0
  %9134 = vmatprep.subr.mxu0 0.0
  %9135 = vmatpush1.xpose.msra.mxu0 0.0
  %9136 = vmatprep.subr.mxu0 0.0
  %9137 = vmatpush1.xpose.msra.mxu0 0.0
  %9138 = vmatprep.subr.mxu0 0.0
  %9139 = vmatpush1.xpose.msra.mxu0 0.0
  %9140 = vmatprep.subr.mxu0 0.0
  %9141 = vmatpush1.xpose.msra.mxu0 0.0
  %9142 = vmatprep.subr.mxu0 0.0
  %9143 = vmatpush1.xpose.msra.mxu0 0.0
  %9144 = vmatprep.subr.mxu0 0.0
  %9145 = vmatpush1.xpose.msra.mxu0 0.0
  %9146 = vmatprep.subr.mxu0 0.0
  %9147 = vmatpush1.xpose.msra.mxu0 0.0
  %9148 = vmatprep.subr.mxu0 0.0
  %9149 = vmatpush1.xpose.msra.mxu0 0.0
  %9150 = vmatprep.subr.mxu0 0.0
  %9151 = vmatpush1.xpose.msra.mxu0 0.0
  %9152 = vmatprep.subr.mxu0 0.0
  %9153 = vmatpush1.xpose.msra.mxu0 0.0
  %9154 = vmatprep.subr.mxu0 0.0
  %9155 = vmatpush1.xpose.msra.mxu0 0.0
  %9156 = vmatprep.subr.mxu0 0.0
  %9157 = vmatpush1.xpose.msra.mxu0 0.0
  %9158 = vmatprep.subr.mxu0 0.0
  %9159 = vmatpush1.xpose.msra.mxu0 0.0
  %9160 = vmatprep.subr.mxu0 0.0
  %9161 = vmatpush1.xpose.msra.mxu0 0.0
  %9162 = vmatprep.subr.mxu0 0.0
  %9163 = vmatpush1.xpose.msra.mxu0 0.0
  %9164 = vmatprep.subr.mxu0 0.0
  %9165 = vmatpush1.xpose.msra.mxu0 0.0
  %9166 = vmatprep.mubr.f32.mxu0 0.0
  %9167 = vmatmul.mubr.f32.gmra.mrb[0].mxu0 %v9098
  %v9168 = vpop.f32.mrb[0].mxu0
  %v9169 = vadd.f32 %v9015, %v9168
  %v9170 = vpop.f32.mrb[0].mxu0
  %9171 = vdwg.mxu0
  %9172 = vrot.lane.b32.xlu0 %v242, 104
  %v9173 = vpop.permute.xlu0 %9172
  %9174 = vrot.lane.b32.xlu0 %v337, 104
  %v9175 = vpop.permute.xlu0 %9174
  %v9176 = vsel %vm555, %v9173, 0
  %v9178 = vsel %vm555, %v9175, 0
  %9180 = vmatprep.subr.mxu0 0.0
  %9181 = vmatpush1.xpose.msra.mxu0 %v9178
  %9182 = vmatprep.subr.mxu0 0.0
  %9183 = vmatpush1.xpose.msra.mxu0 0.0
  %9184 = vmatprep.subr.mxu0 0.0
  %9185 = vmatpush1.xpose.msra.mxu0 0.0
  %9186 = vmatprep.subr.mxu0 0.0
  %9187 = vmatpush1.xpose.msra.mxu0 0.0
  %9188 = vmatprep.subr.mxu0 0.0
  %9189 = vmatpush1.xpose.msra.mxu0 0.0
  %9190 = vmatprep.subr.mxu0 0.0
  %9191 = vmatpush1.xpose.msra.mxu0 0.0
  %9192 = vmatprep.subr.mxu0 0.0
  %9193 = vmatpush1.xpose.msra.mxu0 0.0
  %9194 = vmatprep.subr.mxu0 0.0
  %9195 = vmatpush1.xpose.msra.mxu0 0.0
  %9196 = vmatprep.subr.mxu0 0.0
  %9197 = vmatpush1.xpose.msra.mxu0 0.0
  %9198 = vmatprep.subr.mxu0 0.0
  %9199 = vmatpush1.xpose.msra.mxu0 0.0
  %9200 = vmatprep.subr.mxu0 0.0
  %9201 = vmatpush1.xpose.msra.mxu0 0.0
  %9202 = vmatprep.subr.mxu0 0.0
  %9203 = vmatpush1.xpose.msra.mxu0 0.0
  %9204 = vmatprep.subr.mxu0 0.0
  %9205 = vmatpush1.xpose.msra.mxu0 0.0
  %9206 = vmatprep.subr.mxu0 0.0
  %9207 = vmatpush1.xpose.msra.mxu0 0.0
  %9208 = vmatprep.subr.mxu0 0.0
  %9209 = vmatpush1.xpose.msra.mxu0 0.0
  %9210 = vmatprep.subr.mxu0 0.0
  %9211 = vmatpush1.xpose.msra.mxu0 0.0
  %9212 = vmatprep.subr.mxu0 0.0
  %9213 = vmatpush1.xpose.msra.mxu0 0.0
  %9214 = vmatprep.subr.mxu0 0.0
  %9215 = vmatpush1.xpose.msra.mxu0 0.0
  %9216 = vmatprep.subr.mxu0 0.0
  %9217 = vmatpush1.xpose.msra.mxu0 0.0
  %9218 = vmatprep.subr.mxu0 0.0
  %9219 = vmatpush1.xpose.msra.mxu0 0.0
  %9220 = vmatprep.subr.mxu0 0.0
  %9221 = vmatpush1.xpose.msra.mxu0 0.0
  %9222 = vmatprep.subr.mxu0 0.0
  %9223 = vmatpush1.xpose.msra.mxu0 0.0
  %9224 = vmatprep.subr.mxu0 0.0
  %9225 = vmatpush1.xpose.msra.mxu0 0.0
  %9226 = vmatprep.subr.mxu0 0.0
  %9227 = vmatpush1.xpose.msra.mxu0 0.0
  %9228 = vmatprep.subr.mxu0 0.0
  %9229 = vmatpush1.xpose.msra.mxu0 0.0
  %9230 = vmatprep.subr.mxu0 0.0
  %9231 = vmatpush1.xpose.msra.mxu0 0.0
  %9232 = vmatprep.subr.mxu0 0.0
  %9233 = vmatpush1.xpose.msra.mxu0 0.0
  %9234 = vmatprep.subr.mxu0 0.0
  %9235 = vmatpush1.xpose.msra.mxu0 0.0
  %9236 = vmatprep.subr.mxu0 0.0
  %9237 = vmatpush1.xpose.msra.mxu0 0.0
  %9238 = vmatprep.subr.mxu0 0.0
  %9239 = vmatpush1.xpose.msra.mxu0 0.0
  %9240 = vmatprep.subr.mxu0 0.0
  %9241 = vmatpush1.xpose.msra.mxu0 0.0
  %9242 = vmatprep.subr.mxu0 0.0
  %9243 = vmatpush1.xpose.msra.mxu0 0.0
  %9244 = vmatprep.mubr.f32.mxu0 0.0
  %9245 = vmatmul.mubr.f32.gmra.mrb[0].mxu0 %v9176
  %v9246 = vpop.f32.mrb[0].mxu0
  %v9247 = vadd.f32 %v9015, %v9246
  %v9248 = vpop.f32.mrb[0].mxu0
  %9249 = vdwg.mxu0
  %9250 = vrot.lane.b32.xlu0 %v243, 104
  %v9251 = vpop.permute.xlu0 %9250
  %9252 = vrot.lane.b32.xlu0 %v342, 104
  %v9253 = vpop.permute.xlu0 %9252
  %v9254 = vsel %vm555, %v9251, 0
  %v9256 = vsel %vm555, %v9253, 0
  %9258 = vmatprep.subr.mxu0 0.0
  %9259 = vmatpush1.xpose.msra.mxu0 %v9256
  %9260 = vmatprep.subr.mxu0 0.0
  %9261 = vmatpush1.xpose.msra.mxu0 0.0
  %9262 = vmatprep.subr.mxu0 0.0
  %9263 = vmatpush1.xpose.msra.mxu0 0.0
  %9264 = vmatprep.subr.mxu0 0.0
  %9265 = vmatpush1.xpose.msra.mxu0 0.0
  %9266 = vmatprep.subr.mxu0 0.0
  %9267 = vmatpush1.xpose.msra.mxu0 0.0
  %9268 = vmatprep.subr.mxu0 0.0
  %9269 = vmatpush1.xpose.msra.mxu0 0.0
  %9270 = vmatprep.subr.mxu0 0.0
  %9271 = vmatpush1.xpose.msra.mxu0 0.0
  %9272 = vmatprep.subr.mxu0 0.0
  %9273 = vmatpush1.xpose.msra.mxu0 0.0
  %9274 = vmatprep.subr.mxu0 0.0
  %9275 = vmatpush1.xpose.msra.mxu0 0.0
  %9276 = vmatprep.subr.mxu0 0.0
  %9277 = vmatpush1.xpose.msra.mxu0 0.0
  %9278 = vmatprep.subr.mxu0 0.0
  %9279 = vmatpush1.xpose.msra.mxu0 0.0
  %9280 = vmatprep.subr.mxu0 0.0
  %9281 = vmatpush1.xpose.msra.mxu0 0.0
  %9282 = vmatprep.subr.mxu0 0.0
  %9283 = vmatpush1.xpose.msra.mxu0 0.0
  %9284 = vmatprep.subr.mxu0 0.0
  %9285 = vmatpush1.xpose.msra.mxu0 0.0
  %9286 = vmatprep.subr.mxu0 0.0
  %9287 = vmatpush1.xpose.msra.mxu0 0.0
  %9288 = vmatprep.subr.mxu0 0.0
  %9289 = vmatpush1.xpose.msra.mxu0 0.0
  %9290 = vmatprep.subr.mxu0 0.0
  %9291 = vmatpush1.xpose.msra.mxu0 0.0
  %9292 = vmatprep.subr.mxu0 0.0
  %9293 = vmatpush1.xpose.msra.mxu0 0.0
  %9294 = vmatprep.subr.mxu0 0.0
  %9295 = vmatpush1.xpose.msra.mxu0 0.0
  %9296 = vmatprep.subr.mxu0 0.0
  %9297 = vmatpush1.xpose.msra.mxu0 0.0
  %9298 = vmatprep.subr.mxu0 0.0
  %9299 = vmatpush1.xpose.msra.mxu0 0.0
  %9300 = vmatprep.subr.mxu0 0.0
  %9301 = vmatpush1.xpose.msra.mxu0 0.0
  %9302 = vmatprep.subr.mxu0 0.0
  %9303 = vmatpush1.xpose.msra.mxu0 0.0
  %9304 = vmatprep.subr.mxu0 0.0
  %9305 = vmatpush1.xpose.msra.mxu0 0.0
  %9306 = vmatprep.subr.mxu0 0.0
  %9307 = vmatpush1.xpose.msra.mxu0 0.0
  %9308 = vmatprep.subr.mxu0 0.0
  %9309 = vmatpush1.xpose.msra.mxu0 0.0
  %9310 = vmatprep.subr.mxu0 0.0
  %9311 = vmatpush1.xpose.msra.mxu0 0.0
  %9312 = vmatprep.subr.mxu0 0.0
  %9313 = vmatpush1.xpose.msra.mxu0 0.0
  %9314 = vmatprep.subr.mxu0 0.0
  %9315 = vmatpush1.xpose.msra.mxu0 0.0
  %9316 = vmatprep.subr.mxu0 0.0
  %9317 = vmatpush1.xpose.msra.mxu0 0.0
  %9318 = vmatprep.subr.mxu0 0.0
  %9319 = vmatpush1.xpose.msra.mxu0 0.0
  %9320 = vmatprep.subr.mxu0 0.0
  %9321 = vmatpush1.xpose.msra.mxu0 0.0
  %9322 = vmatprep.mubr.f32.mxu0 0.0
  %9323 = vmatmul.mubr.f32.gmra.mrb[0].mxu0 %v9254
  %v9324 = vpop.f32.mrb[0].mxu0
  %v9325 = vadd.f32 %v9015, %v9324
  %v9326 = vpop.f32.mrb[0].mxu0
  %9327 = vdwg.mxu0
  %9328 = vrot.lane.b32.xlu0 %v244, 104
  %v9329 = vpop.permute.xlu0 %9328
  %9330 = vrot.lane.b32.xlu0 %v347, 104
  %v9331 = vpop.permute.xlu0 %9330
  %v9332 = vsel %vm555, %v9329, 0
  %v9334 = vsel %vm555, %v9331, 0
  %9336 = vmatprep.subr.mxu0 0.0
  %9337 = vmatpush1.xpose.msra.mxu0 %v9334
  %9338 = vmatprep.subr.mxu0 0.0
  %9339 = vmatpush1.xpose.msra.mxu0 0.0
  %9340 = vmatprep.subr.mxu0 0.0
  %9341 = vmatpush1.xpose.msra.mxu0 0.0
  %9342 = vmatprep.subr.mxu0 0.0
  %9343 = vmatpush1.xpose.msra.mxu0 0.0
  %9344 = vmatprep.subr.mxu0 0.0
  %9345 = vmatpush1.xpose.msra.mxu0 0.0
  %9346 = vmatprep.subr.mxu0 0.0
  %9347 = vmatpush1.xpose.msra.mxu0 0.0
  %9348 = vmatprep.subr.mxu0 0.0
  %9349 = vmatpush1.xpose.msra.mxu0 0.0
  %9350 = vmatprep.subr.mxu0 0.0
  %9351 = vmatpush1.xpose.msra.mxu0 0.0
  %9352 = vmatprep.subr.mxu0 0.0
  %9353 = vmatpush1.xpose.msra.mxu0 0.0
  %9354 = vmatprep.subr.mxu0 0.0
  %9355 = vmatpush1.xpose.msra.mxu0 0.0
  %9356 = vmatprep.subr.mxu0 0.0
  %9357 = vmatpush1.xpose.msra.mxu0 0.0
  %9358 = vmatprep.subr.mxu0 0.0
  %9359 = vmatpush1.xpose.msra.mxu0 0.0
  %9360 = vmatprep.subr.mxu0 0.0
  %9361 = vmatpush1.xpose.msra.mxu0 0.0
  %9362 = vmatprep.subr.mxu0 0.0
  %9363 = vmatpush1.xpose.msra.mxu0 0.0
  %9364 = vmatprep.subr.mxu0 0.0
  %9365 = vmatpush1.xpose.msra.mxu0 0.0
  %9366 = vmatprep.subr.mxu0 0.0
  %9367 = vmatpush1.xpose.msra.mxu0 0.0
  %9368 = vmatprep.subr.mxu0 0.0
  %9369 = vmatpush1.xpose.msra.mxu0 0.0
  %9370 = vmatprep.subr.mxu0 0.0
  %9371 = vmatpush1.xpose.msra.mxu0 0.0
  %9372 = vmatprep.subr.mxu0 0.0
  %9373 = vmatpush1.xpose.msra.mxu0 0.0
  %9374 = vmatprep.subr.mxu0 0.0
  %9375 = vmatpush1.xpose.msra.mxu0 0.0
  %9376 = vmatprep.subr.mxu0 0.0
  %9377 = vmatpush1.xpose.msra.mxu0 0.0
  %9378 = vmatprep.subr.mxu0 0.0
  %9379 = vmatpush1.xpose.msra.mxu0 0.0
  %9380 = vmatprep.subr.mxu0 0.0
  %9381 = vmatpush1.xpose.msra.mxu0 0.0
  %9382 = vmatprep.subr.mxu0 0.0
  %9383 = vmatpush1.xpose.msra.mxu0 0.0
  %9384 = vmatprep.subr.mxu0 0.0
  %9385 = vmatpush1.xpose.msra.mxu0 0.0
  %9386 = vmatprep.subr.mxu0 0.0
  %9387 = vmatpush1.xpose.msra.mxu0 0.0
  %9388 = vmatprep.subr.mxu0 0.0
  %9389 = vmatpush1.xpose.msra.mxu0 0.0
  %9390 = vmatprep.subr.mxu0 0.0
  %9391 = vmatpush1.xpose.msra.mxu0 0.0
  %9392 = vmatprep.subr.mxu0 0.0
  %9393 = vmatpush1.xpose.msra.mxu0 0.0
  %9394 = vmatprep.subr.mxu0 0.0
  %9395 = vmatpush1.xpose.msra.mxu0 0.0
  %9396 = vmatprep.subr.mxu0 0.0
  %9397 = vmatpush1.xpose.msra.mxu0 0.0
  %9398 = vmatprep.subr.mxu0 0.0
  %9399 = vmatpush1.xpose.msra.mxu0 0.0
  %9400 = vmatprep.mubr.f32.mxu0 0.0
  %9401 = vmatmul.mubr.f32.gmra.mrb[0].mxu0 %v9332
  %v9402 = vpop.f32.mrb[0].mxu0
  %v9403 = vadd.f32 %v9015, %v9402
  %v9404 = vpop.f32.mrb[0].mxu0
  %9405 = vdwg.mxu0
  %9406 = vrot.lane.b32.xlu0 %v245, 104
  %v9407 = vpop.permute.xlu0 %9406
  %9408 = vrot.lane.b32.xlu0 %v352, 104
  %v9409 = vpop.permute.xlu0 %9408
  %v9410 = vsel %vm555, %v9407, 0
  %v9412 = vsel %vm555, %v9409, 0
  %9414 = vmatprep.subr.mxu0 0.0
  %9415 = vmatpush1.xpose.msra.mxu0 %v9412
  %9416 = vmatprep.subr.mxu0 0.0
  %9417 = vmatpush1.xpose.msra.mxu0 0.0
  %9418 = vmatprep.subr.mxu0 0.0
  %9419 = vmatpush1.xpose.msra.mxu0 0.0
  %9420 = vmatprep.subr.mxu0 0.0
  %9421 = vmatpush1.xpose.msra.mxu0 0.0
  %9422 = vmatprep.subr.mxu0 0.0
  %9423 = vmatpush1.xpose.msra.mxu0 0.0
  %9424 = vmatprep.subr.mxu0 0.0
  %9425 = vmatpush1.xpose.msra.mxu0 0.0
  %9426 = vmatprep.subr.mxu0 0.0
  %9427 = vmatpush1.xpose.msra.mxu0 0.0
  %9428 = vmatprep.subr.mxu0 0.0
  %9429 = vmatpush1.xpose.msra.mxu0 0.0
  %9430 = vmatprep.subr.mxu0 0.0
  %9431 = vmatpush1.xpose.msra.mxu0 0.0
  %9432 = vmatprep.subr.mxu0 0.0
  %9433 = vmatpush1.xpose.msra.mxu0 0.0
  %9434 = vmatprep.subr.mxu0 0.0
  %9435 = vmatpush1.xpose.msra.mxu0 0.0
  %9436 = vmatprep.subr.mxu0 0.0
  %9437 = vmatpush1.xpose.msra.mxu0 0.0
  %9438 = vmatprep.subr.mxu0 0.0
  %9439 = vmatpush1.xpose.msra.mxu0 0.0
  %9440 = vmatprep.subr.mxu0 0.0
  %9441 = vmatpush1.xpose.msra.mxu0 0.0
  %9442 = vmatprep.subr.mxu0 0.0
  %9443 = vmatpush1.xpose.msra.mxu0 0.0
  %9444 = vmatprep.subr.mxu0 0.0
  %9445 = vmatpush1.xpose.msra.mxu0 0.0
  %9446 = vmatprep.subr.mxu0 0.0
  %9447 = vmatpush1.xpose.msra.mxu0 0.0
  %9448 = vmatprep.subr.mxu0 0.0
  %9449 = vmatpush1.xpose.msra.mxu0 0.0
  %9450 = vmatprep.subr.mxu0 0.0
  %9451 = vmatpush1.xpose.msra.mxu0 0.0
  %9452 = vmatprep.subr.mxu0 0.0
  %9453 = vmatpush1.xpose.msra.mxu0 0.0
  %9454 = vmatprep.subr.mxu0 0.0
  %9455 = vmatpush1.xpose.msra.mxu0 0.0
  %9456 = vmatprep.subr.mxu0 0.0
  %9457 = vmatpush1.xpose.msra.mxu0 0.0
  %9458 = vmatprep.subr.mxu0 0.0
  %9459 = vmatpush1.xpose.msra.mxu0 0.0
  %9460 = vmatprep.subr.mxu0 0.0
  %9461 = vmatpush1.xpose.msra.mxu0 0.0
  %9462 = vmatprep.subr.mxu0 0.0
  %9463 = vmatpush1.xpose.msra.mxu0 0.0
  %9464 = vmatprep.subr.mxu0 0.0
  %9465 = vmatpush1.xpose.msra.mxu0 0.0
  %9466 = vmatprep.subr.mxu0 0.0
  %9467 = vmatpush1.xpose.msra.mxu0 0.0
  %9468 = vmatprep.subr.mxu0 0.0
  %9469 = vmatpush1.xpose.msra.mxu0 0.0
  %9470 = vmatprep.subr.mxu0 0.0
  %9471 = vmatpush1.xpose.msra.mxu0 0.0
  %9472 = vmatprep.subr.mxu0 0.0
  %9473 = vmatpush1.xpose.msra.mxu0 0.0
  %9474 = vmatprep.subr.mxu0 0.0
  %9475 = vmatpush1.xpose.msra.mxu0 0.0
  %9476 = vmatprep.subr.mxu0 0.0
  %9477 = vmatpush1.xpose.msra.mxu0 0.0
  %9478 = vmatprep.mubr.f32.mxu0 0.0
  %9479 = vmatmul.mubr.f32.gmra.mrb[0].mxu0 %v9410
  %v9480 = vpop.f32.mrb[0].mxu0
  %v9481 = vadd.f32 %v9015, %v9480
  %v9482 = vpop.f32.mrb[0].mxu0
  %9483 = vdwg.mxu0
  %9484 = vrot.lane.b32.xlu0 %v246, 104
  %v9485 = vpop.permute.xlu0 %9484
  %9486 = vrot.lane.b32.xlu0 %v357, 104
  %v9487 = vpop.permute.xlu0 %9486
  %v9488 = vsel %vm555, %v9485, 0
  %v9490 = vsel %vm555, %v9487, 0
  %9492 = vmatprep.subr.mxu0 0.0
  %9493 = vmatpush1.xpose.msra.mxu0 %v9490
  %9494 = vmatprep.subr.mxu0 0.0
  %9495 = vmatpush1.xpose.msra.mxu0 0.0
  %9496 = vmatprep.subr.mxu0 0.0
  %9497 = vmatpush1.xpose.msra.mxu0 0.0
  %9498 = vmatprep.subr.mxu0 0.0
  %9499 = vmatpush1.xpose.msra.mxu0 0.0
  %9500 = vmatprep.subr.mxu0 0.0
  %9501 = vmatpush1.xpose.msra.mxu0 0.0
  %9502 = vmatprep.subr.mxu0 0.0
  %9503 = vmatpush1.xpose.msra.mxu0 0.0
  %9504 = vmatprep.subr.mxu0 0.0
  %9505 = vmatpush1.xpose.msra.mxu0 0.0
  %9506 = vmatprep.subr.mxu0 0.0
  %9507 = vmatpush1.xpose.msra.mxu0 0.0
  %9508 = vmatprep.subr.mxu0 0.0
  %9509 = vmatpush1.xpose.msra.mxu0 0.0
  %9510 = vmatprep.subr.mxu0 0.0
  %9511 = vmatpush1.xpose.msra.mxu0 0.0
  %9512 = vmatprep.subr.mxu0 0.0
  %9513 = vmatpush1.xpose.msra.mxu0 0.0
  %9514 = vmatprep.subr.mxu0 0.0
  %9515 = vmatpush1.xpose.msra.mxu0 0.0
  %9516 = vmatprep.subr.mxu0 0.0
  %9517 = vmatpush1.xpose.msra.mxu0 0.0
  %9518 = vmatprep.subr.mxu0 0.0
  %9519 = vmatpush1.xpose.msra.mxu0 0.0
  %9520 = vmatprep.subr.mxu0 0.0
  %9521 = vmatpush1.xpose.msra.mxu0 0.0
  %9522 = vmatprep.subr.mxu0 0.0
  %9523 = vmatpush1.xpose.msra.mxu0 0.0
  %9524 = vmatprep.subr.mxu0 0.0
  %9525 = vmatpush1.xpose.msra.mxu0 0.0
  %9526 = vmatprep.subr.mxu0 0.0
  %9527 = vmatpush1.xpose.msra.mxu0 0.0
  %9528 = vmatprep.subr.mxu0 0.0
  %9529 = vmatpush1.xpose.msra.mxu0 0.0
  %9530 = vmatprep.subr.mxu0 0.0
  %9531 = vmatpush1.xpose.msra.mxu0 0.0
  %9532 = vmatprep.subr.mxu0 0.0
  %9533 = vmatpush1.xpose.msra.mxu0 0.0
  %9534 = vmatprep.subr.mxu0 0.0
  %9535 = vmatpush1.xpose.msra.mxu0 0.0
  %9536 = vmatprep.subr.mxu0 0.0
  %9537 = vmatpush1.xpose.msra.mxu0 0.0
  %9538 = vmatprep.subr.mxu0 0.0
  %9539 = vmatpush1.xpose.msra.mxu0 0.0
  %9540 = vmatprep.subr.mxu0 0.0
  %9541 = vmatpush1.xpose.msra.mxu0 0.0
  %9542 = vmatprep.subr.mxu0 0.0
  %9543 = vmatpush1.xpose.msra.mxu0 0.0
  %9544 = vmatprep.subr.mxu0 0.0
  %9545 = vmatpush1.xpose.msra.mxu0 0.0
  %9546 = vmatprep.subr.mxu0 0.0
  %9547 = vmatpush1.xpose.msra.mxu0 0.0
  %9548 = vmatprep.subr.mxu0 0.0
  %9549 = vmatpush1.xpose.msra.mxu0 0.0
  %9550 = vmatprep.subr.mxu0 0.0
  %9551 = vmatpush1.xpose.msra.mxu0 0.0
  %9552 = vmatprep.subr.mxu0 0.0
  %9553 = vmatpush1.xpose.msra.mxu0 0.0
  %9554 = vmatprep.subr.mxu0 0.0
  %9555 = vmatpush1.xpose.msra.mxu0 0.0
  %9556 = vmatprep.mubr.f32.mxu0 0.0
  %9557 = vmatmul.mubr.f32.gmra.mrb[0].mxu0 %v9488
  %v9558 = vpop.f32.mrb[0].mxu0
  %v9559 = vadd.f32 %v9015, %v9558
  %v9560 = vpop.f32.mrb[0].mxu0
  %9561 = vdwg.mxu0
  %9562 = vrot.lane.b32.xlu0 %v247, 104
  %v9563 = vpop.permute.xlu0 %9562
  %9564 = vrot.lane.b32.xlu0 %v362, 104
  %v9565 = vpop.permute.xlu0 %9564
  %v9566 = vsel %vm555, %v9563, 0
  %v9568 = vsel %vm555, %v9565, 0
  %9570 = vmatprep.subr.mxu0 0.0
  %9571 = vmatpush1.xpose.msra.mxu0 %v9568
  %9572 = vmatprep.subr.mxu0 0.0
  %9573 = vmatpush1.xpose.msra.mxu0 0.0
  %9574 = vmatprep.subr.mxu0 0.0
  %9575 = vmatpush1.xpose.msra.mxu0 0.0
  %9576 = vmatprep.subr.mxu0 0.0
  %9577 = vmatpush1.xpose.msra.mxu0 0.0
  %9578 = vmatprep.subr.mxu0 0.0
  %9579 = vmatpush1.xpose.msra.mxu0 0.0
  %9580 = vmatprep.subr.mxu0 0.0
  %9581 = vmatpush1.xpose.msra.mxu0 0.0
  %9582 = vmatprep.subr.mxu0 0.0
  %9583 = vmatpush1.xpose.msra.mxu0 0.0
  %9584 = vmatprep.subr.mxu0 0.0
  %9585 = vmatpush1.xpose.msra.mxu0 0.0
  %9586 = vmatprep.subr.mxu0 0.0
  %9587 = vmatpush1.xpose.msra.mxu0 0.0
  %9588 = vmatprep.subr.mxu0 0.0
  %9589 = vmatpush1.xpose.msra.mxu0 0.0
  %9590 = vmatprep.subr.mxu0 0.0
  %9591 = vmatpush1.xpose.msra.mxu0 0.0
  %9592 = vmatprep.subr.mxu0 0.0
  %9593 = vmatpush1.xpose.msra.mxu0 0.0
  %9594 = vmatprep.subr.mxu0 0.0
  %9595 = vmatpush1.xpose.msra.mxu0 0.0
  %9596 = vmatprep.subr.mxu0 0.0
  %9597 = vmatpush1.xpose.msra.mxu0 0.0
  %9598 = vmatprep.subr.mxu0 0.0
  %9599 = vmatpush1.xpose.msra.mxu0 0.0
  %9600 = vmatprep.subr.mxu0 0.0
  %9601 = vmatpush1.xpose.msra.mxu0 0.0
  %9602 = vmatprep.subr.mxu0 0.0
  %9603 = vmatpush1.xpose.msra.mxu0 0.0
  %9604 = vmatprep.subr.mxu0 0.0
  %9605 = vmatpush1.xpose.msra.mxu0 0.0
  %9606 = vmatprep.subr.mxu0 0.0
  %9607 = vmatpush1.xpose.msra.mxu0 0.0
  %9608 = vmatprep.subr.mxu0 0.0
  %9609 = vmatpush1.xpose.msra.mxu0 0.0
  %9610 = vmatprep.subr.mxu0 0.0
  %9611 = vmatpush1.xpose.msra.mxu0 0.0
  %9612 = vmatprep.subr.mxu0 0.0
  %9613 = vmatpush1.xpose.msra.mxu0 0.0
  %9614 = vmatprep.subr.mxu0 0.0
  %9615 = vmatpush1.xpose.msra.mxu0 0.0
  %9616 = vmatprep.subr.mxu0 0.0
  %9617 = vmatpush1.xpose.msra.mxu0 0.0
  %9618 = vmatprep.subr.mxu0 0.0
  %9619 = vmatpush1.xpose.msra.mxu0 0.0
  %9620 = vmatprep.subr.mxu0 0.0
  %9621 = vmatpush1.xpose.msra.mxu0 0.0
  %9622 = vmatprep.subr.mxu0 0.0
  %9623 = vmatpush1.xpose.msra.mxu0 0.0
  %9624 = vmatprep.subr.mxu0 0.0
  %9625 = vmatpush1.xpose.msra.mxu0 0.0
  %9626 = vmatprep.subr.mxu0 0.0
  %9627 = vmatpush1.xpose.msra.mxu0 0.0
  %9628 = vmatprep.subr.mxu0 0.0
  %9629 = vmatpush1.xpose.msra.mxu0 0.0
  %9630 = vmatprep.subr.mxu0 0.0
  %9631 = vmatpush1.xpose.msra.mxu0 0.0
  %9632 = vmatprep.subr.mxu0 0.0
  %9633 = vmatpush1.xpose.msra.mxu0 0.0
  %9634 = vmatprep.mubr.f32.mxu0 0.0
  %9635 = vmatmul.mubr.f32.gmra.mrb[0].mxu0 %v9566
  %v9636 = vpop.f32.mrb[0].mxu0
  %v9637 = vadd.f32 %v9015, %v9636
  %v9638 = vpop.f32.mrb[0].mxu0
  %9639 = vdwg.mxu0
  %9640 = vrot.lane.b32.xlu0 %v248, 104
  %v9641 = vpop.permute.xlu0 %9640
  %9642 = vrot.lane.b32.xlu0 %v367, 104
  %v9643 = vpop.permute.xlu0 %9642
  %v9644 = vsel %vm555, %v9641, 0
  %v9646 = vsel %vm555, %v9643, 0
  %9648 = vmatprep.subr.mxu0 0.0
  %9649 = vmatpush1.xpose.msra.mxu0 %v9646
  %9650 = vmatprep.subr.mxu0 0.0
  %9651 = vmatpush1.xpose.msra.mxu0 0.0
  %9652 = vmatprep.subr.mxu0 0.0
  %9653 = vmatpush1.xpose.msra.mxu0 0.0
  %9654 = vmatprep.subr.mxu0 0.0
  %9655 = vmatpush1.xpose.msra.mxu0 0.0
  %9656 = vmatprep.subr.mxu0 0.0
  %9657 = vmatpush1.xpose.msra.mxu0 0.0
  %9658 = vmatprep.subr.mxu0 0.0
  %9659 = vmatpush1.xpose.msra.mxu0 0.0
  %9660 = vmatprep.subr.mxu0 0.0
  %9661 = vmatpush1.xpose.msra.mxu0 0.0
  %9662 = vmatprep.subr.mxu0 0.0
  %9663 = vmatpush1.xpose.msra.mxu0 0.0
  %9664 = vmatprep.subr.mxu0 0.0
  %9665 = vmatpush1.xpose.msra.mxu0 0.0
  %9666 = vmatprep.subr.mxu0 0.0
  %9667 = vmatpush1.xpose.msra.mxu0 0.0
  %9668 = vmatprep.subr.mxu0 0.0
  %9669 = vmatpush1.xpose.msra.mxu0 0.0
  %9670 = vmatprep.subr.mxu0 0.0
  %9671 = vmatpush1.xpose.msra.mxu0 0.0
  %9672 = vmatprep.subr.mxu0 0.0
  %9673 = vmatpush1.xpose.msra.mxu0 0.0
  %9674 = vmatprep.subr.mxu0 0.0
  %9675 = vmatpush1.xpose.msra.mxu0 0.0
  %9676 = vmatprep.subr.mxu0 0.0
  %9677 = vmatpush1.xpose.msra.mxu0 0.0
  %9678 = vmatprep.subr.mxu0 0.0
  %9679 = vmatpush1.xpose.msra.mxu0 0.0
  %9680 = vmatprep.subr.mxu0 0.0
  %9681 = vmatpush1.xpose.msra.mxu0 0.0
  %9682 = vmatprep.subr.mxu0 0.0
  %9683 = vmatpush1.xpose.msra.mxu0 0.0
  %9684 = vmatprep.subr.mxu0 0.0
  %9685 = vmatpush1.xpose.msra.mxu0 0.0
  %9686 = vmatprep.subr.mxu0 0.0
  %9687 = vmatpush1.xpose.msra.mxu0 0.0
  %9688 = vmatprep.subr.mxu0 0.0
  %9689 = vmatpush1.xpose.msra.mxu0 0.0
  %9690 = vmatprep.subr.mxu0 0.0
  %9691 = vmatpush1.xpose.msra.mxu0 0.0
  %9692 = vmatprep.subr.mxu0 0.0
  %9693 = vmatpush1.xpose.msra.mxu0 0.0
  %9694 = vmatprep.subr.mxu0 0.0
  %9695 = vmatpush1.xpose.msra.mxu0 0.0
  %9696 = vmatprep.subr.mxu0 0.0
  %9697 = vmatpush1.xpose.msra.mxu0 0.0
  %9698 = vmatprep.subr.mxu0 0.0
  %9699 = vmatpush1.xpose.msra.mxu0 0.0
  %9700 = vmatprep.subr.mxu0 0.0
  %9701 = vmatpush1.xpose.msra.mxu0 0.0
  %9702 = vmatprep.subr.mxu0 0.0
  %9703 = vmatpush1.xpose.msra.mxu0 0.0
  %9704 = vmatprep.subr.mxu0 0.0
  %9705 = vmatpush1.xpose.msra.mxu0 0.0
  %9706 = vmatprep.subr.mxu0 0.0
  %9707 = vmatpush1.xpose.msra.mxu0 0.0
  %9708 = vmatprep.subr.mxu0 0.0
  %9709 = vmatpush1.xpose.msra.mxu0 0.0
  %9710 = vmatprep.subr.mxu0 0.0
  %9711 = vmatpush1.xpose.msra.mxu0 0.0
  %9712 = vmatprep.mubr.f32.mxu0 0.0
  %9713 = vmatmul.mubr.f32.gmra.mrb[0].mxu0 %v9644
  %v9714 = vpop.f32.mrb[0].mxu0
  %v9715 = vadd.f32 %v9015, %v9714
  %v9716 = vpop.f32.mrb[0].mxu0
  %9717 = vdwg.mxu0
  %9718 = vrot.lane.b32.xlu0 %v249, 104
  %v9719 = vpop.permute.xlu0 %9718
  %9720 = vrot.lane.b32.xlu0 %v372, 104
  %v9721 = vpop.permute.xlu0 %9720
  %v9722 = vsel %vm555, %v9719, 0
  %v9724 = vsel %vm555, %v9721, 0
  %9726 = vmatprep.subr.mxu0 0.0
  %9727 = vmatpush1.xpose.msra.mxu0 %v9724
  %9728 = vmatprep.subr.mxu0 0.0
  %9729 = vmatpush1.xpose.msra.mxu0 0.0
  %9730 = vmatprep.subr.mxu0 0.0
  %9731 = vmatpush1.xpose.msra.mxu0 0.0
  %9732 = vmatprep.subr.mxu0 0.0
  %9733 = vmatpush1.xpose.msra.mxu0 0.0
  %9734 = vmatprep.subr.mxu0 0.0
  %9735 = vmatpush1.xpose.msra.mxu0 0.0
  %9736 = vmatprep.subr.mxu0 0.0
  %9737 = vmatpush1.xpose.msra.mxu0 0.0
  %9738 = vmatprep.subr.mxu0 0.0
  %9739 = vmatpush1.xpose.msra.mxu0 0.0
  %9740 = vmatprep.subr.mxu0 0.0
  %9741 = vmatpush1.xpose.msra.mxu0 0.0
  %9742 = vmatprep.subr.mxu0 0.0
  %9743 = vmatpush1.xpose.msra.mxu0 0.0
  %9744 = vmatprep.subr.mxu0 0.0
  %9745 = vmatpush1.xpose.msra.mxu0 0.0
  %9746 = vmatprep.subr.mxu0 0.0
  %9747 = vmatpush1.xpose.msra.mxu0 0.0
  %9748 = vmatprep.subr.mxu0 0.0
  %9749 = vmatpush1.xpose.msra.mxu0 0.0
  %9750 = vmatprep.subr.mxu0 0.0
  %9751 = vmatpush1.xpose.msra.mxu0 0.0
  %9752 = vmatprep.subr.mxu0 0.0
  %9753 = vmatpush1.xpose.msra.mxu0 0.0
  %9754 = vmatprep.subr.mxu0 0.0
  %9755 = vmatpush1.xpose.msra.mxu0 0.0
  %9756 = vmatprep.subr.mxu0 0.0
  %9757 = vmatpush1.xpose.msra.mxu0 0.0
  %9758 = vmatprep.subr.mxu0 0.0
  %9759 = vmatpush1.xpose.msra.mxu0 0.0
  %9760 = vmatprep.subr.mxu0 0.0
  %9761 = vmatpush1.xpose.msra.mxu0 0.0
  %9762 = vmatprep.subr.mxu0 0.0
  %9763 = vmatpush1.xpose.msra.mxu0 0.0
  %9764 = vmatprep.subr.mxu0 0.0
  %9765 = vmatpush1.xpose.msra.mxu0 0.0
  %9766 = vmatprep.subr.mxu0 0.0
  %9767 = vmatpush1.xpose.msra.mxu0 0.0
  %9768 = vmatprep.subr.mxu0 0.0
  %9769 = vmatpush1.xpose.msra.mxu0 0.0
  %9770 = vmatprep.subr.mxu0 0.0
  %9771 = vmatpush1.xpose.msra.mxu0 0.0
  %9772 = vmatprep.subr.mxu0 0.0
  %9773 = vmatpush1.xpose.msra.mxu0 0.0
  %9774 = vmatprep.subr.mxu0 0.0
  %9775 = vmatpush1.xpose.msra.mxu0 0.0
  %9776 = vmatprep.subr.mxu0 0.0
  %9777 = vmatpush1.xpose.msra.mxu0 0.0
  %9778 = vmatprep.subr.mxu0 0.0
  %9779 = vmatpush1.xpose.msra.mxu0 0.0
  %9780 = vmatprep.subr.mxu0 0.0
  %9781 = vmatpush1.xpose.msra.mxu0 0.0
  %9782 = vmatprep.subr.mxu0 0.0
  %9783 = vmatpush1.xpose.msra.mxu0 0.0
  %9784 = vmatprep.subr.mxu0 0.0
  %9785 = vmatpush1.xpose.msra.mxu0 0.0
  %9786 = vmatprep.subr.mxu0 0.0
  %9787 = vmatpush1.xpose.msra.mxu0 0.0
  %9788 = vmatprep.subr.mxu0 0.0
  %9789 = vmatpush1.xpose.msra.mxu0 0.0
  %9790 = vmatprep.mubr.f32.mxu0 0.0
  %9791 = vmatmul.mubr.f32.gmra.mrb[0].mxu0 %v9722
  %v9792 = vpop.f32.mrb[0].mxu0
  %v9793 = vadd.f32 %v9015, %v9792
  %v9794 = vpop.f32.mrb[0].mxu0
  %9795 = vdwg.mxu0
  %9796 = vrot.lane.b32.xlu0 %v250, 104
  %v9797 = vpop.permute.xlu0 %9796
  %9798 = vrot.lane.b32.xlu0 %v377, 104
  %v9799 = vpop.permute.xlu0 %9798
  %v9800 = vsel %vm555, %v9797, 0
  %v9802 = vsel %vm555, %v9799, 0
  %9804 = vmatprep.subr.mxu0 0.0
  %9805 = vmatpush1.xpose.msra.mxu0 %v9802
  %9806 = vmatprep.subr.mxu0 0.0
  %9807 = vmatpush1.xpose.msra.mxu0 0.0
  %9808 = vmatprep.subr.mxu0 0.0
  %9809 = vmatpush1.xpose.msra.mxu0 0.0
  %9810 = vmatprep.subr.mxu0 0.0
  %9811 = vmatpush1.xpose.msra.mxu0 0.0
  %9812 = vmatprep.subr.mxu0 0.0
  %9813 = vmatpush1.xpose.msra.mxu0 0.0
  %9814 = vmatprep.subr.mxu0 0.0
  %9815 = vmatpush1.xpose.msra.mxu0 0.0
  %9816 = vmatprep.subr.mxu0 0.0
  %9817 = vmatpush1.xpose.msra.mxu0 0.0
  %9818 = vmatprep.subr.mxu0 0.0
  %9819 = vmatpush1.xpose.msra.mxu0 0.0
  %9820 = vmatprep.subr.mxu0 0.0
  %9821 = vmatpush1.xpose.msra.mxu0 0.0
  %9822 = vmatprep.subr.mxu0 0.0
  %9823 = vmatpush1.xpose.msra.mxu0 0.0
  %9824 = vmatprep.subr.mxu0 0.0
  %9825 = vmatpush1.xpose.msra.mxu0 0.0
  %9826 = vmatprep.subr.mxu0 0.0
  %9827 = vmatpush1.xpose.msra.mxu0 0.0
  %9828 = vmatprep.subr.mxu0 0.0
  %9829 = vmatpush1.xpose.msra.mxu0 0.0
  %9830 = vmatprep.subr.mxu0 0.0
  %9831 = vmatpush1.xpose.msra.mxu0 0.0
  %9832 = vmatprep.subr.mxu0 0.0
  %9833 = vmatpush1.xpose.msra.mxu0 0.0
  %9834 = vmatprep.subr.mxu0 0.0
  %9835 = vmatpush1.xpose.msra.mxu0 0.0
  %9836 = vmatprep.subr.mxu0 0.0
  %9837 = vmatpush1.xpose.msra.mxu0 0.0
  %9838 = vmatprep.subr.mxu0 0.0
  %9839 = vmatpush1.xpose.msra.mxu0 0.0
  %9840 = vmatprep.subr.mxu0 0.0
  %9841 = vmatpush1.xpose.msra.mxu0 0.0
  %9842 = vmatprep.subr.mxu0 0.0
  %9843 = vmatpush1.xpose.msra.mxu0 0.0
  %9844 = vmatprep.subr.mxu0 0.0
  %9845 = vmatpush1.xpose.msra.mxu0 0.0
  %9846 = vmatprep.subr.mxu0 0.0
  %9847 = vmatpush1.xpose.msra.mxu0 0.0
  %9848 = vmatprep.subr.mxu0 0.0
  %9849 = vmatpush1.xpose.msra.mxu0 0.0
  %9850 = vmatprep.subr.mxu0 0.0
  %9851 = vmatpush1.xpose.msra.mxu0 0.0
  %9852 = vmatprep.subr.mxu0 0.0
  %9853 = vmatpush1.xpose.msra.mxu0 0.0
  %9854 = vmatprep.subr.mxu0 0.0
  %9855 = vmatpush1.xpose.msra.mxu0 0.0
  %9856 = vmatprep.subr.mxu0 0.0
  %9857 = vmatpush1.xpose.msra.mxu0 0.0
  %9858 = vmatprep.subr.mxu0 0.0
  %9859 = vmatpush1.xpose.msra.mxu0 0.0
  %9860 = vmatprep.subr.mxu0 0.0
  %9861 = vmatpush1.xpose.msra.mxu0 0.0
  %9862 = vmatprep.subr.mxu0 0.0
  %9863 = vmatpush1.xpose.msra.mxu0 0.0
  %9864 = vmatprep.subr.mxu0 0.0
  %9865 = vmatpush1.xpose.msra.mxu0 0.0
  %9866 = vmatprep.subr.mxu0 0.0
  %9867 = vmatpush1.xpose.msra.mxu0 0.0
  %9868 = vmatprep.mubr.f32.mxu0 0.0
  %9869 = vmatmul.mubr.f32.gmra.mrb[0].mxu0 %v9800
  %v9870 = vpop.f32.mrb[0].mxu0
  %v9871 = vadd.f32 %v9015, %v9870
  %v9872 = vpop.f32.mrb[0].mxu0
  %9873 = vdwg.mxu0
  %9874 = vrot.lane.b32.xlu0 %v251, 104
  %v9875 = vpop.permute.xlu0 %9874
  %9876 = vrot.lane.b32.xlu0 %v382, 104
  %v9877 = vpop.permute.xlu0 %9876
  %v9878 = vsel %vm555, %v9875, 0
  %v9880 = vsel %vm555, %v9877, 0
  %9882 = vmatprep.subr.mxu0 0.0
  %9883 = vmatpush1.xpose.msra.mxu0 %v9880
  %9884 = vmatprep.subr.mxu0 0.0
  %9885 = vmatpush1.xpose.msra.mxu0 0.0
  %9886 = vmatprep.subr.mxu0 0.0
  %9887 = vmatpush1.xpose.msra.mxu0 0.0
  %9888 = vmatprep.subr.mxu0 0.0
  %9889 = vmatpush1.xpose.msra.mxu0 0.0
  %9890 = vmatprep.subr.mxu0 0.0
  %9891 = vmatpush1.xpose.msra.mxu0 0.0
  %9892 = vmatprep.subr.mxu0 0.0
  %9893 = vmatpush1.xpose.msra.mxu0 0.0
  %9894 = vmatprep.subr.mxu0 0.0
  %9895 = vmatpush1.xpose.msra.mxu0 0.0
  %9896 = vmatprep.subr.mxu0 0.0
  %9897 = vmatpush1.xpose.msra.mxu0 0.0
  %9898 = vmatprep.subr.mxu0 0.0
  %9899 = vmatpush1.xpose.msra.mxu0 0.0
  %9900 = vmatprep.subr.mxu0 0.0
  %9901 = vmatpush1.xpose.msra.mxu0 0.0
  %9902 = vmatprep.subr.mxu0 0.0
  %9903 = vmatpush1.xpose.msra.mxu0 0.0
  %9904 = vmatprep.subr.mxu0 0.0
  %9905 = vmatpush1.xpose.msra.mxu0 0.0
  %9906 = vmatprep.subr.mxu0 0.0
  %9907 = vmatpush1.xpose.msra.mxu0 0.0
  %9908 = vmatprep.subr.mxu0 0.0
  %9909 = vmatpush1.xpose.msra.mxu0 0.0
  %9910 = vmatprep.subr.mxu0 0.0
  %9911 = vmatpush1.xpose.msra.mxu0 0.0
  %9912 = vmatprep.subr.mxu0 0.0
  %9913 = vmatpush1.xpose.msra.mxu0 0.0
  %9914 = vmatprep.subr.mxu0 0.0
  %9915 = vmatpush1.xpose.msra.mxu0 0.0
  %9916 = vmatprep.subr.mxu0 0.0
  %9917 = vmatpush1.xpose.msra.mxu0 0.0
  %9918 = vmatprep.subr.mxu0 0.0
  %9919 = vmatpush1.xpose.msra.mxu0 0.0
  %9920 = vmatprep.subr.mxu0 0.0
  %9921 = vmatpush1.xpose.msra.mxu0 0.0
  %9922 = vmatprep.subr.mxu0 0.0
  %9923 = vmatpush1.xpose.msra.mxu0 0.0
  %9924 = vmatprep.subr.mxu0 0.0
  %9925 = vmatpush1.xpose.msra.mxu0 0.0
  %9926 = vmatprep.subr.mxu0 0.0
  %9927 = vmatpush1.xpose.msra.mxu0 0.0
  %9928 = vmatprep.subr.mxu0 0.0
  %9929 = vmatpush1.xpose.msra.mxu0 0.0
  %9930 = vmatprep.subr.mxu0 0.0
  %9931 = vmatpush1.xpose.msra.mxu0 0.0
  %9932 = vmatprep.subr.mxu0 0.0
  %9933 = vmatpush1.xpose.msra.mxu0 0.0
  %9934 = vmatprep.subr.mxu0 0.0
  %9935 = vmatpush1.xpose.msra.mxu0 0.0
  %9936 = vmatprep.subr.mxu0 0.0
  %9937 = vmatpush1.xpose.msra.mxu0 0.0
  %9938 = vmatprep.subr.mxu0 0.0
  %9939 = vmatpush1.xpose.msra.mxu0 0.0
  %9940 = vmatprep.subr.mxu0 0.0
  %9941 = vmatpush1.xpose.msra.mxu0 0.0
  %9942 = vmatprep.subr.mxu0 0.0
  %9943 = vmatpush1.xpose.msra.mxu0 0.0
  %9944 = vmatprep.subr.mxu0 0.0
  %9945 = vmatpush1.xpose.msra.mxu0 0.0
  %9946 = vmatprep.mubr.f32.mxu0 0.0
  %9947 = vmatmul.mubr.f32.gmra.mrb[0].mxu0 %v9878
  %v9948 = vpop.f32.mrb[0].mxu0
  %v9949 = vadd.f32 %v9015, %v9948
  %v9950 = vpop.f32.mrb[0].mxu0
  %9951 = vdwg.mxu0
  %9952 = vrot.lane.b32.xlu0 %v252, 104
  %v9953 = vpop.permute.xlu0 %9952
  %9954 = vrot.lane.b32.xlu0 %v387, 104
  %v9955 = vpop.permute.xlu0 %9954
  %v9956 = vsel %vm555, %v9953, 0
  %v9958 = vsel %vm555, %v9955, 0
  %9960 = vmatprep.subr.mxu0 0.0
  %9961 = vmatpush1.xpose.msra.mxu0 %v9958
  %9962 = vmatprep.subr.mxu0 0.0
  %9963 = vmatpush1.xpose.msra.mxu0 0.0
  %9964 = vmatprep.subr.mxu0 0.0
  %9965 = vmatpush1.xpose.msra.mxu0 0.0
  %9966 = vmatprep.subr.mxu0 0.0
  %9967 = vmatpush1.xpose.msra.mxu0 0.0
  %9968 = vmatprep.subr.mxu0 0.0
  %9969 = vmatpush1.xpose.msra.mxu0 0.0
  %9970 = vmatprep.subr.mxu0 0.0
  %9971 = vmatpush1.xpose.msra.mxu0 0.0
  %9972 = vmatprep.subr.mxu0 0.0
  %9973 = vmatpush1.xpose.msra.mxu0 0.0
  %9974 = vmatprep.subr.mxu0 0.0
  %9975 = vmatpush1.xpose.msra.mxu0 0.0
  %9976 = vmatprep.subr.mxu0 0.0
  %9977 = vmatpush1.xpose.msra.mxu0 0.0
  %9978 = vmatprep.subr.mxu0 0.0
  %9979 = vmatpush1.xpose.msra.mxu0 0.0
  %9980 = vmatprep.subr.mxu0 0.0
  %9981 = vmatpush1.xpose.msra.mxu0 0.0
  %9982 = vmatprep.subr.mxu0 0.0
  %9983 = vmatpush1.xpose.msra.mxu0 0.0
  %9984 = vmatprep.subr.mxu0 0.0
  %9985 = vmatpush1.xpose.msra.mxu0 0.0
  %9986 = vmatprep.subr.mxu0 0.0
  %9987 = vmatpush1.xpose.msra.mxu0 0.0
  %9988 = vmatprep.subr.mxu0 0.0
  %9989 = vmatpush1.xpose.msra.mxu0 0.0
  %9990 = vmatprep.subr.mxu0 0.0
  %9991 = vmatpush1.xpose.msra.mxu0 0.0
  %9992 = vmatprep.subr.mxu0 0.0
  %9993 = vmatpush1.xpose.msra.mxu0 0.0
  %9994 = vmatprep.subr.mxu0 0.0
  %9995 = vmatpush1.xpose.msra.mxu0 0.0
  %9996 = vmatprep.subr.mxu0 0.0
  %9997 = vmatpush1.xpose.msra.mxu0 0.0
  %9998 = vmatprep.subr.mxu0 0.0
  %9999 = vmatpush1.xpose.msra.mxu0 0.0
  %10000 = vmatprep.subr.mxu0 0.0
  %10001 = vmatpush1.xpose.msra.mxu0 0.0
  %10002 = vmatprep.subr.mxu0 0.0
  %10003 = vmatpush1.xpose.msra.mxu0 0.0
  %10004 = vmatprep.subr.mxu0 0.0
  %10005 = vmatpush1.xpose.msra.mxu0 0.0
  %10006 = vmatprep.subr.mxu0 0.0
  %10007 = vmatpush1.xpose.msra.mxu0 0.0
  %10008 = vmatprep.subr.mxu0 0.0
  %10009 = vmatpush1.xpose.msra.mxu0 0.0
  %10010 = vmatprep.subr.mxu0 0.0
  %10011 = vmatpush1.xpose.msra.mxu0 0.0
  %10012 = vmatprep.subr.mxu0 0.0
  %10013 = vmatpush1.xpose.msra.mxu0 0.0
  %10014 = vmatprep.subr.mxu0 0.0
  %10015 = vmatpush1.xpose.msra.mxu0 0.0
  %10016 = vmatprep.subr.mxu0 0.0
  %10017 = vmatpush1.xpose.msra.mxu0 0.0
  %10018 = vmatprep.subr.mxu0 0.0
  %10019 = vmatpush1.xpose.msra.mxu0 0.0
  %10020 = vmatprep.subr.mxu0 0.0
  %10021 = vmatpush1.xpose.msra.mxu0 0.0
  %10022 = vmatprep.subr.mxu0 0.0
  %10023 = vmatpush1.xpose.msra.mxu0 0.0
  %10024 = vmatprep.mubr.f32.mxu0 0.0
  %10025 = vmatmul.mubr.f32.gmra.mrb[0].mxu0 %v9956
  %v10026 = vpop.f32.mrb[0].mxu0
  %v10027 = vadd.f32 %v9015, %v10026
  %v10028 = vpop.f32.mrb[0].mxu0
  %10029 = vdwg.mxu0
  %10030 = vrot.lane.b32.xlu0 %v253, 104
  %v10031 = vpop.permute.xlu0 %10030
  %10032 = vrot.lane.b32.xlu0 %v392, 104
  %v10033 = vpop.permute.xlu0 %10032
  %v10034 = vsel %vm555, %v10031, 0
  %v10036 = vsel %vm555, %v10033, 0
  %10038 = vmatprep.subr.mxu0 0.0
  %10039 = vmatpush1.xpose.msra.mxu0 %v10036
  %10040 = vmatprep.subr.mxu0 0.0
  %10041 = vmatpush1.xpose.msra.mxu0 0.0
  %10042 = vmatprep.subr.mxu0 0.0
  %10043 = vmatpush1.xpose.msra.mxu0 0.0
  %10044 = vmatprep.subr.mxu0 0.0
  %10045 = vmatpush1.xpose.msra.mxu0 0.0
  %10046 = vmatprep.subr.mxu0 0.0
  %10047 = vmatpush1.xpose.msra.mxu0 0.0
  %10048 = vmatprep.subr.mxu0 0.0
  %10049 = vmatpush1.xpose.msra.mxu0 0.0
  %10050 = vmatprep.subr.mxu0 0.0
  %10051 = vmatpush1.xpose.msra.mxu0 0.0
  %10052 = vmatprep.subr.mxu0 0.0
  %10053 = vmatpush1.xpose.msra.mxu0 0.0
  %10054 = vmatprep.subr.mxu0 0.0
  %10055 = vmatpush1.xpose.msra.mxu0 0.0
  %10056 = vmatprep.subr.mxu0 0.0
  %10057 = vmatpush1.xpose.msra.mxu0 0.0
  %10058 = vmatprep.subr.mxu0 0.0
  %10059 = vmatpush1.xpose.msra.mxu0 0.0
  %10060 = vmatprep.subr.mxu0 0.0
  %10061 = vmatpush1.xpose.msra.mxu0 0.0
  %10062 = vmatprep.subr.mxu0 0.0
  %10063 = vmatpush1.xpose.msra.mxu0 0.0
  %10064 = vmatprep.subr.mxu0 0.0
  %10065 = vmatpush1.xpose.msra.mxu0 0.0
  %10066 = vmatprep.subr.mxu0 0.0
  %10067 = vmatpush1.xpose.msra.mxu0 0.0
  %10068 = vmatprep.subr.mxu0 0.0
  %10069 = vmatpush1.xpose.msra.mxu0 0.0
  %10070 = vmatprep.subr.mxu0 0.0
  %10071 = vmatpush1.xpose.msra.mxu0 0.0
  %10072 = vmatprep.subr.mxu0 0.0
  %10073 = vmatpush1.xpose.msra.mxu0 0.0
  %10074 = vmatprep.subr.mxu0 0.0
  %10075 = vmatpush1.xpose.msra.mxu0 0.0
  %10076 = vmatprep.subr.mxu0 0.0
  %10077 = vmatpush1.xpose.msra.mxu0 0.0
  %10078 = vmatprep.subr.mxu0 0.0
  %10079 = vmatpush1.xpose.msra.mxu0 0.0
  %10080 = vmatprep.subr.mxu0 0.0
  %10081 = vmatpush1.xpose.msra.mxu0 0.0
  %10082 = vmatprep.subr.mxu0 0.0
  %10083 = vmatpush1.xpose.msra.mxu0 0.0
  %10084 = vmatprep.subr.mxu0 0.0
  %10085 = vmatpush1.xpose.msra.mxu0 0.0
  %10086 = vmatprep.subr.mxu0 0.0
  %10087 = vmatpush1.xpose.msra.mxu0 0.0
  %10088 = vmatprep.subr.mxu0 0.0
  %10089 = vmatpush1.xpose.msra.mxu0 0.0
  %10090 = vmatprep.subr.mxu0 0.0
  %10091 = vmatpush1.xpose.msra.mxu0 0.0
  %10092 = vmatprep.subr.mxu0 0.0
  %10093 = vmatpush1.xpose.msra.mxu0 0.0
  %10094 = vmatprep.subr.mxu0 0.0
  %10095 = vmatpush1.xpose.msra.mxu0 0.0
  %10096 = vmatprep.subr.mxu0 0.0
  %10097 = vmatpush1.xpose.msra.mxu0 0.0
  %10098 = vmatprep.subr.mxu0 0.0
  %10099 = vmatpush1.xpose.msra.mxu0 0.0
  %10100 = vmatprep.subr.mxu0 0.0
  %10101 = vmatpush1.xpose.msra.mxu0 0.0
  %10102 = vmatprep.mubr.f32.mxu0 0.0
  %10103 = vmatmul.mubr.f32.gmra.mrb[0].mxu0 %v10034
  %v10104 = vpop.f32.mrb[0].mxu0
  %v10105 = vadd.f32 %v9015, %v10104
  %v10106 = vpop.f32.mrb[0].mxu0
  %10107 = vdwg.mxu0
  %10108 = vrot.lane.b32.xlu0 %v254, 104
  %v10109 = vpop.permute.xlu0 %10108
  %10110 = vrot.lane.b32.xlu0 %v397, 104
  %v10111 = vpop.permute.xlu0 %10110
  %v10112 = vsel %vm555, %v10109, 0
  %v10114 = vsel %vm555, %v10111, 0
  %10116 = vmatprep.subr.mxu0 0.0
  %10117 = vmatpush1.xpose.msra.mxu0 %v10114
  %10118 = vmatprep.subr.mxu0 0.0
  %10119 = vmatpush1.xpose.msra.mxu0 0.0
  %10120 = vmatprep.subr.mxu0 0.0
  %10121 = vmatpush1.xpose.msra.mxu0 0.0
  %10122 = vmatprep.subr.mxu0 0.0
  %10123 = vmatpush1.xpose.msra.mxu0 0.0
  %10124 = vmatprep.subr.mxu0 0.0
  %10125 = vmatpush1.xpose.msra.mxu0 0.0
  %10126 = vmatprep.subr.mxu0 0.0
  %10127 = vmatpush1.xpose.msra.mxu0 0.0
  %10128 = vmatprep.subr.mxu0 0.0
  %10129 = vmatpush1.xpose.msra.mxu0 0.0
  %10130 = vmatprep.subr.mxu0 0.0
  %10131 = vmatpush1.xpose.msra.mxu0 0.0
  %10132 = vmatprep.subr.mxu0 0.0
  %10133 = vmatpush1.xpose.msra.mxu0 0.0
  %10134 = vmatprep.subr.mxu0 0.0
  %10135 = vmatpush1.xpose.msra.mxu0 0.0
  %10136 = vmatprep.subr.mxu0 0.0
  %10137 = vmatpush1.xpose.msra.mxu0 0.0
  %10138 = vmatprep.subr.mxu0 0.0
  %10139 = vmatpush1.xpose.msra.mxu0 0.0
  %10140 = vmatprep.subr.mxu0 0.0
  %10141 = vmatpush1.xpose.msra.mxu0 0.0
  %10142 = vmatprep.subr.mxu0 0.0
  %10143 = vmatpush1.xpose.msra.mxu0 0.0
  %10144 = vmatprep.subr.mxu0 0.0
  %10145 = vmatpush1.xpose.msra.mxu0 0.0
  %10146 = vmatprep.subr.mxu0 0.0
  %10147 = vmatpush1.xpose.msra.mxu0 0.0
  %10148 = vmatprep.subr.mxu0 0.0
  %10149 = vmatpush1.xpose.msra.mxu0 0.0
  %10150 = vmatprep.subr.mxu0 0.0
  %10151 = vmatpush1.xpose.msra.mxu0 0.0
  %10152 = vmatprep.subr.mxu0 0.0
  %10153 = vmatpush1.xpose.msra.mxu0 0.0
  %10154 = vmatprep.subr.mxu0 0.0
  %10155 = vmatpush1.xpose.msra.mxu0 0.0
  %10156 = vmatprep.subr.mxu0 0.0
  %10157 = vmatpush1.xpose.msra.mxu0 0.0
  %10158 = vmatprep.subr.mxu0 0.0
  %10159 = vmatpush1.xpose.msra.mxu0 0.0
  %10160 = vmatprep.subr.mxu0 0.0
  %10161 = vmatpush1.xpose.msra.mxu0 0.0
  %10162 = vmatprep.subr.mxu0 0.0
  %10163 = vmatpush1.xpose.msra.mxu0 0.0
  %10164 = vmatprep.subr.mxu0 0.0
  %10165 = vmatpush1.xpose.msra.mxu0 0.0
  %10166 = vmatprep.subr.mxu0 0.0
  %10167 = vmatpush1.xpose.msra.mxu0 0.0
  %10168 = vmatprep.subr.mxu0 0.0
  %10169 = vmatpush1.xpose.msra.mxu0 0.0
  %10170 = vmatprep.subr.mxu0 0.0
  %10171 = vmatpush1.xpose.msra.mxu0 0.0
  %10172 = vmatprep.subr.mxu0 0.0
  %10173 = vmatpush1.xpose.msra.mxu0 0.0
  %10174 = vmatprep.subr.mxu0 0.0
  %10175 = vmatpush1.xpose.msra.mxu0 0.0
  %10176 = vmatprep.subr.mxu0 0.0
  %10177 = vmatpush1.xpose.msra.mxu0 0.0
  %10178 = vmatprep.subr.mxu0 0.0
  %10179 = vmatpush1.xpose.msra.mxu0 0.0
  %10180 = vmatprep.mubr.f32.mxu0 0.0
  %10181 = vmatmul.mubr.f32.gmra.mrb[0].mxu0 %v10112
  %v10182 = vpop.f32.mrb[0].mxu0
  %v10183 = vadd.f32 %v9015, %v10182
  %v10184 = vpop.f32.mrb[0].mxu0
  %10185 = vdwg.mxu0
  %10186 = vrot.lane.b32.xlu0 %v255, 104
  %v10187 = vpop.permute.xlu0 %10186
  %10188 = vrot.lane.b32.xlu0 %v402, 104
  %v10189 = vpop.permute.xlu0 %10188
  %v10190 = vsel %vm555, %v10187, 0
  %v10192 = vsel %vm555, %v10189, 0
  %10194 = vmatprep.subr.mxu0 0.0
  %10195 = vmatpush1.xpose.msra.mxu0 %v10192
  %10196 = vmatprep.subr.mxu0 0.0
  %10197 = vmatpush1.xpose.msra.mxu0 0.0
  %10198 = vmatprep.subr.mxu0 0.0
  %10199 = vmatpush1.xpose.msra.mxu0 0.0
  %10200 = vmatprep.subr.mxu0 0.0
  %10201 = vmatpush1.xpose.msra.mxu0 0.0
  %10202 = vmatprep.subr.mxu0 0.0
  %10203 = vmatpush1.xpose.msra.mxu0 0.0
  %10204 = vmatprep.subr.mxu0 0.0
  %10205 = vmatpush1.xpose.msra.mxu0 0.0
  %10206 = vmatprep.subr.mxu0 0.0
  %10207 = vmatpush1.xpose.msra.mxu0 0.0
  %10208 = vmatprep.subr.mxu0 0.0
  %10209 = vmatpush1.xpose.msra.mxu0 0.0
  %10210 = vmatprep.subr.mxu0 0.0
  %10211 = vmatpush1.xpose.msra.mxu0 0.0
  %10212 = vmatprep.subr.mxu0 0.0
  %10213 = vmatpush1.xpose.msra.mxu0 0.0
  %10214 = vmatprep.subr.mxu0 0.0
  %10215 = vmatpush1.xpose.msra.mxu0 0.0
  %10216 = vmatprep.subr.mxu0 0.0
  %10217 = vmatpush1.xpose.msra.mxu0 0.0
  %10218 = vmatprep.subr.mxu0 0.0
  %10219 = vmatpush1.xpose.msra.mxu0 0.0
  %10220 = vmatprep.subr.mxu0 0.0
  %10221 = vmatpush1.xpose.msra.mxu0 0.0
  %10222 = vmatprep.subr.mxu0 0.0
  %10223 = vmatpush1.xpose.msra.mxu0 0.0
  %10224 = vmatprep.subr.mxu0 0.0
  %10225 = vmatpush1.xpose.msra.mxu0 0.0
  %10226 = vmatprep.subr.mxu0 0.0
  %10227 = vmatpush1.xpose.msra.mxu0 0.0
  %10228 = vmatprep.subr.mxu0 0.0
  %10229 = vmatpush1.xpose.msra.mxu0 0.0
  %10230 = vmatprep.subr.mxu0 0.0
  %10231 = vmatpush1.xpose.msra.mxu0 0.0
  %10232 = vmatprep.subr.mxu0 0.0
  %10233 = vmatpush1.xpose.msra.mxu0 0.0
  %10234 = vmatprep.subr.mxu0 0.0
  %10235 = vmatpush1.xpose.msra.mxu0 0.0
  %10236 = vmatprep.subr.mxu0 0.0
  %10237 = vmatpush1.xpose.msra.mxu0 0.0
  %10238 = vmatprep.subr.mxu0 0.0
  %10239 = vmatpush1.xpose.msra.mxu0 0.0
  %10240 = vmatprep.subr.mxu0 0.0
  %10241 = vmatpush1.xpose.msra.mxu0 0.0
  %10242 = vmatprep.subr.mxu0 0.0
  %10243 = vmatpush1.xpose.msra.mxu0 0.0
  %10244 = vmatprep.subr.mxu0 0.0
  %10245 = vmatpush1.xpose.msra.mxu0 0.0
  %10246 = vmatprep.subr.mxu0 0.0
  %10247 = vmatpush1.xpose.msra.mxu0 0.0
  %10248 = vmatprep.subr.mxu0 0.0
  %10249 = vmatpush1.xpose.msra.mxu0 0.0
  %10250 = vmatprep.subr.mxu0 0.0
  %10251 = vmatpush1.xpose.msra.mxu0 0.0
  %10252 = vmatprep.subr.mxu0 0.0
  %10253 = vmatpush1.xpose.msra.mxu0 0.0
  %10254 = vmatprep.subr.mxu0 0.0
  %10255 = vmatpush1.xpose.msra.mxu0 0.0
  %10256 = vmatprep.subr.mxu0 0.0
  %10257 = vmatpush1.xpose.msra.mxu0 0.0
  %10258 = vmatprep.mubr.f32.mxu0 0.0
  %10259 = vmatmul.mubr.f32.gmra.mrb[0].mxu0 %v10190
  %v10260 = vpop.f32.mrb[0].mxu0
  %v10261 = vadd.f32 %v9015, %v10260
  %v10262 = vpop.f32.mrb[0].mxu0
  %10263 = vdwg.mxu0
  %v10264 = vsel %vm555, %v9091, -inf
  %10265 = vmax.xlane.f32.xlu0 %v10264
  %v10266 = vpop.xlane.xlu0 %10265
  %v10267 = vsel %vm555, %v9169, -inf
  %10268 = vmax.xlane.f32.xlu0 %v10267
  %v10269 = vpop.xlane.xlu0 %10268
  %v10270 = vsel %vm555, %v9247, -inf
  %10271 = vmax.xlane.f32.xlu0 %v10270
  %v10272 = vpop.xlane.xlu0 %10271
  %v10273 = vsel %vm555, %v9325, -inf
  %10274 = vmax.xlane.f32.xlu0 %v10273
  %v10275 = vpop.xlane.xlu0 %10274
  %v10276 = vsel %vm555, %v9403, -inf
  %10277 = vmax.xlane.f32.xlu0 %v10276
  %v10278 = vpop.xlane.xlu0 %10277
  %v10279 = vsel %vm555, %v9481, -inf
  %10280 = vmax.xlane.f32.xlu0 %v10279
  %v10281 = vpop.xlane.xlu0 %10280
  %v10282 = vsel %vm555, %v9559, -inf
  %10283 = vmax.xlane.f32.xlu0 %v10282
  %v10284 = vpop.xlane.xlu0 %10283
  %v10285 = vsel %vm555, %v9637, -inf
  %10286 = vmax.xlane.f32.xlu0 %v10285
  %v10287 = vpop.xlane.xlu0 %10286
  %v10288 = vsel %vm555, %v9715, -inf
  %10289 = vmax.xlane.f32.xlu0 %v10288
  %v10290 = vpop.xlane.xlu0 %10289
  %v10291 = vsel %vm555, %v9793, -inf
  %10292 = vmax.xlane.f32.xlu0 %v10291
  %v10293 = vpop.xlane.xlu0 %10292
  %v10294 = vsel %vm555, %v9871, -inf
  %10295 = vmax.xlane.f32.xlu0 %v10294
  %v10296 = vpop.xlane.xlu0 %10295
  %v10297 = vsel %vm555, %v9949, -inf
  %10298 = vmax.xlane.f32.xlu0 %v10297
  %v10299 = vpop.xlane.xlu0 %10298
  %v10300 = vsel %vm555, %v10027, -inf
  %10301 = vmax.xlane.f32.xlu0 %v10300
  %v10302 = vpop.xlane.xlu0 %10301
  %v10303 = vsel %vm555, %v10105, -inf
  %10304 = vmax.xlane.f32.xlu0 %v10303
  %v10305 = vpop.xlane.xlu0 %10304
  %v10306 = vsel %vm555, %v10183, -inf
  %10307 = vmax.xlane.f32.xlu0 %v10306
  %v10308 = vpop.xlane.xlu0 %10307
  %v10309 = vsel %vm555, %v10261, -inf
  %10310 = vmax.xlane.f32.xlu0 %v10309
  %v10311 = vpop.xlane.xlu0 %10310
  %v10312 = vsub.f32 %v9091, %v10266
  %v10313 = vsub.f32 %v9169, %v10269
  %v10314 = vsub.f32 %v9247, %v10272
  %v10315 = vsub.f32 %v9325, %v10275
  %v10316 = vsub.f32 %v9403, %v10278
  %v10317 = vsub.f32 %v9481, %v10281
  %v10318 = vsub.f32 %v9559, %v10284
  %v10319 = vsub.f32 %v9637, %v10287
  %v10320 = vsub.f32 %v9715, %v10290
  %v10321 = vsub.f32 %v9793, %v10293
  %v10322 = vsub.f32 %v9871, %v10296
  %v10323 = vsub.f32 %v9949, %v10299
  %v10324 = vsub.f32 %v10027, %v10302
  %v10325 = vsub.f32 %v10105, %v10305
  %v10326 = vsub.f32 %v10183, %v10308
  %v10327 = vsub.f32 %v10261, %v10311
  %v10328 = vmul.f32 %v10312, 1.442695
  %v10329 = vpow.pop %v10328
  %v10330 = vmul.f32 %v10313, 1.442695
  %v10331 = vpow.pop %v10330
  %v10332 = vmul.f32 %v10314, 1.442695
  %v10333 = vpow.pop %v10332
  %v10334 = vmul.f32 %v10315, 1.442695
  %v10335 = vpow.pop %v10334
  %v10336 = vmul.f32 %v10316, 1.442695
  %v10337 = vpow.pop %v10336
  %v10338 = vmul.f32 %v10317, 1.442695
  %v10339 = vpow.pop %v10338
  %v10340 = vmul.f32 %v10318, 1.442695
  %v10341 = vpow.pop %v10340
  %v10342 = vmul.f32 %v10319, 1.442695
  %v10343 = vpow.pop %v10342
  %v10344 = vmul.f32 %v10320, 1.442695
  %v10345 = vpow.pop %v10344
  %v10346 = vmul.f32 %v10321, 1.442695
  %v10347 = vpow.pop %v10346
  %v10348 = vmul.f32 %v10322, 1.442695
  %v10349 = vpow.pop %v10348
  %v10350 = vmul.f32 %v10323, 1.442695
  %v10351 = vpow.pop %v10350
  %v10352 = vmul.f32 %v10324, 1.442695
  %v10353 = vpow.pop %v10352
  %v10354 = vmul.f32 %v10325, 1.442695
  %v10355 = vpow.pop %v10354
  %v10356 = vmul.f32 %v10326, 1.442695
  %v10357 = vpow.pop %v10356
  %v10358 = vmul.f32 %v10327, 1.442695
  %v10359 = vpow.pop %v10358
  %v10360 = vsel %vm555, %v10329, 0.0
  %10361 = vadd.xlane.f32.xlu0 %v10360
  %v10362 = vpop.xlane.xlu0 %10361
  %v10363 = vsel %vm555, %v10331, 0.0
  %10364 = vadd.xlane.f32.xlu0 %v10363
  %v10365 = vpop.xlane.xlu0 %10364
  %v10366 = vsel %vm555, %v10333, 0.0
  %10367 = vadd.xlane.f32.xlu0 %v10366
  %v10368 = vpop.xlane.xlu0 %10367
  %v10369 = vsel %vm555, %v10335, 0.0
  %10370 = vadd.xlane.f32.xlu0 %v10369
  %v10371 = vpop.xlane.xlu0 %10370
  %v10372 = vsel %vm555, %v10337, 0.0
  %10373 = vadd.xlane.f32.xlu0 %v10372
  %v10374 = vpop.xlane.xlu0 %10373
  %v10375 = vsel %vm555, %v10339, 0.0
  %10376 = vadd.xlane.f32.xlu0 %v10375
  %v10377 = vpop.xlane.xlu0 %10376
  %v10378 = vsel %vm555, %v10341, 0.0
  %10379 = vadd.xlane.f32.xlu0 %v10378
  %v10380 = vpop.xlane.xlu0 %10379
  %v10381 = vsel %vm555, %v10343, 0.0
  %10382 = vadd.xlane.f32.xlu0 %v10381
  %v10383 = vpop.xlane.xlu0 %10382
  %v10384 = vsel %vm555, %v10345, 0.0
  %10385 = vadd.xlane.f32.xlu0 %v10384
  %v10386 = vpop.xlane.xlu0 %10385
  %v10387 = vsel %vm555, %v10347, 0.0
  %10388 = vadd.xlane.f32.xlu0 %v10387
  %v10389 = vpop.xlane.xlu0 %10388
  %v10390 = vsel %vm555, %v10349, 0.0
  %10391 = vadd.xlane.f32.xlu0 %v10390
  %v10392 = vpop.xlane.xlu0 %10391
  %v10393 = vsel %vm555, %v10351, 0.0
  %10394 = vadd.xlane.f32.xlu0 %v10393
  %v10395 = vpop.xlane.xlu0 %10394
  %v10396 = vsel %vm555, %v10353, 0.0
  %10397 = vadd.xlane.f32.xlu0 %v10396
  %v10398 = vpop.xlane.xlu0 %10397
  %v10399 = vsel %vm555, %v10355, 0.0
  %10400 = vadd.xlane.f32.xlu0 %v10399
  %v10401 = vpop.xlane.xlu0 %10400
  %v10402 = vsel %vm555, %v10357, 0.0
  %10403 = vadd.xlane.f32.xlu0 %v10402
  %v10404 = vpop.xlane.xlu0 %10403
  %v10405 = vsel %vm555, %v10359, 0.0
  %10406 = vadd.xlane.f32.xlu0 %v10405
  %v10407 = vpop.xlane.xlu0 %10406
  %v10408 = vrcp.pop %v10362
  %v10409 = vmul.f32 %v10329, %v10408
  %v10410 = vrcp.pop %v10365
  %v10411 = vmul.f32 %v10331, %v10410
  %v10412 = vrcp.pop %v10368
  %v10413 = vmul.f32 %v10333, %v10412
  %v10414 = vrcp.pop %v10371
  %v10415 = vmul.f32 %v10335, %v10414
  %v10416 = vrcp.pop %v10374
  %v10417 = vmul.f32 %v10337, %v10416
  %v10418 = vrcp.pop %v10377
  %v10419 = vmul.f32 %v10339, %v10418
  %v10420 = vrcp.pop %v10380
  %v10421 = vmul.f32 %v10341, %v10420
  %v10422 = vrcp.pop %v10383
  %v10423 = vmul.f32 %v10343, %v10422
  %v10424 = vrcp.pop %v10386
  %v10425 = vmul.f32 %v10345, %v10424
  %v10426 = vrcp.pop %v10389
  %v10427 = vmul.f32 %v10347, %v10426
  %v10428 = vrcp.pop %v10392
  %v10429 = vmul.f32 %v10349, %v10428
  %v10430 = vrcp.pop %v10395
  %v10431 = vmul.f32 %v10351, %v10430
  %v10432 = vrcp.pop %v10398
  %v10433 = vmul.f32 %v10353, %v10432
  %v10434 = vrcp.pop %v10401
  %v10435 = vmul.f32 %v10355, %v10434
  %v10436 = vrcp.pop %v10404
  %v10437 = vmul.f32 %v10357, %v10436
  %v10438 = vrcp.pop %v10407
  %v10439 = vmul.f32 %v10359, %v10438
  %10440 = vrot.lane.b32.xlu0 %v476, 104
  %v10441 = vpop.permute.xlu0 %10440
  %v10444 = vsel %vm555, %v10409, 0
  %10446 = vmatprep.subr.mxu0 0.0
  %10447 = vmatpush1.msra.mxu0 %v10441
  %10448 = vmatprep.subr.mxu0 0.0
  %10449 = vmatpush1.msra.mxu0 0.0
  %10450 = vmatprep.subr.mxu0 0.0
  %10451 = vmatpush1.msra.mxu0 0.0
  %10452 = vmatprep.subr.mxu0 0.0
  %10453 = vmatpush1.msra.mxu0 0.0
  %10454 = vmatprep.subr.mxu0 0.0
  %10455 = vmatpush1.msra.mxu0 0.0
  %10456 = vmatprep.subr.mxu0 0.0
  %10457 = vmatpush1.msra.mxu0 0.0
  %10458 = vmatprep.subr.mxu0 0.0
  %10459 = vmatpush1.msra.mxu0 0.0
  %10460 = vmatprep.subr.mxu0 0.0
  %10461 = vmatpush1.msra.mxu0 0.0
  %10462 = vmatprep.subr.mxu0 0.0
  %10463 = vmatpush1.msra.mxu0 0.0
  %10464 = vmatprep.subr.mxu0 0.0
  %10465 = vmatpush1.msra.mxu0 0.0
  %10466 = vmatprep.subr.mxu0 0.0
  %10467 = vmatpush1.msra.mxu0 0.0
  %10468 = vmatprep.subr.mxu0 0.0
  %10469 = vmatpush1.msra.mxu0 0.0
  %10470 = vmatprep.subr.mxu0 0.0
  %10471 = vmatpush1.msra.mxu0 0.0
  %10472 = vmatprep.subr.mxu0 0.0
  %10473 = vmatpush1.msra.mxu0 0.0
  %10474 = vmatprep.subr.mxu0 0.0
  %10475 = vmatpush1.msra.mxu0 0.0
  %10476 = vmatprep.subr.mxu0 0.0
  %10477 = vmatpush1.msra.mxu0 0.0
  %10478 = vmatprep.subr.mxu0 0.0
  %10479 = vmatpush1.msra.mxu0 0.0
  %10480 = vmatprep.subr.mxu0 0.0
  %10481 = vmatpush1.msra.mxu0 0.0
  %10482 = vmatprep.subr.mxu0 0.0
  %10483 = vmatpush1.msra.mxu0 0.0
  %10484 = vmatprep.subr.mxu0 0.0
  %10485 = vmatpush1.msra.mxu0 0.0
  %10486 = vmatprep.subr.mxu0 0.0
  %10487 = vmatpush1.msra.mxu0 0.0
  %10488 = vmatprep.subr.mxu0 0.0
  %10489 = vmatpush1.msra.mxu0 0.0
  %10490 = vmatprep.subr.mxu0 0.0
  %10491 = vmatpush1.msra.mxu0 0.0
  %10492 = vmatprep.subr.mxu0 0.0
  %10493 = vmatpush1.msra.mxu0 0.0
  %10494 = vmatprep.subr.mxu0 0.0
  %10495 = vmatpush1.msra.mxu0 0.0
  %10496 = vmatprep.subr.mxu0 0.0
  %10497 = vmatpush1.msra.mxu0 0.0
  %10498 = vmatprep.subr.mxu0 0.0
  %10499 = vmatpush1.msra.mxu0 0.0
  %10500 = vmatprep.subr.mxu0 0.0
  %10501 = vmatpush1.msra.mxu0 0.0
  %10502 = vmatprep.subr.mxu0 0.0
  %10503 = vmatpush1.msra.mxu0 0.0
  %10504 = vmatprep.subr.mxu0 0.0
  %10505 = vmatpush1.msra.mxu0 0.0
  %10506 = vmatprep.subr.mxu0 0.0
  %10507 = vmatpush1.msra.mxu0 0.0
  %10508 = vmatprep.subr.mxu0 0.0
  %10509 = vmatpush1.msra.mxu0 0.0
  %10510 = vmatprep.mubr.f32.mxu0 0.0
  %10511 = vmatmul.mubr.f32.gmra.mrb[0].mxu0 %v10444
  %v10512 = vpop.f32.mrb[0].mxu0
  %v10513 = vadd.f32 0.0, %v10512
  %v10514 = vpop.f32.mrb[0].mxu0
  %10515 = vdwg.mxu0
  %10516 = vrot.lane.b32.xlu0 %v481, 104
  %v10517 = vpop.permute.xlu0 %10516
  %v10520 = vsel %vm555, %v10411, 0
  %10522 = vmatprep.subr.mxu0 0.0
  %10523 = vmatpush1.msra.mxu0 %v10517
  %10524 = vmatprep.subr.mxu0 0.0
  %10525 = vmatpush1.msra.mxu0 0.0
  %10526 = vmatprep.subr.mxu0 0.0
  %10527 = vmatpush1.msra.mxu0 0.0
  %10528 = vmatprep.subr.mxu0 0.0
  %10529 = vmatpush1.msra.mxu0 0.0
  %10530 = vmatprep.subr.mxu0 0.0
  %10531 = vmatpush1.msra.mxu0 0.0
  %10532 = vmatprep.subr.mxu0 0.0
  %10533 = vmatpush1.msra.mxu0 0.0
  %10534 = vmatprep.subr.mxu0 0.0
  %10535 = vmatpush1.msra.mxu0 0.0
  %10536 = vmatprep.subr.mxu0 0.0
  %10537 = vmatpush1.msra.mxu0 0.0
  %10538 = vmatprep.subr.mxu0 0.0
  %10539 = vmatpush1.msra.mxu0 0.0
  %10540 = vmatprep.subr.mxu0 0.0
  %10541 = vmatpush1.msra.mxu0 0.0
  %10542 = vmatprep.subr.mxu0 0.0
  %10543 = vmatpush1.msra.mxu0 0.0
  %10544 = vmatprep.subr.mxu0 0.0
  %10545 = vmatpush1.msra.mxu0 0.0
  %10546 = vmatprep.subr.mxu0 0.0
  %10547 = vmatpush1.msra.mxu0 0.0
  %10548 = vmatprep.subr.mxu0 0.0
  %10549 = vmatpush1.msra.mxu0 0.0
  %10550 = vmatprep.subr.mxu0 0.0
  %10551 = vmatpush1.msra.mxu0 0.0
  %10552 = vmatprep.subr.mxu0 0.0
  %10553 = vmatpush1.msra.mxu0 0.0
  %10554 = vmatprep.subr.mxu0 0.0
  %10555 = vmatpush1.msra.mxu0 0.0
  %10556 = vmatprep.subr.mxu0 0.0
  %10557 = vmatpush1.msra.mxu0 0.0
  %10558 = vmatprep.subr.mxu0 0.0
  %10559 = vmatpush1.msra.mxu0 0.0
  %10560 = vmatprep.subr.mxu0 0.0
  %10561 = vmatpush1.msra.mxu0 0.0
  %10562 = vmatprep.subr.mxu0 0.0
  %10563 = vmatpush1.msra.mxu0 0.0
  %10564 = vmatprep.subr.mxu0 0.0
  %10565 = vmatpush1.msra.mxu0 0.0
  %10566 = vmatprep.subr.mxu0 0.0
  %10567 = vmatpush1.msra.mxu0 0.0
  %10568 = vmatprep.subr.mxu0 0.0
  %10569 = vmatpush1.msra.mxu0 0.0
  %10570 = vmatprep.subr.mxu0 0.0
  %10571 = vmatpush1.msra.mxu0 0.0
  %10572 = vmatprep.subr.mxu0 0.0
  %10573 = vmatpush1.msra.mxu0 0.0
  %10574 = vmatprep.subr.mxu0 0.0
  %10575 = vmatpush1.msra.mxu0 0.0
  %10576 = vmatprep.subr.mxu0 0.0
  %10577 = vmatpush1.msra.mxu0 0.0
  %10578 = vmatprep.subr.mxu0 0.0
  %10579 = vmatpush1.msra.mxu0 0.0
  %10580 = vmatprep.subr.mxu0 0.0
  %10581 = vmatpush1.msra.mxu0 0.0
  %10582 = vmatprep.subr.mxu0 0.0
  %10583 = vmatpush1.msra.mxu0 0.0
  %10584 = vmatprep.subr.mxu0 0.0
  %10585 = vmatpush1.msra.mxu0 0.0
  %10586 = vmatprep.mubr.f32.mxu0 0.0
  %10587 = vmatmul.mubr.f32.gmra.mrb[0].mxu0 %v10520
  %v10588 = vpop.f32.mrb[0].mxu0
  %v10589 = vadd.f32 0.0, %v10588
  %v10590 = vpop.f32.mrb[0].mxu0
  %10591 = vdwg.mxu0
  %10592 = vrot.lane.b32.xlu0 %v486, 104
  %v10593 = vpop.permute.xlu0 %10592
  %v10596 = vsel %vm555, %v10413, 0
  %10598 = vmatprep.subr.mxu0 0.0
  %10599 = vmatpush1.msra.mxu0 %v10593
  %10600 = vmatprep.subr.mxu0 0.0
  %10601 = vmatpush1.msra.mxu0 0.0
  %10602 = vmatprep.subr.mxu0 0.0
  %10603 = vmatpush1.msra.mxu0 0.0
  %10604 = vmatprep.subr.mxu0 0.0
  %10605 = vmatpush1.msra.mxu0 0.0
  %10606 = vmatprep.subr.mxu0 0.0
  %10607 = vmatpush1.msra.mxu0 0.0
  %10608 = vmatprep.subr.mxu0 0.0
  %10609 = vmatpush1.msra.mxu0 0.0
  %10610 = vmatprep.subr.mxu0 0.0
  %10611 = vmatpush1.msra.mxu0 0.0
  %10612 = vmatprep.subr.mxu0 0.0
  %10613 = vmatpush1.msra.mxu0 0.0
  %10614 = vmatprep.subr.mxu0 0.0
  %10615 = vmatpush1.msra.mxu0 0.0
  %10616 = vmatprep.subr.mxu0 0.0
  %10617 = vmatpush1.msra.mxu0 0.0
  %10618 = vmatprep.subr.mxu0 0.0
  %10619 = vmatpush1.msra.mxu0 0.0
  %10620 = vmatprep.subr.mxu0 0.0
  %10621 = vmatpush1.msra.mxu0 0.0
  %10622 = vmatprep.subr.mxu0 0.0
  %10623 = vmatpush1.msra.mxu0 0.0
  %10624 = vmatprep.subr.mxu0 0.0
  %10625 = vmatpush1.msra.mxu0 0.0
  %10626 = vmatprep.subr.mxu0 0.0
  %10627 = vmatpush1.msra.mxu0 0.0
  %10628 = vmatprep.subr.mxu0 0.0
  %10629 = vmatpush1.msra.mxu0 0.0
  %10630 = vmatprep.subr.mxu0 0.0
  %10631 = vmatpush1.msra.mxu0 0.0
  %10632 = vmatprep.subr.mxu0 0.0
  %10633 = vmatpush1.msra.mxu0 0.0
  %10634 = vmatprep.subr.mxu0 0.0
  %10635 = vmatpush1.msra.mxu0 0.0
  %10636 = vmatprep.subr.mxu0 0.0
  %10637 = vmatpush1.msra.mxu0 0.0
  %10638 = vmatprep.subr.mxu0 0.0
  %10639 = vmatpush1.msra.mxu0 0.0
  %10640 = vmatprep.subr.mxu0 0.0
  %10641 = vmatpush1.msra.mxu0 0.0
  %10642 = vmatprep.subr.mxu0 0.0
  %10643 = vmatpush1.msra.mxu0 0.0
  %10644 = vmatprep.subr.mxu0 0.0
  %10645 = vmatpush1.msra.mxu0 0.0
  %10646 = vmatprep.subr.mxu0 0.0
  %10647 = vmatpush1.msra.mxu0 0.0
  %10648 = vmatprep.subr.mxu0 0.0
  %10649 = vmatpush1.msra.mxu0 0.0
  %10650 = vmatprep.subr.mxu0 0.0
  %10651 = vmatpush1.msra.mxu0 0.0
  %10652 = vmatprep.subr.mxu0 0.0
  %10653 = vmatpush1.msra.mxu0 0.0
  %10654 = vmatprep.subr.mxu0 0.0
  %10655 = vmatpush1.msra.mxu0 0.0
  %10656 = vmatprep.subr.mxu0 0.0
  %10657 = vmatpush1.msra.mxu0 0.0
  %10658 = vmatprep.subr.mxu0 0.0
  %10659 = vmatpush1.msra.mxu0 0.0
  %10660 = vmatprep.subr.mxu0 0.0
  %10661 = vmatpush1.msra.mxu0 0.0
  %10662 = vmatprep.mubr.f32.mxu0 0.0
  %10663 = vmatmul.mubr.f32.gmra.mrb[0].mxu0 %v10596
  %v10664 = vpop.f32.mrb[0].mxu0
  %v10665 = vadd.f32 0.0, %v10664
  %v10666 = vpop.f32.mrb[0].mxu0
  %10667 = vdwg.mxu0
  %10668 = vrot.lane.b32.xlu0 %v491, 104
  %v10669 = vpop.permute.xlu0 %10668
  %v10672 = vsel %vm555, %v10415, 0
  %10674 = vmatprep.subr.mxu0 0.0
  %10675 = vmatpush1.msra.mxu0 %v10669
  %10676 = vmatprep.subr.mxu0 0.0
  %10677 = vmatpush1.msra.mxu0 0.0
  %10678 = vmatprep.subr.mxu0 0.0
  %10679 = vmatpush1.msra.mxu0 0.0
  %10680 = vmatprep.subr.mxu0 0.0
  %10681 = vmatpush1.msra.mxu0 0.0
  %10682 = vmatprep.subr.mxu0 0.0
  %10683 = vmatpush1.msra.mxu0 0.0
  %10684 = vmatprep.subr.mxu0 0.0
  %10685 = vmatpush1.msra.mxu0 0.0
  %10686 = vmatprep.subr.mxu0 0.0
  %10687 = vmatpush1.msra.mxu0 0.0
  %10688 = vmatprep.subr.mxu0 0.0
  %10689 = vmatpush1.msra.mxu0 0.0
  %10690 = vmatprep.subr.mxu0 0.0
  %10691 = vmatpush1.msra.mxu0 0.0
  %10692 = vmatprep.subr.mxu0 0.0
  %10693 = vmatpush1.msra.mxu0 0.0
  %10694 = vmatprep.subr.mxu0 0.0
  %10695 = vmatpush1.msra.mxu0 0.0
  %10696 = vmatprep.subr.mxu0 0.0
  %10697 = vmatpush1.msra.mxu0 0.0
  %10698 = vmatprep.subr.mxu0 0.0
  %10699 = vmatpush1.msra.mxu0 0.0
  %10700 = vmatprep.subr.mxu0 0.0
  %10701 = vmatpush1.msra.mxu0 0.0
  %10702 = vmatprep.subr.mxu0 0.0
  %10703 = vmatpush1.msra.mxu0 0.0
  %10704 = vmatprep.subr.mxu0 0.0
  %10705 = vmatpush1.msra.mxu0 0.0
  %10706 = vmatprep.subr.mxu0 0.0
  %10707 = vmatpush1.msra.mxu0 0.0
  %10708 = vmatprep.subr.mxu0 0.0
  %10709 = vmatpush1.msra.mxu0 0.0
  %10710 = vmatprep.subr.mxu0 0.0
  %10711 = vmatpush1.msra.mxu0 0.0
  %10712 = vmatprep.subr.mxu0 0.0
  %10713 = vmatpush1.msra.mxu0 0.0
  %10714 = vmatprep.subr.mxu0 0.0
  %10715 = vmatpush1.msra.mxu0 0.0
  %10716 = vmatprep.subr.mxu0 0.0
  %10717 = vmatpush1.msra.mxu0 0.0
  %10718 = vmatprep.subr.mxu0 0.0
  %10719 = vmatpush1.msra.mxu0 0.0
  %10720 = vmatprep.subr.mxu0 0.0
  %10721 = vmatpush1.msra.mxu0 0.0
  %10722 = vmatprep.subr.mxu0 0.0
  %10723 = vmatpush1.msra.mxu0 0.0
  %10724 = vmatprep.subr.mxu0 0.0
  %10725 = vmatpush1.msra.mxu0 0.0
  %10726 = vmatprep.subr.mxu0 0.0
  %10727 = vmatpush1.msra.mxu0 0.0
  %10728 = vmatprep.subr.mxu0 0.0
  %10729 = vmatpush1.msra.mxu0 0.0
  %10730 = vmatprep.subr.mxu0 0.0
  %10731 = vmatpush1.msra.mxu0 0.0
  %10732 = vmatprep.subr.mxu0 0.0
  %10733 = vmatpush1.msra.mxu0 0.0
  %10734 = vmatprep.subr.mxu0 0.0
  %10735 = vmatpush1.msra.mxu0 0.0
  %10736 = vmatprep.subr.mxu0 0.0
  %10737 = vmatpush1.msra.mxu0 0.0
  %10738 = vmatprep.mubr.f32.mxu0 0.0
  %10739 = vmatmul.mubr.f32.gmra.mrb[0].mxu0 %v10672
  %v10740 = vpop.f32.mrb[0].mxu0
  %v10741 = vadd.f32 0.0, %v10740
  %v10742 = vpop.f32.mrb[0].mxu0
  %10743 = vdwg.mxu0
  %10744 = vrot.lane.b32.xlu0 %v496, 104
  %v10745 = vpop.permute.xlu0 %10744
  %v10748 = vsel %vm555, %v10417, 0
  %10750 = vmatprep.subr.mxu0 0.0
  %10751 = vmatpush1.msra.mxu0 %v10745
  %10752 = vmatprep.subr.mxu0 0.0
  %10753 = vmatpush1.msra.mxu0 0.0
  %10754 = vmatprep.subr.mxu0 0.0
  %10755 = vmatpush1.msra.mxu0 0.0
  %10756 = vmatprep.subr.mxu0 0.0
  %10757 = vmatpush1.msra.mxu0 0.0
  %10758 = vmatprep.subr.mxu0 0.0
  %10759 = vmatpush1.msra.mxu0 0.0
  %10760 = vmatprep.subr.mxu0 0.0
  %10761 = vmatpush1.msra.mxu0 0.0
  %10762 = vmatprep.subr.mxu0 0.0
  %10763 = vmatpush1.msra.mxu0 0.0
  %10764 = vmatprep.subr.mxu0 0.0
  %10765 = vmatpush1.msra.mxu0 0.0
  %10766 = vmatprep.subr.mxu0 0.0
  %10767 = vmatpush1.msra.mxu0 0.0
  %10768 = vmatprep.subr.mxu0 0.0
  %10769 = vmatpush1.msra.mxu0 0.0
  %10770 = vmatprep.subr.mxu0 0.0
  %10771 = vmatpush1.msra.mxu0 0.0
  %10772 = vmatprep.subr.mxu0 0.0
  %10773 = vmatpush1.msra.mxu0 0.0
  %10774 = vmatprep.subr.mxu0 0.0
  %10775 = vmatpush1.msra.mxu0 0.0
  %10776 = vmatprep.subr.mxu0 0.0
  %10777 = vmatpush1.msra.mxu0 0.0
  %10778 = vmatprep.subr.mxu0 0.0
  %10779 = vmatpush1.msra.mxu0 0.0
  %10780 = vmatprep.subr.mxu0 0.0
  %10781 = vmatpush1.msra.mxu0 0.0
  %10782 = vmatprep.subr.mxu0 0.0
  %10783 = vmatpush1.msra.mxu0 0.0
  %10784 = vmatprep.subr.mxu0 0.0
  %10785 = vmatpush1.msra.mxu0 0.0
  %10786 = vmatprep.subr.mxu0 0.0
  %10787 = vmatpush1.msra.mxu0 0.0
  %10788 = vmatprep.subr.mxu0 0.0
  %10789 = vmatpush1.msra.mxu0 0.0
  %10790 = vmatprep.subr.mxu0 0.0
  %10791 = vmatpush1.msra.mxu0 0.0
  %10792 = vmatprep.subr.mxu0 0.0
  %10793 = vmatpush1.msra.mxu0 0.0
  %10794 = vmatprep.subr.mxu0 0.0
  %10795 = vmatpush1.msra.mxu0 0.0
  %10796 = vmatprep.subr.mxu0 0.0
  %10797 = vmatpush1.msra.mxu0 0.0
  %10798 = vmatprep.subr.mxu0 0.0
  %10799 = vmatpush1.msra.mxu0 0.0
  %10800 = vmatprep.subr.mxu0 0.0
  %10801 = vmatpush1.msra.mxu0 0.0
  %10802 = vmatprep.subr.mxu0 0.0
  %10803 = vmatpush1.msra.mxu0 0.0
  %10804 = vmatprep.subr.mxu0 0.0
  %10805 = vmatpush1.msra.mxu0 0.0
  %10806 = vmatprep.subr.mxu0 0.0
  %10807 = vmatpush1.msra.mxu0 0.0
  %10808 = vmatprep.subr.mxu0 0.0
  %10809 = vmatpush1.msra.mxu0 0.0
  %10810 = vmatprep.subr.mxu0 0.0
  %10811 = vmatpush1.msra.mxu0 0.0
  %10812 = vmatprep.subr.mxu0 0.0
  %10813 = vmatpush1.msra.mxu0 0.0
  %10814 = vmatprep.mubr.f32.mxu0 0.0
  %10815 = vmatmul.mubr.f32.gmra.mrb[0].mxu0 %v10748
  %v10816 = vpop.f32.mrb[0].mxu0
  %v10817 = vadd.f32 0.0, %v10816
  %v10818 = vpop.f32.mrb[0].mxu0
  %10819 = vdwg.mxu0
  %10820 = vrot.lane.b32.xlu0 %v501, 104
  %v10821 = vpop.permute.xlu0 %10820
  %v10824 = vsel %vm555, %v10419, 0
  %10826 = vmatprep.subr.mxu0 0.0
  %10827 = vmatpush1.msra.mxu0 %v10821
  %10828 = vmatprep.subr.mxu0 0.0
  %10829 = vmatpush1.msra.mxu0 0.0
  %10830 = vmatprep.subr.mxu0 0.0
  %10831 = vmatpush1.msra.mxu0 0.0
  %10832 = vmatprep.subr.mxu0 0.0
  %10833 = vmatpush1.msra.mxu0 0.0
  %10834 = vmatprep.subr.mxu0 0.0
  %10835 = vmatpush1.msra.mxu0 0.0
  %10836 = vmatprep.subr.mxu0 0.0
  %10837 = vmatpush1.msra.mxu0 0.0
  %10838 = vmatprep.subr.mxu0 0.0
  %10839 = vmatpush1.msra.mxu0 0.0
  %10840 = vmatprep.subr.mxu0 0.0
  %10841 = vmatpush1.msra.mxu0 0.0
  %10842 = vmatprep.subr.mxu0 0.0
  %10843 = vmatpush1.msra.mxu0 0.0
  %10844 = vmatprep.subr.mxu0 0.0
  %10845 = vmatpush1.msra.mxu0 0.0
  %10846 = vmatprep.subr.mxu0 0.0
  %10847 = vmatpush1.msra.mxu0 0.0
  %10848 = vmatprep.subr.mxu0 0.0
  %10849 = vmatpush1.msra.mxu0 0.0
  %10850 = vmatprep.subr.mxu0 0.0
  %10851 = vmatpush1.msra.mxu0 0.0
  %10852 = vmatprep.subr.mxu0 0.0
  %10853 = vmatpush1.msra.mxu0 0.0
  %10854 = vmatprep.subr.mxu0 0.0
  %10855 = vmatpush1.msra.mxu0 0.0
  %10856 = vmatprep.subr.mxu0 0.0
  %10857 = vmatpush1.msra.mxu0 0.0
  %10858 = vmatprep.subr.mxu0 0.0
  %10859 = vmatpush1.msra.mxu0 0.0
  %10860 = vmatprep.subr.mxu0 0.0
  %10861 = vmatpush1.msra.mxu0 0.0
  %10862 = vmatprep.subr.mxu0 0.0
  %10863 = vmatpush1.msra.mxu0 0.0
  %10864 = vmatprep.subr.mxu0 0.0
  %10865 = vmatpush1.msra.mxu0 0.0
  %10866 = vmatprep.subr.mxu0 0.0
  %10867 = vmatpush1.msra.mxu0 0.0
  %10868 = vmatprep.subr.mxu0 0.0
  %10869 = vmatpush1.msra.mxu0 0.0
  %10870 = vmatprep.subr.mxu0 0.0
  %10871 = vmatpush1.msra.mxu0 0.0
  %10872 = vmatprep.subr.mxu0 0.0
  %10873 = vmatpush1.msra.mxu0 0.0
  %10874 = vmatprep.subr.mxu0 0.0
  %10875 = vmatpush1.msra.mxu0 0.0
  %10876 = vmatprep.subr.mxu0 0.0
  %10877 = vmatpush1.msra.mxu0 0.0
  %10878 = vmatprep.subr.mxu0 0.0
  %10879 = vmatpush1.msra.mxu0 0.0
  %10880 = vmatprep.subr.mxu0 0.0
  %10881 = vmatpush1.msra.mxu0 0.0
  %10882 = vmatprep.subr.mxu0 0.0
  %10883 = vmatpush1.msra.mxu0 0.0
  %10884 = vmatprep.subr.mxu0 0.0
  %10885 = vmatpush1.msra.mxu0 0.0
  %10886 = vmatprep.subr.mxu0 0.0
  %10887 = vmatpush1.msra.mxu0 0.0
  %10888 = vmatprep.subr.mxu0 0.0
  %10889 = vmatpush1.msra.mxu0 0.0
  %10890 = vmatprep.mubr.f32.mxu0 0.0
  %10891 = vmatmul.mubr.f32.gmra.mrb[0].mxu0 %v10824
  %v10892 = vpop.f32.mrb[0].mxu0
  %v10893 = vadd.f32 0.0, %v10892
  %v10894 = vpop.f32.mrb[0].mxu0
  %10895 = vdwg.mxu0
  %10896 = vrot.lane.b32.xlu0 %v506, 104
  %v10897 = vpop.permute.xlu0 %10896
  %v10900 = vsel %vm555, %v10421, 0
  %10902 = vmatprep.subr.mxu0 0.0
  %10903 = vmatpush1.msra.mxu0 %v10897
  %10904 = vmatprep.subr.mxu0 0.0
  %10905 = vmatpush1.msra.mxu0 0.0
  %10906 = vmatprep.subr.mxu0 0.0
  %10907 = vmatpush1.msra.mxu0 0.0
  %10908 = vmatprep.subr.mxu0 0.0
  %10909 = vmatpush1.msra.mxu0 0.0
  %10910 = vmatprep.subr.mxu0 0.0
  %10911 = vmatpush1.msra.mxu0 0.0
  %10912 = vmatprep.subr.mxu0 0.0
  %10913 = vmatpush1.msra.mxu0 0.0
  %10914 = vmatprep.subr.mxu0 0.0
  %10915 = vmatpush1.msra.mxu0 0.0
  %10916 = vmatprep.subr.mxu0 0.0
  %10917 = vmatpush1.msra.mxu0 0.0
  %10918 = vmatprep.subr.mxu0 0.0
  %10919 = vmatpush1.msra.mxu0 0.0
  %10920 = vmatprep.subr.mxu0 0.0
  %10921 = vmatpush1.msra.mxu0 0.0
  %10922 = vmatprep.subr.mxu0 0.0
  %10923 = vmatpush1.msra.mxu0 0.0
  %10924 = vmatprep.subr.mxu0 0.0
  %10925 = vmatpush1.msra.mxu0 0.0
  %10926 = vmatprep.subr.mxu0 0.0
  %10927 = vmatpush1.msra.mxu0 0.0
  %10928 = vmatprep.subr.mxu0 0.0
  %10929 = vmatpush1.msra.mxu0 0.0
  %10930 = vmatprep.subr.mxu0 0.0
  %10931 = vmatpush1.msra.mxu0 0.0
  %10932 = vmatprep.subr.mxu0 0.0
  %10933 = vmatpush1.msra.mxu0 0.0
  %10934 = vmatprep.subr.mxu0 0.0
  %10935 = vmatpush1.msra.mxu0 0.0
  %10936 = vmatprep.subr.mxu0 0.0
  %10937 = vmatpush1.msra.mxu0 0.0
  %10938 = vmatprep.subr.mxu0 0.0
  %10939 = vmatpush1.msra.mxu0 0.0
  %10940 = vmatprep.subr.mxu0 0.0
  %10941 = vmatpush1.msra.mxu0 0.0
  %10942 = vmatprep.subr.mxu0 0.0
  %10943 = vmatpush1.msra.mxu0 0.0
  %10944 = vmatprep.subr.mxu0 0.0
  %10945 = vmatpush1.msra.mxu0 0.0
  %10946 = vmatprep.subr.mxu0 0.0
  %10947 = vmatpush1.msra.mxu0 0.0
  %10948 = vmatprep.subr.mxu0 0.0
  %10949 = vmatpush1.msra.mxu0 0.0
  %10950 = vmatprep.subr.mxu0 0.0
  %10951 = vmatpush1.msra.mxu0 0.0
  %10952 = vmatprep.subr.mxu0 0.0
  %10953 = vmatpush1.msra.mxu0 0.0
  %10954 = vmatprep.subr.mxu0 0.0
  %10955 = vmatpush1.msra.mxu0 0.0
  %10956 = vmatprep.subr.mxu0 0.0
  %10957 = vmatpush1.msra.mxu0 0.0
  %10958 = vmatprep.subr.mxu0 0.0
  %10959 = vmatpush1.msra.mxu0 0.0
  %10960 = vmatprep.subr.mxu0 0.0
  %10961 = vmatpush1.msra.mxu0 0.0
  %10962 = vmatprep.subr.mxu0 0.0
  %10963 = vmatpush1.msra.mxu0 0.0
  %10964 = vmatprep.subr.mxu0 0.0
  %10965 = vmatpush1.msra.mxu0 0.0
  %10966 = vmatprep.mubr.f32.mxu0 0.0
  %10967 = vmatmul.mubr.f32.gmra.mrb[0].mxu0 %v10900
  %v10968 = vpop.f32.mrb[0].mxu0
  %v10969 = vadd.f32 0.0, %v10968
  %v10970 = vpop.f32.mrb[0].mxu0
  %10971 = vdwg.mxu0
  %10972 = vrot.lane.b32.xlu0 %v511, 104
  %v10973 = vpop.permute.xlu0 %10972
  %v10976 = vsel %vm555, %v10423, 0
  %10978 = vmatprep.subr.mxu0 0.0
  %10979 = vmatpush1.msra.mxu0 %v10973
  %10980 = vmatprep.subr.mxu0 0.0
  %10981 = vmatpush1.msra.mxu0 0.0
  %10982 = vmatprep.subr.mxu0 0.0
  %10983 = vmatpush1.msra.mxu0 0.0
  %10984 = vmatprep.subr.mxu0 0.0
  %10985 = vmatpush1.msra.mxu0 0.0
  %10986 = vmatprep.subr.mxu0 0.0
  %10987 = vmatpush1.msra.mxu0 0.0
  %10988 = vmatprep.subr.mxu0 0.0
  %10989 = vmatpush1.msra.mxu0 0.0
  %10990 = vmatprep.subr.mxu0 0.0
  %10991 = vmatpush1.msra.mxu0 0.0
  %10992 = vmatprep.subr.mxu0 0.0
  %10993 = vmatpush1.msra.mxu0 0.0
  %10994 = vmatprep.subr.mxu0 0.0
  %10995 = vmatpush1.msra.mxu0 0.0
  %10996 = vmatprep.subr.mxu0 0.0
  %10997 = vmatpush1.msra.mxu0 0.0
  %10998 = vmatprep.subr.mxu0 0.0
  %10999 = vmatpush1.msra.mxu0 0.0
  %11000 = vmatprep.subr.mxu0 0.0
  %11001 = vmatpush1.msra.mxu0 0.0
  %11002 = vmatprep.subr.mxu0 0.0
  %11003 = vmatpush1.msra.mxu0 0.0
  %11004 = vmatprep.subr.mxu0 0.0
  %11005 = vmatpush1.msra.mxu0 0.0
  %11006 = vmatprep.subr.mxu0 0.0
  %11007 = vmatpush1.msra.mxu0 0.0
  %11008 = vmatprep.subr.mxu0 0.0
  %11009 = vmatpush1.msra.mxu0 0.0
  %11010 = vmatprep.subr.mxu0 0.0
  %11011 = vmatpush1.msra.mxu0 0.0
  %11012 = vmatprep.subr.mxu0 0.0
  %11013 = vmatpush1.msra.mxu0 0.0
  %11014 = vmatprep.subr.mxu0 0.0
  %11015 = vmatpush1.msra.mxu0 0.0
  %11016 = vmatprep.subr.mxu0 0.0
  %11017 = vmatpush1.msra.mxu0 0.0
  %11018 = vmatprep.subr.mxu0 0.0
  %11019 = vmatpush1.msra.mxu0 0.0
  %11020 = vmatprep.subr.mxu0 0.0
  %11021 = vmatpush1.msra.mxu0 0.0
  %11022 = vmatprep.subr.mxu0 0.0
  %11023 = vmatpush1.msra.mxu0 0.0
  %11024 = vmatprep.subr.mxu0 0.0
  %11025 = vmatpush1.msra.mxu0 0.0
  %11026 = vmatprep.subr.mxu0 0.0
  %11027 = vmatpush1.msra.mxu0 0.0
  %11028 = vmatprep.subr.mxu0 0.0
  %11029 = vmatpush1.msra.mxu0 0.0
  %11030 = vmatprep.subr.mxu0 0.0
  %11031 = vmatpush1.msra.mxu0 0.0
  %11032 = vmatprep.subr.mxu0 0.0
  %11033 = vmatpush1.msra.mxu0 0.0
  %11034 = vmatprep.subr.mxu0 0.0
  %11035 = vmatpush1.msra.mxu0 0.0
  %11036 = vmatprep.subr.mxu0 0.0
  %11037 = vmatpush1.msra.mxu0 0.0
  %11038 = vmatprep.subr.mxu0 0.0
  %11039 = vmatpush1.msra.mxu0 0.0
  %11040 = vmatprep.subr.mxu0 0.0
  %11041 = vmatpush1.msra.mxu0 0.0
  %11042 = vmatprep.mubr.f32.mxu0 0.0
  %11043 = vmatmul.mubr.f32.gmra.mrb[0].mxu0 %v10976
  %v11044 = vpop.f32.mrb[0].mxu0
  %v11045 = vadd.f32 0.0, %v11044
  %v11046 = vpop.f32.mrb[0].mxu0
  %11047 = vdwg.mxu0
  %11048 = vrot.lane.b32.xlu0 %v516, 104
  %v11049 = vpop.permute.xlu0 %11048
  %v11052 = vsel %vm555, %v10425, 0
  %11054 = vmatprep.subr.mxu0 0.0
  %11055 = vmatpush1.msra.mxu0 %v11049
  %11056 = vmatprep.subr.mxu0 0.0
  %11057 = vmatpush1.msra.mxu0 0.0
  %11058 = vmatprep.subr.mxu0 0.0
  %11059 = vmatpush1.msra.mxu0 0.0
  %11060 = vmatprep.subr.mxu0 0.0
  %11061 = vmatpush1.msra.mxu0 0.0
  %11062 = vmatprep.subr.mxu0 0.0
  %11063 = vmatpush1.msra.mxu0 0.0
  %11064 = vmatprep.subr.mxu0 0.0
  %11065 = vmatpush1.msra.mxu0 0.0
  %11066 = vmatprep.subr.mxu0 0.0
  %11067 = vmatpush1.msra.mxu0 0.0
  %11068 = vmatprep.subr.mxu0 0.0
  %11069 = vmatpush1.msra.mxu0 0.0
  %11070 = vmatprep.subr.mxu0 0.0
  %11071 = vmatpush1.msra.mxu0 0.0
  %11072 = vmatprep.subr.mxu0 0.0
  %11073 = vmatpush1.msra.mxu0 0.0
  %11074 = vmatprep.subr.mxu0 0.0
  %11075 = vmatpush1.msra.mxu0 0.0
  %11076 = vmatprep.subr.mxu0 0.0
  %11077 = vmatpush1.msra.mxu0 0.0
  %11078 = vmatprep.subr.mxu0 0.0
  %11079 = vmatpush1.msra.mxu0 0.0
  %11080 = vmatprep.subr.mxu0 0.0
  %11081 = vmatpush1.msra.mxu0 0.0
  %11082 = vmatprep.subr.mxu0 0.0
  %11083 = vmatpush1.msra.mxu0 0.0
  %11084 = vmatprep.subr.mxu0 0.0
  %11085 = vmatpush1.msra.mxu0 0.0
  %11086 = vmatprep.subr.mxu0 0.0
  %11087 = vmatpush1.msra.mxu0 0.0
  %11088 = vmatprep.subr.mxu0 0.0
  %11089 = vmatpush1.msra.mxu0 0.0
  %11090 = vmatprep.subr.mxu0 0.0
  %11091 = vmatpush1.msra.mxu0 0.0
  %11092 = vmatprep.subr.mxu0 0.0
  %11093 = vmatpush1.msra.mxu0 0.0
  %11094 = vmatprep.subr.mxu0 0.0
  %11095 = vmatpush1.msra.mxu0 0.0
  %11096 = vmatprep.subr.mxu0 0.0
  %11097 = vmatpush1.msra.mxu0 0.0
  %11098 = vmatprep.subr.mxu0 0.0
  %11099 = vmatpush1.msra.mxu0 0.0
  %11100 = vmatprep.subr.mxu0 0.0
  %11101 = vmatpush1.msra.mxu0 0.0
  %11102 = vmatprep.subr.mxu0 0.0
  %11103 = vmatpush1.msra.mxu0 0.0
  %11104 = vmatprep.subr.mxu0 0.0
  %11105 = vmatpush1.msra.mxu0 0.0
  %11106 = vmatprep.subr.mxu0 0.0
  %11107 = vmatpush1.msra.mxu0 0.0
  %11108 = vmatprep.subr.mxu0 0.0
  %11109 = vmatpush1.msra.mxu0 0.0
  %11110 = vmatprep.subr.mxu0 0.0
  %11111 = vmatpush1.msra.mxu0 0.0
  %11112 = vmatprep.subr.mxu0 0.0
  %11113 = vmatpush1.msra.mxu0 0.0
  %11114 = vmatprep.subr.mxu0 0.0
  %11115 = vmatpush1.msra.mxu0 0.0
  %11116 = vmatprep.subr.mxu0 0.0
  %11117 = vmatpush1.msra.mxu0 0.0
  %11118 = vmatprep.mubr.f32.mxu0 0.0
  %11119 = vmatmul.mubr.f32.gmra.mrb[0].mxu0 %v11052
  %v11120 = vpop.f32.mrb[0].mxu0
  %v11121 = vadd.f32 0.0, %v11120
  %v11122 = vpop.f32.mrb[0].mxu0
  %11123 = vdwg.mxu0
  %11124 = vrot.lane.b32.xlu0 %v521, 104
  %v11125 = vpop.permute.xlu0 %11124
  %v11128 = vsel %vm555, %v10427, 0
  %11130 = vmatprep.subr.mxu0 0.0
  %11131 = vmatpush1.msra.mxu0 %v11125
  %11132 = vmatprep.subr.mxu0 0.0
  %11133 = vmatpush1.msra.mxu0 0.0
  %11134 = vmatprep.subr.mxu0 0.0
  %11135 = vmatpush1.msra.mxu0 0.0
  %11136 = vmatprep.subr.mxu0 0.0
  %11137 = vmatpush1.msra.mxu0 0.0
  %11138 = vmatprep.subr.mxu0 0.0
  %11139 = vmatpush1.msra.mxu0 0.0
  %11140 = vmatprep.subr.mxu0 0.0
  %11141 = vmatpush1.msra.mxu0 0.0
  %11142 = vmatprep.subr.mxu0 0.0
  %11143 = vmatpush1.msra.mxu0 0.0
  %11144 = vmatprep.subr.mxu0 0.0
  %11145 = vmatpush1.msra.mxu0 0.0
  %11146 = vmatprep.subr.mxu0 0.0
  %11147 = vmatpush1.msra.mxu0 0.0
  %11148 = vmatprep.subr.mxu0 0.0
  %11149 = vmatpush1.msra.mxu0 0.0
  %11150 = vmatprep.subr.mxu0 0.0
  %11151 = vmatpush1.msra.mxu0 0.0
  %11152 = vmatprep.subr.mxu0 0.0
  %11153 = vmatpush1.msra.mxu0 0.0
  %11154 = vmatprep.subr.mxu0 0.0
  %11155 = vmatpush1.msra.mxu0 0.0
  %11156 = vmatprep.subr.mxu0 0.0
  %11157 = vmatpush1.msra.mxu0 0.0
  %11158 = vmatprep.subr.mxu0 0.0
  %11159 = vmatpush1.msra.mxu0 0.0
  %11160 = vmatprep.subr.mxu0 0.0
  %11161 = vmatpush1.msra.mxu0 0.0
  %11162 = vmatprep.subr.mxu0 0.0
  %11163 = vmatpush1.msra.mxu0 0.0
  %11164 = vmatprep.subr.mxu0 0.0
  %11165 = vmatpush1.msra.mxu0 0.0
  %11166 = vmatprep.subr.mxu0 0.0
  %11167 = vmatpush1.msra.mxu0 0.0
  %11168 = vmatprep.subr.mxu0 0.0
  %11169 = vmatpush1.msra.mxu0 0.0
  %11170 = vmatprep.subr.mxu0 0.0
  %11171 = vmatpush1.msra.mxu0 0.0
  %11172 = vmatprep.subr.mxu0 0.0
  %11173 = vmatpush1.msra.mxu0 0.0
  %11174 = vmatprep.subr.mxu0 0.0
  %11175 = vmatpush1.msra.mxu0 0.0
  %11176 = vmatprep.subr.mxu0 0.0
  %11177 = vmatpush1.msra.mxu0 0.0
  %11178 = vmatprep.subr.mxu0 0.0
  %11179 = vmatpush1.msra.mxu0 0.0
  %11180 = vmatprep.subr.mxu0 0.0
  %11181 = vmatpush1.msra.mxu0 0.0
  %11182 = vmatprep.subr.mxu0 0.0
  %11183 = vmatpush1.msra.mxu0 0.0
  %11184 = vmatprep.subr.mxu0 0.0
  %11185 = vmatpush1.msra.mxu0 0.0
  %11186 = vmatprep.subr.mxu0 0.0
  %11187 = vmatpush1.msra.mxu0 0.0
  %11188 = vmatprep.subr.mxu0 0.0
  %11189 = vmatpush1.msra.mxu0 0.0
  %11190 = vmatprep.subr.mxu0 0.0
  %11191 = vmatpush1.msra.mxu0 0.0
  %11192 = vmatprep.subr.mxu0 0.0
  %11193 = vmatpush1.msra.mxu0 0.0
  %11194 = vmatprep.mubr.f32.mxu0 0.0
  %11195 = vmatmul.mubr.f32.gmra.mrb[0].mxu0 %v11128
  %v11196 = vpop.f32.mrb[0].mxu0
  %v11197 = vadd.f32 0.0, %v11196
  %v11198 = vpop.f32.mrb[0].mxu0
  %11199 = vdwg.mxu0
  %11200 = vrot.lane.b32.xlu0 %v526, 104
  %v11201 = vpop.permute.xlu0 %11200
  %v11204 = vsel %vm555, %v10429, 0
  %11206 = vmatprep.subr.mxu0 0.0
  %11207 = vmatpush1.msra.mxu0 %v11201
  %11208 = vmatprep.subr.mxu0 0.0
  %11209 = vmatpush1.msra.mxu0 0.0
  %11210 = vmatprep.subr.mxu0 0.0
  %11211 = vmatpush1.msra.mxu0 0.0
  %11212 = vmatprep.subr.mxu0 0.0
  %11213 = vmatpush1.msra.mxu0 0.0
  %11214 = vmatprep.subr.mxu0 0.0
  %11215 = vmatpush1.msra.mxu0 0.0
  %11216 = vmatprep.subr.mxu0 0.0
  %11217 = vmatpush1.msra.mxu0 0.0
  %11218 = vmatprep.subr.mxu0 0.0
  %11219 = vmatpush1.msra.mxu0 0.0
  %11220 = vmatprep.subr.mxu0 0.0
  %11221 = vmatpush1.msra.mxu0 0.0
  %11222 = vmatprep.subr.mxu0 0.0
  %11223 = vmatpush1.msra.mxu0 0.0
  %11224 = vmatprep.subr.mxu0 0.0
  %11225 = vmatpush1.msra.mxu0 0.0
  %11226 = vmatprep.subr.mxu0 0.0
  %11227 = vmatpush1.msra.mxu0 0.0
  %11228 = vmatprep.subr.mxu0 0.0
  %11229 = vmatpush1.msra.mxu0 0.0
  %11230 = vmatprep.subr.mxu0 0.0
  %11231 = vmatpush1.msra.mxu0 0.0
  %11232 = vmatprep.subr.mxu0 0.0
  %11233 = vmatpush1.msra.mxu0 0.0
  %11234 = vmatprep.subr.mxu0 0.0
  %11235 = vmatpush1.msra.mxu0 0.0
  %11236 = vmatprep.subr.mxu0 0.0
  %11237 = vmatpush1.msra.mxu0 0.0
  %11238 = vmatprep.subr.mxu0 0.0
  %11239 = vmatpush1.msra.mxu0 0.0
  %11240 = vmatprep.subr.mxu0 0.0
  %11241 = vmatpush1.msra.mxu0 0.0
  %11242 = vmatprep.subr.mxu0 0.0
  %11243 = vmatpush1.msra.mxu0 0.0
  %11244 = vmatprep.subr.mxu0 0.0
  %11245 = vmatpush1.msra.mxu0 0.0
  %11246 = vmatprep.subr.mxu0 0.0
  %11247 = vmatpush1.msra.mxu0 0.0
  %11248 = vmatprep.subr.mxu0 0.0
  %11249 = vmatpush1.msra.mxu0 0.0
  %11250 = vmatprep.subr.mxu0 0.0
  %11251 = vmatpush1.msra.mxu0 0.0
  %11252 = vmatprep.subr.mxu0 0.0
  %11253 = vmatpush1.msra.mxu0 0.0
  %11254 = vmatprep.subr.mxu0 0.0
  %11255 = vmatpush1.msra.mxu0 0.0
  %11256 = vmatprep.subr.mxu0 0.0
  %11257 = vmatpush1.msra.mxu0 0.0
  %11258 = vmatprep.subr.mxu0 0.0
  %11259 = vmatpush1.msra.mxu0 0.0
  %11260 = vmatprep.subr.mxu0 0.0
  %11261 = vmatpush1.msra.mxu0 0.0
  %11262 = vmatprep.subr.mxu0 0.0
  %11263 = vmatpush1.msra.mxu0 0.0
  %11264 = vmatprep.subr.mxu0 0.0
  %11265 = vmatpush1.msra.mxu0 0.0
  %11266 = vmatprep.subr.mxu0 0.0
  %11267 = vmatpush1.msra.mxu0 0.0
  %11268 = vmatprep.subr.mxu0 0.0
  %11269 = vmatpush1.msra.mxu0 0.0
  %11270 = vmatprep.mubr.f32.mxu0 0.0
  %11271 = vmatmul.mubr.f32.gmra.mrb[0].mxu0 %v11204
  %v11272 = vpop.f32.mrb[0].mxu0
  %v11273 = vadd.f32 0.0, %v11272
  %v11274 = vpop.f32.mrb[0].mxu0
  %11275 = vdwg.mxu0
  %11276 = vrot.lane.b32.xlu0 %v531, 104
  %v11277 = vpop.permute.xlu0 %11276
  %v11280 = vsel %vm555, %v10431, 0
  %11282 = vmatprep.subr.mxu0 0.0
  %11283 = vmatpush1.msra.mxu0 %v11277
  %11284 = vmatprep.subr.mxu0 0.0
  %11285 = vmatpush1.msra.mxu0 0.0
  %11286 = vmatprep.subr.mxu0 0.0
  %11287 = vmatpush1.msra.mxu0 0.0
  %11288 = vmatprep.subr.mxu0 0.0
  %11289 = vmatpush1.msra.mxu0 0.0
  %11290 = vmatprep.subr.mxu0 0.0
  %11291 = vmatpush1.msra.mxu0 0.0
  %11292 = vmatprep.subr.mxu0 0.0
  %11293 = vmatpush1.msra.mxu0 0.0
  %11294 = vmatprep.subr.mxu0 0.0
  %11295 = vmatpush1.msra.mxu0 0.0
  %11296 = vmatprep.subr.mxu0 0.0
  %11297 = vmatpush1.msra.mxu0 0.0
  %11298 = vmatprep.subr.mxu0 0.0
  %11299 = vmatpush1.msra.mxu0 0.0
  %11300 = vmatprep.subr.mxu0 0.0
  %11301 = vmatpush1.msra.mxu0 0.0
  %11302 = vmatprep.subr.mxu0 0.0
  %11303 = vmatpush1.msra.mxu0 0.0
  %11304 = vmatprep.subr.mxu0 0.0
  %11305 = vmatpush1.msra.mxu0 0.0
  %11306 = vmatprep.subr.mxu0 0.0
  %11307 = vmatpush1.msra.mxu0 0.0
  %11308 = vmatprep.subr.mxu0 0.0
  %11309 = vmatpush1.msra.mxu0 0.0
  %11310 = vmatprep.subr.mxu0 0.0
  %11311 = vmatpush1.msra.mxu0 0.0
  %11312 = vmatprep.subr.mxu0 0.0
  %11313 = vmatpush1.msra.mxu0 0.0
  %11314 = vmatprep.subr.mxu0 0.0
  %11315 = vmatpush1.msra.mxu0 0.0
  %11316 = vmatprep.subr.mxu0 0.0
  %11317 = vmatpush1.msra.mxu0 0.0
  %11318 = vmatprep.subr.mxu0 0.0
  %11319 = vmatpush1.msra.mxu0 0.0
  %11320 = vmatprep.subr.mxu0 0.0
  %11321 = vmatpush1.msra.mxu0 0.0
  %11322 = vmatprep.subr.mxu0 0.0
  %11323 = vmatpush1.msra.mxu0 0.0
  %11324 = vmatprep.subr.mxu0 0.0
  %11325 = vmatpush1.msra.mxu0 0.0
  %11326 = vmatprep.subr.mxu0 0.0
  %11327 = vmatpush1.msra.mxu0 0.0
  %11328 = vmatprep.subr.mxu0 0.0
  %11329 = vmatpush1.msra.mxu0 0.0
  %11330 = vmatprep.subr.mxu0 0.0
  %11331 = vmatpush1.msra.mxu0 0.0
  %11332 = vmatprep.subr.mxu0 0.0
  %11333 = vmatpush1.msra.mxu0 0.0
  %11334 = vmatprep.subr.mxu0 0.0
  %11335 = vmatpush1.msra.mxu0 0.0
  %11336 = vmatprep.subr.mxu0 0.0
  %11337 = vmatpush1.msra.mxu0 0.0
  %11338 = vmatprep.subr.mxu0 0.0
  %11339 = vmatpush1.msra.mxu0 0.0
  %11340 = vmatprep.subr.mxu0 0.0
  %11341 = vmatpush1.msra.mxu0 0.0
  %11342 = vmatprep.subr.mxu0 0.0
  %11343 = vmatpush1.msra.mxu0 0.0
  %11344 = vmatprep.subr.mxu0 0.0
  %11345 = vmatpush1.msra.mxu0 0.0
  %11346 = vmatprep.mubr.f32.mxu0 0.0
  %11347 = vmatmul.mubr.f32.gmra.mrb[0].mxu0 %v11280
  %v11348 = vpop.f32.mrb[0].mxu0
  %v11349 = vadd.f32 0.0, %v11348
  %v11350 = vpop.f32.mrb[0].mxu0
  %11351 = vdwg.mxu0
  %11352 = vrot.lane.b32.xlu0 %v536, 104
  %v11353 = vpop.permute.xlu0 %11352
  %v11356 = vsel %vm555, %v10433, 0
  %11358 = vmatprep.subr.mxu0 0.0
  %11359 = vmatpush1.msra.mxu0 %v11353
  %11360 = vmatprep.subr.mxu0 0.0
  %11361 = vmatpush1.msra.mxu0 0.0
  %11362 = vmatprep.subr.mxu0 0.0
  %11363 = vmatpush1.msra.mxu0 0.0
  %11364 = vmatprep.subr.mxu0 0.0
  %11365 = vmatpush1.msra.mxu0 0.0
  %11366 = vmatprep.subr.mxu0 0.0
  %11367 = vmatpush1.msra.mxu0 0.0
  %11368 = vmatprep.subr.mxu0 0.0
  %11369 = vmatpush1.msra.mxu0 0.0
  %11370 = vmatprep.subr.mxu0 0.0
  %11371 = vmatpush1.msra.mxu0 0.0
  %11372 = vmatprep.subr.mxu0 0.0
  %11373 = vmatpush1.msra.mxu0 0.0
  %11374 = vmatprep.subr.mxu0 0.0
  %11375 = vmatpush1.msra.mxu0 0.0
  %11376 = vmatprep.subr.mxu0 0.0
  %11377 = vmatpush1.msra.mxu0 0.0
  %11378 = vmatprep.subr.mxu0 0.0
  %11379 = vmatpush1.msra.mxu0 0.0
  %11380 = vmatprep.subr.mxu0 0.0
  %11381 = vmatpush1.msra.mxu0 0.0
  %11382 = vmatprep.subr.mxu0 0.0
  %11383 = vmatpush1.msra.mxu0 0.0
  %11384 = vmatprep.subr.mxu0 0.0
  %11385 = vmatpush1.msra.mxu0 0.0
  %11386 = vmatprep.subr.mxu0 0.0
  %11387 = vmatpush1.msra.mxu0 0.0
  %11388 = vmatprep.subr.mxu0 0.0
  %11389 = vmatpush1.msra.mxu0 0.0
  %11390 = vmatprep.subr.mxu0 0.0
  %11391 = vmatpush1.msra.mxu0 0.0
  %11392 = vmatprep.subr.mxu0 0.0
  %11393 = vmatpush1.msra.mxu0 0.0
  %11394 = vmatprep.subr.mxu0 0.0
  %11395 = vmatpush1.msra.mxu0 0.0
  %11396 = vmatprep.subr.mxu0 0.0
  %11397 = vmatpush1.msra.mxu0 0.0
  %11398 = vmatprep.subr.mxu0 0.0
  %11399 = vmatpush1.msra.mxu0 0.0
  %11400 = vmatprep.subr.mxu0 0.0
  %11401 = vmatpush1.msra.mxu0 0.0
  %11402 = vmatprep.subr.mxu0 0.0
  %11403 = vmatpush1.msra.mxu0 0.0
  %11404 = vmatprep.subr.mxu0 0.0
  %11405 = vmatpush1.msra.mxu0 0.0
  %11406 = vmatprep.subr.mxu0 0.0
  %11407 = vmatpush1.msra.mxu0 0.0
  %11408 = vmatprep.subr.mxu0 0.0
  %11409 = vmatpush1.msra.mxu0 0.0
  %11410 = vmatprep.subr.mxu0 0.0
  %11411 = vmatpush1.msra.mxu0 0.0
  %11412 = vmatprep.subr.mxu0 0.0
  %11413 = vmatpush1.msra.mxu0 0.0
  %11414 = vmatprep.subr.mxu0 0.0
  %11415 = vmatpush1.msra.mxu0 0.0
  %11416 = vmatprep.subr.mxu0 0.0
  %11417 = vmatpush1.msra.mxu0 0.0
  %11418 = vmatprep.subr.mxu0 0.0
  %11419 = vmatpush1.msra.mxu0 0.0
  %11420 = vmatprep.subr.mxu0 0.0
  %11421 = vmatpush1.msra.mxu0 0.0
  %11422 = vmatprep.mubr.f32.mxu0 0.0
  %11423 = vmatmul.mubr.f32.gmra.mrb[0].mxu0 %v11356
  %v11424 = vpop.f32.mrb[0].mxu0
  %v11425 = vadd.f32 0.0, %v11424
  %v11426 = vpop.f32.mrb[0].mxu0
  %11427 = vdwg.mxu0
  %11428 = vrot.lane.b32.xlu0 %v541, 104
  %v11429 = vpop.permute.xlu0 %11428
  %v11432 = vsel %vm555, %v10435, 0
  %11434 = vmatprep.subr.mxu0 0.0
  %11435 = vmatpush1.msra.mxu0 %v11429
  %11436 = vmatprep.subr.mxu0 0.0
  %11437 = vmatpush1.msra.mxu0 0.0
  %11438 = vmatprep.subr.mxu0 0.0
  %11439 = vmatpush1.msra.mxu0 0.0
  %11440 = vmatprep.subr.mxu0 0.0
  %11441 = vmatpush1.msra.mxu0 0.0
  %11442 = vmatprep.subr.mxu0 0.0
  %11443 = vmatpush1.msra.mxu0 0.0
  %11444 = vmatprep.subr.mxu0 0.0
  %11445 = vmatpush1.msra.mxu0 0.0
  %11446 = vmatprep.subr.mxu0 0.0
  %11447 = vmatpush1.msra.mxu0 0.0
  %11448 = vmatprep.subr.mxu0 0.0
  %11449 = vmatpush1.msra.mxu0 0.0
  %11450 = vmatprep.subr.mxu0 0.0
  %11451 = vmatpush1.msra.mxu0 0.0
  %11452 = vmatprep.subr.mxu0 0.0
  %11453 = vmatpush1.msra.mxu0 0.0
  %11454 = vmatprep.subr.mxu0 0.0
  %11455 = vmatpush1.msra.mxu0 0.0
  %11456 = vmatprep.subr.mxu0 0.0
  %11457 = vmatpush1.msra.mxu0 0.0
  %11458 = vmatprep.subr.mxu0 0.0
  %11459 = vmatpush1.msra.mxu0 0.0
  %11460 = vmatprep.subr.mxu0 0.0
  %11461 = vmatpush1.msra.mxu0 0.0
  %11462 = vmatprep.subr.mxu0 0.0
  %11463 = vmatpush1.msra.mxu0 0.0
  %11464 = vmatprep.subr.mxu0 0.0
  %11465 = vmatpush1.msra.mxu0 0.0
  %11466 = vmatprep.subr.mxu0 0.0
  %11467 = vmatpush1.msra.mxu0 0.0
  %11468 = vmatprep.subr.mxu0 0.0
  %11469 = vmatpush1.msra.mxu0 0.0
  %11470 = vmatprep.subr.mxu0 0.0
  %11471 = vmatpush1.msra.mxu0 0.0
  %11472 = vmatprep.subr.mxu0 0.0
  %11473 = vmatpush1.msra.mxu0 0.0
  %11474 = vmatprep.subr.mxu0 0.0
  %11475 = vmatpush1.msra.mxu0 0.0
  %11476 = vmatprep.subr.mxu0 0.0
  %11477 = vmatpush1.msra.mxu0 0.0
  %11478 = vmatprep.subr.mxu0 0.0
  %11479 = vmatpush1.msra.mxu0 0.0
  %11480 = vmatprep.subr.mxu0 0.0
  %11481 = vmatpush1.msra.mxu0 0.0
  %11482 = vmatprep.subr.mxu0 0.0
  %11483 = vmatpush1.msra.mxu0 0.0
  %11484 = vmatprep.subr.mxu0 0.0
  %11485 = vmatpush1.msra.mxu0 0.0
  %11486 = vmatprep.subr.mxu0 0.0
  %11487 = vmatpush1.msra.mxu0 0.0
  %11488 = vmatprep.subr.mxu0 0.0
  %11489 = vmatpush1.msra.mxu0 0.0
  %11490 = vmatprep.subr.mxu0 0.0
  %11491 = vmatpush1.msra.mxu0 0.0
  %11492 = vmatprep.subr.mxu0 0.0
  %11493 = vmatpush1.msra.mxu0 0.0
  %11494 = vmatprep.subr.mxu0 0.0
  %11495 = vmatpush1.msra.mxu0 0.0
  %11496 = vmatprep.subr.mxu0 0.0
  %11497 = vmatpush1.msra.mxu0 0.0
  %11498 = vmatprep.mubr.f32.mxu0 0.0
  %11499 = vmatmul.mubr.f32.gmra.mrb[0].mxu0 %v11432
  %v11500 = vpop.f32.mrb[0].mxu0
  %v11501 = vadd.f32 0.0, %v11500
  %v11502 = vpop.f32.mrb[0].mxu0
  %11503 = vdwg.mxu0
  %11504 = vrot.lane.b32.xlu0 %v546, 104
  %v11505 = vpop.permute.xlu0 %11504
  %v11508 = vsel %vm555, %v10437, 0
  %11510 = vmatprep.subr.mxu0 0.0
  %11511 = vmatpush1.msra.mxu0 %v11505
  %11512 = vmatprep.subr.mxu0 0.0
  %11513 = vmatpush1.msra.mxu0 0.0
  %11514 = vmatprep.subr.mxu0 0.0
  %11515 = vmatpush1.msra.mxu0 0.0
  %11516 = vmatprep.subr.mxu0 0.0
  %11517 = vmatpush1.msra.mxu0 0.0
  %11518 = vmatprep.subr.mxu0 0.0
  %11519 = vmatpush1.msra.mxu0 0.0
  %11520 = vmatprep.subr.mxu0 0.0
  %11521 = vmatpush1.msra.mxu0 0.0
  %11522 = vmatprep.subr.mxu0 0.0
  %11523 = vmatpush1.msra.mxu0 0.0
  %11524 = vmatprep.subr.mxu0 0.0
  %11525 = vmatpush1.msra.mxu0 0.0
  %11526 = vmatprep.subr.mxu0 0.0
  %11527 = vmatpush1.msra.mxu0 0.0
  %11528 = vmatprep.subr.mxu0 0.0
  %11529 = vmatpush1.msra.mxu0 0.0
  %11530 = vmatprep.subr.mxu0 0.0
  %11531 = vmatpush1.msra.mxu0 0.0
  %11532 = vmatprep.subr.mxu0 0.0
  %11533 = vmatpush1.msra.mxu0 0.0
  %11534 = vmatprep.subr.mxu0 0.0
  %11535 = vmatpush1.msra.mxu0 0.0
  %11536 = vmatprep.subr.mxu0 0.0
  %11537 = vmatpush1.msra.mxu0 0.0
  %11538 = vmatprep.subr.mxu0 0.0
  %11539 = vmatpush1.msra.mxu0 0.0
  %11540 = vmatprep.subr.mxu0 0.0
  %11541 = vmatpush1.msra.mxu0 0.0
  %11542 = vmatprep.subr.mxu0 0.0
  %11543 = vmatpush1.msra.mxu0 0.0
  %11544 = vmatprep.subr.mxu0 0.0
  %11545 = vmatpush1.msra.mxu0 0.0
  %11546 = vmatprep.subr.mxu0 0.0
  %11547 = vmatpush1.msra.mxu0 0.0
  %11548 = vmatprep.subr.mxu0 0.0
  %11549 = vmatpush1.msra.mxu0 0.0
  %11550 = vmatprep.subr.mxu0 0.0
  %11551 = vmatpush1.msra.mxu0 0.0
  %11552 = vmatprep.subr.mxu0 0.0
  %11553 = vmatpush1.msra.mxu0 0.0
  %11554 = vmatprep.subr.mxu0 0.0
  %11555 = vmatpush1.msra.mxu0 0.0
  %11556 = vmatprep.subr.mxu0 0.0
  %11557 = vmatpush1.msra.mxu0 0.0
  %11558 = vmatprep.subr.mxu0 0.0
  %11559 = vmatpush1.msra.mxu0 0.0
  %11560 = vmatprep.subr.mxu0 0.0
  %11561 = vmatpush1.msra.mxu0 0.0
  %11562 = vmatprep.subr.mxu0 0.0
  %11563 = vmatpush1.msra.mxu0 0.0
  %11564 = vmatprep.subr.mxu0 0.0
  %11565 = vmatpush1.msra.mxu0 0.0
  %11566 = vmatprep.subr.mxu0 0.0
  %11567 = vmatpush1.msra.mxu0 0.0
  %11568 = vmatprep.subr.mxu0 0.0
  %11569 = vmatpush1.msra.mxu0 0.0
  %11570 = vmatprep.subr.mxu0 0.0
  %11571 = vmatpush1.msra.mxu0 0.0
  %11572 = vmatprep.subr.mxu0 0.0
  %11573 = vmatpush1.msra.mxu0 0.0
  %11574 = vmatprep.mubr.f32.mxu0 0.0
  %11575 = vmatmul.mubr.f32.gmra.mrb[0].mxu0 %v11508
  %v11576 = vpop.f32.mrb[0].mxu0
  %v11577 = vadd.f32 0.0, %v11576
  %v11578 = vpop.f32.mrb[0].mxu0
  %11579 = vdwg.mxu0
  %11580 = vrot.lane.b32.xlu0 %v551, 104
  %v11581 = vpop.permute.xlu0 %11580
  %v11584 = vsel %vm555, %v10439, 0
  %11586 = vmatprep.subr.mxu0 0.0
  %11587 = vmatpush1.msra.mxu0 %v11581
  %11588 = vmatprep.subr.mxu0 0.0
  %11589 = vmatpush1.msra.mxu0 0.0
  %11590 = vmatprep.subr.mxu0 0.0
  %11591 = vmatpush1.msra.mxu0 0.0
  %11592 = vmatprep.subr.mxu0 0.0
  %11593 = vmatpush1.msra.mxu0 0.0
  %11594 = vmatprep.subr.mxu0 0.0
  %11595 = vmatpush1.msra.mxu0 0.0
  %11596 = vmatprep.subr.mxu0 0.0
  %11597 = vmatpush1.msra.mxu0 0.0
  %11598 = vmatprep.subr.mxu0 0.0
  %11599 = vmatpush1.msra.mxu0 0.0
  %11600 = vmatprep.subr.mxu0 0.0
  %11601 = vmatpush1.msra.mxu0 0.0
  %11602 = vmatprep.subr.mxu0 0.0
  %11603 = vmatpush1.msra.mxu0 0.0
  %11604 = vmatprep.subr.mxu0 0.0
  %11605 = vmatpush1.msra.mxu0 0.0
  %11606 = vmatprep.subr.mxu0 0.0
  %11607 = vmatpush1.msra.mxu0 0.0
  %11608 = vmatprep.subr.mxu0 0.0
  %11609 = vmatpush1.msra.mxu0 0.0
  %11610 = vmatprep.subr.mxu0 0.0
  %11611 = vmatpush1.msra.mxu0 0.0
  %11612 = vmatprep.subr.mxu0 0.0
  %11613 = vmatpush1.msra.mxu0 0.0
  %11614 = vmatprep.subr.mxu0 0.0
  %11615 = vmatpush1.msra.mxu0 0.0
  %11616 = vmatprep.subr.mxu0 0.0
  %11617 = vmatpush1.msra.mxu0 0.0
  %11618 = vmatprep.subr.mxu0 0.0
  %11619 = vmatpush1.msra.mxu0 0.0
  %11620 = vmatprep.subr.mxu0 0.0
  %11621 = vmatpush1.msra.mxu0 0.0
  %11622 = vmatprep.subr.mxu0 0.0
  %11623 = vmatpush1.msra.mxu0 0.0
  %11624 = vmatprep.subr.mxu0 0.0
  %11625 = vmatpush1.msra.mxu0 0.0
  %11626 = vmatprep.subr.mxu0 0.0
  %11627 = vmatpush1.msra.mxu0 0.0
  %11628 = vmatprep.subr.mxu0 0.0
  %11629 = vmatpush1.msra.mxu0 0.0
  %11630 = vmatprep.subr.mxu0 0.0
  %11631 = vmatpush1.msra.mxu0 0.0
  %11632 = vmatprep.subr.mxu0 0.0
  %11633 = vmatpush1.msra.mxu0 0.0
  %11634 = vmatprep.subr.mxu0 0.0
  %11635 = vmatpush1.msra.mxu0 0.0
  %11636 = vmatprep.subr.mxu0 0.0
  %11637 = vmatpush1.msra.mxu0 0.0
  %11638 = vmatprep.subr.mxu0 0.0
  %11639 = vmatpush1.msra.mxu0 0.0
  %11640 = vmatprep.subr.mxu0 0.0
  %11641 = vmatpush1.msra.mxu0 0.0
  %11642 = vmatprep.subr.mxu0 0.0
  %11643 = vmatpush1.msra.mxu0 0.0
  %11644 = vmatprep.subr.mxu0 0.0
  %11645 = vmatpush1.msra.mxu0 0.0
  %11646 = vmatprep.subr.mxu0 0.0
  %11647 = vmatpush1.msra.mxu0 0.0
  %11648 = vmatprep.subr.mxu0 0.0
  %11649 = vmatpush1.msra.mxu0 0.0
  %11650 = vmatprep.mubr.f32.mxu0 0.0
  %11651 = vmatmul.mubr.f32.gmra.mrb[0].mxu0 %v11584
  %v11652 = vpop.f32.mrb[0].mxu0
  %v11653 = vadd.f32 0.0, %v11652
  %v11654 = vpop.f32.mrb[0].mxu0
  %11655 = vdwg.mxu0
  %v11656 = vld [vmem:[%s4 + $0x18] sm:$0xff]
  %v11658 = vsel %vm555, %v10513, 0
  %v11661 = vsel %vm555, %v10589, 0
  %v11664 = vsel %vm555, %v10665, 0
  %v11667 = vsel %vm555, %v10741, 0
  %v11670 = vsel %vm555, %v10817, 0
  %v11673 = vsel %vm555, %v10893, 0
  %v11676 = vsel %vm555, %v10969, 0
  %v11679 = vsel %vm555, %v11045, 0
  %v11682 = vsel %vm555, %v11121, 0
  %v11685 = vsel %vm555, %v11197, 0
  %v11688 = vsel %vm555, %v11273, 0
  %v11691 = vsel %vm555, %v11349, 0
  %v11694 = vsel %vm555, %v11425, 0
  %v11697 = vsel %vm555, %v11501, 0
  %v11700 = vsel %vm555, %v11577, 0
  %v11703 = vsel %vm555, %v11653, 0
  %11705 = vmatprep.subr.mxu0 0.0
  %11706 = vmatpush1.msra.mxu0 %v11656
  %11707 = vmatprep.subr.mxu0 0.0
  %11708 = vmatpush1.msra.mxu0 0.0
  %11709 = vmatprep.subr.mxu0 0.0
  %11710 = vmatpush1.msra.mxu0 0.0
  %11711 = vmatprep.subr.mxu0 0.0
  %11712 = vmatpush1.msra.mxu0 0.0
  %11713 = vmatprep.subr.mxu0 0.0
  %11714 = vmatpush1.msra.mxu0 0.0
  %11715 = vmatprep.subr.mxu0 0.0
  %11716 = vmatpush1.msra.mxu0 0.0
  %11717 = vmatprep.subr.mxu0 0.0
  %11718 = vmatpush1.msra.mxu0 0.0
  %11719 = vmatprep.subr.mxu0 0.0
  %11720 = vmatpush1.msra.mxu0 0.0
  %11721 = vmatprep.subr.mxu0 0.0
  %11722 = vmatpush1.msra.mxu0 0.0
  %11723 = vmatprep.subr.mxu0 0.0
  %11724 = vmatpush1.msra.mxu0 0.0
  %11725 = vmatprep.subr.mxu0 0.0
  %11726 = vmatpush1.msra.mxu0 0.0
  %11727 = vmatprep.subr.mxu0 0.0
  %11728 = vmatpush1.msra.mxu0 0.0
  %11729 = vmatprep.subr.mxu0 0.0
  %11730 = vmatpush1.msra.mxu0 0.0
  %11731 = vmatprep.subr.mxu0 0.0
  %11732 = vmatpush1.msra.mxu0 0.0
  %11733 = vmatprep.subr.mxu0 0.0
  %11734 = vmatpush1.msra.mxu0 0.0
  %11735 = vmatprep.subr.mxu0 0.0
  %11736 = vmatpush1.msra.mxu0 0.0
  %11737 = vmatprep.subr.mxu0 0.0
  %11738 = vmatpush1.msra.mxu0 0.0
  %11739 = vmatprep.subr.mxu0 0.0
  %11740 = vmatpush1.msra.mxu0 0.0
  %11741 = vmatprep.subr.mxu0 0.0
  %11742 = vmatpush1.msra.mxu0 0.0
  %11743 = vmatprep.subr.mxu0 0.0
  %11744 = vmatpush1.msra.mxu0 0.0
  %11745 = vmatprep.subr.mxu0 0.0
  %11746 = vmatpush1.msra.mxu0 0.0
  %11747 = vmatprep.subr.mxu0 0.0
  %11748 = vmatpush1.msra.mxu0 0.0
  %11749 = vmatprep.subr.mxu0 0.0
  %11750 = vmatpush1.msra.mxu0 0.0
  %11751 = vmatprep.subr.mxu0 0.0
  %11752 = vmatpush1.msra.mxu0 0.0
  %11753 = vmatprep.subr.mxu0 0.0
  %11754 = vmatpush1.msra.mxu0 0.0
  %11755 = vmatprep.subr.mxu0 0.0
  %11756 = vmatpush1.msra.mxu0 0.0
  %11757 = vmatprep.subr.mxu0 0.0
  %11758 = vmatpush1.msra.mxu0 0.0
  %11759 = vmatprep.subr.mxu0 0.0
  %11760 = vmatpush1.msra.mxu0 0.0
  %11761 = vmatprep.subr.mxu0 0.0
  %11762 = vmatpush1.msra.mxu0 0.0
  %11763 = vmatprep.subr.mxu0 0.0
  %11764 = vmatpush1.msra.mxu0 0.0
  %11765 = vmatprep.subr.mxu0 0.0
  %11766 = vmatpush1.msra.mxu0 0.0
  %11767 = vmatprep.subr.mxu0 0.0
  %11768 = vmatpush1.msra.mxu0 0.0
  %11769 = vmatprep.mubr.f32.mxu0 0.0
  %11770 = vmatmul.mubr.f32.gmra.mrb[0].mxu0 %v11658
  %v11771 = vpop.f32.mrb[0].mxu0
  %v11772 = vadd.f32 0.0, %v11771
  %v11773 = vpop.f32.mrb[0].mxu0
  %11774 = vmatprep.mubr.f32.mxu0 0.0
  %11775 = vmatmul.mubr.f32.gmra.mrb[0].mxu0 %v11661
  %v11776 = vpop.f32.mrb[0].mxu0
  %v11777 = vadd.f32 0.0, %v11776
  %v11778 = vpop.f32.mrb[0].mxu0
  %11779 = vmatprep.mubr.f32.mxu0 0.0
  %11780 = vmatmul.mubr.f32.gmra.mrb[0].mxu0 %v11664
  %v11781 = vpop.f32.mrb[0].mxu0
  %v11782 = vadd.f32 0.0, %v11781
  %v11783 = vpop.f32.mrb[0].mxu0
  %11784 = vmatprep.mubr.f32.mxu0 0.0
  %11785 = vmatmul.mubr.f32.gmra.mrb[0].mxu0 %v11667
  %v11786 = vpop.f32.mrb[0].mxu0
  %v11787 = vadd.f32 0.0, %v11786
  %v11788 = vpop.f32.mrb[0].mxu0
  %11789 = vmatprep.mubr.f32.mxu0 0.0
  %11790 = vmatmul.mubr.f32.gmra.mrb[0].mxu0 %v11670
  %v11791 = vpop.f32.mrb[0].mxu0
  %v11792 = vadd.f32 0.0, %v11791
  %v11793 = vpop.f32.mrb[0].mxu0
  %11794 = vmatprep.mubr.f32.mxu0 0.0
  %11795 = vmatmul.mubr.f32.gmra.mrb[0].mxu0 %v11673
  %v11796 = vpop.f32.mrb[0].mxu0
  %v11797 = vadd.f32 0.0, %v11796
  %v11798 = vpop.f32.mrb[0].mxu0
  %11799 = vmatprep.mubr.f32.mxu0 0.0
  %11800 = vmatmul.mubr.f32.gmra.mrb[0].mxu0 %v11676
  %v11801 = vpop.f32.mrb[0].mxu0
  %v11802 = vadd.f32 0.0, %v11801
  %v11803 = vpop.f32.mrb[0].mxu0
  %11804 = vmatprep.mubr.f32.mxu0 0.0
  %11805 = vmatmul.mubr.f32.gmra.mrb[0].mxu0 %v11679
  %v11806 = vpop.f32.mrb[0].mxu0
  %v11807 = vadd.f32 0.0, %v11806
  %v11808 = vpop.f32.mrb[0].mxu0
  %11809 = vmatprep.mubr.f32.mxu0 0.0
  %11810 = vmatmul.mubr.f32.gmra.mrb[0].mxu0 %v11682
  %v11811 = vpop.f32.mrb[0].mxu0
  %v11812 = vadd.f32 0.0, %v11811
  %v11813 = vpop.f32.mrb[0].mxu0
  %11814 = vmatprep.mubr.f32.mxu0 0.0
  %11815 = vmatmul.mubr.f32.gmra.mrb[0].mxu0 %v11685
  %v11816 = vpop.f32.mrb[0].mxu0
  %v11817 = vadd.f32 0.0, %v11816
  %v11818 = vpop.f32.mrb[0].mxu0
  %11819 = vmatprep.mubr.f32.mxu0 0.0
  %11820 = vmatmul.mubr.f32.gmra.mrb[0].mxu0 %v11688
  %v11821 = vpop.f32.mrb[0].mxu0
  %v11822 = vadd.f32 0.0, %v11821
  %v11823 = vpop.f32.mrb[0].mxu0
  %11824 = vmatprep.mubr.f32.mxu0 0.0
  %11825 = vmatmul.mubr.f32.gmra.mrb[0].mxu0 %v11691
  %v11826 = vpop.f32.mrb[0].mxu0
  %v11827 = vadd.f32 0.0, %v11826
  %v11828 = vpop.f32.mrb[0].mxu0
  %11829 = vmatprep.mubr.f32.mxu0 0.0
  %11830 = vmatmul.mubr.f32.gmra.mrb[0].mxu0 %v11694
  %v11831 = vpop.f32.mrb[0].mxu0
  %v11832 = vadd.f32 0.0, %v11831
  %v11833 = vpop.f32.mrb[0].mxu0
  %11834 = vmatprep.mubr.f32.mxu0 0.0
  %11835 = vmatmul.mubr.f32.gmra.mrb[0].mxu0 %v11697
  %v11836 = vpop.f32.mrb[0].mxu0
  %v11837 = vadd.f32 0.0, %v11836
  %v11838 = vpop.f32.mrb[0].mxu0
  %11839 = vmatprep.mubr.f32.mxu0 0.0
  %11840 = vmatmul.mubr.f32.gmra.mrb[0].mxu0 %v11700
  %v11841 = vpop.f32.mrb[0].mxu0
  %v11842 = vadd.f32 0.0, %v11841
  %v11843 = vpop.f32.mrb[0].mxu0
  %11844 = vmatprep.mubr.f32.mxu0 0.0
  %11845 = vmatmul.mubr.f32.gmra.mrb[0].mxu0 %v11703
  %v11846 = vpop.f32.mrb[0].mxu0
  %v11847 = vadd.f32 0.0, %v11846
  %v11848 = vpop.f32.mrb[0].mxu0
  %11849 = vdwg.mxu0
  %v11850 = vadd.f32 %v8998, %v11772
  %v11851 = vadd.f32 %v8999, %v11777
  %v11852 = vadd.f32 %v9000, %v11782
  %v11853 = vadd.f32 %v9001, %v11787
  %v11854 = vadd.f32 %v9002, %v11792
  %v11855 = vadd.f32 %v9003, %v11797
  %v11856 = vadd.f32 %v9004, %v11802
  %v11857 = vadd.f32 %v9005, %v11807
  %v11858 = vadd.f32 %v9006, %v11812
  %v11859 = vadd.f32 %v9007, %v11817
  %v11860 = vadd.f32 %v9008, %v11822
  %v11861 = vadd.f32 %v9009, %v11827
  %v11862 = vadd.f32 %v9010, %v11832
  %v11863 = vadd.f32 %v9011, %v11837
  %v11864 = vadd.f32 %v9012, %v11842
  %v11865 = vadd.f32 %v9013, %v11847
  %v11866 = vld [vmem:[%s5] sm:$0x1]
  %v11868 = vlaneseq
  %v11869 = vshrl.u32 %v11868, 7
  %v11870 = vsub.s32 0, %v11869
  %v11871 = vrot.slane %v11866, %v11870
  %v11873 = vadd.f32 %v11850, %v11871
  %v11874 = vadd.f32 %v11851, %v11871
  %v11875 = vadd.f32 %v11852, %v11871
  %v11876 = vadd.f32 %v11853, %v11871
  %v11877 = vadd.f32 %v11854, %v11871
  %v11878 = vadd.f32 %v11855, %v11871
  %v11879 = vadd.f32 %v11856, %v11871
  %v11880 = vadd.f32 %v11857, %v11871
  %v11881 = vadd.f32 %v11858, %v11871
  %v11882 = vadd.f32 %v11859, %v11871
  %v11883 = vadd.f32 %v11860, %v11871
  %v11884 = vadd.f32 %v11861, %v11871
  %v11885 = vadd.f32 %v11862, %v11871
  %v11886 = vadd.f32 %v11863, %v11871
  %v11887 = vadd.f32 %v11864, %v11871
  %v11888 = vadd.f32 %v11865, %v11871
  %11889 = vst.msk [vmem:[%s7] sm:$0xff] %vm46, %v11873
  %11890 = vst.msk [vmem:[%s7 + $0x8] sm:$0xff] %vm46, %v11874
  %11891 = vst.msk [vmem:[%s7 + $0x10] sm:$0xff] %vm46, %v11875
  %11892 = vst.msk [vmem:[%s7 + $0x18] sm:$0xff] %vm46, %v11876
  %11893 = vst.msk [vmem:[%s7 + $0x20] sm:$0xff] %vm46, %v11877
  %11894 = vst.msk [vmem:[%s7 + $0x28] sm:$0xff] %vm46, %v11878
  %11895 = vst.msk [vmem:[%s7 + $0x30] sm:$0xff] %vm46, %v11879
  %11896 = vst.msk [vmem:[%s7 + $0x38] sm:$0xff] %vm46, %v11880
  %11897 = vst.msk [vmem:[%s7 + $0x40] sm:$0xff] %vm46, %v11881
  %11898 = vst.msk [vmem:[%s7 + $0x48] sm:$0xff] %vm46, %v11882
  %11899 = vst.msk [vmem:[%s7 + $0x50] sm:$0xff] %vm46, %v11883
  %11900 = vst.msk [vmem:[%s7 + $0x58] sm:$0xff] %vm46, %v11884
  %11901 = vst.msk [vmem:[%s7 + $0x60] sm:$0xff] %vm46, %v11885
  %11902 = vst.msk [vmem:[%s7 + $0x68] sm:$0xff] %vm46, %v11886
  %11903 = vst.msk [vmem:[%s7 + $0x70] sm:$0xff] %vm46, %v11887
  %11904 = vst.msk [vmem:[%s7 + $0x78] sm:$0xff] %vm46, %v11888
  // Predicated region
  $region30: #{line_attention_forward.1} parent=0 // pred_check
    _
  $region31: #{line_attention_forward.1} parent=0 // pred_check_branch
    %11906 = sbr.rel (0) target = $region33
  $region32: #{line_attention_forward.1} parent=0 // pred_region
    _
  $region33: #{line_attention_forward.1} parent=0 // pred_fallthru
    _
  // Predicated region
  $region34: #{line_attention_forward.1} parent=0 // pred_check
    _
  $region35: #{line_attention_forward.1} parent=0 // pred_check_branch
    %11908 = sbr.rel (0) target = $region37
  $region36: #{line_attention_forward.1} parent=0 // pred_region
    _
  $region37: #{line_attention_forward.1} parent=0 // pred_fallthru
    _

</llo_original>
